<compile_context>
chip_gen: v6e
topology: v6e:2x2x1
jax: 0.10.0
libtpu: 0.0.40
codegen_flags: <defaults>
</compile_context>

<pallas_src>
import jax
import jax.numpy as jnp
from jax.experimental import pallas as pl
from jax.experimental.pallas import tpu as pltpu

LEAKY_SLOPE = 0.01
BN_EPS = 1e-5


def _pick_tm(m, cap=256):
    """Largest multiple-of-8 divisor of m that is <= cap (falls back to m)."""
    best = None
    for d in range(8, min(m, cap) + 1, 8):
        if m % d == 0:
            best = d
    return best if best is not None else m


# ----------------------------- Pallas kernels ------------------------------

def _conv_fused_kernel(a_ref, s_ref, t_ref, w_ref, b_ref, y_ref, stats_ref):
    # Input-side BN affine (ones/zeros for layer 1) applied right before the dot.
    a = a_ref[...] * s_ref[...] + t_ref[...]
    acc = jnp.dot(a, w_ref[...], preferred_element_type=jnp.float32)
    acc = acc + b_ref[...]
    y = jnp.where(acc > 0, acc, LEAKY_SLOPE * acc)          # leaky_relu
    y_ref[...] = y
    # Fused BN statistics: per-tile partial sum / sum-of-squares, padded to 8 rows
    # so the side output stays (8,128)-aligned.
    s0 = jnp.sum(y, axis=0, keepdims=True)
    s1 = jnp.sum(y * y, axis=0, keepdims=True)
    pad = jnp.zeros((6, s0.shape[1]), jnp.float32)
    stats_ref[...] = jnp.concatenate([s0, s1, pad], axis=0)


def _fc_bn_sigmoid_kernel(x_ref, s_ref, t_ref, w_ref, b_ref, o_ref):
    xs = x_ref[...] * s_ref[...] + t_ref[...]               # BN2 affine fused here
    z = jnp.sum(xs * w_ref[...], axis=1, keepdims=True) + b_ref[...]
    o_ref[...] = 1.0 / (1.0 + jnp.exp(-z))


# ------------------------------- wrappers -----------------------------------

def pallas_conv_fused(a, scale_k, shift_k, w, b):
    """im2col matmul + bias + leaky_relu with BN stats fused into the epilogue.

    a: (M, K) im2col columns; scale_k/shift_k: (K,) input-side affine;
    w: (K, OC); b: (OC,).  Returns y (M, OC) and sums (2, OC) = [sum, sum_sq].
    """
    m, k = a.shape
    n = w.shape[1]
    tm = _pick_tm(m)
    grid = m // tm
    y, stats = pl.pallas_call(
        _conv_fused_kernel,
        out_shape=(jax.ShapeDtypeStruct((m, n), jnp.float32),
                   jax.ShapeDtypeStruct((grid * 8, n), jnp.float32)),
        grid=(grid,),
        in_specs=[pl.BlockSpec((tm, k), lambda i: (i, 0)),
                  pl.BlockSpec((1, k), lambda i: (0, 0)),
                  pl.BlockSpec((1, k), lambda i: (0, 0)),
                  pl.BlockSpec((k, n), lambda i: (0, 0)),
                  pl.BlockSpec((1, n), lambda i: (0, 0))],
        out_specs=[pl.BlockSpec((tm, n), lambda i: (i, 0)),
                   pl.BlockSpec((8, n), lambda i: (i, 0))],
        compiler_params=pltpu.CompilerParams(
            dimension_semantics=("parallel",)),
    )(a, scale_k.reshape(1, k), shift_k.reshape(1, k), w, b.reshape(1, n))
    sums = stats.reshape(grid, 8, n)[:, :2, :].sum(axis=0)   # tiny cross-tile reduce
    return y, sums


def pallas_fc_bn_sigmoid(x2d, scale_t, shift_t, w_row, b):
    bsz, k = x2d.shape
    return pl.pallas_call(
        _fc_bn_sigmoid_kernel,
        out_shape=jax.ShapeDtypeStruct((bsz, 1), jnp.float32),
    )(x2d, scale_t.reshape(1, k), shift_t.reshape(1, k),
      w_row.reshape(1, k), b.reshape(1, 1))


# ------------------------------ model forward -------------------------------

def _im2col_nhwc(x, k, stride):
    n, h, w, _ = x.shape
    oh = (h - k) // stride + 1
    ow = (w - k) // stride + 1
    cols = []
    for i in range(k):
        for j in range(k):
            cols.append(x[:, i:i + stride * oh:stride, j:j + stride * ow:stride, :])
    p = jnp.stack(cols, axis=3)                    # [n, oh, ow, k*k, c]
    return p.reshape(n * oh * ow, -1), (n, oh, ow)


def prepare_params(params, sz):
    """One-time (outside the hot path) parameter re-layout."""
    w1 = params["w1"]
    k1 = w1.shape[0]
    k1p = ((k1 + 127) // 128) * 128                          # lane-pad K: 75 -> 128
    oc = params["w2"].shape[1]
    p = dict(params)
    p["w1p"] = jnp.pad(w1, ((0, k1p - k1), (0, 0)))
    # Reorder fc weight from PyTorch NCHW flatten (c,h,w) to NHWC flatten (h,w,c)
    # so no transpose is needed between conv2 and the FC kernel.
    p["wfc_nhwc"] = params["wfc"].reshape(oc, sz, sz).transpose(1, 2, 0).reshape(-1)
    return p


@jax.jit
def disc_cero_forward(x_nchw, cond_nchw, params):
    x = jnp.transpose(x_nchw, (0, 2, 3, 1)).astype(jnp.float32)   # NCHW -> NHWC
    c = jnp.transpose(cond_nchw, (0, 2, 3, 1)).astype(jnp.float32)
    h = x + c                       # plain JAX; XLA fuses it into the im2col below

    def bn_coeffs(sums, m, gamma, beta):
        mean = sums[0] / m
        var = jnp.maximum(sums[1] / m - mean * mean, 0.0)    # biased (train-mode BN)
        scale = gamma / jnp.sqrt(var + BN_EPS)
        shift = beta - mean * scale
        return scale, shift

    # --- layer 1: conv(3->128, k5, s1) + bias + leaky_relu, BN stats fused -------
    cols1, (n, oh1, ow1) = _im2col_nhwc(h, 5, 1)             # (N*28*28, 75)
    k1 = cols1.shape[1]
    k1p = params["w1p"].shape[0]
    cols1 = jnp.pad(cols1, ((0, 0), (0, k1p - k1)))          # lane-pad K to 128
    y1, sums1 = pallas_conv_fused(
        cols1, jnp.ones((k1p,), jnp.float32), jnp.zeros((k1p,), jnp.float32),
        params["w1p"], params["b1"])
    scale1, shift1 = bn_coeffs(sums1, float(y1.shape[0]), params["g1"], params["be1"])

    # --- layer 2: BN1 affine folded into conv2's LHS; conv(128->128, k5, s2) -----
    h1 = y1.reshape(n, oh1, ow1, -1)
    cols2, (n2, oh2, ow2) = _im2col_nhwc(h1, 5, 2)           # (N*12*12, 3200)
    # TODO(synk): for large batches do the 5x5 tap expansion in-kernel instead of
    # materializing the 25x-expanded activation in HBM.
    scale1_k = jnp.tile(scale1, 25)                          # K order = (kh, kw, ic)
    shift1_k = jnp.tile(shift1, 25)
    y2, sums2 = pallas_conv_fused(cols2, scale1_k, shift1_k,
                                  params["w2"], params["b2"])
    scale2, shift2 = bn_coeffs(sums2, float(y2.shape[0]), params["g2"], params["be2"])

    # --- fc: BN2 affine fused into the FC + sigmoid kernel -----------------------
    hw = oh2 * ow2
    oc = y2.shape[1]
    flat = y2.reshape(n2, hw * oc)                           # free reshape, NHWC order
    scale2_t = jnp.tile(scale2, hw)
    shift2_t = jnp.tile(shift2, hw)
    # TODO(synk): BatchNorm running-stats update (training side effect) is not reproduced.
    return pallas_fc_bn_sigmoid(flat, scale2_t, shift2_t,
                                params["wfc_nhwc"], params["bfc"])


# --------------------------- pure-JAX reference ------------------------------

@jax.jit
def reference_forward(x_nchw, cond_nchw, params):
    x = jnp.transpose(x_nchw, (0, 2, 3, 1)) + jnp.transpose(cond_nchw, (0, 2, 3, 1))

    def conv(v, w_mat, b, k, stride):
        w_hwio = w_mat.reshape(k, k, -1, w_mat.shape[1])
        y = jax.lax.conv_general_dilated(
            v, w_hwio, (stride, stride), "VALID",
            dimension_numbers=("NHWC", "HWIO", "NHWC"))      # default precision
        return y + b

    def lrelu(v):
        return jnp.where(v > 0, v, LEAKY_SLOPE * v)

    def bn(v, g, be):
        mean = jnp.mean(v, axis=(0, 1, 2))
        var = jnp.mean((v - mean) ** 2, axis=(0, 1, 2))
        return (v - mean) / jnp.sqrt(var + BN_EPS) * g + be

    h = bn(lrelu(conv(x, params["w1"], params["b1"], 5, 1)), params["g1"], params["be1"])
    h = bn(lrelu(conv(h, params["w2"], params["b2"], 5, 2)), params["g2"], params["be2"])
    flat = jnp.transpose(h, (0, 3, 1, 2)).reshape(h.shape[0], -1)
    z = jnp.sum(flat * params["wfc"][None, :], axis=1, keepdims=True) + params["bfc"]
    return 1.0 / (1.0 + jnp.exp(-z))


# ---------------------------------- main -------------------------------------

if __name__ == "__main__":
    key = jax.random.PRNGKey(0)
    ks = jax.random.split(key, 12)
    B = 2
    SZ = (32 - 5 + 1 - 5) // 2 + 1      # 12, matches the PyTorch module

    params = {
        # weight layout: (kh*kw*IC, OC), K ordered as (kh, kw, IC)
        "w1": jax.random.normal(ks[0], (5 * 5 * 3, 128), jnp.float32) * 0.05,
        "b1": jax.random.normal(ks[1], (128,), jnp.float32) * 0.05,
        "g1": jnp.ones((128,), jnp.float32) + 0.1 * jax.random.normal(ks[2], (128,), jnp.float32),
        "be1": 0.1 * jax.random.normal(ks[3], (128,), jnp.float32),
        "w2": jax.random.normal(ks[4], (5 * 5 * 128, 128), jnp.float32) * 0.02,
        "b2": jax.random.normal(ks[5], (128,), jnp.float32) * 0.05,
        "g2": jnp.ones((128,), jnp.float32) + 0.1 * jax.random.normal(ks[6], (128,), jnp.float32),
        "be2": 0.1 * jax.random.normal(ks[7], (128,), jnp.float32),
        # fc weight ordered to match the PyTorch NCHW flattening (C, H, W)
        "wfc": jax.random.normal(ks[8], (128 * SZ * SZ,), jnp.float32) * 0.01,
        "bfc": 0.1 * jax.random.normal(ks[9], (1,), jnp.float32),
    }
    prepped = prepare_params(params, SZ)     # one-time re-layout, outside the hot path

    x = jax.random.normal(ks[10], (B, 3, 32, 32), jnp.float32)
    condicion = jax.random.normal(ks[11], (B, 3, 32, 32), jnp.float32)

    out = jax.block_until_ready(disc_cero_forward(x, condicion, prepped))
    ref = jax.block_until_ready(reference_forward(x, condicion, params))

    assert out.shape == (B, 1), out.shape
    assert bool(jnp.all(jnp.isfinite(out)))
    # Tolerance accounts for default (bf16-pass) MXU precision in both paths.
    if not bool(jnp.allclose(out, ref, atol=5e-3, rtol=5e-3)):
        raise AssertionError(f"kernel/reference mismatch: {out} vs {ref}")
    print("KERNEL_OK")
</pallas_src>

<mosaic_0001>
module attributes {stable_mosaic.version = 11 : i64} {
  func.func @_conv_fused_kernel(%arg0: i32, %arg1: memref<224x128xf32, #tpu.memory_space<vmem>>, %arg2: memref<1x128xf32, #tpu.memory_space<vmem>>, %arg3: memref<1x128xf32, #tpu.memory_space<vmem>>, %arg4: memref<128x128xf32, #tpu.memory_space<vmem>>, %arg5: memref<1x128xf32, #tpu.memory_space<vmem>>, %arg6: memref<224x128xf32, #tpu.memory_space<vmem>>, %arg7: memref<8x128xf32, #tpu.memory_space<vmem>>) attributes {dimension_semantics = [#tpu.dimension_semantics<parallel>], iteration_bounds = array<i64: 7>, scalar_prefetch = 0 : i64, scratch_operands = 0 : i64, tpu.core_type = #tpu.core_type<tc>, window_params = [{transform_indices = @transform_0, window_bounds = array<i64: 224, 128>}, {pipeline_mode = #tpu.pipeline_mode<synchronous>, transform_indices = @transform_1, window_bounds = array<i64: 1, 128>}, {pipeline_mode = #tpu.pipeline_mode<synchronous>, transform_indices = @transform_2, window_bounds = array<i64: 1, 128>}, {pipeline_mode = #tpu.pipeline_mode<synchronous>, transform_indices = @transform_3, window_bounds = array<i64: 128, 128>}, {pipeline_mode = #tpu.pipeline_mode<synchronous>, transform_indices = @transform_4, window_bounds = array<i64: 1, 128>}, {transform_indices = @transform_5, window_bounds = array<i64: 224, 128>}, {transform_indices = @transform_6, window_bounds = array<i64: 8, 128>}]} {
    %c0 = arith.constant 0 : index
    %c0_0 = arith.constant 0 : index
    %0 = vector.load %arg1[%c0, %c0_0] : memref<224x128xf32, #tpu.memory_space<vmem>>, vector<224x128xf32>
    %c0_1 = arith.constant 0 : index
    %c0_2 = arith.constant 0 : index
    %1 = vector.load %arg2[%c0_1, %c0_2] : memref<1x128xf32, #tpu.memory_space<vmem>>, vector<1x128xf32>
    %2 = vector.broadcast %1 : vector<1x128xf32> to vector<224x128xf32>
    %3 = arith.mulf %0, %2 : vector<224x128xf32>
    %c0_3 = arith.constant 0 : index
    %c0_4 = arith.constant 0 : index
    %4 = vector.load %arg3[%c0_3, %c0_4] : memref<1x128xf32, #tpu.memory_space<vmem>>, vector<1x128xf32>
    %5 = vector.broadcast %4 : vector<1x128xf32> to vector<224x128xf32>
    %6 = arith.addf %3, %5 : vector<224x128xf32>
    %c0_5 = arith.constant 0 : index
    %c0_6 = arith.constant 0 : index
    %7 = vector.load %arg4[%c0_5, %c0_6] : memref<128x128xf32, #tpu.memory_space<vmem>>, vector<128x128xf32>
    %cst = arith.constant dense<0.000000e+00> : vector<224x128xf32>
    %8 = tpu.matmul %6, %7, %cst {dimension_numbers = #tpu.dot_dimension_numbers<[1], [0], [0], [1], [0, 0, 1, 1], [], []>} : vector<224x128xf32>, vector<128x128xf32>, vector<224x128xf32> -> vector<224x128xf32>
    %c0_7 = arith.constant 0 : index
    %c0_8 = arith.constant 0 : index
    %9 = vector.load %arg5[%c0_7, %c0_8] : memref<1x128xf32, #tpu.memory_space<vmem>>, vector<1x128xf32>
    %10 = vector.broadcast %9 : vector<1x128xf32> to vector<224x128xf32>
    %11 = arith.addf %8, %10 : vector<224x128xf32>
    %cst_9 = arith.constant 0.000000e+00 : f32
    %12 = vector.broadcast %cst_9 : f32 to vector<224x128xf32>
    %13 = arith.cmpf ogt, %11, %12 : vector<224x128xf32>
    %cst_10 = arith.constant 0.00999999977 : f32
    %14 = vector.broadcast %cst_10 : f32 to vector<224x128xf32>
    %15 = arith.mulf %14, %11 : vector<224x128xf32>
    %16 = arith.select %13, %11, %15 : vector<224x128xi1>, vector<224x128xf32>
    %c0_11 = arith.constant 0 : index
    %c0_12 = arith.constant 0 : index
    %17 = vector.load %arg6[%c0_11, %c0_12] : memref<224x128xf32, #tpu.memory_space<vmem>>, vector<224x128xf32>
    tpu.vector_store %arg6[%c0_11, %c0_12], %16 {strides = array<i32>} : memref<224x128xf32, #tpu.memory_space<vmem>>, vector<224x128xf32>,
    %cst_13 = arith.constant dense<0.000000e+00> : vector<128xf32>
    %18 = vector.multi_reduction <add>, %16, %cst_13 [0] : vector<224x128xf32> to vector<128xf32>
    %19 = vector.shape_cast %18 : vector<128xf32> to vector<1x128xf32>
    %20 = arith.mulf %16, %16 : vector<224x128xf32>
    %cst_14 = arith.constant dense<0.000000e+00> : vector<128xf32>
    %21 = vector.multi_reduction <add>, %20, %cst_14 [0] : vector<224x128xf32> to vector<128xf32>
    %22 = vector.shape_cast %21 : vector<128xf32> to vector<1x128xf32>
    %cst_15 = arith.constant 0.000000e+00 : f32
    %23 = vector.broadcast %cst_15 : f32 to vector<6x128xf32>
    %24 = tpu.concatenate %19, %22, %23 in 0 : vector<1x128xf32>, vector<1x128xf32>, vector<6x128xf32> -> vector<8x128xf32>
    %c0_16 = arith.constant 0 : index
    %c0_17 = arith.constant 0 : index
    %25 = vector.load %arg7[%c0_16, %c0_17] : memref<8x128xf32, #tpu.memory_space<vmem>>, vector<8x128xf32>
    tpu.vector_store %arg7[%c0_16, %c0_17], %24 {strides = array<i32>} : memref<8x128xf32, #tpu.memory_space<vmem>>, vector<8x128xf32>,
    return
  }
  func.func @transform_0(%arg0: i32) -> (i32, i32) {
    %c0_i32 = arith.constant 0 : i32
    %c0_i32_0 = arith.constant 0 : i32
    return %arg0, %c0_i32 : i32, i32
  }
  func.func @transform_1(%arg0: i32) -> (i32, i32) {
    %c0_i32 = arith.constant 0 : i32
    %c0_i32_0 = arith.constant 0 : i32
    %c0_i32_1 = arith.constant 0 : i32
    return %c0_i32, %c0_i32_0 : i32, i32
  }
  func.func @transform_2(%arg0: i32) -> (i32, i32) {
    %c0_i32 = arith.constant 0 : i32
    %c0_i32_0 = arith.constant 0 : i32
    %c0_i32_1 = arith.constant 0 : i32
    return %c0_i32, %c0_i32_0 : i32, i32
  }
  func.func @transform_3(%arg0: i32) -> (i32, i32) {
    %c0_i32 = arith.constant 0 : i32
    %c0_i32_0 = arith.constant 0 : i32
    %c0_i32_1 = arith.constant 0 : i32
    return %c0_i32, %c0_i32_0 : i32, i32
  }
  func.func @transform_4(%arg0: i32) -> (i32, i32) {
    %c0_i32 = arith.constant 0 : i32
    %c0_i32_0 = arith.constant 0 : i32
    %c0_i32_1 = arith.constant 0 : i32
    return %c0_i32, %c0_i32_0 : i32, i32
  }
  func.func @transform_5(%arg0: i32) -> (i32, i32) {
    %c0_i32 = arith.constant 0 : i32
    %c0_i32_0 = arith.constant 0 : i32
    return %arg0, %c0_i32 : i32, i32
  }
  func.func @transform_6(%arg0: i32) -> (i32, i32) {
    %c0_i32 = arith.constant 0 : i32
    %c0_i32_0 = arith.constant 0 : i32
    return %arg0, %c0_i32 : i32, i32
  }
}

module attributes {stable_mosaic.version = 11 : i64} {
  func.func @_conv_fused_kernel(%arg0: i32, %arg1: memref<144x3200xf32, #tpu.memory_space<vmem>>, %arg2: memref<1x3200xf32, #tpu.memory_space<vmem>>, %arg3: memref<1x3200xf32, #tpu.memory_space<vmem>>, %arg4: memref<3200x128xf32, #tpu.memory_space<vmem>>, %arg5: memref<1x128xf32, #tpu.memory_space<vmem>>, %arg6: memref<144x128xf32, #tpu.memory_space<vmem>>, %arg7: memref<8x128xf32, #tpu.memory_space<vmem>>) attributes {dimension_semantics = [#tpu.dimension_semantics<parallel>], iteration_bounds = array<i64: 2>, scalar_prefetch = 0 : i64, scratch_operands = 0 : i64, tpu.core_type = #tpu.core_type<tc>, window_params = [{transform_indices = @transform_0, window_bounds = array<i64: 144, 3200>}, {pipeline_mode = #tpu.pipeline_mode<synchronous>, transform_indices = @transform_1, window_bounds = array<i64: 1, 3200>}, {pipeline_mode = #tpu.pipeline_mode<synchronous>, transform_indices = @transform_2, window_bounds = array<i64: 1, 3200>}, {pipeline_mode = #tpu.pipeline_mode<synchronous>, transform_indices = @transform_3, window_bounds = array<i64: 3200, 128>}, {pipeline_mode = #tpu.pipeline_mode<synchronous>, transform_indices = @transform_4, window_bounds = array<i64: 1, 128>}, {transform_indices = @transform_5, window_bounds = array<i64: 144, 128>}, {transform_indices = @transform_6, window_bounds = array<i64: 8, 128>}]} {
    %c0 = arith.constant 0 : index
    %c0_0 = arith.constant 0 : index
    %0 = vector.load %arg1[%c0, %c0_0] : memref<144x3200xf32, #tpu.memory_space<vmem>>, vector<144x3200xf32>
    %c0_1 = arith.constant 0 : index
    %c0_2 = arith.constant 0 : index
    %1 = vector.load %arg2[%c0_1, %c0_2] : memref<1x3200xf32, #tpu.memory_space<vmem>>, vector<1x3200xf32>
    %2 = vector.broadcast %1 : vector<1x3200xf32> to vector<144x3200xf32>
    %3 = arith.mulf %0, %2 : vector<144x3200xf32>
    %c0_3 = arith.constant 0 : index
    %c0_4 = arith.constant 0 : index
    %4 = vector.load %arg3[%c0_3, %c0_4] : memref<1x3200xf32, #tpu.memory_space<vmem>>, vector<1x3200xf32>
    %5 = vector.broadcast %4 : vector<1x3200xf32> to vector<144x3200xf32>
    %6 = arith.addf %3, %5 : vector<144x3200xf32>
    %c0_5 = arith.constant 0 : index
    %c0_6 = arith.constant 0 : index
    %7 = vector.load %arg4[%c0_5, %c0_6] : memref<3200x128xf32, #tpu.memory_space<vmem>>, vector<3200x128xf32>
    %cst = arith.constant dense<0.000000e+00> : vector<144x128xf32>
    %8 = tpu.matmul %6, %7, %cst {dimension_numbers = #tpu.dot_dimension_numbers<[1], [0], [0], [1], [0, 0, 1, 1], [], []>} : vector<144x3200xf32>, vector<3200x128xf32>, vector<144x128xf32> -> vector<144x128xf32>
    %c0_7 = arith.constant 0 : index
    %c0_8 = arith.constant 0 : index
    %9 = vector.load %arg5[%c0_7, %c0_8] : memref<1x128xf32, #tpu.memory_space<vmem>>, vector<1x128xf32>
    %10 = vector.broadcast %9 : vector<1x128xf32> to vector<144x128xf32>
    %11 = arith.addf %8, %10 : vector<144x128xf32>
    %cst_9 = arith.constant 0.000000e+00 : f32
    %12 = vector.broadcast %cst_9 : f32 to vector<144x128xf32>
    %13 = arith.cmpf ogt, %11, %12 : vector<144x128xf32>
    %cst_10 = arith.constant 0.00999999977 : f32
    %14 = vector.broadcast %cst_10 : f32 to vector<144x128xf32>
    %15 = arith.mulf %14, %11 : vector<144x128xf32>
    %16 = arith.select %13, %11, %15 : vector<144x128xi1>, vector<144x128xf32>
    %c0_11 = arith.constant 0 : index
    %c0_12 = arith.constant 0 : index
    %17 = vector.load %arg6[%c0_11, %c0_12] : memref<144x128xf32, #tpu.memory_space<vmem>>, vector<144x128xf32>
    tpu.vector_store %arg6[%c0_11, %c0_12], %16 {strides = array<i32>} : memref<144x128xf32, #tpu.memory_space<vmem>>, vector<144x128xf32>,
    %cst_13 = arith.constant dense<0.000000e+00> : vector<128xf32>
    %18 = vector.multi_reduction <add>, %16, %cst_13 [0] : vector<144x128xf32> to vector<128xf32>
    %19 = vector.shape_cast %18 : vector<128xf32> to vector<1x128xf32>
    %20 = arith.mulf %16, %16 : vector<144x128xf32>
    %cst_14 = arith.constant dense<0.000000e+00> : vector<128xf32>
    %21 = vector.multi_reduction <add>, %20, %cst_14 [0] : vector<144x128xf32> to vector<128xf32>
    %22 = vector.shape_cast %21 : vector<128xf32> to vector<1x128xf32>
    %cst_15 = arith.constant 0.000000e+00 : f32
    %23 = vector.broadcast %cst_15 : f32 to vector<6x128xf32>
    %24 = tpu.concatenate %19, %22, %23 in 0 : vector<1x128xf32>, vector<1x128xf32>, vector<6x128xf32> -> vector<8x128xf32>
    %c0_16 = arith.constant 0 : index
    %c0_17 = arith.constant 0 : index
    %25 = vector.load %arg7[%c0_16, %c0_17] : memref<8x128xf32, #tpu.memory_space<vmem>>, vector<8x128xf32>
    tpu.vector_store %arg7[%c0_16, %c0_17], %24 {strides = array<i32>} : memref<8x128xf32, #tpu.memory_space<vmem>>, vector<8x128xf32>,
    return
  }
  func.func @transform_0(%arg0: i32) -> (i32, i32) {
    %c0_i32 = arith.constant 0 : i32
    %c0_i32_0 = arith.constant 0 : i32
    return %arg0, %c0_i32 : i32, i32
  }
  func.func @transform_1(%arg0: i32) -> (i32, i32) {
    %c0_i32 = arith.constant 0 : i32
    %c0_i32_0 = arith.constant 0 : i32
    %c0_i32_1 = arith.constant 0 : i32
    return %c0_i32, %c0_i32_0 : i32, i32
  }
  func.func @transform_2(%arg0: i32) -> (i32, i32) {
    %c0_i32 = arith.constant 0 : i32
    %c0_i32_0 = arith.constant 0 : i32
    %c0_i32_1 = arith.constant 0 : i32
    return %c0_i32, %c0_i32_0 : i32, i32
  }
  func.func @transform_3(%arg0: i32) -> (i32, i32) {
    %c0_i32 = arith.constant 0 : i32
    %c0_i32_0 = arith.constant 0 : i32
    %c0_i32_1 = arith.constant 0 : i32
    return %c0_i32, %c0_i32_0 : i32, i32
  }
  func.func @transform_4(%arg0: i32) -> (i32, i32) {
    %c0_i32 = arith.constant 0 : i32
    %c0_i32_0 = arith.constant 0 : i32
    %c0_i32_1 = arith.constant 0 : i32
    return %c0_i32, %c0_i32_0 : i32, i32
  }
  func.func @transform_5(%arg0: i32) -> (i32, i32) {
    %c0_i32 = arith.constant 0 : i32
    %c0_i32_0 = arith.constant 0 : i32
    return %arg0, %c0_i32 : i32, i32
  }
  func.func @transform_6(%arg0: i32) -> (i32, i32) {
    %c0_i32 = arith.constant 0 : i32
    %c0_i32_0 = arith.constant 0 : i32
    return %arg0, %c0_i32 : i32, i32
  }
}

module attributes {stable_mosaic.version = 11 : i64} {
  func.func @_fc_bn_sigmoid_kernel(%arg0: memref<2x18432xf32, #tpu.memory_space<vmem>>, %arg1: memref<1x18432xf32, #tpu.memory_space<vmem>>, %arg2: memref<1x18432xf32, #tpu.memory_space<vmem>>, %arg3: memref<1x18432xf32, #tpu.memory_space<vmem>>, %arg4: memref<1x1xf32, #tpu.memory_space<vmem>>, %arg5: memref<2x1xf32, #tpu.memory_space<vmem>>) attributes {dimension_semantics = [], scalar_prefetch = 0 : i64, scratch_operands = 0 : i64, tpu.core_type = #tpu.core_type<tc>} {
    %c0 = arith.constant 0 : index
    %c0_0 = arith.constant 0 : index
    %0 = vector.load %arg0[%c0, %c0_0] : memref<2x18432xf32, #tpu.memory_space<vmem>>, vector<2x18432xf32>
    %c0_1 = arith.constant 0 : index
    %c0_2 = arith.constant 0 : index
    %1 = vector.load %arg1[%c0_1, %c0_2] : memref<1x18432xf32, #tpu.memory_space<vmem>>, vector<1x18432xf32>
    %2 = vector.broadcast %1 : vector<1x18432xf32> to vector<2x18432xf32>
    %3 = arith.mulf %0, %2 : vector<2x18432xf32>
    %c0_3 = arith.constant 0 : index
    %c0_4 = arith.constant 0 : index
    %4 = vector.load %arg2[%c0_3, %c0_4] : memref<1x18432xf32, #tpu.memory_space<vmem>>, vector<1x18432xf32>
    %5 = vector.broadcast %4 : vector<1x18432xf32> to vector<2x18432xf32>
    %6 = arith.addf %3, %5 : vector<2x18432xf32>
    %c0_5 = arith.constant 0 : index
    %c0_6 = arith.constant 0 : index
    %7 = vector.load %arg3[%c0_5, %c0_6] : memref<1x18432xf32, #tpu.memory_space<vmem>>, vector<1x18432xf32>
    %8 = vector.broadcast %7 : vector<1x18432xf32> to vector<2x18432xf32>
    %9 = arith.mulf %6, %8 : vector<2x18432xf32>
    %cst = arith.constant dense<0.000000e+00> : vector<2xf32>
    %10 = vector.multi_reduction <add>, %9, %cst [1] : vector<2x18432xf32> to vector<2xf32>
    %11 = vector.shape_cast %10 : vector<2xf32> to vector<2x1xf32>
    %c0_7 = arith.constant 0 : index
    %c0_8 = arith.constant 0 : index
    %12 = vector.load %arg4[%c0_7, %c0_8] : memref<1x1xf32, #tpu.memory_space<vmem>>, vector<1x1xf32>
    %13 = vector.broadcast %12 : vector<1x1xf32> to vector<2x1xf32>
    %14 = arith.addf %11, %13 : vector<2x1xf32>
    %cst_9 = arith.constant 0.000000e+00 : f32
    %15 = vector.broadcast %cst_9 : f32 to vector<2x1xf32>
    %16 = arith.subf %15, %14 : vector<2x1xf32>
    %17 = math.exp %16 : vector<2x1xf32>
    %cst_10 = arith.constant 1.000000e+00 : f32
    %18 = vector.broadcast %cst_10 : f32 to vector<2x1xf32>
    %19 = arith.addf %18, %17 : vector<2x1xf32>
    %cst_11 = arith.constant 1.000000e+00 : f32
    %20 = vector.broadcast %cst_11 : f32 to vector<2x1xf32>
    %21 = arith.divf %20, %19 : vector<2x1xf32>
    %c0_12 = arith.constant 0 : index
    %c0_13 = arith.constant 0 : index
    %22 = vector.load %arg5[%c0_12, %c0_13] : memref<2x1xf32, #tpu.memory_space<vmem>>, vector<2x1xf32>
    tpu.vector_store %arg5[%c0_12, %c0_13], %21 {strides = array<i32>} : memref<2x1xf32, #tpu.memory_space<vmem>>, vector<2x1xf32>,
    return
  }
}

</mosaic_0001>

<llo_original>
// kernel: disc_cero_forward.3
$region0: #{disc_cero_forward.3}
  #allocation0 [shape = 'u32[]', space=smem, size = 0x4, offset = 0x4, fixed_abs, tag = 'smem constant byte address 0x4 - core index']
  #allocation1 [shape = 'u32[144,128]{1,0:T(1,128)}', space=vmem, size = 0x12000, scoped, tag = 'internal scratch']
  %s0 = inlined_call_operand.vmem [shape: f32[1568,128], index: 0, kind: input, shape index: {}]
  %s1 = inlined_call_operand.vmem [shape: f32[1,128], index: 1, kind: input, shape index: {}]
  %s2 = inlined_call_operand.vmem [shape: f32[1,128], index: 2, kind: input, shape index: {}]
  %s3 = inlined_call_operand.vmem [shape: f32[128,128], index: 3, kind: input, shape index: {}]
  %s4 = inlined_call_operand.vmem [shape: f32[1,128], index: 4, kind: input, shape index: {}]
  %s5 = inlined_call_operand.vmem [shape: f32[1568,128], index: 5, kind: output, shape index: {0}]
  %s6 = inlined_call_operand.vmem [shape: f32[56,128], index: 6, kind: output, shape index: {1}]
  %7 = xla_tuple %s5, %s6
  %s8 = sld [smem:[#allocation0]]
  $region61: #{disc_cero_forward.3} parent=0
    _
  %s10 = ssub.s32 1, %s8
  %s11 = scalar_select 0, %s10, %s8
  loop: start=0, step=1, limit=9
  $region2: #{disc_cero_forward.3} parent=0 // loop_pre_header
    _
  $region3: #{disc_cero_forward.3} parent=0 // loop_header
    %s13 = sphi 0, %s17
    %p14 = scmp.ge.s32.totalorder %s13, 9
    %s23 = sphi 0, %s25
    %s26 = sphi 0, %s23
    %s27 = sphi 0, %s26
    %s43 = sphi 0, %s27
    %s47 = sphi 0, %s47
    %s49 = sphi 0, %s47
    %s50 = sphi 0, %s49
    %s64 = sphi 0, %s50
    %s68 = sphi 0, %s68
    %s70 = sphi 0, %s68
    %s71 = sphi 0, %s70
    %s85 = sphi 0, %s71
    %s89 = sphi 0, %s89
    %s91 = sphi 0, %s89
    %s92 = sphi 0, %s91
    %s106 = sphi 0, %s92
    %s110 = sphi 0, %s110
    %s112 = sphi 0, %s110
    %s113 = sphi 0, %s112
    %s127 = sphi 0, %s113
    %s133 = sphi 0, %s135
    %s136 = sphi 0, %s133
    %s137 = sphi 0, %s136
    %s153 = sphi 0, %s137
    %s159 = sphi 0, %s161
    %s162 = sphi 0, %s159
    %s163 = sphi 0, %s162
    %s179 = sphi 0, %s163
  $region4: #{disc_cero_forward.3} parent=0 // loop_header_branch
    %16 = sbr.rel (%p14) target = $region8
  $region5: #{disc_cero_forward.3} parent=0 // loop_body
    %s18 = ssub.s32 %s13, 1
    %s19 = ssub.s32 %s13, 2
    %s20 = sadd.s32 %s13, 1
    %s21 = ssub.s32 %s13, %s20
    %p22 = scmp.eq.s32.totalorder %s21, 0
    %s24 = sadd.s32 %s23, 1
    %s25 = scalar_select %p22, %s23, %s24
    %p28 = pneg %p22
    %p29 = scmp.eq.s32.totalorder %s13, 6
    %p30 = por %p28, %p29
    %p31 = scmp.ne.s32.totalorder %s23, %s26
    %p32 = scmp.eq.s32.totalorder %s13, 0
    %p33 = por %p31, %p32
    %p34 = scmp.ne.s32.totalorder %s23, %s26
    %p35 = scmp.eq.s32.totalorder %s18, 6
    %p36 = por %p34, %p35
    %p37 = scmp.ne.s32.totalorder %s26, %s27
    %p38 = scmp.eq.s32.totalorder %s18, 0
    %p39 = por %p37, %p38
    %p40 = scmp.ne.s32.totalorder %s26, %s27
    %p41 = scmp.eq.s32.totalorder %s19, 6
    %p42 = por %p40, %p41
    %p44 = scmp.ne.s32.totalorder %s27, %s43
    %p45 = scmp.eq.s32.totalorder %s19, 0
    %p46 = por %p44, %p45
    %s48 = sadd.s32 %s47, 1
    %p51 = scmp.eq.s32.totalorder %s13, 6
    %p52 = scmp.ne.s32.totalorder %s47, %s49
    %p53 = scmp.eq.s32.totalorder %s13, 0
    %p54 = por %p52, %p53
    %p55 = scmp.ne.s32.totalorder %s47, %s49
    %p56 = scmp.eq.s32.totalorder %s18, 6
    %p57 = por %p55, %p56
    %p58 = scmp.ne.s32.totalorder %s49, %s50
    %p59 = scmp.eq.s32.totalorder %s18, 0
    %p60 = por %p58, %p59
    %p61 = scmp.ne.s32.totalorder %s49, %s50
    %p62 = scmp.eq.s32.totalorder %s19, 6
    %p63 = por %p61, %p62
    %p65 = scmp.ne.s32.totalorder %s50, %s64
    %p66 = scmp.eq.s32.totalorder %s19, 0
    %p67 = por %p65, %p66
    %s69 = sadd.s32 %s68, 1
    %p72 = scmp.eq.s32.totalorder %s13, 6
    %p73 = scmp.ne.s32.totalorder %s68, %s70
    %p74 = scmp.eq.s32.totalorder %s13, 0
    %p75 = por %p73, %p74
    %p76 = scmp.ne.s32.totalorder %s68, %s70
    %p77 = scmp.eq.s32.totalorder %s18, 6
    %p78 = por %p76, %p77
    %p79 = scmp.ne.s32.totalorder %s70, %s71
    %p80 = scmp.eq.s32.totalorder %s18, 0
    %p81 = por %p79, %p80
    %p82 = scmp.ne.s32.totalorder %s70, %s71
    %p83 = scmp.eq.s32.totalorder %s19, 6
    %p84 = por %p82, %p83
    %p86 = scmp.ne.s32.totalorder %s71, %s85
    %p87 = scmp.eq.s32.totalorder %s19, 0
    %p88 = por %p86, %p87
    %s90 = sadd.s32 %s89, 1
    %p93 = scmp.eq.s32.totalorder %s13, 6
    %p94 = scmp.ne.s32.totalorder %s89, %s91
    %p95 = scmp.eq.s32.totalorder %s13, 0
    %p96 = por %p94, %p95
    %p97 = scmp.ne.s32.totalorder %s89, %s91
    %p98 = scmp.eq.s32.totalorder %s18, 6
    %p99 = por %p97, %p98
    %p100 = scmp.ne.s32.totalorder %s91, %s92
    %p101 = scmp.eq.s32.totalorder %s18, 0
    %p102 = por %p100, %p101
    %p103 = scmp.ne.s32.totalorder %s91, %s92
    %p104 = scmp.eq.s32.totalorder %s19, 6
    %p105 = por %p103, %p104
    %p107 = scmp.ne.s32.totalorder %s92, %s106
    %p108 = scmp.eq.s32.totalorder %s19, 0
    %p109 = por %p107, %p108
    %s111 = sadd.s32 %s110, 1
    %p114 = scmp.eq.s32.totalorder %s13, 6
    %p115 = scmp.ne.s32.totalorder %s110, %s112
    %p116 = scmp.eq.s32.totalorder %s13, 0
    %p117 = por %p115, %p116
    %p118 = scmp.ne.s32.totalorder %s110, %s112
    %p119 = scmp.eq.s32.totalorder %s18, 6
    %p120 = por %p118, %p119
    %p121 = scmp.ne.s32.totalorder %s112, %s113
    %p122 = scmp.eq.s32.totalorder %s18, 0
    %p123 = por %p121, %p122
    %p124 = scmp.ne.s32.totalorder %s112, %s113
    %p125 = scmp.eq.s32.totalorder %s19, 6
    %p126 = por %p124, %p125
    %p128 = scmp.ne.s32.totalorder %s113, %s127
    %p129 = scmp.eq.s32.totalorder %s19, 0
    %p130 = por %p128, %p129
    %s131 = ssub.s32 %s13, %s20
    %p132 = scmp.eq.s32.totalorder %s131, 0
    %s134 = sadd.s32 %s133, 1
    %s135 = scalar_select %p132, %s133, %s134
    %p138 = pneg %p132
    %p139 = scmp.eq.s32.totalorder %s13, 6
    %p140 = por %p138, %p139
    %p141 = scmp.ne.s32.totalorder %s133, %s136
    %p142 = scmp.eq.s32.totalorder %s13, 0
    %p143 = por %p141, %p142
    %p144 = scmp.ne.s32.totalorder %s133, %s136
    %p145 = scmp.eq.s32.totalorder %s18, 6
    %p146 = por %p144, %p145
    %p147 = scmp.ne.s32.totalorder %s136, %s137
    %p148 = scmp.eq.s32.totalorder %s18, 0
    %p149 = por %p147, %p148
    %p150 = scmp.ne.s32.totalorder %s136, %s137
    %p151 = scmp.eq.s32.totalorder %s19, 6
    %p152 = por %p150, %p151
    %p154 = scmp.ne.s32.totalorder %s137, %s153
    %p155 = scmp.eq.s32.totalorder %s19, 0
    %p156 = por %p154, %p155
    %s157 = ssub.s32 %s13, %s20
    %p158 = scmp.eq.s32.totalorder %s157, 0
    %s160 = sadd.s32 %s159, 1
    %s161 = scalar_select %p158, %s159, %s160
    %p164 = pneg %p158
    %p165 = scmp.eq.s32.totalorder %s13, 6
    %p166 = por %p164, %p165
    %p167 = scmp.ne.s32.totalorder %s159, %s162
    %p168 = scmp.eq.s32.totalorder %s13, 0
    %p169 = por %p167, %p168
    %p170 = scmp.ne.s32.totalorder %s159, %s162
    %p171 = scmp.eq.s32.totalorder %s18, 6
    %p172 = por %p170, %p171
    %p173 = scmp.ne.s32.totalorder %s162, %s163
    %p174 = scmp.eq.s32.totalorder %s18, 0
    %p175 = por %p173, %p174
    %p176 = scmp.ne.s32.totalorder %s162, %s163
    %p177 = scmp.eq.s32.totalorder %s19, 6
    %p178 = por %p176, %p177
    %p180 = scmp.ne.s32.totalorder %s163, %s179
    %p181 = scmp.eq.s32.totalorder %s19, 0
    %p182 = por %p180, %p181
    %p183 = scmp.le.s32.totalorder 1, %s13
    %p184 = scmp.lt.s32.totalorder %s13, 8
    %p185 = pnand %p183, %p184
    %p186 = pneg %p185
    // Predicated region
    $region9: #{disc_cero_forward.3} parent=5 // pred_check
      _
    $region10: #{disc_cero_forward.3} parent=5 // pred_check_branch
      %188 = sbr.rel (%p185) target = $region12
    $region11: #{disc_cero_forward.3} parent=5 // pred_region
      %s189 = ssub.s32 %s13, 1
      // Predicated region
      $region13: #{disc_cero_forward.3} parent=11 // pred_check
        %p190 = pneg %p60
      $region14: #{disc_cero_forward.3} parent=11 // pred_check_branch
        %192 = sbr.rel (%p190) target = $region16
      $region15: #{disc_cero_forward.3} parent=11 // pred_region
        _
      $region16: #{disc_cero_forward.3} parent=11 // pred_fallthru
        _
      // Predicated region
      $region17: #{disc_cero_forward.3} parent=11 // pred_check
        %p193 = pneg %p81
      $region18: #{disc_cero_forward.3} parent=11 // pred_check_branch
        %195 = sbr.rel (%p193) target = $region20
      $region19: #{disc_cero_forward.3} parent=11 // pred_region
        _
      $region20: #{disc_cero_forward.3} parent=11 // pred_fallthru
        _
      // Predicated region
      $region21: #{disc_cero_forward.3} parent=11 // pred_check
        %p196 = pneg %p102
      $region22: #{disc_cero_forward.3} parent=11 // pred_check_branch
        %198 = sbr.rel (%p196) target = $region24
      $region23: #{disc_cero_forward.3} parent=11 // pred_region
        _
      $region24: #{disc_cero_forward.3} parent=11 // pred_fallthru
        _
      // Predicated region
      $region25: #{disc_cero_forward.3} parent=11 // pred_check
        %p199 = pneg %p123
      $region26: #{disc_cero_forward.3} parent=11 // pred_check_branch
        %201 = sbr.rel (%p199) target = $region28
      $region27: #{disc_cero_forward.3} parent=11 // pred_region
        _
      $region28: #{disc_cero_forward.3} parent=11 // pred_fallthru
        _
    $region12: #{disc_cero_forward.3} parent=5 // pred_fallthru
      _
    %p202 = scmp.lt.s32.totalorder %s13, 7
    // Predicated region
    $region29: #{disc_cero_forward.3} parent=5 // pred_check
      %p203 = pneg %p202
    $region30: #{disc_cero_forward.3} parent=5 // pred_check_branch
      %205 = sbr.rel (%p203) target = $region32
    $region31: #{disc_cero_forward.3} parent=5 // pred_region
      // Predicated region
      $region33: #{disc_cero_forward.3} parent=31 // pred_check
        %p206 = pneg %p33
      $region34: #{disc_cero_forward.3} parent=31 // pred_check_branch
        %208 = sbr.rel (%p206) target = $region36
      $region35: #{disc_cero_forward.3} parent=31 // pred_region
        %s209 = smul.u32 28, %s13
        %p210 = scmp.lt.s32.totalorder %s209, 195
        %s211 = scalar_select %p210, %s209, 195
        %s212 = smul.addr %s211, 8
        %s213 = scalar_lea.vmem %s0, %s212
        %s214 = smul.u32 28, %s13
      $region36: #{disc_cero_forward.3} parent=31 // pred_fallthru
        _
    $region32: #{disc_cero_forward.3} parent=5 // pred_fallthru
      _
    %p215 = scmp.le.s32.totalorder 1, %s13
    %p216 = scmp.lt.s32.totalorder %s13, 8
    %p217 = pnand %p215, %p216
    %p218 = pneg %p217
    // Predicated region
    $region37: #{disc_cero_forward.3} parent=5 // pred_check
      _
    $region38: #{disc_cero_forward.3} parent=5 // pred_check_branch
      %220 = sbr.rel (%p217) target = $region40
    $region39: #{disc_cero_forward.3} parent=5 // pred_region
      %s221 = ssub.s32 %s13, 1
      %s222 = smul.u32 28, %s18
      %p223 = scmp.lt.s32.totalorder %s222, 195
      %s224 = scalar_select %p223, %s222, 195
      %s225 = smul.addr %s224, 8
      %s226 = scalar_lea.vmem %s0, %s225
      %p227 = pneg %p39
      %p228 = pneg %p36
      %p229 = pneg %p60
      %p230 = pneg %p57
      %p231 = pneg %p81
      %p232 = pneg %p78
      %p233 = pneg %p102
      %p234 = pneg %p99
      %p235 = pneg %p123
      %p236 = pneg %p120
      %p237 = pneg %p149
      %p238 = pneg %p146
      %s239 = smul.u32 28, %s18
      %p240 = scmp.lt.s32.totalorder %s239, 195
      %s241 = scalar_select %p240, %s239, 195
      %s242 = smul.addr %s241, 8
      %s243 = scalar_lea.vmem %s5, %s242
      %p244 = pneg %p175
      %p245 = pneg %p172
      %p246 = scmp.lt.s32.totalorder %s18, 6
      %s247 = scalar_select %p246, %s18, 6
      %s248 = smul.addr %s247, 8
      %s249 = scalar_lea.vmem %s6, %s248
      %s250 = smul.u32 28, %s18
      %p251 = scmp.lt.s32.totalorder %s250, 195
      %s252 = scalar_select %p251, %s250, 195
      %s253 = smul.addr %s252, 8
      %s254 = scalar_lea.vmem %s0, %s253
      %s255 = smul.u32 28, %s18
      %s256 = smul.u32 28, %s18
      %p257 = scmp.lt.s32.totalorder %s256, 195
      %s258 = scalar_select %p257, %s256, 195
      %s259 = smul.addr %s258, 8
      %s260 = scalar_lea.vmem %s5, %s259
      %s261 = smul.u32 28, %s18
      %p262 = scmp.lt.s32.totalorder %s18, 6
      %s263 = scalar_select %p262, %s18, 6
      %s264 = smul.addr %s263, 8
      %s265 = scalar_lea.vmem %s6, %s264
      %v266 = vld [vmem:[%s254] sm:$0xff]
      %v267 = vld [vmem:[%s254 + $0x8] sm:$0xff]
      %v268 = vld [vmem:[%s254 + $0x10] sm:$0xff]
      %v269 = vld [vmem:[%s254 + $0x18] sm:$0xff]
      %v270 = vld [vmem:[%s254 + $0x20] sm:$0xff]
      %v271 = vld [vmem:[%s254 + $0x28] sm:$0xff]
      %v272 = vld [vmem:[%s254 + $0x30] sm:$0xff]
      %v273 = vld [vmem:[%s254 + $0x38] sm:$0xff]
      %v274 = vld [vmem:[%s254 + $0x40] sm:$0xff]
      %v275 = vld [vmem:[%s254 + $0x48] sm:$0xff]
      %v276 = vld [vmem:[%s254 + $0x50] sm:$0xff]
      %v277 = vld [vmem:[%s254 + $0x58] sm:$0xff]
      %v278 = vld [vmem:[%s254 + $0x60] sm:$0xff]
      %v279 = vld [vmem:[%s254 + $0x68] sm:$0xff]
      %v280 = vld [vmem:[%s254 + $0x70] sm:$0xff]
      %v281 = vld [vmem:[%s254 + $0x78] sm:$0xff]
      %v282 = vld [vmem:[%s254 + $0x80] sm:$0xff]
      %v283 = vld [vmem:[%s254 + $0x88] sm:$0xff]
      %v284 = vld [vmem:[%s254 + $0x90] sm:$0xff]
      %v285 = vld [vmem:[%s254 + $0x98] sm:$0xff]
      %v286 = vld [vmem:[%s254 + $0xa0] sm:$0xff]
      %v287 = vld [vmem:[%s254 + $0xa8] sm:$0xff]
      %v288 = vld [vmem:[%s254 + $0xb0] sm:$0xff]
      %v289 = vld [vmem:[%s254 + $0xb8] sm:$0xff]
      %v290 = vld [vmem:[%s254 + $0xc0] sm:$0xff]
      %v291 = vld [vmem:[%s254 + $0xc8] sm:$0xff]
      %v292 = vld [vmem:[%s254 + $0xd0] sm:$0xff]
      %v293 = vld [vmem:[%s254 + $0xd8] sm:$0xff]
      %v294 = vld [vmem:[%s1] sm:$0x1]
      %v296 = vlaneseq
      %v297 = vshrl.u32 %v296, 7
      %v298 = vsub.s32 0, %v297
      %v299 = vrot.slane %v294, %v298
      %v301 = vmul.f32 %v266, %v299
      %v302 = vmul.f32 %v267, %v299
      %v303 = vmul.f32 %v268, %v299
      %v304 = vmul.f32 %v269, %v299
      %v305 = vmul.f32 %v270, %v299
      %v306 = vmul.f32 %v271, %v299
      %v307 = vmul.f32 %v272, %v299
      %v308 = vmul.f32 %v273, %v299
      %v309 = vmul.f32 %v274, %v299
      %v310 = vmul.f32 %v275, %v299
      %v311 = vmul.f32 %v276, %v299
      %v312 = vmul.f32 %v277, %v299
      %v313 = vmul.f32 %v278, %v299
      %v314 = vmul.f32 %v279, %v299
      %v315 = vmul.f32 %v280, %v299
      %v316 = vmul.f32 %v281, %v299
      %v317 = vmul.f32 %v282, %v299
      %v318 = vmul.f32 %v283, %v299
      %v319 = vmul.f32 %v284, %v299
      %v320 = vmul.f32 %v285, %v299
      %v321 = vmul.f32 %v286, %v299
      %v322 = vmul.f32 %v287, %v299
      %v323 = vmul.f32 %v288, %v299
      %v324 = vmul.f32 %v289, %v299
      %v325 = vmul.f32 %v290, %v299
      %v326 = vmul.f32 %v291, %v299
      %v327 = vmul.f32 %v292, %v299
      %v328 = vmul.f32 %v293, %v299
      %v329 = vld [vmem:[%s2] sm:$0x1]
      %v331 = vlaneseq
      %v332 = vshrl.u32 %v331, 7
      %v333 = vsub.s32 0, %v332
      %v334 = vrot.slane %v329, %v333
      %v336 = vadd.f32 %v301, %v334
      %v337 = vadd.f32 %v302, %v334
      %v338 = vadd.f32 %v303, %v334
      %v339 = vadd.f32 %v304, %v334
      %v340 = vadd.f32 %v305, %v334
      %v341 = vadd.f32 %v306, %v334
      %v342 = vadd.f32 %v307, %v334
      %v343 = vadd.f32 %v308, %v334
      %v344 = vadd.f32 %v309, %v334
      %v345 = vadd.f32 %v310, %v334
      %v346 = vadd.f32 %v311, %v334
      %v347 = vadd.f32 %v312, %v334
      %v348 = vadd.f32 %v313, %v334
      %v349 = vadd.f32 %v314, %v334
      %v350 = vadd.f32 %v315, %v334
      %v351 = vadd.f32 %v316, %v334
      %v352 = vadd.f32 %v317, %v334
      %v353 = vadd.f32 %v318, %v334
      %v354 = vadd.f32 %v319, %v334
      %v355 = vadd.f32 %v320, %v334
      %v356 = vadd.f32 %v321, %v334
      %v357 = vadd.f32 %v322, %v334
      %v358 = vadd.f32 %v323, %v334
      %v359 = vadd.f32 %v324, %v334
      %v360 = vadd.f32 %v325, %v334
      %v361 = vadd.f32 %v326, %v334
      %v362 = vadd.f32 %v327, %v334
      %v363 = vadd.f32 %v328, %v334
      %v364 = vld [vmem:[%s3] sm:$0xff]
      %v365 = vld [vmem:[%s3 + $0x8] sm:$0xff]
      %v366 = vld [vmem:[%s3 + $0x10] sm:$0xff]
      %v367 = vld [vmem:[%s3 + $0x18] sm:$0xff]
      %v368 = vld [vmem:[%s3 + $0x20] sm:$0xff]
      %v369 = vld [vmem:[%s3 + $0x28] sm:$0xff]
      %v370 = vld [vmem:[%s3 + $0x30] sm:$0xff]
      %v371 = vld [vmem:[%s3 + $0x38] sm:$0xff]
      %v372 = vld [vmem:[%s3 + $0x40] sm:$0xff]
      %v373 = vld [vmem:[%s3 + $0x48] sm:$0xff]
      %v374 = vld [vmem:[%s3 + $0x50] sm:$0xff]
      %v375 = vld [vmem:[%s3 + $0x58] sm:$0xff]
      %v376 = vld [vmem:[%s3 + $0x60] sm:$0xff]
      %v377 = vld [vmem:[%s3 + $0x68] sm:$0xff]
      %v378 = vld [vmem:[%s3 + $0x70] sm:$0xff]
      %v379 = vld [vmem:[%s3 + $0x78] sm:$0xff]
      %v380 = vld [vmem:[%s4] sm:$0x1]
      %v382 = vlaneseq
      %v383 = vshrl.u32 %v382, 7
      %v384 = vsub.s32 0, %v383
      %v385 = vrot.slane %v380, %v384
      %387 = vmatprep.subr.mxu0 0.0
      %388 = vmatpush1.msra.mxu0 %v379
      %389 = vmatprep.subr.mxu0 0.0
      %390 = vmatpush1.msra.mxu0 %v378
      %391 = vmatprep.subr.mxu0 0.0
      %392 = vmatpush1.msra.mxu0 %v377
      %393 = vmatprep.subr.mxu0 0.0
      %394 = vmatpush1.msra.mxu0 %v376
      %395 = vmatprep.subr.mxu0 0.0
      %396 = vmatpush1.msra.mxu0 %v375
      %397 = vmatprep.subr.mxu0 0.0
      %398 = vmatpush1.msra.mxu0 %v374
      %399 = vmatprep.subr.mxu0 0.0
      %400 = vmatpush1.msra.mxu0 %v373
      %401 = vmatprep.subr.mxu0 0.0
      %402 = vmatpush1.msra.mxu0 %v372
      %403 = vmatprep.subr.mxu0 0.0
      %404 = vmatpush1.msra.mxu0 %v371
      %405 = vmatprep.subr.mxu0 0.0
      %406 = vmatpush1.msra.mxu0 %v370
      %407 = vmatprep.subr.mxu0 0.0
      %408 = vmatpush1.msra.mxu0 %v369
      %409 = vmatprep.subr.mxu0 0.0
      %410 = vmatpush1.msra.mxu0 %v368
      %411 = vmatprep.subr.mxu0 0.0
      %412 = vmatpush1.msra.mxu0 %v367
      %413 = vmatprep.subr.mxu0 0.0
      %414 = vmatpush1.msra.mxu0 %v366
      %415 = vmatprep.subr.mxu0 0.0
      %416 = vmatpush1.msra.mxu0 %v365
      %417 = vmatprep.subr.mxu0 0.0
      %418 = vmatpush1.msra.mxu0 %v364
      %419 = vmatprep.subr.mxu0 0.0
      %420 = vmatpush2.msra.mxu0 0.0
      %421 = vmatprep.subr.mxu0 0.0
      %422 = vmatpush2.msra.mxu0 0.0
      %423 = vmatprep.subr.mxu0 0.0
      %424 = vmatpush2.msra.mxu0 0.0
      %425 = vmatprep.subr.mxu0 0.0
      %426 = vmatpush2.msra.mxu0 0.0
      %427 = vmatprep.subr.mxu0 0.0
      %428 = vmatpush2.msra.mxu0 0.0
      %429 = vmatprep.subr.mxu0 0.0
      %430 = vmatpush2.msra.mxu0 0.0
      %431 = vmatprep.subr.mxu0 0.0
      %432 = vmatpush2.msra.mxu0 0.0
      %433 = vmatprep.subr.mxu0 0.0
      %434 = vmatpush2.msra.mxu0 0.0
      %435 = vmatprep.subr.mxu0 0.0
      %436 = vmatpush2.msra.mxu0 0.0
      %437 = vmatprep.subr.mxu0 0.0
      %438 = vmatpush2.msra.mxu0 0.0
      %439 = vmatprep.subr.mxu0 0.0
      %440 = vmatpush2.msra.mxu0 0.0
      %441 = vmatprep.subr.mxu0 0.0
      %442 = vmatpush2.msra.mxu0 0.0
      %443 = vmatprep.subr.mxu0 0.0
      %444 = vmatpush2.msra.mxu0 0.0
      %445 = vmatprep.subr.mxu0 0.0
      %446 = vmatpush2.msra.mxu0 0.0
      %447 = vmatprep.subr.mxu0 0.0
      %448 = vmatpush2.msra.mxu0 0.0
      %449 = vmatprep.subr.mxu0 0.0
      %450 = vmatpush2.msra.mxu0 0.0
      %451 = vmatprep.mubr.f32.mxu0 0.0
      %452 = vmatmul.mubr.f32.gmra.mxu0 %v336
      %v453 = vpop.f32.mrf.mxu0
      %v454 = vadd.f32 %v385, %v453
      %v455 = vpop.f32.mrf.mxu0
      %456 = vmatprep.mubr.f32.mxu0 0.0
      %457 = vmatmul.mubr.f32.gmra.mxu0 %v337
      %v458 = vpop.f32.mrf.mxu0
      %v459 = vadd.f32 %v385, %v458
      %v460 = vpop.f32.mrf.mxu0
      %461 = vmatprep.mubr.f32.mxu0 0.0
      %462 = vmatmul.mubr.f32.gmra.mxu0 %v338
      %v463 = vpop.f32.mrf.mxu0
      %v464 = vadd.f32 %v385, %v463
      %v465 = vpop.f32.mrf.mxu0
      %466 = vmatprep.mubr.f32.mxu0 0.0
      %467 = vmatmul.mubr.f32.gmra.mxu0 %v339
      %v468 = vpop.f32.mrf.mxu0
      %v469 = vadd.f32 %v385, %v468
      %v470 = vpop.f32.mrf.mxu0
      %471 = vmatprep.mubr.f32.mxu0 0.0
      %472 = vmatmul.mubr.f32.gmra.mxu0 %v340
      %v473 = vpop.f32.mrf.mxu0
      %v474 = vadd.f32 %v385, %v473
      %v475 = vpop.f32.mrf.mxu0
      %476 = vmatprep.mubr.f32.mxu0 0.0
      %477 = vmatmul.mubr.f32.gmra.mxu0 %v341
      %v478 = vpop.f32.mrf.mxu0
      %v479 = vadd.f32 %v385, %v478
      %v480 = vpop.f32.mrf.mxu0
      %481 = vmatprep.mubr.f32.mxu0 0.0
      %482 = vmatmul.mubr.f32.gmra.mxu0 %v342
      %v483 = vpop.f32.mrf.mxu0
      %v484 = vadd.f32 %v385, %v483
      %v485 = vpop.f32.mrf.mxu0
      %486 = vmatprep.mubr.f32.mxu0 0.0
      %487 = vmatmul.mubr.f32.gmra.mxu0 %v343
      %v488 = vpop.f32.mrf.mxu0
      %v489 = vadd.f32 %v385, %v488
      %v490 = vpop.f32.mrf.mxu0
      %491 = vmatprep.mubr.f32.mxu0 0.0
      %492 = vmatmul.mubr.f32.gmra.mxu0 %v344
      %v493 = vpop.f32.mrf.mxu0
      %v494 = vadd.f32 %v385, %v493
      %v495 = vpop.f32.mrf.mxu0
      %496 = vmatprep.mubr.f32.mxu0 0.0
      %497 = vmatmul.mubr.f32.gmra.mxu0 %v345
      %v498 = vpop.f32.mrf.mxu0
      %v499 = vadd.f32 %v385, %v498
      %v500 = vpop.f32.mrf.mxu0
      %501 = vmatprep.mubr.f32.mxu0 0.0
      %502 = vmatmul.mubr.f32.gmra.mxu0 %v346
      %v503 = vpop.f32.mrf.mxu0
      %v504 = vadd.f32 %v385, %v503
      %v505 = vpop.f32.mrf.mxu0
      %506 = vmatprep.mubr.f32.mxu0 0.0
      %507 = vmatmul.mubr.f32.gmra.mxu0 %v347
      %v508 = vpop.f32.mrf.mxu0
      %v509 = vadd.f32 %v385, %v508
      %v510 = vpop.f32.mrf.mxu0
      %511 = vmatprep.mubr.f32.mxu0 0.0
      %512 = vmatmul.mubr.f32.gmra.mxu0 %v348
      %v513 = vpop.f32.mrf.mxu0
      %v514 = vadd.f32 %v385, %v513
      %v515 = vpop.f32.mrf.mxu0
      %516 = vmatprep.mubr.f32.mxu0 0.0
      %517 = vmatmul.mubr.f32.gmra.mxu0 %v349
      %v518 = vpop.f32.mrf.mxu0
      %v519 = vadd.f32 %v385, %v518
      %v520 = vpop.f32.mrf.mxu0
      %521 = vmatprep.mubr.f32.mxu0 0.0
      %522 = vmatmul.mubr.f32.gmra.mxu0 %v350
      %v523 = vpop.f32.mrf.mxu0
      %v524 = vadd.f32 %v385, %v523
      %v525 = vpop.f32.mrf.mxu0
      %526 = vmatprep.mubr.f32.mxu0 0.0
      %527 = vmatmul.mubr.f32.gmra.mxu0 %v351
      %v528 = vpop.f32.mrf.mxu0
      %v529 = vadd.f32 %v385, %v528
      %v530 = vpop.f32.mrf.mxu0
      %531 = vmatprep.mubr.f32.mxu0 0.0
      %532 = vmatmul.mubr.f32.gmra.mxu0 %v352
      %v533 = vpop.f32.mrf.mxu0
      %v534 = vadd.f32 %v385, %v533
      %v535 = vpop.f32.mrf.mxu0
      %536 = vmatprep.mubr.f32.mxu0 0.0
      %537 = vmatmul.mubr.f32.gmra.mxu0 %v353
      %v538 = vpop.f32.mrf.mxu0
      %v539 = vadd.f32 %v385, %v538
      %v540 = vpop.f32.mrf.mxu0
      %541 = vmatprep.mubr.f32.mxu0 0.0
      %542 = vmatmul.mubr.f32.gmra.mxu0 %v354
      %v543 = vpop.f32.mrf.mxu0
      %v544 = vadd.f32 %v385, %v543
      %v545 = vpop.f32.mrf.mxu0
      %546 = vmatprep.mubr.f32.mxu0 0.0
      %547 = vmatmul.mubr.f32.gmra.mxu0 %v355
      %v548 = vpop.f32.mrf.mxu0
      %v549 = vadd.f32 %v385, %v548
      %v550 = vpop.f32.mrf.mxu0
      %551 = vmatprep.mubr.f32.mxu0 0.0
      %552 = vmatmul.mubr.f32.gmra.mxu0 %v356
      %v553 = vpop.f32.mrf.mxu0
      %v554 = vadd.f32 %v385, %v553
      %v555 = vpop.f32.mrf.mxu0
      %556 = vmatprep.mubr.f32.mxu0 0.0
      %557 = vmatmul.mubr.f32.gmra.mxu0 %v357
      %v558 = vpop.f32.mrf.mxu0
      %v559 = vadd.f32 %v385, %v558
      %v560 = vpop.f32.mrf.mxu0
      %561 = vmatprep.mubr.f32.mxu0 0.0
      %562 = vmatmul.mubr.f32.gmra.mxu0 %v358
      %v563 = vpop.f32.mrf.mxu0
      %v564 = vadd.f32 %v385, %v563
      %v565 = vpop.f32.mrf.mxu0
      %566 = vmatprep.mubr.f32.mxu0 0.0
      %567 = vmatmul.mubr.f32.gmra.mxu0 %v359
      %v568 = vpop.f32.mrf.mxu0
      %v569 = vadd.f32 %v385, %v568
      %v570 = vpop.f32.mrf.mxu0
      %571 = vmatprep.mubr.f32.mxu0 0.0
      %572 = vmatmul.mubr.f32.gmra.mxu0 %v360
      %v573 = vpop.f32.mrf.mxu0
      %v574 = vadd.f32 %v385, %v573
      %v575 = vpop.f32.mrf.mxu0
      %576 = vmatprep.mubr.f32.mxu0 0.0
      %577 = vmatmul.mubr.f32.gmra.mxu0 %v361
      %v578 = vpop.f32.mrf.mxu0
      %v579 = vadd.f32 %v385, %v578
      %v580 = vpop.f32.mrf.mxu0
      %581 = vmatprep.mubr.f32.mxu0 0.0
      %582 = vmatmul.mubr.f32.gmra.mxu0 %v362
      %v583 = vpop.f32.mrf.mxu0
      %v584 = vadd.f32 %v385, %v583
      %v585 = vpop.f32.mrf.mxu0
      %586 = vmatprep.mubr.f32.mxu0 0.0
      %587 = vmatmul.mubr.f32.gmra.mxu0 %v363
      %v588 = vpop.f32.mrf.mxu0
      %v589 = vadd.f32 %v385, %v588
      %v590 = vpop.f32.mrf.mxu0
      %591 = vdwg.mxu0
      %vm592 = vcmp.gt.f32.partialorder %v454, 0.0
      %vm593 = vcmp.gt.f32.partialorder %v459, 0.0
      %vm594 = vcmp.gt.f32.partialorder %v464, 0.0
      %vm595 = vcmp.gt.f32.partialorder %v469, 0.0
      %vm596 = vcmp.gt.f32.partialorder %v474, 0.0
      %vm597 = vcmp.gt.f32.partialorder %v479, 0.0
      %vm598 = vcmp.gt.f32.partialorder %v484, 0.0
      %vm599 = vcmp.gt.f32.partialorder %v489, 0.0
      %vm600 = vcmp.gt.f32.partialorder %v494, 0.0
      %vm601 = vcmp.gt.f32.partialorder %v499, 0.0
      %vm602 = vcmp.gt.f32.partialorder %v504, 0.0
      %vm603 = vcmp.gt.f32.partialorder %v509, 0.0
      %vm604 = vcmp.gt.f32.partialorder %v514, 0.0
      %vm605 = vcmp.gt.f32.partialorder %v519, 0.0
      %vm606 = vcmp.gt.f32.partialorder %v524, 0.0
      %vm607 = vcmp.gt.f32.partialorder %v529, 0.0
      %vm608 = vcmp.gt.f32.partialorder %v534, 0.0
      %vm609 = vcmp.gt.f32.partialorder %v539, 0.0
      %vm610 = vcmp.gt.f32.partialorder %v544, 0.0
      %vm611 = vcmp.gt.f32.partialorder %v549, 0.0
      %vm612 = vcmp.gt.f32.partialorder %v554, 0.0
      %vm613 = vcmp.gt.f32.partialorder %v559, 0.0
      %vm614 = vcmp.gt.f32.partialorder %v564, 0.0
      %vm615 = vcmp.gt.f32.partialorder %v569, 0.0
      %vm616 = vcmp.gt.f32.partialorder %v574, 0.0
      %vm617 = vcmp.gt.f32.partialorder %v579, 0.0
      %vm618 = vcmp.gt.f32.partialorder %v584, 0.0
      %vm619 = vcmp.gt.f32.partialorder %v589, 0.0
      %v620 = vmul.f32 %v454, 0.01
      %v621 = vmul.f32 %v459, 0.01
      %v622 = vmul.f32 %v464, 0.01
      %v623 = vmul.f32 %v469, 0.01
      %v624 = vmul.f32 %v474, 0.01
      %v625 = vmul.f32 %v479, 0.01
      %v626 = vmul.f32 %v484, 0.01
      %v627 = vmul.f32 %v489, 0.01
      %v628 = vmul.f32 %v494, 0.01
      %v629 = vmul.f32 %v499, 0.01
      %v630 = vmul.f32 %v504, 0.01
      %v631 = vmul.f32 %v509, 0.01
      %v632 = vmul.f32 %v514, 0.01
      %v633 = vmul.f32 %v519, 0.01
      %v634 = vmul.f32 %v524, 0.01
      %v635 = vmul.f32 %v529, 0.01
      %v636 = vmul.f32 %v534, 0.01
      %v637 = vmul.f32 %v539, 0.01
      %v638 = vmul.f32 %v544, 0.01
      %v639 = vmul.f32 %v549, 0.01
      %v640 = vmul.f32 %v554, 0.01
      %v641 = vmul.f32 %v559, 0.01
      %v642 = vmul.f32 %v564, 0.01
      %v643 = vmul.f32 %v569, 0.01
      %v644 = vmul.f32 %v574, 0.01
      %v645 = vmul.f32 %v579, 0.01
      %v646 = vmul.f32 %v584, 0.01
      %v647 = vmul.f32 %v589, 0.01
      %v648 = vsel %vm592, %v454, %v620
      %v649 = vsel %vm593, %v459, %v621
      %v650 = vsel %vm594, %v464, %v622
      %v651 = vsel %vm595, %v469, %v623
      %v652 = vsel %vm596, %v474, %v624
      %v653 = vsel %vm597, %v479, %v625
      %v654 = vsel %vm598, %v484, %v626
      %v655 = vsel %vm599, %v489, %v627
      %v656 = vsel %vm600, %v494, %v628
      %v657 = vsel %vm601, %v499, %v629
      %v658 = vsel %vm602, %v504, %v630
      %v659 = vsel %vm603, %v509, %v631
      %v660 = vsel %vm604, %v514, %v632
      %v661 = vsel %vm605, %v519, %v633
      %v662 = vsel %vm606, %v524, %v634
      %v663 = vsel %vm607, %v529, %v635
      %v664 = vsel %vm608, %v534, %v636
      %v665 = vsel %vm609, %v539, %v637
      %v666 = vsel %vm610, %v544, %v638
      %v667 = vsel %vm611, %v549, %v639
      %v668 = vsel %vm612, %v554, %v640
      %v669 = vsel %vm613, %v559, %v641
      %v670 = vsel %vm614, %v564, %v642
      %v671 = vsel %vm615, %v569, %v643
      %v672 = vsel %vm616, %v574, %v644
      %v673 = vsel %vm617, %v579, %v645
      %v674 = vsel %vm618, %v584, %v646
      %v675 = vsel %vm619, %v589, %v647
      %676 = vst [vmem:[%s260] sm:$0xff] %v648
      %677 = vst [vmem:[%s260 + $0x8] sm:$0xff] %v649
      %678 = vst [vmem:[%s260 + $0x10] sm:$0xff] %v650
      %679 = vst [vmem:[%s260 + $0x18] sm:$0xff] %v651
      %680 = vst [vmem:[%s260 + $0x20] sm:$0xff] %v652
      %681 = vst [vmem:[%s260 + $0x28] sm:$0xff] %v653
      %682 = vst [vmem:[%s260 + $0x30] sm:$0xff] %v654
      %683 = vst [vmem:[%s260 + $0x38] sm:$0xff] %v655
      %684 = vst [vmem:[%s260 + $0x40] sm:$0xff] %v656
      %685 = vst [vmem:[%s260 + $0x48] sm:$0xff] %v657
      %686 = vst [vmem:[%s260 + $0x50] sm:$0xff] %v658
      %687 = vst [vmem:[%s260 + $0x58] sm:$0xff] %v659
      %688 = vst [vmem:[%s260 + $0x60] sm:$0xff] %v660
      %689 = vst [vmem:[%s260 + $0x68] sm:$0xff] %v661
      %690 = vst [vmem:[%s260 + $0x70] sm:$0xff] %v662
      %691 = vst [vmem:[%s260 + $0x78] sm:$0xff] %v663
      %692 = vst [vmem:[%s260 + $0x80] sm:$0xff] %v664
      %693 = vst [vmem:[%s260 + $0x88] sm:$0xff] %v665
      %694 = vst [vmem:[%s260 + $0x90] sm:$0xff] %v666
      %695 = vst [vmem:[%s260 + $0x98] sm:$0xff] %v667
      %696 = vst [vmem:[%s260 + $0xa0] sm:$0xff] %v668
      %697 = vst [vmem:[%s260 + $0xa8] sm:$0xff] %v669
      %698 = vst [vmem:[%s260 + $0xb0] sm:$0xff] %v670
      %699 = vst [vmem:[%s260 + $0xb8] sm:$0xff] %v671
      %700 = vst [vmem:[%s260 + $0xc0] sm:$0xff] %v672
      %701 = vst [vmem:[%s260 + $0xc8] sm:$0xff] %v673
      %702 = vst [vmem:[%s260 + $0xd0] sm:$0xff] %v674
      %703 = vst [vmem:[%s260 + $0xd8] sm:$0xff] %v675
      %v704 = vadd.f32 %v648, %v649
      %v705 = vadd.f32 %v704, %v650
      %v706 = vadd.f32 %v705, %v651
      %v707 = vadd.f32 %v706, %v652
      %v708 = vadd.f32 %v707, %v653
      %v709 = vadd.f32 %v708, %v654
      %v710 = vadd.f32 %v709, %v655
      %v711 = vadd.f32 %v710, %v656
      %v712 = vadd.f32 %v711, %v657
      %v713 = vadd.f32 %v712, %v658
      %v714 = vadd.f32 %v713, %v659
      %v715 = vadd.f32 %v714, %v660
      %v716 = vadd.f32 %v715, %v661
      %v717 = vadd.f32 %v716, %v662
      %v718 = vadd.f32 %v717, %v663
      %v719 = vadd.f32 %v718, %v664
      %v720 = vadd.f32 %v719, %v665
      %v721 = vadd.f32 %v720, %v666
      %v722 = vadd.f32 %v721, %v667
      %v723 = vadd.f32 %v722, %v668
      %v724 = vadd.f32 %v723, %v669
      %v725 = vadd.f32 %v724, %v670
      %v726 = vadd.f32 %v725, %v671
      %v727 = vadd.f32 %v726, %v672
      %v728 = vadd.f32 %v727, %v673
      %v729 = vadd.f32 %v728, %v674
      %v730 = vadd.f32 %v729, %v675
      %v731 = vrot.slane %v730, 4
      %v732 = vadd.f32 %v730, %v731
      %v733 = vrot.slane %v732, 2
      %v734 = vadd.f32 %v732, %v733
      %v735 = vrot.slane %v734, 1
      %v736 = vadd.f32 %v734, %v735
      %v737 = vmul.f32 %v648, %v648
      %v738 = vmul.f32 %v649, %v649
      %v739 = vmul.f32 %v650, %v650
      %v740 = vmul.f32 %v651, %v651
      %v741 = vmul.f32 %v652, %v652
      %v742 = vmul.f32 %v653, %v653
      %v743 = vmul.f32 %v654, %v654
      %v744 = vmul.f32 %v655, %v655
      %v745 = vmul.f32 %v656, %v656
      %v746 = vmul.f32 %v657, %v657
      %v747 = vmul.f32 %v658, %v658
      %v748 = vmul.f32 %v659, %v659
      %v749 = vmul.f32 %v660, %v660
      %v750 = vmul.f32 %v661, %v661
      %v751 = vmul.f32 %v662, %v662
      %v752 = vmul.f32 %v663, %v663
      %v753 = vmul.f32 %v664, %v664
      %v754 = vmul.f32 %v665, %v665
      %v755 = vmul.f32 %v666, %v666
      %v756 = vmul.f32 %v667, %v667
      %v757 = vmul.f32 %v668, %v668
      %v758 = vmul.f32 %v669, %v669
      %v759 = vmul.f32 %v670, %v670
      %v760 = vmul.f32 %v671, %v671
      %v761 = vmul.f32 %v672, %v672
      %v762 = vmul.f32 %v673, %v673
      %v763 = vmul.f32 %v674, %v674
      %v764 = vmul.f32 %v675, %v675
      %v765 = vadd.f32 %v737, %v738
      %v766 = vadd.f32 %v765, %v739
      %v767 = vadd.f32 %v766, %v740
      %v768 = vadd.f32 %v767, %v741
      %v769 = vadd.f32 %v768, %v742
      %v770 = vadd.f32 %v769, %v743
      %v771 = vadd.f32 %v770, %v744
      %v772 = vadd.f32 %v771, %v745
      %v773 = vadd.f32 %v772, %v746
      %v774 = vadd.f32 %v773, %v747
      %v775 = vadd.f32 %v774, %v748
      %v776 = vadd.f32 %v775, %v749
      %v777 = vadd.f32 %v776, %v750
      %v778 = vadd.f32 %v777, %v751
      %v779 = vadd.f32 %v778, %v752
      %v780 = vadd.f32 %v779, %v753
      %v781 = vadd.f32 %v780, %v754
      %v782 = vadd.f32 %v781, %v755
      %v783 = vadd.f32 %v782, %v756
      %v784 = vadd.f32 %v783, %v757
      %v785 = vadd.f32 %v784, %v758
      %v786 = vadd.f32 %v785, %v759
      %v787 = vadd.f32 %v786, %v760
      %v788 = vadd.f32 %v787, %v761
      %v789 = vadd.f32 %v788, %v762
      %v790 = vadd.f32 %v789, %v763
      %v791 = vadd.f32 %v790, %v764
      %v792 = vrot.slane %v791, 4
      %v793 = vadd.f32 %v791, %v792
      %v794 = vrot.slane %v793, 2
      %v795 = vadd.f32 %v793, %v794
      %v796 = vrot.slane %v795, 1
      %v797 = vadd.f32 %v795, %v796
      %vm798 = vcmask 1040384
      %v799 = vsel %vm798, %v736, %v797
      %vm800 = vcmask 1041408
      %v801 = vsel %vm800, %v799, 0.0
      %802 = vst [vmem:[%s265] sm:$0xff] %v801
      %s803 = smul.u32 28, %s18
      %p804 = scmp.lt.s32.totalorder %s803, 195
      %s805 = scalar_select %p804, %s803, 195
      %s806 = smul.addr %s805, 8
      %s807 = scalar_lea.vmem %s5, %s806
      %p808 = scmp.lt.s32.totalorder %s18, 6
      %s809 = scalar_select %p808, %s18, 6
      %s810 = smul.addr %s809, 8
      %s811 = scalar_lea.vmem %s6, %s810
      // Predicated region
      $region41: #{disc_cero_forward.3} parent=39 // pred_check
        %p812 = pneg %p146
      $region42: #{disc_cero_forward.3} parent=39 // pred_check_branch
        %814 = sbr.rel (%p812) target = $region44
      $region43: #{disc_cero_forward.3} parent=39 // pred_region
        %s815 = smul.u32 28, %s18
      $region44: #{disc_cero_forward.3} parent=39 // pred_fallthru
        _
      // Predicated region
      $region45: #{disc_cero_forward.3} parent=39 // pred_check
        %p816 = pneg %p172
      $region46: #{disc_cero_forward.3} parent=39 // pred_check_branch
        %818 = sbr.rel (%p816) target = $region48
      $region47: #{disc_cero_forward.3} parent=39 // pred_region
        _
      $region48: #{disc_cero_forward.3} parent=39 // pred_fallthru
        _
    $region40: #{disc_cero_forward.3} parent=5 // pred_fallthru
      _
    %p819 = scmp.le.s32.totalorder 2, %s13
    // Predicated region
    $region49: #{disc_cero_forward.3} parent=5 // pred_check
      %p820 = pneg %p819
    $region50: #{disc_cero_forward.3} parent=5 // pred_check_branch
      %822 = sbr.rel (%p820) target = $region52
    $region51: #{disc_cero_forward.3} parent=5 // pred_region
      %s823 = ssub.s32 %s13, 2
      // Predicated region
      $region53: #{disc_cero_forward.3} parent=51 // pred_check
        %p824 = pneg %p152
      $region54: #{disc_cero_forward.3} parent=51 // pred_check_branch
        %826 = sbr.rel (%p824) target = $region56
      $region55: #{disc_cero_forward.3} parent=51 // pred_region
        %s827 = smul.u32 28, %s19
        %p828 = scmp.lt.s32.totalorder %s827, 195
        %s829 = scalar_select %p828, %s827, 195
        %s830 = smul.addr %s829, 8
        %s831 = scalar_lea.vmem %s5, %s830
      $region56: #{disc_cero_forward.3} parent=51 // pred_fallthru
        _
      // Predicated region
      $region57: #{disc_cero_forward.3} parent=51 // pred_check
        %p832 = pneg %p178
      $region58: #{disc_cero_forward.3} parent=51 // pred_check_branch
        %834 = sbr.rel (%p832) target = $region60
      $region59: #{disc_cero_forward.3} parent=51 // pred_region
        %p835 = scmp.lt.s32.totalorder %s19, 6
        %s836 = scalar_select %p835, %s19, 6
        %s837 = smul.addr %s836, 8
        %s838 = scalar_lea.vmem %s6, %s837
      $region60: #{disc_cero_forward.3} parent=51 // pred_fallthru
        _
    $region52: #{disc_cero_forward.3} parent=5 // pred_fallthru
      _
  $region6: #{disc_cero_forward.3} parent=0 // loop_footer
    %s17 = sadd.s32 1, %s13
  $region7: #{disc_cero_forward.3} parent=0 // loop_footer_branch
    %12 = sbr.rel target = $region3
  $region8: #{disc_cero_forward.3} parent=0 // loop_exit
    _

// kernel: disc_cero_forward.4
$region0: #{disc_cero_forward.4}
  #allocation0 [shape = 'u32[]', space=smem, size = 0x4, offset = 0x4, fixed_abs, tag = 'smem constant byte address 0x4 - core index']
  #allocation1 [shape = 'u32[144,128]{1,0:T(1,128)}', space=vmem, size = 0x12000, scoped, tag = 'internal scratch']
  %s0 = inlined_call_operand.vmem [shape: f32[288,3200], index: 0, kind: input, shape index: {}]
  %s1 = inlined_call_operand.vmem [shape: f32[1,3200], index: 1, kind: input, shape index: {}]
  %s2 = inlined_call_operand.vmem [shape: f32[1,3200], index: 2, kind: input, shape index: {}]
  %s3 = inlined_call_operand.vmem [shape: f32[3200,128], index: 3, kind: input, shape index: {}]
  %s4 = inlined_call_operand.vmem [shape: f32[1,128], index: 4, kind: input, shape index: {}]
  %s5 = inlined_call_operand.vmem [shape: f32[288,128], index: 5, kind: output, shape index: {0}]
  %s6 = inlined_call_operand.vmem [shape: f32[16,128], index: 6, kind: output, shape index: {1}]
  %7 = xla_tuple %s5, %s6
  %s8 = sld [smem:[#allocation0]]
  $region61: #{disc_cero_forward.4} parent=0
    _
  %s10 = ssub.s32 1, %s8
  %s11 = scalar_select 0, %s10, %s8
  loop: start=0, step=1, limit=4
  $region2: #{disc_cero_forward.4} parent=0 // loop_pre_header
    _
  $region3: #{disc_cero_forward.4} parent=0 // loop_header
    %s13 = sphi 0, %s17
    %p14 = scmp.ge.s32.totalorder %s13, 4
    %s23 = sphi 0, %s25
    %s26 = sphi 0, %s23
    %s27 = sphi 0, %s26
    %s43 = sphi 0, %s27
    %s47 = sphi 0, %s47
    %s49 = sphi 0, %s47
    %s50 = sphi 0, %s49
    %s64 = sphi 0, %s50
    %s68 = sphi 0, %s68
    %s70 = sphi 0, %s68
    %s71 = sphi 0, %s70
    %s85 = sphi 0, %s71
    %s89 = sphi 0, %s89
    %s91 = sphi 0, %s89
    %s92 = sphi 0, %s91
    %s106 = sphi 0, %s92
    %s110 = sphi 0, %s110
    %s112 = sphi 0, %s110
    %s113 = sphi 0, %s112
    %s127 = sphi 0, %s113
    %s133 = sphi 0, %s135
    %s136 = sphi 0, %s133
    %s137 = sphi 0, %s136
    %s153 = sphi 0, %s137
    %s159 = sphi 0, %s161
    %s162 = sphi 0, %s159
    %s163 = sphi 0, %s162
    %s179 = sphi 0, %s163
  $region4: #{disc_cero_forward.4} parent=0 // loop_header_branch
    %16 = sbr.rel (%p14) target = $region8
  $region5: #{disc_cero_forward.4} parent=0 // loop_body
    %s18 = ssub.s32 %s13, 1
    %s19 = ssub.s32 %s13, 2
    %s20 = sadd.s32 %s13, 1
    %s21 = ssub.s32 %s13, %s20
    %p22 = scmp.eq.s32.totalorder %s21, 0
    %s24 = sadd.s32 %s23, 1
    %s25 = scalar_select %p22, %s23, %s24
    %p28 = pneg %p22
    %p29 = scmp.eq.s32.totalorder %s13, 1
    %p30 = por %p28, %p29
    %p31 = scmp.ne.s32.totalorder %s23, %s26
    %p32 = scmp.eq.s32.totalorder %s13, 0
    %p33 = por %p31, %p32
    %p34 = scmp.ne.s32.totalorder %s23, %s26
    %p35 = scmp.eq.s32.totalorder %s18, 1
    %p36 = por %p34, %p35
    %p37 = scmp.ne.s32.totalorder %s26, %s27
    %p38 = scmp.eq.s32.totalorder %s18, 0
    %p39 = por %p37, %p38
    %p40 = scmp.ne.s32.totalorder %s26, %s27
    %p41 = scmp.eq.s32.totalorder %s19, 1
    %p42 = por %p40, %p41
    %p44 = scmp.ne.s32.totalorder %s27, %s43
    %p45 = scmp.eq.s32.totalorder %s19, 0
    %p46 = por %p44, %p45
    %s48 = sadd.s32 %s47, 1
    %p51 = scmp.eq.s32.totalorder %s13, 1
    %p52 = scmp.ne.s32.totalorder %s47, %s49
    %p53 = scmp.eq.s32.totalorder %s13, 0
    %p54 = por %p52, %p53
    %p55 = scmp.ne.s32.totalorder %s47, %s49
    %p56 = scmp.eq.s32.totalorder %s18, 1
    %p57 = por %p55, %p56
    %p58 = scmp.ne.s32.totalorder %s49, %s50
    %p59 = scmp.eq.s32.totalorder %s18, 0
    %p60 = por %p58, %p59
    %p61 = scmp.ne.s32.totalorder %s49, %s50
    %p62 = scmp.eq.s32.totalorder %s19, 1
    %p63 = por %p61, %p62
    %p65 = scmp.ne.s32.totalorder %s50, %s64
    %p66 = scmp.eq.s32.totalorder %s19, 0
    %p67 = por %p65, %p66
    %s69 = sadd.s32 %s68, 1
    %p72 = scmp.eq.s32.totalorder %s13, 1
    %p73 = scmp.ne.s32.totalorder %s68, %s70
    %p74 = scmp.eq.s32.totalorder %s13, 0
    %p75 = por %p73, %p74
    %p76 = scmp.ne.s32.totalorder %s68, %s70
    %p77 = scmp.eq.s32.totalorder %s18, 1
    %p78 = por %p76, %p77
    %p79 = scmp.ne.s32.totalorder %s70, %s71
    %p80 = scmp.eq.s32.totalorder %s18, 0
    %p81 = por %p79, %p80
    %p82 = scmp.ne.s32.totalorder %s70, %s71
    %p83 = scmp.eq.s32.totalorder %s19, 1
    %p84 = por %p82, %p83
    %p86 = scmp.ne.s32.totalorder %s71, %s85
    %p87 = scmp.eq.s32.totalorder %s19, 0
    %p88 = por %p86, %p87
    %s90 = sadd.s32 %s89, 1
    %p93 = scmp.eq.s32.totalorder %s13, 1
    %p94 = scmp.ne.s32.totalorder %s89, %s91
    %p95 = scmp.eq.s32.totalorder %s13, 0
    %p96 = por %p94, %p95
    %p97 = scmp.ne.s32.totalorder %s89, %s91
    %p98 = scmp.eq.s32.totalorder %s18, 1
    %p99 = por %p97, %p98
    %p100 = scmp.ne.s32.totalorder %s91, %s92
    %p101 = scmp.eq.s32.totalorder %s18, 0
    %p102 = por %p100, %p101
    %p103 = scmp.ne.s32.totalorder %s91, %s92
    %p104 = scmp.eq.s32.totalorder %s19, 1
    %p105 = por %p103, %p104
    %p107 = scmp.ne.s32.totalorder %s92, %s106
    %p108 = scmp.eq.s32.totalorder %s19, 0
    %p109 = por %p107, %p108
    %s111 = sadd.s32 %s110, 1
    %p114 = scmp.eq.s32.totalorder %s13, 1
    %p115 = scmp.ne.s32.totalorder %s110, %s112
    %p116 = scmp.eq.s32.totalorder %s13, 0
    %p117 = por %p115, %p116
    %p118 = scmp.ne.s32.totalorder %s110, %s112
    %p119 = scmp.eq.s32.totalorder %s18, 1
    %p120 = por %p118, %p119
    %p121 = scmp.ne.s32.totalorder %s112, %s113
    %p122 = scmp.eq.s32.totalorder %s18, 0
    %p123 = por %p121, %p122
    %p124 = scmp.ne.s32.totalorder %s112, %s113
    %p125 = scmp.eq.s32.totalorder %s19, 1
    %p126 = por %p124, %p125
    %p128 = scmp.ne.s32.totalorder %s113, %s127
    %p129 = scmp.eq.s32.totalorder %s19, 0
    %p130 = por %p128, %p129
    %s131 = ssub.s32 %s13, %s20
    %p132 = scmp.eq.s32.totalorder %s131, 0
    %s134 = sadd.s32 %s133, 1
    %s135 = scalar_select %p132, %s133, %s134
    %p138 = pneg %p132
    %p139 = scmp.eq.s32.totalorder %s13, 1
    %p140 = por %p138, %p139
    %p141 = scmp.ne.s32.totalorder %s133, %s136
    %p142 = scmp.eq.s32.totalorder %s13, 0
    %p143 = por %p141, %p142
    %p144 = scmp.ne.s32.totalorder %s133, %s136
    %p145 = scmp.eq.s32.totalorder %s18, 1
    %p146 = por %p144, %p145
    %p147 = scmp.ne.s32.totalorder %s136, %s137
    %p148 = scmp.eq.s32.totalorder %s18, 0
    %p149 = por %p147, %p148
    %p150 = scmp.ne.s32.totalorder %s136, %s137
    %p151 = scmp.eq.s32.totalorder %s19, 1
    %p152 = por %p150, %p151
    %p154 = scmp.ne.s32.totalorder %s137, %s153
    %p155 = scmp.eq.s32.totalorder %s19, 0
    %p156 = por %p154, %p155
    %s157 = ssub.s32 %s13, %s20
    %p158 = scmp.eq.s32.totalorder %s157, 0
    %s160 = sadd.s32 %s159, 1
    %s161 = scalar_select %p158, %s159, %s160
    %p164 = pneg %p158
    %p165 = scmp.eq.s32.totalorder %s13, 1
    %p166 = por %p164, %p165
    %p167 = scmp.ne.s32.totalorder %s159, %s162
    %p168 = scmp.eq.s32.totalorder %s13, 0
    %p169 = por %p167, %p168
    %p170 = scmp.ne.s32.totalorder %s159, %s162
    %p171 = scmp.eq.s32.totalorder %s18, 1
    %p172 = por %p170, %p171
    %p173 = scmp.ne.s32.totalorder %s162, %s163
    %p174 = scmp.eq.s32.totalorder %s18, 0
    %p175 = por %p173, %p174
    %p176 = scmp.ne.s32.totalorder %s162, %s163
    %p177 = scmp.eq.s32.totalorder %s19, 1
    %p178 = por %p176, %p177
    %p180 = scmp.ne.s32.totalorder %s163, %s179
    %p181 = scmp.eq.s32.totalorder %s19, 0
    %p182 = por %p180, %p181
    %p183 = scmp.le.s32.totalorder 1, %s13
    %p184 = scmp.lt.s32.totalorder %s13, 3
    %p185 = pnand %p183, %p184
    %p186 = pneg %p185
    // Predicated region
    $region9: #{disc_cero_forward.4} parent=5 // pred_check
      _
    $region10: #{disc_cero_forward.4} parent=5 // pred_check_branch
      %188 = sbr.rel (%p185) target = $region12
    $region11: #{disc_cero_forward.4} parent=5 // pred_region
      %s189 = ssub.s32 %s13, 1
      // Predicated region
      $region13: #{disc_cero_forward.4} parent=11 // pred_check
        %p190 = pneg %p60
      $region14: #{disc_cero_forward.4} parent=11 // pred_check_branch
        %192 = sbr.rel (%p190) target = $region16
      $region15: #{disc_cero_forward.4} parent=11 // pred_region
        _
      $region16: #{disc_cero_forward.4} parent=11 // pred_fallthru
        _
      // Predicated region
      $region17: #{disc_cero_forward.4} parent=11 // pred_check
        %p193 = pneg %p81
      $region18: #{disc_cero_forward.4} parent=11 // pred_check_branch
        %195 = sbr.rel (%p193) target = $region20
      $region19: #{disc_cero_forward.4} parent=11 // pred_region
        _
      $region20: #{disc_cero_forward.4} parent=11 // pred_fallthru
        _
      // Predicated region
      $region21: #{disc_cero_forward.4} parent=11 // pred_check
        %p196 = pneg %p102
      $region22: #{disc_cero_forward.4} parent=11 // pred_check_branch
        %198 = sbr.rel (%p196) target = $region24
      $region23: #{disc_cero_forward.4} parent=11 // pred_region
        _
      $region24: #{disc_cero_forward.4} parent=11 // pred_fallthru
        _
      // Predicated region
      $region25: #{disc_cero_forward.4} parent=11 // pred_check
        %p199 = pneg %p123
      $region26: #{disc_cero_forward.4} parent=11 // pred_check_branch
        %201 = sbr.rel (%p199) target = $region28
      $region27: #{disc_cero_forward.4} parent=11 // pred_region
        _
      $region28: #{disc_cero_forward.4} parent=11 // pred_fallthru
        _
    $region12: #{disc_cero_forward.4} parent=5 // pred_fallthru
      _
    %p202 = scmp.lt.s32.totalorder %s13, 2
    // Predicated region
    $region29: #{disc_cero_forward.4} parent=5 // pred_check
      %p203 = pneg %p202
    $region30: #{disc_cero_forward.4} parent=5 // pred_check_branch
      %205 = sbr.rel (%p203) target = $region32
    $region31: #{disc_cero_forward.4} parent=5 // pred_region
      // Predicated region
      $region33: #{disc_cero_forward.4} parent=31 // pred_check
        %p206 = pneg %p33
      $region34: #{disc_cero_forward.4} parent=31 // pred_check_branch
        %208 = sbr.rel (%p206) target = $region36
      $region35: #{disc_cero_forward.4} parent=31 // pred_region
        %s209 = smul.u32 18, %s13
        %p210 = scmp.lt.s32.totalorder %s209, 35
        %s211 = scalar_select %p210, %s209, 35
        %s212 = smul.addr %s211, 25
        %s213 = smul.addr %s212, 8
        %s214 = scalar_lea.vmem %s0, %s213
        %s215 = smul.u32 18, %s13
      $region36: #{disc_cero_forward.4} parent=31 // pred_fallthru
        _
    $region32: #{disc_cero_forward.4} parent=5 // pred_fallthru
      _
    %p216 = scmp.le.s32.totalorder 1, %s13
    %p217 = scmp.lt.s32.totalorder %s13, 3
    %p218 = pnand %p216, %p217
    %p219 = pneg %p218
    // Predicated region
    $region37: #{disc_cero_forward.4} parent=5 // pred_check
      _
    $region38: #{disc_cero_forward.4} parent=5 // pred_check_branch
      %221 = sbr.rel (%p218) target = $region40
    $region39: #{disc_cero_forward.4} parent=5 // pred_region
      %s222 = ssub.s32 %s13, 1
      %s223 = smul.u32 18, %s18
      %p224 = scmp.lt.s32.totalorder %s223, 35
      %s225 = scalar_select %p224, %s223, 35
      %s226 = smul.addr %s225, 25
      %s227 = smul.addr %s226, 8
      %s228 = scalar_lea.vmem %s0, %s227
      %p229 = pneg %p39
      %p230 = pneg %p36
      %p231 = pneg %p60
      %p232 = pneg %p57
      %p233 = pneg %p81
      %p234 = pneg %p78
      %p235 = pneg %p102
      %p236 = pneg %p99
      %p237 = pneg %p123
      %p238 = pneg %p120
      %p239 = pneg %p149
      %p240 = pneg %p146
      %s241 = smul.u32 18, %s18
      %p242 = scmp.lt.s32.totalorder %s241, 35
      %s243 = scalar_select %p242, %s241, 35
      %s244 = smul.addr %s243, 8
      %s245 = scalar_lea.vmem %s5, %s244
      %p246 = pneg %p175
      %p247 = pneg %p172
      %p248 = scmp.lt.s32.totalorder %s18, 1
      %s249 = scalar_select %p248, %s18, 1
      %s250 = smul.addr %s249, 8
      %s251 = scalar_lea.vmem %s6, %s250
      %s252 = smul.u32 18, %s18
      %p253 = scmp.lt.s32.totalorder %s252, 35
      %s254 = scalar_select %p253, %s252, 35
      %s255 = smul.addr %s254, 25
      %s256 = smul.addr %s255, 8
      %s257 = scalar_lea.vmem %s0, %s256
      %s258 = smul.u32 18, %s18
      %s259 = smul.u32 18, %s18
      %p260 = scmp.lt.s32.totalorder %s259, 35
      %s261 = scalar_select %p260, %s259, 35
      %s262 = smul.addr %s261, 8
      %s263 = scalar_lea.vmem %s5, %s262
      %s264 = smul.u32 18, %s18
      %p265 = scmp.lt.s32.totalorder %s18, 1
      %s266 = scalar_select %p265, %s18, 1
      %s267 = smul.addr %s266, 8
      %s268 = scalar_lea.vmem %s6, %s267
      %v269 = vld [vmem:[%s257] sm:$0xff]
      %v270 = vld [vmem:[%s257 + $0x8] sm:$0xff]
      %v271 = vld [vmem:[%s257 + $0x10] sm:$0xff]
      %v272 = vld [vmem:[%s257 + $0x18] sm:$0xff]
      %v273 = vld [vmem:[%s257 + $0x20] sm:$0xff]
      %v274 = vld [vmem:[%s257 + $0x28] sm:$0xff]
      %v275 = vld [vmem:[%s257 + $0x30] sm:$0xff]
      %v276 = vld [vmem:[%s257 + $0x38] sm:$0xff]
      %v277 = vld [vmem:[%s257 + $0x40] sm:$0xff]
      %v278 = vld [vmem:[%s257 + $0x48] sm:$0xff]
      %v279 = vld [vmem:[%s257 + $0x50] sm:$0xff]
      %v280 = vld [vmem:[%s257 + $0x58] sm:$0xff]
      %v281 = vld [vmem:[%s257 + $0x60] sm:$0xff]
      %v282 = vld [vmem:[%s257 + $0x68] sm:$0xff]
      %v283 = vld [vmem:[%s257 + $0x70] sm:$0xff]
      %v284 = vld [vmem:[%s257 + $0x78] sm:$0xff]
      %v285 = vld [vmem:[%s257 + $0x80] sm:$0xff]
      %v286 = vld [vmem:[%s257 + $0x88] sm:$0xff]
      %v287 = vld [vmem:[%s257 + $0x90] sm:$0xff]
      %v288 = vld [vmem:[%s257 + $0x98] sm:$0xff]
      %v289 = vld [vmem:[%s257 + $0xa0] sm:$0xff]
      %v290 = vld [vmem:[%s257 + $0xa8] sm:$0xff]
      %v291 = vld [vmem:[%s257 + $0xb0] sm:$0xff]
      %v292 = vld [vmem:[%s257 + $0xb8] sm:$0xff]
      %v293 = vld [vmem:[%s257 + $0xc0] sm:$0xff]
      %v294 = vld [vmem:[%s257 + $0xc8] sm:$0xff]
      %v295 = vld [vmem:[%s257 + $0xd0] sm:$0xff]
      %v296 = vld [vmem:[%s257 + $0xd8] sm:$0xff]
      %v297 = vld [vmem:[%s257 + $0xe0] sm:$0xff]
      %v298 = vld [vmem:[%s257 + $0xe8] sm:$0xff]
      %v299 = vld [vmem:[%s257 + $0xf0] sm:$0xff]
      %v300 = vld [vmem:[%s257 + $0xf8] sm:$0xff]
      %v301 = vld [vmem:[%s257 + $0x100] sm:$0xff]
      %v302 = vld [vmem:[%s257 + $0x108] sm:$0xff]
      %v303 = vld [vmem:[%s257 + $0x110] sm:$0xff]
      %v304 = vld [vmem:[%s257 + $0x118] sm:$0xff]
      %v305 = vld [vmem:[%s257 + $0x120] sm:$0xff]
      %v306 = vld [vmem:[%s257 + $0x128] sm:$0xff]
      %v307 = vld [vmem:[%s257 + $0x130] sm:$0xff]
      %v308 = vld [vmem:[%s257 + $0x138] sm:$0xff]
      %v309 = vld [vmem:[%s257 + $0x140] sm:$0xff]
      %v310 = vld [vmem:[%s257 + $0x148] sm:$0xff]
      %v311 = vld [vmem:[%s257 + $0x150] sm:$0xff]
      %v312 = vld [vmem:[%s257 + $0x158] sm:$0xff]
      %v313 = vld [vmem:[%s257 + $0x160] sm:$0xff]
      %v314 = vld [vmem:[%s257 + $0x168] sm:$0xff]
      %v315 = vld [vmem:[%s257 + $0x170] sm:$0xff]
      %v316 = vld [vmem:[%s257 + $0x178] sm:$0xff]
      %v317 = vld [vmem:[%s257 + $0x180] sm:$0xff]
      %v318 = vld [vmem:[%s257 + $0x188] sm:$0xff]
      %v319 = vld [vmem:[%s257 + $0x190] sm:$0xff]
      %v320 = vld [vmem:[%s257 + $0x198] sm:$0xff]
      %v321 = vld [vmem:[%s257 + $0x1a0] sm:$0xff]
      %v322 = vld [vmem:[%s257 + $0x1a8] sm:$0xff]
      %v323 = vld [vmem:[%s257 + $0x1b0] sm:$0xff]
      %v324 = vld [vmem:[%s257 + $0x1b8] sm:$0xff]
      %v325 = vld [vmem:[%s257 + $0x1c0] sm:$0xff]
      %v326 = vld [vmem:[%s257 + $0x1c8] sm:$0xff]
      %v327 = vld [vmem:[%s257 + $0x1d0] sm:$0xff]
      %v328 = vld [vmem:[%s257 + $0x1d8] sm:$0xff]
      %v329 = vld [vmem:[%s257 + $0x1e0] sm:$0xff]
      %v330 = vld [vmem:[%s257 + $0x1e8] sm:$0xff]
      %v331 = vld [vmem:[%s257 + $0x1f0] sm:$0xff]
      %v332 = vld [vmem:[%s257 + $0x1f8] sm:$0xff]
      %v333 = vld [vmem:[%s257 + $0x200] sm:$0xff]
      %v334 = vld [vmem:[%s257 + $0x208] sm:$0xff]
      %v335 = vld [vmem:[%s257 + $0x210] sm:$0xff]
      %v336 = vld [vmem:[%s257 + $0x218] sm:$0xff]
      %v337 = vld [vmem:[%s257 + $0x220] sm:$0xff]
      %v338 = vld [vmem:[%s257 + $0x228] sm:$0xff]
      %v339 = vld [vmem:[%s257 + $0x230] sm:$0xff]
      %v340 = vld [vmem:[%s257 + $0x238] sm:$0xff]
      %v341 = vld [vmem:[%s257 + $0x240] sm:$0xff]
      %v342 = vld [vmem:[%s257 + $0x248] sm:$0xff]
      %v343 = vld [vmem:[%s257 + $0x250] sm:$0xff]
      %v344 = vld [vmem:[%s257 + $0x258] sm:$0xff]
      %v345 = vld [vmem:[%s257 + $0x260] sm:$0xff]
      %v346 = vld [vmem:[%s257 + $0x268] sm:$0xff]
      %v347 = vld [vmem:[%s257 + $0x270] sm:$0xff]
      %v348 = vld [vmem:[%s257 + $0x278] sm:$0xff]
      %v349 = vld [vmem:[%s257 + $0x280] sm:$0xff]
      %v350 = vld [vmem:[%s257 + $0x288] sm:$0xff]
      %v351 = vld [vmem:[%s257 + $0x290] sm:$0xff]
      %v352 = vld [vmem:[%s257 + $0x298] sm:$0xff]
      %v353 = vld [vmem:[%s257 + $0x2a0] sm:$0xff]
      %v354 = vld [vmem:[%s257 + $0x2a8] sm:$0xff]
      %v355 = vld [vmem:[%s257 + $0x2b0] sm:$0xff]
      %v356 = vld [vmem:[%s257 + $0x2b8] sm:$0xff]
      %v357 = vld [vmem:[%s257 + $0x2c0] sm:$0xff]
      %v358 = vld [vmem:[%s257 + $0x2c8] sm:$0xff]
      %v359 = vld [vmem:[%s257 + $0x2d0] sm:$0xff]
      %v360 = vld [vmem:[%s257 + $0x2d8] sm:$0xff]
      %v361 = vld [vmem:[%s257 + $0x2e0] sm:$0xff]
      %v362 = vld [vmem:[%s257 + $0x2e8] sm:$0xff]
      %v363 = vld [vmem:[%s257 + $0x2f0] sm:$0xff]
      %v364 = vld [vmem:[%s257 + $0x2f8] sm:$0xff]
      %v365 = vld [vmem:[%s257 + $0x300] sm:$0xff]
      %v366 = vld [vmem:[%s257 + $0x308] sm:$0xff]
      %v367 = vld [vmem:[%s257 + $0x310] sm:$0xff]
      %v368 = vld [vmem:[%s257 + $0x318] sm:$0xff]
      %v369 = vld [vmem:[%s257 + $0x320] sm:$0xff]
      %v370 = vld [vmem:[%s257 + $0x328] sm:$0xff]
      %v371 = vld [vmem:[%s257 + $0x330] sm:$0xff]
      %v372 = vld [vmem:[%s257 + $0x338] sm:$0xff]
      %v373 = vld [vmem:[%s257 + $0x340] sm:$0xff]
      %v374 = vld [vmem:[%s257 + $0x348] sm:$0xff]
      %v375 = vld [vmem:[%s257 + $0x350] sm:$0xff]
      %v376 = vld [vmem:[%s257 + $0x358] sm:$0xff]
      %v377 = vld [vmem:[%s257 + $0x360] sm:$0xff]
      %v378 = vld [vmem:[%s257 + $0x368] sm:$0xff]
      %v379 = vld [vmem:[%s257 + $0x370] sm:$0xff]
      %v380 = vld [vmem:[%s257 + $0x378] sm:$0xff]
      %v381 = vld [vmem:[%s257 + $0x380] sm:$0xff]
      %v382 = vld [vmem:[%s257 + $0x388] sm:$0xff]
      %v383 = vld [vmem:[%s257 + $0x390] sm:$0xff]
      %v384 = vld [vmem:[%s257 + $0x398] sm:$0xff]
      %v385 = vld [vmem:[%s257 + $0x3a0] sm:$0xff]
      %v386 = vld [vmem:[%s257 + $0x3a8] sm:$0xff]
      %v387 = vld [vmem:[%s257 + $0x3b0] sm:$0xff]
      %v388 = vld [vmem:[%s257 + $0x3b8] sm:$0xff]
      %v389 = vld [vmem:[%s257 + $0x3c0] sm:$0xff]
      %v390 = vld [vmem:[%s257 + $0x3c8] sm:$0xff]
      %v391 = vld [vmem:[%s257 + $0x3d0] sm:$0xff]
      %v392 = vld [vmem:[%s257 + $0x3d8] sm:$0xff]
      %v393 = vld [vmem:[%s257 + $0x3e0] sm:$0xff]
      %v394 = vld [vmem:[%s257 + $0x3e8] sm:$0xff]
      %v395 = vld [vmem:[%s257 + $0x3f0] sm:$0xff]
      %v396 = vld [vmem:[%s257 + $0x3f8] sm:$0xff]
      %v397 = vld [vmem:[%s257 + $0x400] sm:$0xff]
      %v398 = vld [vmem:[%s257 + $0x408] sm:$0xff]
      %v399 = vld [vmem:[%s257 + $0x410] sm:$0xff]
      %v400 = vld [vmem:[%s257 + $0x418] sm:$0xff]
      %v401 = vld [vmem:[%s257 + $0x420] sm:$0xff]
      %v402 = vld [vmem:[%s257 + $0x428] sm:$0xff]
      %v403 = vld [vmem:[%s257 + $0x430] sm:$0xff]
      %v404 = vld [vmem:[%s257 + $0x438] sm:$0xff]
      %v405 = vld [vmem:[%s257 + $0x440] sm:$0xff]
      %v406 = vld [vmem:[%s257 + $0x448] sm:$0xff]
      %v407 = vld [vmem:[%s257 + $0x450] sm:$0xff]
      %v408 = vld [vmem:[%s257 + $0x458] sm:$0xff]
      %v409 = vld [vmem:[%s257 + $0x460] sm:$0xff]
      %v410 = vld [vmem:[%s257 + $0x468] sm:$0xff]
      %v411 = vld [vmem:[%s257 + $0x470] sm:$0xff]
      %v412 = vld [vmem:[%s257 + $0x478] sm:$0xff]
      %v413 = vld [vmem:[%s257 + $0x480] sm:$0xff]
      %v414 = vld [vmem:[%s257 + $0x488] sm:$0xff]
      %v415 = vld [vmem:[%s257 + $0x490] sm:$0xff]
      %v416 = vld [vmem:[%s257 + $0x498] sm:$0xff]
      %v417 = vld [vmem:[%s257 + $0x4a0] sm:$0xff]
      %v418 = vld [vmem:[%s257 + $0x4a8] sm:$0xff]
      %v419 = vld [vmem:[%s257 + $0x4b0] sm:$0xff]
      %v420 = vld [vmem:[%s257 + $0x4b8] sm:$0xff]
      %v421 = vld [vmem:[%s257 + $0x4c0] sm:$0xff]
      %v422 = vld [vmem:[%s257 + $0x4c8] sm:$0xff]
      %v423 = vld [vmem:[%s257 + $0x4d0] sm:$0xff]
      %v424 = vld [vmem:[%s257 + $0x4d8] sm:$0xff]
      %v425 = vld [vmem:[%s257 + $0x4e0] sm:$0xff]
      %v426 = vld [vmem:[%s257 + $0x4e8] sm:$0xff]
      %v427 = vld [vmem:[%s257 + $0x4f0] sm:$0xff]
      %v428 = vld [vmem:[%s257 + $0x4f8] sm:$0xff]
      %v429 = vld [vmem:[%s257 + $0x500] sm:$0xff]
      %v430 = vld [vmem:[%s257 + $0x508] sm:$0xff]
      %v431 = vld [vmem:[%s257 + $0x510] sm:$0xff]
      %v432 = vld [vmem:[%s257 + $0x518] sm:$0xff]
      %v433 = vld [vmem:[%s257 + $0x520] sm:$0xff]
      %v434 = vld [vmem:[%s257 + $0x528] sm:$0xff]
      %v435 = vld [vmem:[%s257 + $0x530] sm:$0xff]
      %v436 = vld [vmem:[%s257 + $0x538] sm:$0xff]
      %v437 = vld [vmem:[%s257 + $0x540] sm:$0xff]
      %v438 = vld [vmem:[%s257 + $0x548] sm:$0xff]
      %v439 = vld [vmem:[%s257 + $0x550] sm:$0xff]
      %v440 = vld [vmem:[%s257 + $0x558] sm:$0xff]
      %v441 = vld [vmem:[%s257 + $0x560] sm:$0xff]
      %v442 = vld [vmem:[%s257 + $0x568] sm:$0xff]
      %v443 = vld [vmem:[%s257 + $0x570] sm:$0xff]
      %v444 = vld [vmem:[%s257 + $0x578] sm:$0xff]
      %v445 = vld [vmem:[%s257 + $0x580] sm:$0xff]
      %v446 = vld [vmem:[%s257 + $0x588] sm:$0xff]
      %v447 = vld [vmem:[%s257 + $0x590] sm:$0xff]
      %v448 = vld [vmem:[%s257 + $0x598] sm:$0xff]
      %v449 = vld [vmem:[%s257 + $0x5a0] sm:$0xff]
      %v450 = vld [vmem:[%s257 + $0x5a8] sm:$0xff]
      %v451 = vld [vmem:[%s257 + $0x5b0] sm:$0xff]
      %v452 = vld [vmem:[%s257 + $0x5b8] sm:$0xff]
      %v453 = vld [vmem:[%s257 + $0x5c0] sm:$0xff]
      %v454 = vld [vmem:[%s257 + $0x5c8] sm:$0xff]
      %v455 = vld [vmem:[%s257 + $0x5d0] sm:$0xff]
      %v456 = vld [vmem:[%s257 + $0x5d8] sm:$0xff]
      %v457 = vld [vmem:[%s257 + $0x5e0] sm:$0xff]
      %v458 = vld [vmem:[%s257 + $0x5e8] sm:$0xff]
      %v459 = vld [vmem:[%s257 + $0x5f0] sm:$0xff]
      %v460 = vld [vmem:[%s257 + $0x5f8] sm:$0xff]
      %v461 = vld [vmem:[%s257 + $0x600] sm:$0xff]
      %v462 = vld [vmem:[%s257 + $0x608] sm:$0xff]
      %v463 = vld [vmem:[%s257 + $0x610] sm:$0xff]
      %v464 = vld [vmem:[%s257 + $0x618] sm:$0xff]
      %v465 = vld [vmem:[%s257 + $0x620] sm:$0xff]
      %v466 = vld [vmem:[%s257 + $0x628] sm:$0xff]
      %v467 = vld [vmem:[%s257 + $0x630] sm:$0xff]
      %v468 = vld [vmem:[%s257 + $0x638] sm:$0xff]
      %v469 = vld [vmem:[%s257 + $0x640] sm:$0xff]
      %v470 = vld [vmem:[%s257 + $0x648] sm:$0xff]
      %v471 = vld [vmem:[%s257 + $0x650] sm:$0xff]
      %v472 = vld [vmem:[%s257 + $0x658] sm:$0xff]
      %v473 = vld [vmem:[%s257 + $0x660] sm:$0xff]
      %v474 = vld [vmem:[%s257 + $0x668] sm:$0xff]
      %v475 = vld [vmem:[%s257 + $0x670] sm:$0xff]
      %v476 = vld [vmem:[%s257 + $0x678] sm:$0xff]
      %v477 = vld [vmem:[%s257 + $0x680] sm:$0xff]
      %v478 = vld [vmem:[%s257 + $0x688] sm:$0xff]
      %v479 = vld [vmem:[%s257 + $0x690] sm:$0xff]
      %v480 = vld [vmem:[%s257 + $0x698] sm:$0xff]
      %v481 = vld [vmem:[%s257 + $0x6a0] sm:$0xff]
      %v482 = vld [vmem:[%s257 + $0x6a8] sm:$0xff]
      %v483 = vld [vmem:[%s257 + $0x6b0] sm:$0xff]
      %v484 = vld [vmem:[%s257 + $0x6b8] sm:$0xff]
      %v485 = vld [vmem:[%s257 + $0x6c0] sm:$0xff]
      %v486 = vld [vmem:[%s257 + $0x6c8] sm:$0xff]
      %v487 = vld [vmem:[%s257 + $0x6d0] sm:$0xff]
      %v488 = vld [vmem:[%s257 + $0x6d8] sm:$0xff]
      %v489 = vld [vmem:[%s257 + $0x6e0] sm:$0xff]
      %v490 = vld [vmem:[%s257 + $0x6e8] sm:$0xff]
      %v491 = vld [vmem:[%s257 + $0x6f0] sm:$0xff]
      %v492 = vld [vmem:[%s257 + $0x6f8] sm:$0xff]
      %v493 = vld [vmem:[%s257 + $0x700] sm:$0xff]
      %v494 = vld [vmem:[%s257 + $0x708] sm:$0xff]
      %v495 = vld [vmem:[%s257 + $0x710] sm:$0xff]
      %v496 = vld [vmem:[%s257 + $0x718] sm:$0xff]
      %v497 = vld [vmem:[%s257 + $0x720] sm:$0xff]
      %v498 = vld [vmem:[%s257 + $0x728] sm:$0xff]
      %v499 = vld [vmem:[%s257 + $0x730] sm:$0xff]
      %v500 = vld [vmem:[%s257 + $0x738] sm:$0xff]
      %v501 = vld [vmem:[%s257 + $0x740] sm:$0xff]
      %v502 = vld [vmem:[%s257 + $0x748] sm:$0xff]
      %v503 = vld [vmem:[%s257 + $0x750] sm:$0xff]
      %v504 = vld [vmem:[%s257 + $0x758] sm:$0xff]
      %v505 = vld [vmem:[%s257 + $0x760] sm:$0xff]
      %v506 = vld [vmem:[%s257 + $0x768] sm:$0xff]
      %v507 = vld [vmem:[%s257 + $0x770] sm:$0xff]
      %v508 = vld [vmem:[%s257 + $0x778] sm:$0xff]
      %v509 = vld [vmem:[%s257 + $0x780] sm:$0xff]
      %v510 = vld [vmem:[%s257 + $0x788] sm:$0xff]
      %v511 = vld [vmem:[%s257 + $0x790] sm:$0xff]
      %v512 = vld [vmem:[%s257 + $0x798] sm:$0xff]
      %v513 = vld [vmem:[%s257 + $0x7a0] sm:$0xff]
      %v514 = vld [vmem:[%s257 + $0x7a8] sm:$0xff]
      %v515 = vld [vmem:[%s257 + $0x7b0] sm:$0xff]
      %v516 = vld [vmem:[%s257 + $0x7b8] sm:$0xff]
      %v517 = vld [vmem:[%s257 + $0x7c0] sm:$0xff]
      %v518 = vld [vmem:[%s257 + $0x7c8] sm:$0xff]
      %v519 = vld [vmem:[%s257 + $0x7d0] sm:$0xff]
      %v520 = vld [vmem:[%s257 + $0x7d8] sm:$0xff]
      %v521 = vld [vmem:[%s257 + $0x7e0] sm:$0xff]
      %v522 = vld [vmem:[%s257 + $0x7e8] sm:$0xff]
      %v523 = vld [vmem:[%s257 + $0x7f0] sm:$0xff]
      %v524 = vld [vmem:[%s257 + $0x7f8] sm:$0xff]
      %v525 = vld [vmem:[%s257 + $0x800] sm:$0xff]
      %v526 = vld [vmem:[%s257 + $0x808] sm:$0xff]
      %v527 = vld [vmem:[%s257 + $0x810] sm:$0xff]
      %v528 = vld [vmem:[%s257 + $0x818] sm:$0xff]
      %v529 = vld [vmem:[%s257 + $0x820] sm:$0xff]
      %v530 = vld [vmem:[%s257 + $0x828] sm:$0xff]
      %v531 = vld [vmem:[%s257 + $0x830] sm:$0xff]
      %v532 = vld [vmem:[%s257 + $0x838] sm:$0xff]
      %v533 = vld [vmem:[%s257 + $0x840] sm:$0xff]
      %v534 = vld [vmem:[%s257 + $0x848] sm:$0xff]
      %v535 = vld [vmem:[%s257 + $0x850] sm:$0xff]
      %v536 = vld [vmem:[%s257 + $0x858] sm:$0xff]
      %v537 = vld [vmem:[%s257 + $0x860] sm:$0xff]
      %v538 = vld [vmem:[%s257 + $0x868] sm:$0xff]
      %v539 = vld [vmem:[%s257 + $0x870] sm:$0xff]
      %v540 = vld [vmem:[%s257 + $0x878] sm:$0xff]
      %v541 = vld [vmem:[%s257 + $0x880] sm:$0xff]
      %v542 = vld [vmem:[%s257 + $0x888] sm:$0xff]
      %v543 = vld [vmem:[%s257 + $0x890] sm:$0xff]
      %v544 = vld [vmem:[%s257 + $0x898] sm:$0xff]
      %v545 = vld [vmem:[%s257 + $0x8a0] sm:$0xff]
      %v546 = vld [vmem:[%s257 + $0x8a8] sm:$0xff]
      %v547 = vld [vmem:[%s257 + $0x8b0] sm:$0xff]
      %v548 = vld [vmem:[%s257 + $0x8b8] sm:$0xff]
      %v549 = vld [vmem:[%s257 + $0x8c0] sm:$0xff]
      %v550 = vld [vmem:[%s257 + $0x8c8] sm:$0xff]
      %v551 = vld [vmem:[%s257 + $0x8d0] sm:$0xff]
      %v552 = vld [vmem:[%s257 + $0x8d8] sm:$0xff]
      %v553 = vld [vmem:[%s257 + $0x8e0] sm:$0xff]
      %v554 = vld [vmem:[%s257 + $0x8e8] sm:$0xff]
      %v555 = vld [vmem:[%s257 + $0x8f0] sm:$0xff]
      %v556 = vld [vmem:[%s257 + $0x8f8] sm:$0xff]
      %v557 = vld [vmem:[%s257 + $0x900] sm:$0xff]
      %v558 = vld [vmem:[%s257 + $0x908] sm:$0xff]
      %v559 = vld [vmem:[%s257 + $0x910] sm:$0xff]
      %v560 = vld [vmem:[%s257 + $0x918] sm:$0xff]
      %v561 = vld [vmem:[%s257 + $0x920] sm:$0xff]
      %v562 = vld [vmem:[%s257 + $0x928] sm:$0xff]
      %v563 = vld [vmem:[%s257 + $0x930] sm:$0xff]
      %v564 = vld [vmem:[%s257 + $0x938] sm:$0xff]
      %v565 = vld [vmem:[%s257 + $0x940] sm:$0xff]
      %v566 = vld [vmem:[%s257 + $0x948] sm:$0xff]
      %v567 = vld [vmem:[%s257 + $0x950] sm:$0xff]
      %v568 = vld [vmem:[%s257 + $0x958] sm:$0xff]
      %v569 = vld [vmem:[%s257 + $0x960] sm:$0xff]
      %v570 = vld [vmem:[%s257 + $0x968] sm:$0xff]
      %v571 = vld [vmem:[%s257 + $0x970] sm:$0xff]
      %v572 = vld [vmem:[%s257 + $0x978] sm:$0xff]
      %v573 = vld [vmem:[%s257 + $0x980] sm:$0xff]
      %v574 = vld [vmem:[%s257 + $0x988] sm:$0xff]
      %v575 = vld [vmem:[%s257 + $0x990] sm:$0xff]
      %v576 = vld [vmem:[%s257 + $0x998] sm:$0xff]
      %v577 = vld [vmem:[%s257 + $0x9a0] sm:$0xff]
      %v578 = vld [vmem:[%s257 + $0x9a8] sm:$0xff]
      %v579 = vld [vmem:[%s257 + $0x9b0] sm:$0xff]
      %v580 = vld [vmem:[%s257 + $0x9b8] sm:$0xff]
      %v581 = vld [vmem:[%s257 + $0x9c0] sm:$0xff]
      %v582 = vld [vmem:[%s257 + $0x9c8] sm:$0xff]
      %v583 = vld [vmem:[%s257 + $0x9d0] sm:$0xff]
      %v584 = vld [vmem:[%s257 + $0x9d8] sm:$0xff]
      %v585 = vld [vmem:[%s257 + $0x9e0] sm:$0xff]
      %v586 = vld [vmem:[%s257 + $0x9e8] sm:$0xff]
      %v587 = vld [vmem:[%s257 + $0x9f0] sm:$0xff]
      %v588 = vld [vmem:[%s257 + $0x9f8] sm:$0xff]
      %v589 = vld [vmem:[%s257 + $0xa00] sm:$0xff]
      %v590 = vld [vmem:[%s257 + $0xa08] sm:$0xff]
      %v591 = vld [vmem:[%s257 + $0xa10] sm:$0xff]
      %v592 = vld [vmem:[%s257 + $0xa18] sm:$0xff]
      %v593 = vld [vmem:[%s257 + $0xa20] sm:$0xff]
      %v594 = vld [vmem:[%s257 + $0xa28] sm:$0xff]
      %v595 = vld [vmem:[%s257 + $0xa30] sm:$0xff]
      %v596 = vld [vmem:[%s257 + $0xa38] sm:$0xff]
      %v597 = vld [vmem:[%s257 + $0xa40] sm:$0xff]
      %v598 = vld [vmem:[%s257 + $0xa48] sm:$0xff]
      %v599 = vld [vmem:[%s257 + $0xa50] sm:$0xff]
      %v600 = vld [vmem:[%s257 + $0xa58] sm:$0xff]
      %v601 = vld [vmem:[%s257 + $0xa60] sm:$0xff]
      %v602 = vld [vmem:[%s257 + $0xa68] sm:$0xff]
      %v603 = vld [vmem:[%s257 + $0xa70] sm:$0xff]
      %v604 = vld [vmem:[%s257 + $0xa78] sm:$0xff]
      %v605 = vld [vmem:[%s257 + $0xa80] sm:$0xff]
      %v606 = vld [vmem:[%s257 + $0xa88] sm:$0xff]
      %v607 = vld [vmem:[%s257 + $0xa90] sm:$0xff]
      %v608 = vld [vmem:[%s257 + $0xa98] sm:$0xff]
      %v609 = vld [vmem:[%s257 + $0xaa0] sm:$0xff]
      %v610 = vld [vmem:[%s257 + $0xaa8] sm:$0xff]
      %v611 = vld [vmem:[%s257 + $0xab0] sm:$0xff]
      %v612 = vld [vmem:[%s257 + $0xab8] sm:$0xff]
      %v613 = vld [vmem:[%s257 + $0xac0] sm:$0xff]
      %v614 = vld [vmem:[%s257 + $0xac8] sm:$0xff]
      %v615 = vld [vmem:[%s257 + $0xad0] sm:$0xff]
      %v616 = vld [vmem:[%s257 + $0xad8] sm:$0xff]
      %v617 = vld [vmem:[%s257 + $0xae0] sm:$0xff]
      %v618 = vld [vmem:[%s257 + $0xae8] sm:$0xff]
      %v619 = vld [vmem:[%s257 + $0xaf0] sm:$0xff]
      %v620 = vld [vmem:[%s257 + $0xaf8] sm:$0xff]
      %v621 = vld [vmem:[%s257 + $0xb00] sm:$0xff]
      %v622 = vld [vmem:[%s257 + $0xb08] sm:$0xff]
      %v623 = vld [vmem:[%s257 + $0xb10] sm:$0xff]
      %v624 = vld [vmem:[%s257 + $0xb18] sm:$0xff]
      %v625 = vld [vmem:[%s257 + $0xb20] sm:$0xff]
      %v626 = vld [vmem:[%s257 + $0xb28] sm:$0xff]
      %v627 = vld [vmem:[%s257 + $0xb30] sm:$0xff]
      %v628 = vld [vmem:[%s257 + $0xb38] sm:$0xff]
      %v629 = vld [vmem:[%s257 + $0xb40] sm:$0xff]
      %v630 = vld [vmem:[%s257 + $0xb48] sm:$0xff]
      %v631 = vld [vmem:[%s257 + $0xb50] sm:$0xff]
      %v632 = vld [vmem:[%s257 + $0xb58] sm:$0xff]
      %v633 = vld [vmem:[%s257 + $0xb60] sm:$0xff]
      %v634 = vld [vmem:[%s257 + $0xb68] sm:$0xff]
      %v635 = vld [vmem:[%s257 + $0xb70] sm:$0xff]
      %v636 = vld [vmem:[%s257 + $0xb78] sm:$0xff]
      %v637 = vld [vmem:[%s257 + $0xb80] sm:$0xff]
      %v638 = vld [vmem:[%s257 + $0xb88] sm:$0xff]
      %v639 = vld [vmem:[%s257 + $0xb90] sm:$0xff]
      %v640 = vld [vmem:[%s257 + $0xb98] sm:$0xff]
      %v641 = vld [vmem:[%s257 + $0xba0] sm:$0xff]
      %v642 = vld [vmem:[%s257 + $0xba8] sm:$0xff]
      %v643 = vld [vmem:[%s257 + $0xbb0] sm:$0xff]
      %v644 = vld [vmem:[%s257 + $0xbb8] sm:$0xff]
      %v645 = vld [vmem:[%s257 + $0xbc0] sm:$0xff]
      %v646 = vld [vmem:[%s257 + $0xbc8] sm:$0xff]
      %v647 = vld [vmem:[%s257 + $0xbd0] sm:$0xff]
      %v648 = vld [vmem:[%s257 + $0xbd8] sm:$0xff]
      %v649 = vld [vmem:[%s257 + $0xbe0] sm:$0xff]
      %v650 = vld [vmem:[%s257 + $0xbe8] sm:$0xff]
      %v651 = vld [vmem:[%s257 + $0xbf0] sm:$0xff]
      %v652 = vld [vmem:[%s257 + $0xbf8] sm:$0xff]
      %v653 = vld [vmem:[%s257 + $0xc00] sm:$0xff]
      %v654 = vld [vmem:[%s257 + $0xc08] sm:$0xff]
      %v655 = vld [vmem:[%s257 + $0xc10] sm:$0xff]
      %v656 = vld [vmem:[%s257 + $0xc18] sm:$0xff]
      %v657 = vld [vmem:[%s257 + $0xc20] sm:$0xff]
      %v658 = vld [vmem:[%s257 + $0xc28] sm:$0xff]
      %v659 = vld [vmem:[%s257 + $0xc30] sm:$0xff]
      %v660 = vld [vmem:[%s257 + $0xc38] sm:$0xff]
      %v661 = vld [vmem:[%s257 + $0xc40] sm:$0xff]
      %v662 = vld [vmem:[%s257 + $0xc48] sm:$0xff]
      %v663 = vld [vmem:[%s257 + $0xc50] sm:$0xff]
      %v664 = vld [vmem:[%s257 + $0xc58] sm:$0xff]
      %v665 = vld [vmem:[%s257 + $0xc60] sm:$0xff]
      %v666 = vld [vmem:[%s257 + $0xc68] sm:$0xff]
      %v667 = vld [vmem:[%s257 + $0xc70] sm:$0xff]
      %v668 = vld [vmem:[%s257 + $0xc78] sm:$0xff]
      %v669 = vld [vmem:[%s257 + $0xc80] sm:$0xff]
      %v670 = vld [vmem:[%s257 + $0xc88] sm:$0xff]
      %v671 = vld [vmem:[%s257 + $0xc90] sm:$0xff]
      %v672 = vld [vmem:[%s257 + $0xc98] sm:$0xff]
      %v673 = vld [vmem:[%s257 + $0xca0] sm:$0xff]
      %v674 = vld [vmem:[%s257 + $0xca8] sm:$0xff]
      %v675 = vld [vmem:[%s257 + $0xcb0] sm:$0xff]
      %v676 = vld [vmem:[%s257 + $0xcb8] sm:$0xff]
      %v677 = vld [vmem:[%s257 + $0xcc0] sm:$0xff]
      %v678 = vld [vmem:[%s257 + $0xcc8] sm:$0xff]
      %v679 = vld [vmem:[%s257 + $0xcd0] sm:$0xff]
      %v680 = vld [vmem:[%s257 + $0xcd8] sm:$0xff]
      %v681 = vld [vmem:[%s257 + $0xce0] sm:$0xff]
      %v682 = vld [vmem:[%s257 + $0xce8] sm:$0xff]
      %v683 = vld [vmem:[%s257 + $0xcf0] sm:$0xff]
      %v684 = vld [vmem:[%s257 + $0xcf8] sm:$0xff]
      %v685 = vld [vmem:[%s257 + $0xd00] sm:$0xff]
      %v686 = vld [vmem:[%s257 + $0xd08] sm:$0xff]
      %v687 = vld [vmem:[%s257 + $0xd10] sm:$0xff]
      %v688 = vld [vmem:[%s257 + $0xd18] sm:$0xff]
      %v689 = vld [vmem:[%s257 + $0xd20] sm:$0xff]
      %v690 = vld [vmem:[%s257 + $0xd28] sm:$0xff]
      %v691 = vld [vmem:[%s257 + $0xd30] sm:$0xff]
      %v692 = vld [vmem:[%s257 + $0xd38] sm:$0xff]
      %v693 = vld [vmem:[%s257 + $0xd40] sm:$0xff]
      %v694 = vld [vmem:[%s257 + $0xd48] sm:$0xff]
      %v695 = vld [vmem:[%s257 + $0xd50] sm:$0xff]
      %v696 = vld [vmem:[%s257 + $0xd58] sm:$0xff]
      %v697 = vld [vmem:[%s257 + $0xd60] sm:$0xff]
      %v698 = vld [vmem:[%s257 + $0xd68] sm:$0xff]
      %v699 = vld [vmem:[%s257 + $0xd70] sm:$0xff]
      %v700 = vld [vmem:[%s257 + $0xd78] sm:$0xff]
      %v701 = vld [vmem:[%s257 + $0xd80] sm:$0xff]
      %v702 = vld [vmem:[%s257 + $0xd88] sm:$0xff]
      %v703 = vld [vmem:[%s257 + $0xd90] sm:$0xff]
      %v704 = vld [vmem:[%s257 + $0xd98] sm:$0xff]
      %v705 = vld [vmem:[%s257 + $0xda0] sm:$0xff]
      %v706 = vld [vmem:[%s257 + $0xda8] sm:$0xff]
      %v707 = vld [vmem:[%s257 + $0xdb0] sm:$0xff]
      %v708 = vld [vmem:[%s257 + $0xdb8] sm:$0xff]
      %v709 = vld [vmem:[%s257 + $0xdc0] sm:$0xff]
      %v710 = vld [vmem:[%s257 + $0xdc8] sm:$0xff]
      %v711 = vld [vmem:[%s257 + $0xdd0] sm:$0xff]
      %v712 = vld [vmem:[%s257 + $0xdd8] sm:$0xff]
      %v713 = vld [vmem:[%s257 + $0xde0] sm:$0xff]
      %v714 = vld [vmem:[%s257 + $0xde8] sm:$0xff]
      %v715 = vld [vmem:[%s257 + $0xdf0] sm:$0xff]
      %v716 = vld [vmem:[%s257 + $0xdf8] sm:$0xff]
      %v717 = vld [vmem:[%s257 + $0xe00] sm:$0xff]
      %v718 = vld [vmem:[%s257 + $0xe08] sm:$0xff]
      %v719 = vld [vmem:[%s1] sm:$0xff]
      %v720 = vld [vmem:[%s1 + $0x8] sm:$0xff]
      %v721 = vld [vmem:[%s1 + $0x10] sm:$0xff]
      %v722 = vld [vmem:[%s1 + $0x18] sm:$0x1]
      %v727 = vlaneseq
      %v728 = vshrl.u32 %v727, 7
      %v729 = vsub.s32 0, %v728
      %v730 = vrot.slane %v719, %v729
      %v731 = vlaneseq
      %v732 = vshrl.u32 %v731, 7
      %v733 = vsub.s32 1, %v732
      %v734 = vrot.slane %v719, %v733
      %v735 = vlaneseq
      %v736 = vshrl.u32 %v735, 7
      %v737 = vsub.s32 2, %v736
      %v738 = vrot.slane %v719, %v737
      %v739 = vlaneseq
      %v740 = vshrl.u32 %v739, 7
      %v741 = vsub.s32 3, %v740
      %v742 = vrot.slane %v719, %v741
      %v743 = vlaneseq
      %v744 = vshrl.u32 %v743, 7
      %v745 = vsub.s32 4, %v744
      %v746 = vrot.slane %v719, %v745
      %v747 = vlaneseq
      %v748 = vshrl.u32 %v747, 7
      %v749 = vsub.s32 5, %v748
      %v750 = vrot.slane %v719, %v749
      %v751 = vlaneseq
      %v752 = vshrl.u32 %v751, 7
      %v753 = vsub.s32 6, %v752
      %v754 = vrot.slane %v719, %v753
      %v755 = vlaneseq
      %v756 = vshrl.u32 %v755, 7
      %v757 = vsub.s32 7, %v756
      %v758 = vrot.slane %v719, %v757
      %v759 = vlaneseq
      %v760 = vshrl.u32 %v759, 7
      %v761 = vsub.s32 0, %v760
      %v762 = vrot.slane %v720, %v761
      %v763 = vlaneseq
      %v764 = vshrl.u32 %v763, 7
      %v765 = vsub.s32 1, %v764
      %v766 = vrot.slane %v720, %v765
      %v767 = vlaneseq
      %v768 = vshrl.u32 %v767, 7
      %v769 = vsub.s32 2, %v768
      %v770 = vrot.slane %v720, %v769
      %v771 = vlaneseq
      %v772 = vshrl.u32 %v771, 7
      %v773 = vsub.s32 3, %v772
      %v774 = vrot.slane %v720, %v773
      %v775 = vlaneseq
      %v776 = vshrl.u32 %v775, 7
      %v777 = vsub.s32 4, %v776
      %v778 = vrot.slane %v720, %v777
      %v779 = vlaneseq
      %v780 = vshrl.u32 %v779, 7
      %v781 = vsub.s32 5, %v780
      %v782 = vrot.slane %v720, %v781
      %v783 = vlaneseq
      %v784 = vshrl.u32 %v783, 7
      %v785 = vsub.s32 6, %v784
      %v786 = vrot.slane %v720, %v785
      %v787 = vlaneseq
      %v788 = vshrl.u32 %v787, 7
      %v789 = vsub.s32 7, %v788
      %v790 = vrot.slane %v720, %v789
      %v791 = vlaneseq
      %v792 = vshrl.u32 %v791, 7
      %v793 = vsub.s32 0, %v792
      %v794 = vrot.slane %v721, %v793
      %v795 = vlaneseq
      %v796 = vshrl.u32 %v795, 7
      %v797 = vsub.s32 1, %v796
      %v798 = vrot.slane %v721, %v797
      %v799 = vlaneseq
      %v800 = vshrl.u32 %v799, 7
      %v801 = vsub.s32 2, %v800
      %v802 = vrot.slane %v721, %v801
      %v803 = vlaneseq
      %v804 = vshrl.u32 %v803, 7
      %v805 = vsub.s32 3, %v804
      %v806 = vrot.slane %v721, %v805
      %v807 = vlaneseq
      %v808 = vshrl.u32 %v807, 7
      %v809 = vsub.s32 4, %v808
      %v810 = vrot.slane %v721, %v809
      %v811 = vlaneseq
      %v812 = vshrl.u32 %v811, 7
      %v813 = vsub.s32 5, %v812
      %v814 = vrot.slane %v721, %v813
      %v815 = vlaneseq
      %v816 = vshrl.u32 %v815, 7
      %v817 = vsub.s32 6, %v816
      %v818 = vrot.slane %v721, %v817
      %v819 = vlaneseq
      %v820 = vshrl.u32 %v819, 7
      %v821 = vsub.s32 7, %v820
      %v822 = vrot.slane %v721, %v821
      %v823 = vlaneseq
      %v824 = vshrl.u32 %v823, 7
      %v825 = vsub.s32 0, %v824
      %v826 = vrot.slane %v722, %v825
      %v852 = vmul.f32 %v269, %v730
      %v853 = vmul.f32 %v270, %v734
      %v854 = vmul.f32 %v271, %v738
      %v855 = vmul.f32 %v272, %v742
      %v856 = vmul.f32 %v273, %v746
      %v857 = vmul.f32 %v274, %v750
      %v858 = vmul.f32 %v275, %v754
      %v859 = vmul.f32 %v276, %v758
      %v860 = vmul.f32 %v277, %v762
      %v861 = vmul.f32 %v278, %v766
      %v862 = vmul.f32 %v279, %v770
      %v863 = vmul.f32 %v280, %v774
      %v864 = vmul.f32 %v281, %v778
      %v865 = vmul.f32 %v282, %v782
      %v866 = vmul.f32 %v283, %v786
      %v867 = vmul.f32 %v284, %v790
      %v868 = vmul.f32 %v285, %v794
      %v869 = vmul.f32 %v286, %v798
      %v870 = vmul.f32 %v287, %v802
      %v871 = vmul.f32 %v288, %v806
      %v872 = vmul.f32 %v289, %v810
      %v873 = vmul.f32 %v290, %v814
      %v874 = vmul.f32 %v291, %v818
      %v875 = vmul.f32 %v292, %v822
      %v876 = vmul.f32 %v293, %v826
      %v877 = vmul.f32 %v294, %v730
      %v878 = vmul.f32 %v295, %v734
      %v879 = vmul.f32 %v296, %v738
      %v880 = vmul.f32 %v297, %v742
      %v881 = vmul.f32 %v298, %v746
      %v882 = vmul.f32 %v299, %v750
      %v883 = vmul.f32 %v300, %v754
      %v884 = vmul.f32 %v301, %v758
      %v885 = vmul.f32 %v302, %v762
      %v886 = vmul.f32 %v303, %v766
      %v887 = vmul.f32 %v304, %v770
      %v888 = vmul.f32 %v305, %v774
      %v889 = vmul.f32 %v306, %v778
      %v890 = vmul.f32 %v307, %v782
      %v891 = vmul.f32 %v308, %v786
      %v892 = vmul.f32 %v309, %v790
      %v893 = vmul.f32 %v310, %v794
      %v894 = vmul.f32 %v311, %v798
      %v895 = vmul.f32 %v312, %v802
      %v896 = vmul.f32 %v313, %v806
      %v897 = vmul.f32 %v314, %v810
      %v898 = vmul.f32 %v315, %v814
      %v899 = vmul.f32 %v316, %v818
      %v900 = vmul.f32 %v317, %v822
      %v901 = vmul.f32 %v318, %v826
      %v902 = vmul.f32 %v319, %v730
      %v903 = vmul.f32 %v320, %v734
      %v904 = vmul.f32 %v321, %v738
      %v905 = vmul.f32 %v322, %v742
      %v906 = vmul.f32 %v323, %v746
      %v907 = vmul.f32 %v324, %v750
      %v908 = vmul.f32 %v325, %v754
      %v909 = vmul.f32 %v326, %v758
      %v910 = vmul.f32 %v327, %v762
      %v911 = vmul.f32 %v328, %v766
      %v912 = vmul.f32 %v329, %v770
      %v913 = vmul.f32 %v330, %v774
      %v914 = vmul.f32 %v331, %v778
      %v915 = vmul.f32 %v332, %v782
      %v916 = vmul.f32 %v333, %v786
      %v917 = vmul.f32 %v334, %v790
      %v918 = vmul.f32 %v335, %v794
      %v919 = vmul.f32 %v336, %v798
      %v920 = vmul.f32 %v337, %v802
      %v921 = vmul.f32 %v338, %v806
      %v922 = vmul.f32 %v339, %v810
      %v923 = vmul.f32 %v340, %v814
      %v924 = vmul.f32 %v341, %v818
      %v925 = vmul.f32 %v342, %v822
      %v926 = vmul.f32 %v343, %v826
      %v927 = vmul.f32 %v344, %v730
      %v928 = vmul.f32 %v345, %v734
      %v929 = vmul.f32 %v346, %v738
      %v930 = vmul.f32 %v347, %v742
      %v931 = vmul.f32 %v348, %v746
      %v932 = vmul.f32 %v349, %v750
      %v933 = vmul.f32 %v350, %v754
      %v934 = vmul.f32 %v351, %v758
      %v935 = vmul.f32 %v352, %v762
      %v936 = vmul.f32 %v353, %v766
      %v937 = vmul.f32 %v354, %v770
      %v938 = vmul.f32 %v355, %v774
      %v939 = vmul.f32 %v356, %v778
      %v940 = vmul.f32 %v357, %v782
      %v941 = vmul.f32 %v358, %v786
      %v942 = vmul.f32 %v359, %v790
      %v943 = vmul.f32 %v360, %v794
      %v944 = vmul.f32 %v361, %v798
      %v945 = vmul.f32 %v362, %v802
      %v946 = vmul.f32 %v363, %v806
      %v947 = vmul.f32 %v364, %v810
      %v948 = vmul.f32 %v365, %v814
      %v949 = vmul.f32 %v366, %v818
      %v950 = vmul.f32 %v367, %v822
      %v951 = vmul.f32 %v368, %v826
      %v952 = vmul.f32 %v369, %v730
      %v953 = vmul.f32 %v370, %v734
      %v954 = vmul.f32 %v371, %v738
      %v955 = vmul.f32 %v372, %v742
      %v956 = vmul.f32 %v373, %v746
      %v957 = vmul.f32 %v374, %v750
      %v958 = vmul.f32 %v375, %v754
      %v959 = vmul.f32 %v376, %v758
      %v960 = vmul.f32 %v377, %v762
      %v961 = vmul.f32 %v378, %v766
      %v962 = vmul.f32 %v379, %v770
      %v963 = vmul.f32 %v380, %v774
      %v964 = vmul.f32 %v381, %v778
      %v965 = vmul.f32 %v382, %v782
      %v966 = vmul.f32 %v383, %v786
      %v967 = vmul.f32 %v384, %v790
      %v968 = vmul.f32 %v385, %v794
      %v969 = vmul.f32 %v386, %v798
      %v970 = vmul.f32 %v387, %v802
      %v971 = vmul.f32 %v388, %v806
      %v972 = vmul.f32 %v389, %v810
      %v973 = vmul.f32 %v390, %v814
      %v974 = vmul.f32 %v391, %v818
      %v975 = vmul.f32 %v392, %v822
      %v976 = vmul.f32 %v393, %v826
      %v977 = vmul.f32 %v394, %v730
      %v978 = vmul.f32 %v395, %v734
      %v979 = vmul.f32 %v396, %v738
      %v980 = vmul.f32 %v397, %v742
      %v981 = vmul.f32 %v398, %v746
      %v982 = vmul.f32 %v399, %v750
      %v983 = vmul.f32 %v400, %v754
      %v984 = vmul.f32 %v401, %v758
      %v985 = vmul.f32 %v402, %v762
      %v986 = vmul.f32 %v403, %v766
      %v987 = vmul.f32 %v404, %v770
      %v988 = vmul.f32 %v405, %v774
      %v989 = vmul.f32 %v406, %v778
      %v990 = vmul.f32 %v407, %v782
      %v991 = vmul.f32 %v408, %v786
      %v992 = vmul.f32 %v409, %v790
      %v993 = vmul.f32 %v410, %v794
      %v994 = vmul.f32 %v411, %v798
      %v995 = vmul.f32 %v412, %v802
      %v996 = vmul.f32 %v413, %v806
      %v997 = vmul.f32 %v414, %v810
      %v998 = vmul.f32 %v415, %v814
      %v999 = vmul.f32 %v416, %v818
      %v1000 = vmul.f32 %v417, %v822
      %v1001 = vmul.f32 %v418, %v826
      %v1002 = vmul.f32 %v419, %v730
      %v1003 = vmul.f32 %v420, %v734
      %v1004 = vmul.f32 %v421, %v738
      %v1005 = vmul.f32 %v422, %v742
      %v1006 = vmul.f32 %v423, %v746
      %v1007 = vmul.f32 %v424, %v750
      %v1008 = vmul.f32 %v425, %v754
      %v1009 = vmul.f32 %v426, %v758
      %v1010 = vmul.f32 %v427, %v762
      %v1011 = vmul.f32 %v428, %v766
      %v1012 = vmul.f32 %v429, %v770
      %v1013 = vmul.f32 %v430, %v774
      %v1014 = vmul.f32 %v431, %v778
      %v1015 = vmul.f32 %v432, %v782
      %v1016 = vmul.f32 %v433, %v786
      %v1017 = vmul.f32 %v434, %v790
      %v1018 = vmul.f32 %v435, %v794
      %v1019 = vmul.f32 %v436, %v798
      %v1020 = vmul.f32 %v437, %v802
      %v1021 = vmul.f32 %v438, %v806
      %v1022 = vmul.f32 %v439, %v810
      %v1023 = vmul.f32 %v440, %v814
      %v1024 = vmul.f32 %v441, %v818
      %v1025 = vmul.f32 %v442, %v822
      %v1026 = vmul.f32 %v443, %v826
      %v1027 = vmul.f32 %v444, %v730
      %v1028 = vmul.f32 %v445, %v734
      %v1029 = vmul.f32 %v446, %v738
      %v1030 = vmul.f32 %v447, %v742
      %v1031 = vmul.f32 %v448, %v746
      %v1032 = vmul.f32 %v449, %v750
      %v1033 = vmul.f32 %v450, %v754
      %v1034 = vmul.f32 %v451, %v758
      %v1035 = vmul.f32 %v452, %v762
      %v1036 = vmul.f32 %v453, %v766
      %v1037 = vmul.f32 %v454, %v770
      %v1038 = vmul.f32 %v455, %v774
      %v1039 = vmul.f32 %v456, %v778
      %v1040 = vmul.f32 %v457, %v782
      %v1041 = vmul.f32 %v458, %v786
      %v1042 = vmul.f32 %v459, %v790
      %v1043 = vmul.f32 %v460, %v794
      %v1044 = vmul.f32 %v461, %v798
      %v1045 = vmul.f32 %v462, %v802
      %v1046 = vmul.f32 %v463, %v806
      %v1047 = vmul.f32 %v464, %v810
      %v1048 = vmul.f32 %v465, %v814
      %v1049 = vmul.f32 %v466, %v818
      %v1050 = vmul.f32 %v467, %v822
      %v1051 = vmul.f32 %v468, %v826
      %v1052 = vmul.f32 %v469, %v730
      %v1053 = vmul.f32 %v470, %v734
      %v1054 = vmul.f32 %v471, %v738
      %v1055 = vmul.f32 %v472, %v742
      %v1056 = vmul.f32 %v473, %v746
      %v1057 = vmul.f32 %v474, %v750
      %v1058 = vmul.f32 %v475, %v754
      %v1059 = vmul.f32 %v476, %v758
      %v1060 = vmul.f32 %v477, %v762
      %v1061 = vmul.f32 %v478, %v766
      %v1062 = vmul.f32 %v479, %v770
      %v1063 = vmul.f32 %v480, %v774
      %v1064 = vmul.f32 %v481, %v778
      %v1065 = vmul.f32 %v482, %v782
      %v1066 = vmul.f32 %v483, %v786
      %v1067 = vmul.f32 %v484, %v790
      %v1068 = vmul.f32 %v485, %v794
      %v1069 = vmul.f32 %v486, %v798
      %v1070 = vmul.f32 %v487, %v802
      %v1071 = vmul.f32 %v488, %v806
      %v1072 = vmul.f32 %v489, %v810
      %v1073 = vmul.f32 %v490, %v814
      %v1074 = vmul.f32 %v491, %v818
      %v1075 = vmul.f32 %v492, %v822
      %v1076 = vmul.f32 %v493, %v826
      %v1077 = vmul.f32 %v494, %v730
      %v1078 = vmul.f32 %v495, %v734
      %v1079 = vmul.f32 %v496, %v738
      %v1080 = vmul.f32 %v497, %v742
      %v1081 = vmul.f32 %v498, %v746
      %v1082 = vmul.f32 %v499, %v750
      %v1083 = vmul.f32 %v500, %v754
      %v1084 = vmul.f32 %v501, %v758
      %v1085 = vmul.f32 %v502, %v762
      %v1086 = vmul.f32 %v503, %v766
      %v1087 = vmul.f32 %v504, %v770
      %v1088 = vmul.f32 %v505, %v774
      %v1089 = vmul.f32 %v506, %v778
      %v1090 = vmul.f32 %v507, %v782
      %v1091 = vmul.f32 %v508, %v786
      %v1092 = vmul.f32 %v509, %v790
      %v1093 = vmul.f32 %v510, %v794
      %v1094 = vmul.f32 %v511, %v798
      %v1095 = vmul.f32 %v512, %v802
      %v1096 = vmul.f32 %v513, %v806
      %v1097 = vmul.f32 %v514, %v810
      %v1098 = vmul.f32 %v515, %v814
      %v1099 = vmul.f32 %v516, %v818
      %v1100 = vmul.f32 %v517, %v822
      %v1101 = vmul.f32 %v518, %v826
      %v1102 = vmul.f32 %v519, %v730
      %v1103 = vmul.f32 %v520, %v734
      %v1104 = vmul.f32 %v521, %v738
      %v1105 = vmul.f32 %v522, %v742
      %v1106 = vmul.f32 %v523, %v746
      %v1107 = vmul.f32 %v524, %v750
      %v1108 = vmul.f32 %v525, %v754
      %v1109 = vmul.f32 %v526, %v758
      %v1110 = vmul.f32 %v527, %v762
      %v1111 = vmul.f32 %v528, %v766
      %v1112 = vmul.f32 %v529, %v770
      %v1113 = vmul.f32 %v530, %v774
      %v1114 = vmul.f32 %v531, %v778
      %v1115 = vmul.f32 %v532, %v782
      %v1116 = vmul.f32 %v533, %v786
      %v1117 = vmul.f32 %v534, %v790
      %v1118 = vmul.f32 %v535, %v794
      %v1119 = vmul.f32 %v536, %v798
      %v1120 = vmul.f32 %v537, %v802
      %v1121 = vmul.f32 %v538, %v806
      %v1122 = vmul.f32 %v539, %v810
      %v1123 = vmul.f32 %v540, %v814
      %v1124 = vmul.f32 %v541, %v818
      %v1125 = vmul.f32 %v542, %v822
      %v1126 = vmul.f32 %v543, %v826
      %v1127 = vmul.f32 %v544, %v730
      %v1128 = vmul.f32 %v545, %v734
      %v1129 = vmul.f32 %v546, %v738
      %v1130 = vmul.f32 %v547, %v742
      %v1131 = vmul.f32 %v548, %v746
      %v1132 = vmul.f32 %v549, %v750
      %v1133 = vmul.f32 %v550, %v754
      %v1134 = vmul.f32 %v551, %v758
      %v1135 = vmul.f32 %v552, %v762
      %v1136 = vmul.f32 %v553, %v766
      %v1137 = vmul.f32 %v554, %v770
      %v1138 = vmul.f32 %v555, %v774
      %v1139 = vmul.f32 %v556, %v778
      %v1140 = vmul.f32 %v557, %v782
      %v1141 = vmul.f32 %v558, %v786
      %v1142 = vmul.f32 %v559, %v790
      %v1143 = vmul.f32 %v560, %v794
      %v1144 = vmul.f32 %v561, %v798
      %v1145 = vmul.f32 %v562, %v802
      %v1146 = vmul.f32 %v563, %v806
      %v1147 = vmul.f32 %v564, %v810
      %v1148 = vmul.f32 %v565, %v814
      %v1149 = vmul.f32 %v566, %v818
      %v1150 = vmul.f32 %v567, %v822
      %v1151 = vmul.f32 %v568, %v826
      %v1152 = vmul.f32 %v569, %v730
      %v1153 = vmul.f32 %v570, %v734
      %v1154 = vmul.f32 %v571, %v738
      %v1155 = vmul.f32 %v572, %v742
      %v1156 = vmul.f32 %v573, %v746
      %v1157 = vmul.f32 %v574, %v750
      %v1158 = vmul.f32 %v575, %v754
      %v1159 = vmul.f32 %v576, %v758
      %v1160 = vmul.f32 %v577, %v762
      %v1161 = vmul.f32 %v578, %v766
      %v1162 = vmul.f32 %v579, %v770
      %v1163 = vmul.f32 %v580, %v774
      %v1164 = vmul.f32 %v581, %v778
      %v1165 = vmul.f32 %v582, %v782
      %v1166 = vmul.f32 %v583, %v786
      %v1167 = vmul.f32 %v584, %v790
      %v1168 = vmul.f32 %v585, %v794
      %v1169 = vmul.f32 %v586, %v798
      %v1170 = vmul.f32 %v587, %v802
      %v1171 = vmul.f32 %v588, %v806
      %v1172 = vmul.f32 %v589, %v810
      %v1173 = vmul.f32 %v590, %v814
      %v1174 = vmul.f32 %v591, %v818
      %v1175 = vmul.f32 %v592, %v822
      %v1176 = vmul.f32 %v593, %v826
      %v1177 = vmul.f32 %v594, %v730
      %v1178 = vmul.f32 %v595, %v734
      %v1179 = vmul.f32 %v596, %v738
      %v1180 = vmul.f32 %v597, %v742
      %v1181 = vmul.f32 %v598, %v746
      %v1182 = vmul.f32 %v599, %v750
      %v1183 = vmul.f32 %v600, %v754
      %v1184 = vmul.f32 %v601, %v758
      %v1185 = vmul.f32 %v602, %v762
      %v1186 = vmul.f32 %v603, %v766
      %v1187 = vmul.f32 %v604, %v770
      %v1188 = vmul.f32 %v605, %v774
      %v1189 = vmul.f32 %v606, %v778
      %v1190 = vmul.f32 %v607, %v782
      %v1191 = vmul.f32 %v608, %v786
      %v1192 = vmul.f32 %v609, %v790
      %v1193 = vmul.f32 %v610, %v794
      %v1194 = vmul.f32 %v611, %v798
      %v1195 = vmul.f32 %v612, %v802
      %v1196 = vmul.f32 %v613, %v806
      %v1197 = vmul.f32 %v614, %v810
      %v1198 = vmul.f32 %v615, %v814
      %v1199 = vmul.f32 %v616, %v818
      %v1200 = vmul.f32 %v617, %v822
      %v1201 = vmul.f32 %v618, %v826
      %v1202 = vmul.f32 %v619, %v730
      %v1203 = vmul.f32 %v620, %v734
      %v1204 = vmul.f32 %v621, %v738
      %v1205 = vmul.f32 %v622, %v742
      %v1206 = vmul.f32 %v623, %v746
      %v1207 = vmul.f32 %v624, %v750
      %v1208 = vmul.f32 %v625, %v754
      %v1209 = vmul.f32 %v626, %v758
      %v1210 = vmul.f32 %v627, %v762
      %v1211 = vmul.f32 %v628, %v766
      %v1212 = vmul.f32 %v629, %v770
      %v1213 = vmul.f32 %v630, %v774
      %v1214 = vmul.f32 %v631, %v778
      %v1215 = vmul.f32 %v632, %v782
      %v1216 = vmul.f32 %v633, %v786
      %v1217 = vmul.f32 %v634, %v790
      %v1218 = vmul.f32 %v635, %v794
      %v1219 = vmul.f32 %v636, %v798
      %v1220 = vmul.f32 %v637, %v802
      %v1221 = vmul.f32 %v638, %v806
      %v1222 = vmul.f32 %v639, %v810
      %v1223 = vmul.f32 %v640, %v814
      %v1224 = vmul.f32 %v641, %v818
      %v1225 = vmul.f32 %v642, %v822
      %v1226 = vmul.f32 %v643, %v826
      %v1227 = vmul.f32 %v644, %v730
      %v1228 = vmul.f32 %v645, %v734
      %v1229 = vmul.f32 %v646, %v738
      %v1230 = vmul.f32 %v647, %v742
      %v1231 = vmul.f32 %v648, %v746
      %v1232 = vmul.f32 %v649, %v750
      %v1233 = vmul.f32 %v650, %v754
      %v1234 = vmul.f32 %v651, %v758
      %v1235 = vmul.f32 %v652, %v762
      %v1236 = vmul.f32 %v653, %v766
      %v1237 = vmul.f32 %v654, %v770
      %v1238 = vmul.f32 %v655, %v774
      %v1239 = vmul.f32 %v656, %v778
      %v1240 = vmul.f32 %v657, %v782
      %v1241 = vmul.f32 %v658, %v786
      %v1242 = vmul.f32 %v659, %v790
      %v1243 = vmul.f32 %v660, %v794
      %v1244 = vmul.f32 %v661, %v798
      %v1245 = vmul.f32 %v662, %v802
      %v1246 = vmul.f32 %v663, %v806
      %v1247 = vmul.f32 %v664, %v810
      %v1248 = vmul.f32 %v665, %v814
      %v1249 = vmul.f32 %v666, %v818
      %v1250 = vmul.f32 %v667, %v822
      %v1251 = vmul.f32 %v668, %v826
      %v1252 = vmul.f32 %v669, %v730
      %v1253 = vmul.f32 %v670, %v734
      %v1254 = vmul.f32 %v671, %v738
      %v1255 = vmul.f32 %v672, %v742
      %v1256 = vmul.f32 %v673, %v746
      %v1257 = vmul.f32 %v674, %v750
      %v1258 = vmul.f32 %v675, %v754
      %v1259 = vmul.f32 %v676, %v758
      %v1260 = vmul.f32 %v677, %v762
      %v1261 = vmul.f32 %v678, %v766
      %v1262 = vmul.f32 %v679, %v770
      %v1263 = vmul.f32 %v680, %v774
      %v1264 = vmul.f32 %v681, %v778
      %v1265 = vmul.f32 %v682, %v782
      %v1266 = vmul.f32 %v683, %v786
      %v1267 = vmul.f32 %v684, %v790
      %v1268 = vmul.f32 %v685, %v794
      %v1269 = vmul.f32 %v686, %v798
      %v1270 = vmul.f32 %v687, %v802
      %v1271 = vmul.f32 %v688, %v806
      %v1272 = vmul.f32 %v689, %v810
      %v1273 = vmul.f32 %v690, %v814
      %v1274 = vmul.f32 %v691, %v818
      %v1275 = vmul.f32 %v692, %v822
      %v1276 = vmul.f32 %v693, %v826
      %v1277 = vmul.f32 %v694, %v730
      %v1278 = vmul.f32 %v695, %v734
      %v1279 = vmul.f32 %v696, %v738
      %v1280 = vmul.f32 %v697, %v742
      %v1281 = vmul.f32 %v698, %v746
      %v1282 = vmul.f32 %v699, %v750
      %v1283 = vmul.f32 %v700, %v754
      %v1284 = vmul.f32 %v701, %v758
      %v1285 = vmul.f32 %v702, %v762
      %v1286 = vmul.f32 %v703, %v766
      %v1287 = vmul.f32 %v704, %v770
      %v1288 = vmul.f32 %v705, %v774
      %v1289 = vmul.f32 %v706, %v778
      %v1290 = vmul.f32 %v707, %v782
      %v1291 = vmul.f32 %v708, %v786
      %v1292 = vmul.f32 %v709, %v790
      %v1293 = vmul.f32 %v710, %v794
      %v1294 = vmul.f32 %v711, %v798
      %v1295 = vmul.f32 %v712, %v802
      %v1296 = vmul.f32 %v713, %v806
      %v1297 = vmul.f32 %v714, %v810
      %v1298 = vmul.f32 %v715, %v814
      %v1299 = vmul.f32 %v716, %v818
      %v1300 = vmul.f32 %v717, %v822
      %v1301 = vmul.f32 %v718, %v826
      %v1302 = vld [vmem:[%s2] sm:$0xff]
      %v1303 = vld [vmem:[%s2 + $0x8] sm:$0xff]
      %v1304 = vld [vmem:[%s2 + $0x10] sm:$0xff]
      %v1305 = vld [vmem:[%s2 + $0x18] sm:$0x1]
      %v1310 = vlaneseq
      %v1311 = vshrl.u32 %v1310, 7
      %v1312 = vsub.s32 0, %v1311
      %v1313 = vrot.slane %v1302, %v1312
      %v1314 = vlaneseq
      %v1315 = vshrl.u32 %v1314, 7
      %v1316 = vsub.s32 1, %v1315
      %v1317 = vrot.slane %v1302, %v1316
      %v1318 = vlaneseq
      %v1319 = vshrl.u32 %v1318, 7
      %v1320 = vsub.s32 2, %v1319
      %v1321 = vrot.slane %v1302, %v1320
      %v1322 = vlaneseq
      %v1323 = vshrl.u32 %v1322, 7
      %v1324 = vsub.s32 3, %v1323
      %v1325 = vrot.slane %v1302, %v1324
      %v1326 = vlaneseq
      %v1327 = vshrl.u32 %v1326, 7
      %v1328 = vsub.s32 4, %v1327
      %v1329 = vrot.slane %v1302, %v1328
      %v1330 = vlaneseq
      %v1331 = vshrl.u32 %v1330, 7
      %v1332 = vsub.s32 5, %v1331
      %v1333 = vrot.slane %v1302, %v1332
      %v1334 = vlaneseq
      %v1335 = vshrl.u32 %v1334, 7
      %v1336 = vsub.s32 6, %v1335
      %v1337 = vrot.slane %v1302, %v1336
      %v1338 = vlaneseq
      %v1339 = vshrl.u32 %v1338, 7
      %v1340 = vsub.s32 7, %v1339
      %v1341 = vrot.slane %v1302, %v1340
      %v1342 = vlaneseq
      %v1343 = vshrl.u32 %v1342, 7
      %v1344 = vsub.s32 0, %v1343
      %v1345 = vrot.slane %v1303, %v1344
      %v1346 = vlaneseq
      %v1347 = vshrl.u32 %v1346, 7
      %v1348 = vsub.s32 1, %v1347
      %v1349 = vrot.slane %v1303, %v1348
      %v1350 = vlaneseq
      %v1351 = vshrl.u32 %v1350, 7
      %v1352 = vsub.s32 2, %v1351
      %v1353 = vrot.slane %v1303, %v1352
      %v1354 = vlaneseq
      %v1355 = vshrl.u32 %v1354, 7
      %v1356 = vsub.s32 3, %v1355
      %v1357 = vrot.slane %v1303, %v1356
      %v1358 = vlaneseq
      %v1359 = vshrl.u32 %v1358, 7
      %v1360 = vsub.s32 4, %v1359
      %v1361 = vrot.slane %v1303, %v1360
      %v1362 = vlaneseq
      %v1363 = vshrl.u32 %v1362, 7
      %v1364 = vsub.s32 5, %v1363
      %v1365 = vrot.slane %v1303, %v1364
      %v1366 = vlaneseq
      %v1367 = vshrl.u32 %v1366, 7
      %v1368 = vsub.s32 6, %v1367
      %v1369 = vrot.slane %v1303, %v1368
      %v1370 = vlaneseq
      %v1371 = vshrl.u32 %v1370, 7
      %v1372 = vsub.s32 7, %v1371
      %v1373 = vrot.slane %v1303, %v1372
      %v1374 = vlaneseq
      %v1375 = vshrl.u32 %v1374, 7
      %v1376 = vsub.s32 0, %v1375
      %v1377 = vrot.slane %v1304, %v1376
      %v1378 = vlaneseq
      %v1379 = vshrl.u32 %v1378, 7
      %v1380 = vsub.s32 1, %v1379
      %v1381 = vrot.slane %v1304, %v1380
      %v1382 = vlaneseq
      %v1383 = vshrl.u32 %v1382, 7
      %v1384 = vsub.s32 2, %v1383
      %v1385 = vrot.slane %v1304, %v1384
      %v1386 = vlaneseq
      %v1387 = vshrl.u32 %v1386, 7
      %v1388 = vsub.s32 3, %v1387
      %v1389 = vrot.slane %v1304, %v1388
      %v1390 = vlaneseq
      %v1391 = vshrl.u32 %v1390, 7
      %v1392 = vsub.s32 4, %v1391
      %v1393 = vrot.slane %v1304, %v1392
      %v1394 = vlaneseq
      %v1395 = vshrl.u32 %v1394, 7
      %v1396 = vsub.s32 5, %v1395
      %v1397 = vrot.slane %v1304, %v1396
      %v1398 = vlaneseq
      %v1399 = vshrl.u32 %v1398, 7
      %v1400 = vsub.s32 6, %v1399
      %v1401 = vrot.slane %v1304, %v1400
      %v1402 = vlaneseq
      %v1403 = vshrl.u32 %v1402, 7
      %v1404 = vsub.s32 7, %v1403
      %v1405 = vrot.slane %v1304, %v1404
      %v1406 = vlaneseq
      %v1407 = vshrl.u32 %v1406, 7
      %v1408 = vsub.s32 0, %v1407
      %v1409 = vrot.slane %v1305, %v1408
      %v1435 = vadd.f32 %v852, %v1313
      %v1436 = vadd.f32 %v853, %v1317
      %v1437 = vadd.f32 %v854, %v1321
      %v1438 = vadd.f32 %v855, %v1325
      %v1439 = vadd.f32 %v856, %v1329
      %v1440 = vadd.f32 %v857, %v1333
      %v1441 = vadd.f32 %v858, %v1337
      %v1442 = vadd.f32 %v859, %v1341
      %v1443 = vadd.f32 %v860, %v1345
      %v1444 = vadd.f32 %v861, %v1349
      %v1445 = vadd.f32 %v862, %v1353
      %v1446 = vadd.f32 %v863, %v1357
      %v1447 = vadd.f32 %v864, %v1361
      %v1448 = vadd.f32 %v865, %v1365
      %v1449 = vadd.f32 %v866, %v1369
      %v1450 = vadd.f32 %v867, %v1373
      %v1451 = vadd.f32 %v868, %v1377
      %v1452 = vadd.f32 %v869, %v1381
      %v1453 = vadd.f32 %v870, %v1385
      %v1454 = vadd.f32 %v871, %v1389
      %v1455 = vadd.f32 %v872, %v1393
      %v1456 = vadd.f32 %v873, %v1397
      %v1457 = vadd.f32 %v874, %v1401
      %v1458 = vadd.f32 %v875, %v1405
      %v1459 = vadd.f32 %v876, %v1409
      %v1460 = vadd.f32 %v877, %v1313
      %v1461 = vadd.f32 %v878, %v1317
      %v1462 = vadd.f32 %v879, %v1321
      %v1463 = vadd.f32 %v880, %v1325
      %v1464 = vadd.f32 %v881, %v1329
      %v1465 = vadd.f32 %v882, %v1333
      %v1466 = vadd.f32 %v883, %v1337
      %v1467 = vadd.f32 %v884, %v1341
      %v1468 = vadd.f32 %v885, %v1345
      %v1469 = vadd.f32 %v886, %v1349
      %v1470 = vadd.f32 %v887, %v1353
      %v1471 = vadd.f32 %v888, %v1357
      %v1472 = vadd.f32 %v889, %v1361
      %v1473 = vadd.f32 %v890, %v1365
      %v1474 = vadd.f32 %v891, %v1369
      %v1475 = vadd.f32 %v892, %v1373
      %v1476 = vadd.f32 %v893, %v1377
      %v1477 = vadd.f32 %v894, %v1381
      %v1478 = vadd.f32 %v895, %v1385
      %v1479 = vadd.f32 %v896, %v1389
      %v1480 = vadd.f32 %v897, %v1393
      %v1481 = vadd.f32 %v898, %v1397
      %v1482 = vadd.f32 %v899, %v1401
      %v1483 = vadd.f32 %v900, %v1405
      %v1484 = vadd.f32 %v901, %v1409
      %v1485 = vadd.f32 %v902, %v1313
      %v1486 = vadd.f32 %v903, %v1317
      %v1487 = vadd.f32 %v904, %v1321
      %v1488 = vadd.f32 %v905, %v1325
      %v1489 = vadd.f32 %v906, %v1329
      %v1490 = vadd.f32 %v907, %v1333
      %v1491 = vadd.f32 %v908, %v1337
      %v1492 = vadd.f32 %v909, %v1341
      %v1493 = vadd.f32 %v910, %v1345
      %v1494 = vadd.f32 %v911, %v1349
      %v1495 = vadd.f32 %v912, %v1353
      %v1496 = vadd.f32 %v913, %v1357
      %v1497 = vadd.f32 %v914, %v1361
      %v1498 = vadd.f32 %v915, %v1365
      %v1499 = vadd.f32 %v916, %v1369
      %v1500 = vadd.f32 %v917, %v1373
      %v1501 = vadd.f32 %v918, %v1377
      %v1502 = vadd.f32 %v919, %v1381
      %v1503 = vadd.f32 %v920, %v1385
      %v1504 = vadd.f32 %v921, %v1389
      %v1505 = vadd.f32 %v922, %v1393
      %v1506 = vadd.f32 %v923, %v1397
      %v1507 = vadd.f32 %v924, %v1401
      %v1508 = vadd.f32 %v925, %v1405
      %v1509 = vadd.f32 %v926, %v1409
      %v1510 = vadd.f32 %v927, %v1313
      %v1511 = vadd.f32 %v928, %v1317
      %v1512 = vadd.f32 %v929, %v1321
      %v1513 = vadd.f32 %v930, %v1325
      %v1514 = vadd.f32 %v931, %v1329
      %v1515 = vadd.f32 %v932, %v1333
      %v1516 = vadd.f32 %v933, %v1337
      %v1517 = vadd.f32 %v934, %v1341
      %v1518 = vadd.f32 %v935, %v1345
      %v1519 = vadd.f32 %v936, %v1349
      %v1520 = vadd.f32 %v937, %v1353
      %v1521 = vadd.f32 %v938, %v1357
      %v1522 = vadd.f32 %v939, %v1361
      %v1523 = vadd.f32 %v940, %v1365
      %v1524 = vadd.f32 %v941, %v1369
      %v1525 = vadd.f32 %v942, %v1373
      %v1526 = vadd.f32 %v943, %v1377
      %v1527 = vadd.f32 %v944, %v1381
      %v1528 = vadd.f32 %v945, %v1385
      %v1529 = vadd.f32 %v946, %v1389
      %v1530 = vadd.f32 %v947, %v1393
      %v1531 = vadd.f32 %v948, %v1397
      %v1532 = vadd.f32 %v949, %v1401
      %v1533 = vadd.f32 %v950, %v1405
      %v1534 = vadd.f32 %v951, %v1409
      %v1535 = vadd.f32 %v952, %v1313
      %v1536 = vadd.f32 %v953, %v1317
      %v1537 = vadd.f32 %v954, %v1321
      %v1538 = vadd.f32 %v955, %v1325
      %v1539 = vadd.f32 %v956, %v1329
      %v1540 = vadd.f32 %v957, %v1333
      %v1541 = vadd.f32 %v958, %v1337
      %v1542 = vadd.f32 %v959, %v1341
      %v1543 = vadd.f32 %v960, %v1345
      %v1544 = vadd.f32 %v961, %v1349
      %v1545 = vadd.f32 %v962, %v1353
      %v1546 = vadd.f32 %v963, %v1357
      %v1547 = vadd.f32 %v964, %v1361
      %v1548 = vadd.f32 %v965, %v1365
      %v1549 = vadd.f32 %v966, %v1369
      %v1550 = vadd.f32 %v967, %v1373
      %v1551 = vadd.f32 %v968, %v1377
      %v1552 = vadd.f32 %v969, %v1381
      %v1553 = vadd.f32 %v970, %v1385
      %v1554 = vadd.f32 %v971, %v1389
      %v1555 = vadd.f32 %v972, %v1393
      %v1556 = vadd.f32 %v973, %v1397
      %v1557 = vadd.f32 %v974, %v1401
      %v1558 = vadd.f32 %v975, %v1405
      %v1559 = vadd.f32 %v976, %v1409
      %v1560 = vadd.f32 %v977, %v1313
      %v1561 = vadd.f32 %v978, %v1317
      %v1562 = vadd.f32 %v979, %v1321
      %v1563 = vadd.f32 %v980, %v1325
      %v1564 = vadd.f32 %v981, %v1329
      %v1565 = vadd.f32 %v982, %v1333
      %v1566 = vadd.f32 %v983, %v1337
      %v1567 = vadd.f32 %v984, %v1341
      %v1568 = vadd.f32 %v985, %v1345
      %v1569 = vadd.f32 %v986, %v1349
      %v1570 = vadd.f32 %v987, %v1353
      %v1571 = vadd.f32 %v988, %v1357
      %v1572 = vadd.f32 %v989, %v1361
      %v1573 = vadd.f32 %v990, %v1365
      %v1574 = vadd.f32 %v991, %v1369
      %v1575 = vadd.f32 %v992, %v1373
      %v1576 = vadd.f32 %v993, %v1377
      %v1577 = vadd.f32 %v994, %v1381
      %v1578 = vadd.f32 %v995, %v1385
      %v1579 = vadd.f32 %v996, %v1389
      %v1580 = vadd.f32 %v997, %v1393
      %v1581 = vadd.f32 %v998, %v1397
      %v1582 = vadd.f32 %v999, %v1401
      %v1583 = vadd.f32 %v1000, %v1405
      %v1584 = vadd.f32 %v1001, %v1409
      %v1585 = vadd.f32 %v1002, %v1313
      %v1586 = vadd.f32 %v1003, %v1317
      %v1587 = vadd.f32 %v1004, %v1321
      %v1588 = vadd.f32 %v1005, %v1325
      %v1589 = vadd.f32 %v1006, %v1329
      %v1590 = vadd.f32 %v1007, %v1333
      %v1591 = vadd.f32 %v1008, %v1337
      %v1592 = vadd.f32 %v1009, %v1341
      %v1593 = vadd.f32 %v1010, %v1345
      %v1594 = vadd.f32 %v1011, %v1349
      %v1595 = vadd.f32 %v1012, %v1353
      %v1596 = vadd.f32 %v1013, %v1357
      %v1597 = vadd.f32 %v1014, %v1361
      %v1598 = vadd.f32 %v1015, %v1365
      %v1599 = vadd.f32 %v1016, %v1369
      %v1600 = vadd.f32 %v1017, %v1373
      %v1601 = vadd.f32 %v1018, %v1377
      %v1602 = vadd.f32 %v1019, %v1381
      %v1603 = vadd.f32 %v1020, %v1385
      %v1604 = vadd.f32 %v1021, %v1389
      %v1605 = vadd.f32 %v1022, %v1393
      %v1606 = vadd.f32 %v1023, %v1397
      %v1607 = vadd.f32 %v1024, %v1401
      %v1608 = vadd.f32 %v1025, %v1405
      %v1609 = vadd.f32 %v1026, %v1409
      %v1610 = vadd.f32 %v1027, %v1313
      %v1611 = vadd.f32 %v1028, %v1317
      %v1612 = vadd.f32 %v1029, %v1321
      %v1613 = vadd.f32 %v1030, %v1325
      %v1614 = vadd.f32 %v1031, %v1329
      %v1615 = vadd.f32 %v1032, %v1333
      %v1616 = vadd.f32 %v1033, %v1337
      %v1617 = vadd.f32 %v1034, %v1341
      %v1618 = vadd.f32 %v1035, %v1345
      %v1619 = vadd.f32 %v1036, %v1349
      %v1620 = vadd.f32 %v1037, %v1353
      %v1621 = vadd.f32 %v1038, %v1357
      %v1622 = vadd.f32 %v1039, %v1361
      %v1623 = vadd.f32 %v1040, %v1365
      %v1624 = vadd.f32 %v1041, %v1369
      %v1625 = vadd.f32 %v1042, %v1373
      %v1626 = vadd.f32 %v1043, %v1377
      %v1627 = vadd.f32 %v1044, %v1381
      %v1628 = vadd.f32 %v1045, %v1385
      %v1629 = vadd.f32 %v1046, %v1389
      %v1630 = vadd.f32 %v1047, %v1393
      %v1631 = vadd.f32 %v1048, %v1397
      %v1632 = vadd.f32 %v1049, %v1401
      %v1633 = vadd.f32 %v1050, %v1405
      %v1634 = vadd.f32 %v1051, %v1409
      %v1635 = vadd.f32 %v1052, %v1313
      %v1636 = vadd.f32 %v1053, %v1317
      %v1637 = vadd.f32 %v1054, %v1321
      %v1638 = vadd.f32 %v1055, %v1325
      %v1639 = vadd.f32 %v1056, %v1329
      %v1640 = vadd.f32 %v1057, %v1333
      %v1641 = vadd.f32 %v1058, %v1337
      %v1642 = vadd.f32 %v1059, %v1341
      %v1643 = vadd.f32 %v1060, %v1345
      %v1644 = vadd.f32 %v1061, %v1349
      %v1645 = vadd.f32 %v1062, %v1353
      %v1646 = vadd.f32 %v1063, %v1357
      %v1647 = vadd.f32 %v1064, %v1361
      %v1648 = vadd.f32 %v1065, %v1365
      %v1649 = vadd.f32 %v1066, %v1369
      %v1650 = vadd.f32 %v1067, %v1373
      %v1651 = vadd.f32 %v1068, %v1377
      %v1652 = vadd.f32 %v1069, %v1381
      %v1653 = vadd.f32 %v1070, %v1385
      %v1654 = vadd.f32 %v1071, %v1389
      %v1655 = vadd.f32 %v1072, %v1393
      %v1656 = vadd.f32 %v1073, %v1397
      %v1657 = vadd.f32 %v1074, %v1401
      %v1658 = vadd.f32 %v1075, %v1405
      %v1659 = vadd.f32 %v1076, %v1409
      %v1660 = vadd.f32 %v1077, %v1313
      %v1661 = vadd.f32 %v1078, %v1317
      %v1662 = vadd.f32 %v1079, %v1321
      %v1663 = vadd.f32 %v1080, %v1325
      %v1664 = vadd.f32 %v1081, %v1329
      %v1665 = vadd.f32 %v1082, %v1333
      %v1666 = vadd.f32 %v1083, %v1337
      %v1667 = vadd.f32 %v1084, %v1341
      %v1668 = vadd.f32 %v1085, %v1345
      %v1669 = vadd.f32 %v1086, %v1349
      %v1670 = vadd.f32 %v1087, %v1353
      %v1671 = vadd.f32 %v1088, %v1357
      %v1672 = vadd.f32 %v1089, %v1361
      %v1673 = vadd.f32 %v1090, %v1365
      %v1674 = vadd.f32 %v1091, %v1369
      %v1675 = vadd.f32 %v1092, %v1373
      %v1676 = vadd.f32 %v1093, %v1377
      %v1677 = vadd.f32 %v1094, %v1381
      %v1678 = vadd.f32 %v1095, %v1385
      %v1679 = vadd.f32 %v1096, %v1389
      %v1680 = vadd.f32 %v1097, %v1393
      %v1681 = vadd.f32 %v1098, %v1397
      %v1682 = vadd.f32 %v1099, %v1401
      %v1683 = vadd.f32 %v1100, %v1405
      %v1684 = vadd.f32 %v1101, %v1409
      %v1685 = vadd.f32 %v1102, %v1313
      %v1686 = vadd.f32 %v1103, %v1317
      %v1687 = vadd.f32 %v1104, %v1321
      %v1688 = vadd.f32 %v1105, %v1325
      %v1689 = vadd.f32 %v1106, %v1329
      %v1690 = vadd.f32 %v1107, %v1333
      %v1691 = vadd.f32 %v1108, %v1337
      %v1692 = vadd.f32 %v1109, %v1341
      %v1693 = vadd.f32 %v1110, %v1345
      %v1694 = vadd.f32 %v1111, %v1349
      %v1695 = vadd.f32 %v1112, %v1353
      %v1696 = vadd.f32 %v1113, %v1357
      %v1697 = vadd.f32 %v1114, %v1361
      %v1698 = vadd.f32 %v1115, %v1365
      %v1699 = vadd.f32 %v1116, %v1369
      %v1700 = vadd.f32 %v1117, %v1373
      %v1701 = vadd.f32 %v1118, %v1377
      %v1702 = vadd.f32 %v1119, %v1381
      %v1703 = vadd.f32 %v1120, %v1385
      %v1704 = vadd.f32 %v1121, %v1389
      %v1705 = vadd.f32 %v1122, %v1393
      %v1706 = vadd.f32 %v1123, %v1397
      %v1707 = vadd.f32 %v1124, %v1401
      %v1708 = vadd.f32 %v1125, %v1405
      %v1709 = vadd.f32 %v1126, %v1409
      %v1710 = vadd.f32 %v1127, %v1313
      %v1711 = vadd.f32 %v1128, %v1317
      %v1712 = vadd.f32 %v1129, %v1321
      %v1713 = vadd.f32 %v1130, %v1325
      %v1714 = vadd.f32 %v1131, %v1329
      %v1715 = vadd.f32 %v1132, %v1333
      %v1716 = vadd.f32 %v1133, %v1337
      %v1717 = vadd.f32 %v1134, %v1341
      %v1718 = vadd.f32 %v1135, %v1345
      %v1719 = vadd.f32 %v1136, %v1349
      %v1720 = vadd.f32 %v1137, %v1353
      %v1721 = vadd.f32 %v1138, %v1357
      %v1722 = vadd.f32 %v1139, %v1361
      %v1723 = vadd.f32 %v1140, %v1365
      %v1724 = vadd.f32 %v1141, %v1369
      %v1725 = vadd.f32 %v1142, %v1373
      %v1726 = vadd.f32 %v1143, %v1377
      %v1727 = vadd.f32 %v1144, %v1381
      %v1728 = vadd.f32 %v1145, %v1385
      %v1729 = vadd.f32 %v1146, %v1389
      %v1730 = vadd.f32 %v1147, %v1393
      %v1731 = vadd.f32 %v1148, %v1397
      %v1732 = vadd.f32 %v1149, %v1401
      %v1733 = vadd.f32 %v1150, %v1405
      %v1734 = vadd.f32 %v1151, %v1409
      %v1735 = vadd.f32 %v1152, %v1313
      %v1736 = vadd.f32 %v1153, %v1317
      %v1737 = vadd.f32 %v1154, %v1321
      %v1738 = vadd.f32 %v1155, %v1325
      %v1739 = vadd.f32 %v1156, %v1329
      %v1740 = vadd.f32 %v1157, %v1333
      %v1741 = vadd.f32 %v1158, %v1337
      %v1742 = vadd.f32 %v1159, %v1341
      %v1743 = vadd.f32 %v1160, %v1345
      %v1744 = vadd.f32 %v1161, %v1349
      %v1745 = vadd.f32 %v1162, %v1353
      %v1746 = vadd.f32 %v1163, %v1357
      %v1747 = vadd.f32 %v1164, %v1361
      %v1748 = vadd.f32 %v1165, %v1365
      %v1749 = vadd.f32 %v1166, %v1369
      %v1750 = vadd.f32 %v1167, %v1373
      %v1751 = vadd.f32 %v1168, %v1377
      %v1752 = vadd.f32 %v1169, %v1381
      %v1753 = vadd.f32 %v1170, %v1385
      %v1754 = vadd.f32 %v1171, %v1389
      %v1755 = vadd.f32 %v1172, %v1393
      %v1756 = vadd.f32 %v1173, %v1397
      %v1757 = vadd.f32 %v1174, %v1401
      %v1758 = vadd.f32 %v1175, %v1405
      %v1759 = vadd.f32 %v1176, %v1409
      %v1760 = vadd.f32 %v1177, %v1313
      %v1761 = vadd.f32 %v1178, %v1317
      %v1762 = vadd.f32 %v1179, %v1321
      %v1763 = vadd.f32 %v1180, %v1325
      %v1764 = vadd.f32 %v1181, %v1329
      %v1765 = vadd.f32 %v1182, %v1333
      %v1766 = vadd.f32 %v1183, %v1337
      %v1767 = vadd.f32 %v1184, %v1341
      %v1768 = vadd.f32 %v1185, %v1345
      %v1769 = vadd.f32 %v1186, %v1349
      %v1770 = vadd.f32 %v1187, %v1353
      %v1771 = vadd.f32 %v1188, %v1357
      %v1772 = vadd.f32 %v1189, %v1361
      %v1773 = vadd.f32 %v1190, %v1365
      %v1774 = vadd.f32 %v1191, %v1369
      %v1775 = vadd.f32 %v1192, %v1373
      %v1776 = vadd.f32 %v1193, %v1377
      %v1777 = vadd.f32 %v1194, %v1381
      %v1778 = vadd.f32 %v1195, %v1385
      %v1779 = vadd.f32 %v1196, %v1389
      %v1780 = vadd.f32 %v1197, %v1393
      %v1781 = vadd.f32 %v1198, %v1397
      %v1782 = vadd.f32 %v1199, %v1401
      %v1783 = vadd.f32 %v1200, %v1405
      %v1784 = vadd.f32 %v1201, %v1409
      %v1785 = vadd.f32 %v1202, %v1313
      %v1786 = vadd.f32 %v1203, %v1317
      %v1787 = vadd.f32 %v1204, %v1321
      %v1788 = vadd.f32 %v1205, %v1325
      %v1789 = vadd.f32 %v1206, %v1329
      %v1790 = vadd.f32 %v1207, %v1333
      %v1791 = vadd.f32 %v1208, %v1337
      %v1792 = vadd.f32 %v1209, %v1341
      %v1793 = vadd.f32 %v1210, %v1345
      %v1794 = vadd.f32 %v1211, %v1349
      %v1795 = vadd.f32 %v1212, %v1353
      %v1796 = vadd.f32 %v1213, %v1357
      %v1797 = vadd.f32 %v1214, %v1361
      %v1798 = vadd.f32 %v1215, %v1365
      %v1799 = vadd.f32 %v1216, %v1369
      %v1800 = vadd.f32 %v1217, %v1373
      %v1801 = vadd.f32 %v1218, %v1377
      %v1802 = vadd.f32 %v1219, %v1381
      %v1803 = vadd.f32 %v1220, %v1385
      %v1804 = vadd.f32 %v1221, %v1389
      %v1805 = vadd.f32 %v1222, %v1393
      %v1806 = vadd.f32 %v1223, %v1397
      %v1807 = vadd.f32 %v1224, %v1401
      %v1808 = vadd.f32 %v1225, %v1405
      %v1809 = vadd.f32 %v1226, %v1409
      %v1810 = vadd.f32 %v1227, %v1313
      %v1811 = vadd.f32 %v1228, %v1317
      %v1812 = vadd.f32 %v1229, %v1321
      %v1813 = vadd.f32 %v1230, %v1325
      %v1814 = vadd.f32 %v1231, %v1329
      %v1815 = vadd.f32 %v1232, %v1333
      %v1816 = vadd.f32 %v1233, %v1337
      %v1817 = vadd.f32 %v1234, %v1341
      %v1818 = vadd.f32 %v1235, %v1345
      %v1819 = vadd.f32 %v1236, %v1349
      %v1820 = vadd.f32 %v1237, %v1353
      %v1821 = vadd.f32 %v1238, %v1357
      %v1822 = vadd.f32 %v1239, %v1361
      %v1823 = vadd.f32 %v1240, %v1365
      %v1824 = vadd.f32 %v1241, %v1369
      %v1825 = vadd.f32 %v1242, %v1373
      %v1826 = vadd.f32 %v1243, %v1377
      %v1827 = vadd.f32 %v1244, %v1381
      %v1828 = vadd.f32 %v1245, %v1385
      %v1829 = vadd.f32 %v1246, %v1389
      %v1830 = vadd.f32 %v1247, %v1393
      %v1831 = vadd.f32 %v1248, %v1397
      %v1832 = vadd.f32 %v1249, %v1401
      %v1833 = vadd.f32 %v1250, %v1405
      %v1834 = vadd.f32 %v1251, %v1409
      %v1835 = vadd.f32 %v1252, %v1313
      %v1836 = vadd.f32 %v1253, %v1317
      %v1837 = vadd.f32 %v1254, %v1321
      %v1838 = vadd.f32 %v1255, %v1325
      %v1839 = vadd.f32 %v1256, %v1329
      %v1840 = vadd.f32 %v1257, %v1333
      %v1841 = vadd.f32 %v1258, %v1337
      %v1842 = vadd.f32 %v1259, %v1341
      %v1843 = vadd.f32 %v1260, %v1345
      %v1844 = vadd.f32 %v1261, %v1349
      %v1845 = vadd.f32 %v1262, %v1353
      %v1846 = vadd.f32 %v1263, %v1357
      %v1847 = vadd.f32 %v1264, %v1361
      %v1848 = vadd.f32 %v1265, %v1365
      %v1849 = vadd.f32 %v1266, %v1369
      %v1850 = vadd.f32 %v1267, %v1373
      %v1851 = vadd.f32 %v1268, %v1377
      %v1852 = vadd.f32 %v1269, %v1381
      %v1853 = vadd.f32 %v1270, %v1385
      %v1854 = vadd.f32 %v1271, %v1389
      %v1855 = vadd.f32 %v1272, %v1393
      %v1856 = vadd.f32 %v1273, %v1397
      %v1857 = vadd.f32 %v1274, %v1401
      %v1858 = vadd.f32 %v1275, %v1405
      %v1859 = vadd.f32 %v1276, %v1409
      %v1860 = vadd.f32 %v1277, %v1313
      %v1861 = vadd.f32 %v1278, %v1317
      %v1862 = vadd.f32 %v1279, %v1321
      %v1863 = vadd.f32 %v1280, %v1325
      %v1864 = vadd.f32 %v1281, %v1329
      %v1865 = vadd.f32 %v1282, %v1333
      %v1866 = vadd.f32 %v1283, %v1337
      %v1867 = vadd.f32 %v1284, %v1341
      %v1868 = vadd.f32 %v1285, %v1345
      %v1869 = vadd.f32 %v1286, %v1349
      %v1870 = vadd.f32 %v1287, %v1353
      %v1871 = vadd.f32 %v1288, %v1357
      %v1872 = vadd.f32 %v1289, %v1361
      %v1873 = vadd.f32 %v1290, %v1365
      %v1874 = vadd.f32 %v1291, %v1369
      %v1875 = vadd.f32 %v1292, %v1373
      %v1876 = vadd.f32 %v1293, %v1377
      %v1877 = vadd.f32 %v1294, %v1381
      %v1878 = vadd.f32 %v1295, %v1385
      %v1879 = vadd.f32 %v1296, %v1389
      %v1880 = vadd.f32 %v1297, %v1393
      %v1881 = vadd.f32 %v1298, %v1397
      %v1882 = vadd.f32 %v1299, %v1401
      %v1883 = vadd.f32 %v1300, %v1405
      %v1884 = vadd.f32 %v1301, %v1409
      %v1885 = vld [vmem:[%s3] sm:$0xff]
      %v1886 = vld [vmem:[%s3 + $0x8] sm:$0xff]
      %v1887 = vld [vmem:[%s3 + $0x10] sm:$0xff]
      %v1888 = vld [vmem:[%s3 + $0x18] sm:$0xff]
      %v1889 = vld [vmem:[%s3 + $0x20] sm:$0xff]
      %v1890 = vld [vmem:[%s3 + $0x28] sm:$0xff]
      %v1891 = vld [vmem:[%s3 + $0x30] sm:$0xff]
      %v1892 = vld [vmem:[%s3 + $0x38] sm:$0xff]
      %v1893 = vld [vmem:[%s3 + $0x40] sm:$0xff]
      %v1894 = vld [vmem:[%s3 + $0x48] sm:$0xff]
      %v1895 = vld [vmem:[%s3 + $0x50] sm:$0xff]
      %v1896 = vld [vmem:[%s3 + $0x58] sm:$0xff]
      %v1897 = vld [vmem:[%s3 + $0x60] sm:$0xff]
      %v1898 = vld [vmem:[%s3 + $0x68] sm:$0xff]
      %v1899 = vld [vmem:[%s3 + $0x70] sm:$0xff]
      %v1900 = vld [vmem:[%s3 + $0x78] sm:$0xff]
      %v1901 = vld [vmem:[%s3 + $0x80] sm:$0xff]
      %v1902 = vld [vmem:[%s3 + $0x88] sm:$0xff]
      %v1903 = vld [vmem:[%s3 + $0x90] sm:$0xff]
      %v1904 = vld [vmem:[%s3 + $0x98] sm:$0xff]
      %v1905 = vld [vmem:[%s3 + $0xa0] sm:$0xff]
      %v1906 = vld [vmem:[%s3 + $0xa8] sm:$0xff]
      %v1907 = vld [vmem:[%s3 + $0xb0] sm:$0xff]
      %v1908 = vld [vmem:[%s3 + $0xb8] sm:$0xff]
      %v1909 = vld [vmem:[%s3 + $0xc0] sm:$0xff]
      %v1910 = vld [vmem:[%s3 + $0xc8] sm:$0xff]
      %v1911 = vld [vmem:[%s3 + $0xd0] sm:$0xff]
      %v1912 = vld [vmem:[%s3 + $0xd8] sm:$0xff]
      %v1913 = vld [vmem:[%s3 + $0xe0] sm:$0xff]
      %v1914 = vld [vmem:[%s3 + $0xe8] sm:$0xff]
      %v1915 = vld [vmem:[%s3 + $0xf0] sm:$0xff]
      %v1916 = vld [vmem:[%s3 + $0xf8] sm:$0xff]
      %v1917 = vld [vmem:[%s3 + $0x100] sm:$0xff]
      %v1918 = vld [vmem:[%s3 + $0x108] sm:$0xff]
      %v1919 = vld [vmem:[%s3 + $0x110] sm:$0xff]
      %v1920 = vld [vmem:[%s3 + $0x118] sm:$0xff]
      %v1921 = vld [vmem:[%s3 + $0x120] sm:$0xff]
      %v1922 = vld [vmem:[%s3 + $0x128] sm:$0xff]
      %v1923 = vld [vmem:[%s3 + $0x130] sm:$0xff]
      %v1924 = vld [vmem:[%s3 + $0x138] sm:$0xff]
      %v1925 = vld [vmem:[%s3 + $0x140] sm:$0xff]
      %v1926 = vld [vmem:[%s3 + $0x148] sm:$0xff]
      %v1927 = vld [vmem:[%s3 + $0x150] sm:$0xff]
      %v1928 = vld [vmem:[%s3 + $0x158] sm:$0xff]
      %v1929 = vld [vmem:[%s3 + $0x160] sm:$0xff]
      %v1930 = vld [vmem:[%s3 + $0x168] sm:$0xff]
      %v1931 = vld [vmem:[%s3 + $0x170] sm:$0xff]
      %v1932 = vld [vmem:[%s3 + $0x178] sm:$0xff]
      %v1933 = vld [vmem:[%s3 + $0x180] sm:$0xff]
      %v1934 = vld [vmem:[%s3 + $0x188] sm:$0xff]
      %v1935 = vld [vmem:[%s3 + $0x190] sm:$0xff]
      %v1936 = vld [vmem:[%s3 + $0x198] sm:$0xff]
      %v1937 = vld [vmem:[%s3 + $0x1a0] sm:$0xff]
      %v1938 = vld [vmem:[%s3 + $0x1a8] sm:$0xff]
      %v1939 = vld [vmem:[%s3 + $0x1b0] sm:$0xff]
      %v1940 = vld [vmem:[%s3 + $0x1b8] sm:$0xff]
      %v1941 = vld [vmem:[%s3 + $0x1c0] sm:$0xff]
      %v1942 = vld [vmem:[%s3 + $0x1c8] sm:$0xff]
      %v1943 = vld [vmem:[%s3 + $0x1d0] sm:$0xff]
      %v1944 = vld [vmem:[%s3 + $0x1d8] sm:$0xff]
      %v1945 = vld [vmem:[%s3 + $0x1e0] sm:$0xff]
      %v1946 = vld [vmem:[%s3 + $0x1e8] sm:$0xff]
      %v1947 = vld [vmem:[%s3 + $0x1f0] sm:$0xff]
      %v1948 = vld [vmem:[%s3 + $0x1f8] sm:$0xff]
      %v1949 = vld [vmem:[%s3 + $0x200] sm:$0xff]
      %v1950 = vld [vmem:[%s3 + $0x208] sm:$0xff]
      %v1951 = vld [vmem:[%s3 + $0x210] sm:$0xff]
      %v1952 = vld [vmem:[%s3 + $0x218] sm:$0xff]
      %v1953 = vld [vmem:[%s3 + $0x220] sm:$0xff]
      %v1954 = vld [vmem:[%s3 + $0x228] sm:$0xff]
      %v1955 = vld [vmem:[%s3 + $0x230] sm:$0xff]
      %v1956 = vld [vmem:[%s3 + $0x238] sm:$0xff]
      %v1957 = vld [vmem:[%s3 + $0x240] sm:$0xff]
      %v1958 = vld [vmem:[%s3 + $0x248] sm:$0xff]
      %v1959 = vld [vmem:[%s3 + $0x250] sm:$0xff]
      %v1960 = vld [vmem:[%s3 + $0x258] sm:$0xff]
      %v1961 = vld [vmem:[%s3 + $0x260] sm:$0xff]
      %v1962 = vld [vmem:[%s3 + $0x268] sm:$0xff]
      %v1963 = vld [vmem:[%s3 + $0x270] sm:$0xff]
      %v1964 = vld [vmem:[%s3 + $0x278] sm:$0xff]
      %v1965 = vld [vmem:[%s3 + $0x280] sm:$0xff]
      %v1966 = vld [vmem:[%s3 + $0x288] sm:$0xff]
      %v1967 = vld [vmem:[%s3 + $0x290] sm:$0xff]
      %v1968 = vld [vmem:[%s3 + $0x298] sm:$0xff]
      %v1969 = vld [vmem:[%s3 + $0x2a0] sm:$0xff]
      %v1970 = vld [vmem:[%s3 + $0x2a8] sm:$0xff]
      %v1971 = vld [vmem:[%s3 + $0x2b0] sm:$0xff]
      %v1972 = vld [vmem:[%s3 + $0x2b8] sm:$0xff]
      %v1973 = vld [vmem:[%s3 + $0x2c0] sm:$0xff]
      %v1974 = vld [vmem:[%s3 + $0x2c8] sm:$0xff]
      %v1975 = vld [vmem:[%s3 + $0x2d0] sm:$0xff]
      %v1976 = vld [vmem:[%s3 + $0x2d8] sm:$0xff]
      %v1977 = vld [vmem:[%s3 + $0x2e0] sm:$0xff]
      %v1978 = vld [vmem:[%s3 + $0x2e8] sm:$0xff]
      %v1979 = vld [vmem:[%s3 + $0x2f0] sm:$0xff]
      %v1980 = vld [vmem:[%s3 + $0x2f8] sm:$0xff]
      %v1981 = vld [vmem:[%s3 + $0x300] sm:$0xff]
      %v1982 = vld [vmem:[%s3 + $0x308] sm:$0xff]
      %v1983 = vld [vmem:[%s3 + $0x310] sm:$0xff]
      %v1984 = vld [vmem:[%s3 + $0x318] sm:$0xff]
      %v1985 = vld [vmem:[%s3 + $0x320] sm:$0xff]
      %v1986 = vld [vmem:[%s3 + $0x328] sm:$0xff]
      %v1987 = vld [vmem:[%s3 + $0x330] sm:$0xff]
      %v1988 = vld [vmem:[%s3 + $0x338] sm:$0xff]
      %v1989 = vld [vmem:[%s3 + $0x340] sm:$0xff]
      %v1990 = vld [vmem:[%s3 + $0x348] sm:$0xff]
      %v1991 = vld [vmem:[%s3 + $0x350] sm:$0xff]
      %v1992 = vld [vmem:[%s3 + $0x358] sm:$0xff]
      %v1993 = vld [vmem:[%s3 + $0x360] sm:$0xff]
      %v1994 = vld [vmem:[%s3 + $0x368] sm:$0xff]
      %v1995 = vld [vmem:[%s3 + $0x370] sm:$0xff]
      %v1996 = vld [vmem:[%s3 + $0x378] sm:$0xff]
      %v1997 = vld [vmem:[%s3 + $0x380] sm:$0xff]
      %v1998 = vld [vmem:[%s3 + $0x388] sm:$0xff]
      %v1999 = vld [vmem:[%s3 + $0x390] sm:$0xff]
      %v2000 = vld [vmem:[%s3 + $0x398] sm:$0xff]
      %v2001 = vld [vmem:[%s3 + $0x3a0] sm:$0xff]
      %v2002 = vld [vmem:[%s3 + $0x3a8] sm:$0xff]
      %v2003 = vld [vmem:[%s3 + $0x3b0] sm:$0xff]
      %v2004 = vld [vmem:[%s3 + $0x3b8] sm:$0xff]
      %v2005 = vld [vmem:[%s3 + $0x3c0] sm:$0xff]
      %v2006 = vld [vmem:[%s3 + $0x3c8] sm:$0xff]
      %v2007 = vld [vmem:[%s3 + $0x3d0] sm:$0xff]
      %v2008 = vld [vmem:[%s3 + $0x3d8] sm:$0xff]
      %v2009 = vld [vmem:[%s3 + $0x3e0] sm:$0xff]
      %v2010 = vld [vmem:[%s3 + $0x3e8] sm:$0xff]
      %v2011 = vld [vmem:[%s3 + $0x3f0] sm:$0xff]
      %v2012 = vld [vmem:[%s3 + $0x3f8] sm:$0xff]
      %v2013 = vld [vmem:[%s3 + $0x400] sm:$0xff]
      %v2014 = vld [vmem:[%s3 + $0x408] sm:$0xff]
      %v2015 = vld [vmem:[%s3 + $0x410] sm:$0xff]
      %v2016 = vld [vmem:[%s3 + $0x418] sm:$0xff]
      %v2017 = vld [vmem:[%s3 + $0x420] sm:$0xff]
      %v2018 = vld [vmem:[%s3 + $0x428] sm:$0xff]
      %v2019 = vld [vmem:[%s3 + $0x430] sm:$0xff]
      %v2020 = vld [vmem:[%s3 + $0x438] sm:$0xff]
      %v2021 = vld [vmem:[%s3 + $0x440] sm:$0xff]
      %v2022 = vld [vmem:[%s3 + $0x448] sm:$0xff]
      %v2023 = vld [vmem:[%s3 + $0x450] sm:$0xff]
      %v2024 = vld [vmem:[%s3 + $0x458] sm:$0xff]
      %v2025 = vld [vmem:[%s3 + $0x460] sm:$0xff]
      %v2026 = vld [vmem:[%s3 + $0x468] sm:$0xff]
      %v2027 = vld [vmem:[%s3 + $0x470] sm:$0xff]
      %v2028 = vld [vmem:[%s3 + $0x478] sm:$0xff]
      %v2029 = vld [vmem:[%s3 + $0x480] sm:$0xff]
      %v2030 = vld [vmem:[%s3 + $0x488] sm:$0xff]
      %v2031 = vld [vmem:[%s3 + $0x490] sm:$0xff]
      %v2032 = vld [vmem:[%s3 + $0x498] sm:$0xff]
      %v2033 = vld [vmem:[%s3 + $0x4a0] sm:$0xff]
      %v2034 = vld [vmem:[%s3 + $0x4a8] sm:$0xff]
      %v2035 = vld [vmem:[%s3 + $0x4b0] sm:$0xff]
      %v2036 = vld [vmem:[%s3 + $0x4b8] sm:$0xff]
      %v2037 = vld [vmem:[%s3 + $0x4c0] sm:$0xff]
      %v2038 = vld [vmem:[%s3 + $0x4c8] sm:$0xff]
      %v2039 = vld [vmem:[%s3 + $0x4d0] sm:$0xff]
      %v2040 = vld [vmem:[%s3 + $0x4d8] sm:$0xff]
      %v2041 = vld [vmem:[%s3 + $0x4e0] sm:$0xff]
      %v2042 = vld [vmem:[%s3 + $0x4e8] sm:$0xff]
      %v2043 = vld [vmem:[%s3 + $0x4f0] sm:$0xff]
      %v2044 = vld [vmem:[%s3 + $0x4f8] sm:$0xff]
      %v2045 = vld [vmem:[%s3 + $0x500] sm:$0xff]
      %v2046 = vld [vmem:[%s3 + $0x508] sm:$0xff]
      %v2047 = vld [vmem:[%s3 + $0x510] sm:$0xff]
      %v2048 = vld [vmem:[%s3 + $0x518] sm:$0xff]
      %v2049 = vld [vmem:[%s3 + $0x520] sm:$0xff]
      %v2050 = vld [vmem:[%s3 + $0x528] sm:$0xff]
      %v2051 = vld [vmem:[%s3 + $0x530] sm:$0xff]
      %v2052 = vld [vmem:[%s3 + $0x538] sm:$0xff]
      %v2053 = vld [vmem:[%s3 + $0x540] sm:$0xff]
      %v2054 = vld [vmem:[%s3 + $0x548] sm:$0xff]
      %v2055 = vld [vmem:[%s3 + $0x550] sm:$0xff]
      %v2056 = vld [vmem:[%s3 + $0x558] sm:$0xff]
      %v2057 = vld [vmem:[%s3 + $0x560] sm:$0xff]
      %v2058 = vld [vmem:[%s3 + $0x568] sm:$0xff]
      %v2059 = vld [vmem:[%s3 + $0x570] sm:$0xff]
      %v2060 = vld [vmem:[%s3 + $0x578] sm:$0xff]
      %v2061 = vld [vmem:[%s3 + $0x580] sm:$0xff]
      %v2062 = vld [vmem:[%s3 + $0x588] sm:$0xff]
      %v2063 = vld [vmem:[%s3 + $0x590] sm:$0xff]
      %v2064 = vld [vmem:[%s3 + $0x598] sm:$0xff]
      %v2065 = vld [vmem:[%s3 + $0x5a0] sm:$0xff]
      %v2066 = vld [vmem:[%s3 + $0x5a8] sm:$0xff]
      %v2067 = vld [vmem:[%s3 + $0x5b0] sm:$0xff]
      %v2068 = vld [vmem:[%s3 + $0x5b8] sm:$0xff]
      %v2069 = vld [vmem:[%s3 + $0x5c0] sm:$0xff]
      %v2070 = vld [vmem:[%s3 + $0x5c8] sm:$0xff]
      %v2071 = vld [vmem:[%s3 + $0x5d0] sm:$0xff]
      %v2072 = vld [vmem:[%s3 + $0x5d8] sm:$0xff]
      %v2073 = vld [vmem:[%s3 + $0x5e0] sm:$0xff]
      %v2074 = vld [vmem:[%s3 + $0x5e8] sm:$0xff]
      %v2075 = vld [vmem:[%s3 + $0x5f0] sm:$0xff]
      %v2076 = vld [vmem:[%s3 + $0x5f8] sm:$0xff]
      %v2077 = vld [vmem:[%s3 + $0x600] sm:$0xff]
      %v2078 = vld [vmem:[%s3 + $0x608] sm:$0xff]
      %v2079 = vld [vmem:[%s3 + $0x610] sm:$0xff]
      %v2080 = vld [vmem:[%s3 + $0x618] sm:$0xff]
      %v2081 = vld [vmem:[%s3 + $0x620] sm:$0xff]
      %v2082 = vld [vmem:[%s3 + $0x628] sm:$0xff]
      %v2083 = vld [vmem:[%s3 + $0x630] sm:$0xff]
      %v2084 = vld [vmem:[%s3 + $0x638] sm:$0xff]
      %v2085 = vld [vmem:[%s3 + $0x640] sm:$0xff]
      %v2086 = vld [vmem:[%s3 + $0x648] sm:$0xff]
      %v2087 = vld [vmem:[%s3 + $0x650] sm:$0xff]
      %v2088 = vld [vmem:[%s3 + $0x658] sm:$0xff]
      %v2089 = vld [vmem:[%s3 + $0x660] sm:$0xff]
      %v2090 = vld [vmem:[%s3 + $0x668] sm:$0xff]
      %v2091 = vld [vmem:[%s3 + $0x670] sm:$0xff]
      %v2092 = vld [vmem:[%s3 + $0x678] sm:$0xff]
      %v2093 = vld [vmem:[%s3 + $0x680] sm:$0xff]
      %v2094 = vld [vmem:[%s3 + $0x688] sm:$0xff]
      %v2095 = vld [vmem:[%s3 + $0x690] sm:$0xff]
      %v2096 = vld [vmem:[%s3 + $0x698] sm:$0xff]
      %v2097 = vld [vmem:[%s3 + $0x6a0] sm:$0xff]
      %v2098 = vld [vmem:[%s3 + $0x6a8] sm:$0xff]
      %v2099 = vld [vmem:[%s3 + $0x6b0] sm:$0xff]
      %v2100 = vld [vmem:[%s3 + $0x6b8] sm:$0xff]
      %v2101 = vld [vmem:[%s3 + $0x6c0] sm:$0xff]
      %v2102 = vld [vmem:[%s3 + $0x6c8] sm:$0xff]
      %v2103 = vld [vmem:[%s3 + $0x6d0] sm:$0xff]
      %v2104 = vld [vmem:[%s3 + $0x6d8] sm:$0xff]
      %v2105 = vld [vmem:[%s3 + $0x6e0] sm:$0xff]
      %v2106 = vld [vmem:[%s3 + $0x6e8] sm:$0xff]
      %v2107 = vld [vmem:[%s3 + $0x6f0] sm:$0xff]
      %v2108 = vld [vmem:[%s3 + $0x6f8] sm:$0xff]
      %v2109 = vld [vmem:[%s3 + $0x700] sm:$0xff]
      %v2110 = vld [vmem:[%s3 + $0x708] sm:$0xff]
      %v2111 = vld [vmem:[%s3 + $0x710] sm:$0xff]
      %v2112 = vld [vmem:[%s3 + $0x718] sm:$0xff]
      %v2113 = vld [vmem:[%s3 + $0x720] sm:$0xff]
      %v2114 = vld [vmem:[%s3 + $0x728] sm:$0xff]
      %v2115 = vld [vmem:[%s3 + $0x730] sm:$0xff]
      %v2116 = vld [vmem:[%s3 + $0x738] sm:$0xff]
      %v2117 = vld [vmem:[%s3 + $0x740] sm:$0xff]
      %v2118 = vld [vmem:[%s3 + $0x748] sm:$0xff]
      %v2119 = vld [vmem:[%s3 + $0x750] sm:$0xff]
      %v2120 = vld [vmem:[%s3 + $0x758] sm:$0xff]
      %v2121 = vld [vmem:[%s3 + $0x760] sm:$0xff]
      %v2122 = vld [vmem:[%s3 + $0x768] sm:$0xff]
      %v2123 = vld [vmem:[%s3 + $0x770] sm:$0xff]
      %v2124 = vld [vmem:[%s3 + $0x778] sm:$0xff]
      %v2125 = vld [vmem:[%s3 + $0x780] sm:$0xff]
      %v2126 = vld [vmem:[%s3 + $0x788] sm:$0xff]
      %v2127 = vld [vmem:[%s3 + $0x790] sm:$0xff]
      %v2128 = vld [vmem:[%s3 + $0x798] sm:$0xff]
      %v2129 = vld [vmem:[%s3 + $0x7a0] sm:$0xff]
      %v2130 = vld [vmem:[%s3 + $0x7a8] sm:$0xff]
      %v2131 = vld [vmem:[%s3 + $0x7b0] sm:$0xff]
      %v2132 = vld [vmem:[%s3 + $0x7b8] sm:$0xff]
      %v2133 = vld [vmem:[%s3 + $0x7c0] sm:$0xff]
      %v2134 = vld [vmem:[%s3 + $0x7c8] sm:$0xff]
      %v2135 = vld [vmem:[%s3 + $0x7d0] sm:$0xff]
      %v2136 = vld [vmem:[%s3 + $0x7d8] sm:$0xff]
      %v2137 = vld [vmem:[%s3 + $0x7e0] sm:$0xff]
      %v2138 = vld [vmem:[%s3 + $0x7e8] sm:$0xff]
      %v2139 = vld [vmem:[%s3 + $0x7f0] sm:$0xff]
      %v2140 = vld [vmem:[%s3 + $0x7f8] sm:$0xff]
      %v2141 = vld [vmem:[%s3 + $0x800] sm:$0xff]
      %v2142 = vld [vmem:[%s3 + $0x808] sm:$0xff]
      %v2143 = vld [vmem:[%s3 + $0x810] sm:$0xff]
      %v2144 = vld [vmem:[%s3 + $0x818] sm:$0xff]
      %v2145 = vld [vmem:[%s3 + $0x820] sm:$0xff]
      %v2146 = vld [vmem:[%s3 + $0x828] sm:$0xff]
      %v2147 = vld [vmem:[%s3 + $0x830] sm:$0xff]
      %v2148 = vld [vmem:[%s3 + $0x838] sm:$0xff]
      %v2149 = vld [vmem:[%s3 + $0x840] sm:$0xff]
      %v2150 = vld [vmem:[%s3 + $0x848] sm:$0xff]
      %v2151 = vld [vmem:[%s3 + $0x850] sm:$0xff]
      %v2152 = vld [vmem:[%s3 + $0x858] sm:$0xff]
      %v2153 = vld [vmem:[%s3 + $0x860] sm:$0xff]
      %v2154 = vld [vmem:[%s3 + $0x868] sm:$0xff]
      %v2155 = vld [vmem:[%s3 + $0x870] sm:$0xff]
      %v2156 = vld [vmem:[%s3 + $0x878] sm:$0xff]
      %v2157 = vld [vmem:[%s3 + $0x880] sm:$0xff]
      %v2158 = vld [vmem:[%s3 + $0x888] sm:$0xff]
      %v2159 = vld [vmem:[%s3 + $0x890] sm:$0xff]
      %v2160 = vld [vmem:[%s3 + $0x898] sm:$0xff]
      %v2161 = vld [vmem:[%s3 + $0x8a0] sm:$0xff]
      %v2162 = vld [vmem:[%s3 + $0x8a8] sm:$0xff]
      %v2163 = vld [vmem:[%s3 + $0x8b0] sm:$0xff]
      %v2164 = vld [vmem:[%s3 + $0x8b8] sm:$0xff]
      %v2165 = vld [vmem:[%s3 + $0x8c0] sm:$0xff]
      %v2166 = vld [vmem:[%s3 + $0x8c8] sm:$0xff]
      %v2167 = vld [vmem:[%s3 + $0x8d0] sm:$0xff]
      %v2168 = vld [vmem:[%s3 + $0x8d8] sm:$0xff]
      %v2169 = vld [vmem:[%s3 + $0x8e0] sm:$0xff]
      %v2170 = vld [vmem:[%s3 + $0x8e8] sm:$0xff]
      %v2171 = vld [vmem:[%s3 + $0x8f0] sm:$0xff]
      %v2172 = vld [vmem:[%s3 + $0x8f8] sm:$0xff]
      %v2173 = vld [vmem:[%s3 + $0x900] sm:$0xff]
      %v2174 = vld [vmem:[%s3 + $0x908] sm:$0xff]
      %v2175 = vld [vmem:[%s3 + $0x910] sm:$0xff]
      %v2176 = vld [vmem:[%s3 + $0x918] sm:$0xff]
      %v2177 = vld [vmem:[%s3 + $0x920] sm:$0xff]
      %v2178 = vld [vmem:[%s3 + $0x928] sm:$0xff]
      %v2179 = vld [vmem:[%s3 + $0x930] sm:$0xff]
      %v2180 = vld [vmem:[%s3 + $0x938] sm:$0xff]
      %v2181 = vld [vmem:[%s3 + $0x940] sm:$0xff]
      %v2182 = vld [vmem:[%s3 + $0x948] sm:$0xff]
      %v2183 = vld [vmem:[%s3 + $0x950] sm:$0xff]
      %v2184 = vld [vmem:[%s3 + $0x958] sm:$0xff]
      %v2185 = vld [vmem:[%s3 + $0x960] sm:$0xff]
      %v2186 = vld [vmem:[%s3 + $0x968] sm:$0xff]
      %v2187 = vld [vmem:[%s3 + $0x970] sm:$0xff]
      %v2188 = vld [vmem:[%s3 + $0x978] sm:$0xff]
      %v2189 = vld [vmem:[%s3 + $0x980] sm:$0xff]
      %v2190 = vld [vmem:[%s3 + $0x988] sm:$0xff]
      %v2191 = vld [vmem:[%s3 + $0x990] sm:$0xff]
      %v2192 = vld [vmem:[%s3 + $0x998] sm:$0xff]
      %v2193 = vld [vmem:[%s3 + $0x9a0] sm:$0xff]
      %v2194 = vld [vmem:[%s3 + $0x9a8] sm:$0xff]
      %v2195 = vld [vmem:[%s3 + $0x9b0] sm:$0xff]
      %v2196 = vld [vmem:[%s3 + $0x9b8] sm:$0xff]
      %v2197 = vld [vmem:[%s3 + $0x9c0] sm:$0xff]
      %v2198 = vld [vmem:[%s3 + $0x9c8] sm:$0xff]
      %v2199 = vld [vmem:[%s3 + $0x9d0] sm:$0xff]
      %v2200 = vld [vmem:[%s3 + $0x9d8] sm:$0xff]
      %v2201 = vld [vmem:[%s3 + $0x9e0] sm:$0xff]
      %v2202 = vld [vmem:[%s3 + $0x9e8] sm:$0xff]
      %v2203 = vld [vmem:[%s3 + $0x9f0] sm:$0xff]
      %v2204 = vld [vmem:[%s3 + $0x9f8] sm:$0xff]
      %v2205 = vld [vmem:[%s3 + $0xa00] sm:$0xff]
      %v2206 = vld [vmem:[%s3 + $0xa08] sm:$0xff]
      %v2207 = vld [vmem:[%s3 + $0xa10] sm:$0xff]
      %v2208 = vld [vmem:[%s3 + $0xa18] sm:$0xff]
      %v2209 = vld [vmem:[%s3 + $0xa20] sm:$0xff]
      %v2210 = vld [vmem:[%s3 + $0xa28] sm:$0xff]
      %v2211 = vld [vmem:[%s3 + $0xa30] sm:$0xff]
      %v2212 = vld [vmem:[%s3 + $0xa38] sm:$0xff]
      %v2213 = vld [vmem:[%s3 + $0xa40] sm:$0xff]
      %v2214 = vld [vmem:[%s3 + $0xa48] sm:$0xff]
      %v2215 = vld [vmem:[%s3 + $0xa50] sm:$0xff]
      %v2216 = vld [vmem:[%s3 + $0xa58] sm:$0xff]
      %v2217 = vld [vmem:[%s3 + $0xa60] sm:$0xff]
      %v2218 = vld [vmem:[%s3 + $0xa68] sm:$0xff]
      %v2219 = vld [vmem:[%s3 + $0xa70] sm:$0xff]
      %v2220 = vld [vmem:[%s3 + $0xa78] sm:$0xff]
      %v2221 = vld [vmem:[%s3 + $0xa80] sm:$0xff]
      %v2222 = vld [vmem:[%s3 + $0xa88] sm:$0xff]
      %v2223 = vld [vmem:[%s3 + $0xa90] sm:$0xff]
      %v2224 = vld [vmem:[%s3 + $0xa98] sm:$0xff]
      %v2225 = vld [vmem:[%s3 + $0xaa0] sm:$0xff]
      %v2226 = vld [vmem:[%s3 + $0xaa8] sm:$0xff]
      %v2227 = vld [vmem:[%s3 + $0xab0] sm:$0xff]
      %v2228 = vld [vmem:[%s3 + $0xab8] sm:$0xff]
      %v2229 = vld [vmem:[%s3 + $0xac0] sm:$0xff]
      %v2230 = vld [vmem:[%s3 + $0xac8] sm:$0xff]
      %v2231 = vld [vmem:[%s3 + $0xad0] sm:$0xff]
      %v2232 = vld [vmem:[%s3 + $0xad8] sm:$0xff]
      %v2233 = vld [vmem:[%s3 + $0xae0] sm:$0xff]
      %v2234 = vld [vmem:[%s3 + $0xae8] sm:$0xff]
      %v2235 = vld [vmem:[%s3 + $0xaf0] sm:$0xff]
      %v2236 = vld [vmem:[%s3 + $0xaf8] sm:$0xff]
      %v2237 = vld [vmem:[%s3 + $0xb00] sm:$0xff]
      %v2238 = vld [vmem:[%s3 + $0xb08] sm:$0xff]
      %v2239 = vld [vmem:[%s3 + $0xb10] sm:$0xff]
      %v2240 = vld [vmem:[%s3 + $0xb18] sm:$0xff]
      %v2241 = vld [vmem:[%s3 + $0xb20] sm:$0xff]
      %v2242 = vld [vmem:[%s3 + $0xb28] sm:$0xff]
      %v2243 = vld [vmem:[%s3 + $0xb30] sm:$0xff]
      %v2244 = vld [vmem:[%s3 + $0xb38] sm:$0xff]
      %v2245 = vld [vmem:[%s3 + $0xb40] sm:$0xff]
      %v2246 = vld [vmem:[%s3 + $0xb48] sm:$0xff]
      %v2247 = vld [vmem:[%s3 + $0xb50] sm:$0xff]
      %v2248 = vld [vmem:[%s3 + $0xb58] sm:$0xff]
      %v2249 = vld [vmem:[%s3 + $0xb60] sm:$0xff]
      %v2250 = vld [vmem:[%s3 + $0xb68] sm:$0xff]
      %v2251 = vld [vmem:[%s3 + $0xb70] sm:$0xff]
      %v2252 = vld [vmem:[%s3 + $0xb78] sm:$0xff]
      %v2253 = vld [vmem:[%s3 + $0xb80] sm:$0xff]
      %v2254 = vld [vmem:[%s3 + $0xb88] sm:$0xff]
      %v2255 = vld [vmem:[%s3 + $0xb90] sm:$0xff]
      %v2256 = vld [vmem:[%s3 + $0xb98] sm:$0xff]
      %v2257 = vld [vmem:[%s3 + $0xba0] sm:$0xff]
      %v2258 = vld [vmem:[%s3 + $0xba8] sm:$0xff]
      %v2259 = vld [vmem:[%s3 + $0xbb0] sm:$0xff]
      %v2260 = vld [vmem:[%s3 + $0xbb8] sm:$0xff]
      %v2261 = vld [vmem:[%s3 + $0xbc0] sm:$0xff]
      %v2262 = vld [vmem:[%s3 + $0xbc8] sm:$0xff]
      %v2263 = vld [vmem:[%s3 + $0xbd0] sm:$0xff]
      %v2264 = vld [vmem:[%s3 + $0xbd8] sm:$0xff]
      %v2265 = vld [vmem:[%s3 + $0xbe0] sm:$0xff]
      %v2266 = vld [vmem:[%s3 + $0xbe8] sm:$0xff]
      %v2267 = vld [vmem:[%s3 + $0xbf0] sm:$0xff]
      %v2268 = vld [vmem:[%s3 + $0xbf8] sm:$0xff]
      %v2269 = vld [vmem:[%s3 + $0xc00] sm:$0xff]
      %v2270 = vld [vmem:[%s3 + $0xc08] sm:$0xff]
      %v2271 = vld [vmem:[%s3 + $0xc10] sm:$0xff]
      %v2272 = vld [vmem:[%s3 + $0xc18] sm:$0xff]
      %v2273 = vld [vmem:[%s3 + $0xc20] sm:$0xff]
      %v2274 = vld [vmem:[%s3 + $0xc28] sm:$0xff]
      %v2275 = vld [vmem:[%s3 + $0xc30] sm:$0xff]
      %v2276 = vld [vmem:[%s3 + $0xc38] sm:$0xff]
      %v2277 = vld [vmem:[%s3 + $0xc40] sm:$0xff]
      %v2278 = vld [vmem:[%s3 + $0xc48] sm:$0xff]
      %v2279 = vld [vmem:[%s3 + $0xc50] sm:$0xff]
      %v2280 = vld [vmem:[%s3 + $0xc58] sm:$0xff]
      %v2281 = vld [vmem:[%s3 + $0xc60] sm:$0xff]
      %v2282 = vld [vmem:[%s3 + $0xc68] sm:$0xff]
      %v2283 = vld [vmem:[%s3 + $0xc70] sm:$0xff]
      %v2284 = vld [vmem:[%s3 + $0xc78] sm:$0xff]
      %v2285 = vld [vmem:[%s4] sm:$0x1]
      %v2287 = vlaneseq
      %v2288 = vshrl.u32 %v2287, 7
      %v2289 = vsub.s32 0, %v2288
      %v2290 = vrot.slane %v2285, %v2289
      %2292 = vmatprep.subr.mxu0 0.0
      %2293 = vmatpush1.msra.mxu0 %v1900
      %2294 = vmatprep.subr.mxu0 0.0
      %2295 = vmatpush1.msra.mxu0 %v1899
      %2296 = vmatprep.subr.mxu0 0.0
      %2297 = vmatpush1.msra.mxu0 %v1898
      %2298 = vmatprep.subr.mxu0 0.0
      %2299 = vmatpush1.msra.mxu0 %v1897
      %2300 = vmatprep.subr.mxu0 0.0
      %2301 = vmatpush1.msra.mxu0 %v1896
      %2302 = vmatprep.subr.mxu0 0.0
      %2303 = vmatpush1.msra.mxu0 %v1895
      %2304 = vmatprep.subr.mxu0 0.0
      %2305 = vmatpush1.msra.mxu0 %v1894
      %2306 = vmatprep.subr.mxu0 0.0
      %2307 = vmatpush1.msra.mxu0 %v1893
      %2308 = vmatprep.subr.mxu0 0.0
      %2309 = vmatpush1.msra.mxu0 %v1892
      %2310 = vmatprep.subr.mxu0 0.0
      %2311 = vmatpush1.msra.mxu0 %v1891
      %2312 = vmatprep.subr.mxu0 0.0
      %2313 = vmatpush1.msra.mxu0 %v1890
      %2314 = vmatprep.subr.mxu0 0.0
      %2315 = vmatpush1.msra.mxu0 %v1889
      %2316 = vmatprep.subr.mxu0 0.0
      %2317 = vmatpush1.msra.mxu0 %v1888
      %2318 = vmatprep.subr.mxu0 0.0
      %2319 = vmatpush1.msra.mxu0 %v1887
      %2320 = vmatprep.subr.mxu0 0.0
      %2321 = vmatpush1.msra.mxu0 %v1886
      %2322 = vmatprep.subr.mxu0 0.0
      %2323 = vmatpush1.msra.mxu0 %v1885
      %2324 = vmatprep.subr.mxu0 0.0
      %2325 = vmatpush2.msra.mxu0 %v1916
      %2326 = vmatprep.subr.mxu0 0.0
      %2327 = vmatpush2.msra.mxu0 %v1915
      %2328 = vmatprep.subr.mxu0 0.0
      %2329 = vmatpush2.msra.mxu0 %v1914
      %2330 = vmatprep.subr.mxu0 0.0
      %2331 = vmatpush2.msra.mxu0 %v1913
      %2332 = vmatprep.subr.mxu0 0.0
      %2333 = vmatpush2.msra.mxu0 %v1912
      %2334 = vmatprep.subr.mxu0 0.0
      %2335 = vmatpush2.msra.mxu0 %v1911
      %2336 = vmatprep.subr.mxu0 0.0
      %2337 = vmatpush2.msra.mxu0 %v1910
      %2338 = vmatprep.subr.mxu0 0.0
      %2339 = vmatpush2.msra.mxu0 %v1909
      %2340 = vmatprep.subr.mxu0 0.0
      %2341 = vmatpush2.msra.mxu0 %v1908
      %2342 = vmatprep.subr.mxu0 0.0
      %2343 = vmatpush2.msra.mxu0 %v1907
      %2344 = vmatprep.subr.mxu0 0.0
      %2345 = vmatpush2.msra.mxu0 %v1906
      %2346 = vmatprep.subr.mxu0 0.0
      %2347 = vmatpush2.msra.mxu0 %v1905
      %2348 = vmatprep.subr.mxu0 0.0
      %2349 = vmatpush2.msra.mxu0 %v1904
      %2350 = vmatprep.subr.mxu0 0.0
      %2351 = vmatpush2.msra.mxu0 %v1903
      %2352 = vmatprep.subr.mxu0 0.0
      %2353 = vmatpush2.msra.mxu0 %v1902
      %2354 = vmatprep.subr.mxu0 0.0
      %2355 = vmatpush2.msra.mxu0 %v1901
      %2356 = vmatprep.mubr.f32.mxu0 %v1436
      %2357 = vmatmul.mubr.f32.gmra.mxu0 %v1435
      %v2358 = vpop.f32.mrf.mxu0
      %v2359 = vadd.f32 %v2290, %v2358
      %v2360 = vpop.f32.mrf.mxu0
      %2361 = vmatprep.mubr.f32.mxu0 %v1461
      %2362 = vmatmul.mubr.f32.gmra.mxu0 %v1460
      %v2363 = vpop.f32.mrf.mxu0
      %v2364 = vadd.f32 %v2290, %v2363
      %v2365 = vpop.f32.mrf.mxu0
      %2366 = vmatprep.mubr.f32.mxu0 %v1486
      %2367 = vmatmul.mubr.f32.gmra.mxu0 %v1485
      %v2368 = vpop.f32.mrf.mxu0
      %v2369 = vadd.f32 %v2290, %v2368
      %v2370 = vpop.f32.mrf.mxu0
      %2371 = vmatprep.mubr.f32.mxu0 %v1511
      %2372 = vmatmul.mubr.f32.gmra.mxu0 %v1510
      %v2373 = vpop.f32.mrf.mxu0
      %v2374 = vadd.f32 %v2290, %v2373
      %v2375 = vpop.f32.mrf.mxu0
      %2376 = vmatprep.mubr.f32.mxu0 %v1536
      %2377 = vmatmul.mubr.f32.gmra.mxu0 %v1535
      %v2378 = vpop.f32.mrf.mxu0
      %v2379 = vadd.f32 %v2290, %v2378
      %v2380 = vpop.f32.mrf.mxu0
      %2381 = vmatprep.mubr.f32.mxu0 %v1561
      %2382 = vmatmul.mubr.f32.gmra.mxu0 %v1560
      %v2383 = vpop.f32.mrf.mxu0
      %v2384 = vadd.f32 %v2290, %v2383
      %v2385 = vpop.f32.mrf.mxu0
      %2386 = vmatprep.mubr.f32.mxu0 %v1586
      %2387 = vmatmul.mubr.f32.gmra.mxu0 %v1585
      %v2388 = vpop.f32.mrf.mxu0
      %v2389 = vadd.f32 %v2290, %v2388
      %v2390 = vpop.f32.mrf.mxu0
      %2391 = vmatprep.mubr.f32.mxu0 %v1611
      %2392 = vmatmul.mubr.f32.gmra.mxu0 %v1610
      %v2393 = vpop.f32.mrf.mxu0
      %v2394 = vadd.f32 %v2290, %v2393
      %v2395 = vpop.f32.mrf.mxu0
      %2396 = vmatprep.mubr.f32.mxu0 %v1636
      %2397 = vmatmul.mubr.f32.gmra.mxu0 %v1635
      %v2398 = vpop.f32.mrf.mxu0
      %v2399 = vadd.f32 %v2290, %v2398
      %v2400 = vpop.f32.mrf.mxu0
      %2401 = vmatprep.mubr.f32.mxu0 %v1661
      %2402 = vmatmul.mubr.f32.gmra.mxu0 %v1660
      %v2403 = vpop.f32.mrf.mxu0
      %v2404 = vadd.f32 %v2290, %v2403
      %v2405 = vpop.f32.mrf.mxu0
      %2406 = vmatprep.mubr.f32.mxu0 %v1686
      %2407 = vmatmul.mubr.f32.gmra.mxu0 %v1685
      %v2408 = vpop.f32.mrf.mxu0
      %v2409 = vadd.f32 %v2290, %v2408
      %v2410 = vpop.f32.mrf.mxu0
      %2411 = vmatprep.mubr.f32.mxu0 %v1711
      %2412 = vmatmul.mubr.f32.gmra.mxu0 %v1710
      %v2413 = vpop.f32.mrf.mxu0
      %v2414 = vadd.f32 %v2290, %v2413
      %v2415 = vpop.f32.mrf.mxu0
      %2416 = vmatprep.mubr.f32.mxu0 %v1736
      %2417 = vmatmul.mubr.f32.gmra.mxu0 %v1735
      %v2418 = vpop.f32.mrf.mxu0
      %v2419 = vadd.f32 %v2290, %v2418
      %v2420 = vpop.f32.mrf.mxu0
      %2421 = vmatprep.mubr.f32.mxu0 %v1761
      %2422 = vmatmul.mubr.f32.gmra.mxu0 %v1760
      %v2423 = vpop.f32.mrf.mxu0
      %v2424 = vadd.f32 %v2290, %v2423
      %v2425 = vpop.f32.mrf.mxu0
      %2426 = vmatprep.mubr.f32.mxu0 %v1786
      %2427 = vmatmul.mubr.f32.gmra.mxu0 %v1785
      %v2428 = vpop.f32.mrf.mxu0
      %v2429 = vadd.f32 %v2290, %v2428
      %v2430 = vpop.f32.mrf.mxu0
      %2431 = vmatprep.mubr.f32.mxu0 %v1811
      %2432 = vmatmul.mubr.f32.gmra.mxu0 %v1810
      %v2433 = vpop.f32.mrf.mxu0
      %v2434 = vadd.f32 %v2290, %v2433
      %v2435 = vpop.f32.mrf.mxu0
      %2436 = vmatprep.mubr.f32.mxu0 %v1836
      %2437 = vmatmul.mubr.f32.gmra.mxu0 %v1835
      %v2438 = vpop.f32.mrf.mxu0
      %v2439 = vadd.f32 %v2290, %v2438
      %v2440 = vpop.f32.mrf.mxu0
      %2441 = vmatprep.mubr.f32.mxu0 %v1861
      %2442 = vmatmul.mubr.f32.gmra.mxu0 %v1860
      %v2443 = vpop.f32.mrf.mxu0
      %v2444 = vadd.f32 %v2290, %v2443
      %v2445 = vpop.f32.mrf.mxu0
      %2446 = vdwg.mxu0
      %2447 = vmatprep.subr.mxu0 0.0
      %2448 = vmatpush1.msra.mxu0 %v1932
      %2449 = vmatprep.subr.mxu0 0.0
      %2450 = vmatpush1.msra.mxu0 %v1931
      %2451 = vmatprep.subr.mxu0 0.0
      %2452 = vmatpush1.msra.mxu0 %v1930
      %2453 = vmatprep.subr.mxu0 0.0
      %2454 = vmatpush1.msra.mxu0 %v1929
      %2455 = vmatprep.subr.mxu0 0.0
      %2456 = vmatpush1.msra.mxu0 %v1928
      %2457 = vmatprep.subr.mxu0 0.0
      %2458 = vmatpush1.msra.mxu0 %v1927
      %2459 = vmatprep.subr.mxu0 0.0
      %2460 = vmatpush1.msra.mxu0 %v1926
      %2461 = vmatprep.subr.mxu0 0.0
      %2462 = vmatpush1.msra.mxu0 %v1925
      %2463 = vmatprep.subr.mxu0 0.0
      %2464 = vmatpush1.msra.mxu0 %v1924
      %2465 = vmatprep.subr.mxu0 0.0
      %2466 = vmatpush1.msra.mxu0 %v1923
      %2467 = vmatprep.subr.mxu0 0.0
      %2468 = vmatpush1.msra.mxu0 %v1922
      %2469 = vmatprep.subr.mxu0 0.0
      %2470 = vmatpush1.msra.mxu0 %v1921
      %2471 = vmatprep.subr.mxu0 0.0
      %2472 = vmatpush1.msra.mxu0 %v1920
      %2473 = vmatprep.subr.mxu0 0.0
      %2474 = vmatpush1.msra.mxu0 %v1919
      %2475 = vmatprep.subr.mxu0 0.0
      %2476 = vmatpush1.msra.mxu0 %v1918
      %2477 = vmatprep.subr.mxu0 0.0
      %2478 = vmatpush1.msra.mxu0 %v1917
      %2479 = vmatprep.subr.mxu0 0.0
      %2480 = vmatpush2.msra.mxu0 %v1948
      %2481 = vmatprep.subr.mxu0 0.0
      %2482 = vmatpush2.msra.mxu0 %v1947
      %2483 = vmatprep.subr.mxu0 0.0
      %2484 = vmatpush2.msra.mxu0 %v1946
      %2485 = vmatprep.subr.mxu0 0.0
      %2486 = vmatpush2.msra.mxu0 %v1945
      %2487 = vmatprep.subr.mxu0 0.0
      %2488 = vmatpush2.msra.mxu0 %v1944
      %2489 = vmatprep.subr.mxu0 0.0
      %2490 = vmatpush2.msra.mxu0 %v1943
      %2491 = vmatprep.subr.mxu0 0.0
      %2492 = vmatpush2.msra.mxu0 %v1942
      %2493 = vmatprep.subr.mxu0 0.0
      %2494 = vmatpush2.msra.mxu0 %v1941
      %2495 = vmatprep.subr.mxu0 0.0
      %2496 = vmatpush2.msra.mxu0 %v1940
      %2497 = vmatprep.subr.mxu0 0.0
      %2498 = vmatpush2.msra.mxu0 %v1939
      %2499 = vmatprep.subr.mxu0 0.0
      %2500 = vmatpush2.msra.mxu0 %v1938
      %2501 = vmatprep.subr.mxu0 0.0
      %2502 = vmatpush2.msra.mxu0 %v1937
      %2503 = vmatprep.subr.mxu0 0.0
      %2504 = vmatpush2.msra.mxu0 %v1936
      %2505 = vmatprep.subr.mxu0 0.0
      %2506 = vmatpush2.msra.mxu0 %v1935
      %2507 = vmatprep.subr.mxu0 0.0
      %2508 = vmatpush2.msra.mxu0 %v1934
      %2509 = vmatprep.subr.mxu0 0.0
      %2510 = vmatpush2.msra.mxu0 %v1933
      %2511 = vmatprep.mubr.f32.mxu0 %v1438
      %2512 = vmatmul.mubr.f32.gmra.mxu0 %v1437
      %v2513 = vpop.f32.mrf.mxu0
      %v2514 = vadd.f32 %v2359, %v2513
      %v2515 = vpop.f32.mrf.mxu0
      %2516 = vmatprep.mubr.f32.mxu0 %v1463
      %2517 = vmatmul.mubr.f32.gmra.mxu0 %v1462
      %v2518 = vpop.f32.mrf.mxu0
      %v2519 = vadd.f32 %v2364, %v2518
      %v2520 = vpop.f32.mrf.mxu0
      %2521 = vmatprep.mubr.f32.mxu0 %v1488
      %2522 = vmatmul.mubr.f32.gmra.mxu0 %v1487
      %v2523 = vpop.f32.mrf.mxu0
      %v2524 = vadd.f32 %v2369, %v2523
      %v2525 = vpop.f32.mrf.mxu0
      %2526 = vmatprep.mubr.f32.mxu0 %v1513
      %2527 = vmatmul.mubr.f32.gmra.mxu0 %v1512
      %v2528 = vpop.f32.mrf.mxu0
      %v2529 = vadd.f32 %v2374, %v2528
      %v2530 = vpop.f32.mrf.mxu0
      %2531 = vmatprep.mubr.f32.mxu0 %v1538
      %2532 = vmatmul.mubr.f32.gmra.mxu0 %v1537
      %v2533 = vpop.f32.mrf.mxu0
      %v2534 = vadd.f32 %v2379, %v2533
      %v2535 = vpop.f32.mrf.mxu0
      %2536 = vmatprep.mubr.f32.mxu0 %v1563
      %2537 = vmatmul.mubr.f32.gmra.mxu0 %v1562
      %v2538 = vpop.f32.mrf.mxu0
      %v2539 = vadd.f32 %v2384, %v2538
      %v2540 = vpop.f32.mrf.mxu0
      %2541 = vmatprep.mubr.f32.mxu0 %v1588
      %2542 = vmatmul.mubr.f32.gmra.mxu0 %v1587
      %v2543 = vpop.f32.mrf.mxu0
      %v2544 = vadd.f32 %v2389, %v2543
      %v2545 = vpop.f32.mrf.mxu0
      %2546 = vmatprep.mubr.f32.mxu0 %v1613
      %2547 = vmatmul.mubr.f32.gmra.mxu0 %v1612
      %v2548 = vpop.f32.mrf.mxu0
      %v2549 = vadd.f32 %v2394, %v2548
      %v2550 = vpop.f32.mrf.mxu0
      %2551 = vmatprep.mubr.f32.mxu0 %v1638
      %2552 = vmatmul.mubr.f32.gmra.mxu0 %v1637
      %v2553 = vpop.f32.mrf.mxu0
      %v2554 = vadd.f32 %v2399, %v2553
      %v2555 = vpop.f32.mrf.mxu0
      %2556 = vmatprep.mubr.f32.mxu0 %v1663
      %2557 = vmatmul.mubr.f32.gmra.mxu0 %v1662
      %v2558 = vpop.f32.mrf.mxu0
      %v2559 = vadd.f32 %v2404, %v2558
      %v2560 = vpop.f32.mrf.mxu0
      %2561 = vmatprep.mubr.f32.mxu0 %v1688
      %2562 = vmatmul.mubr.f32.gmra.mxu0 %v1687
      %v2563 = vpop.f32.mrf.mxu0
      %v2564 = vadd.f32 %v2409, %v2563
      %v2565 = vpop.f32.mrf.mxu0
      %2566 = vmatprep.mubr.f32.mxu0 %v1713
      %2567 = vmatmul.mubr.f32.gmra.mxu0 %v1712
      %v2568 = vpop.f32.mrf.mxu0
      %v2569 = vadd.f32 %v2414, %v2568
      %v2570 = vpop.f32.mrf.mxu0
      %2571 = vmatprep.mubr.f32.mxu0 %v1738
      %2572 = vmatmul.mubr.f32.gmra.mxu0 %v1737
      %v2573 = vpop.f32.mrf.mxu0
      %v2574 = vadd.f32 %v2419, %v2573
      %v2575 = vpop.f32.mrf.mxu0
      %2576 = vmatprep.mubr.f32.mxu0 %v1763
      %2577 = vmatmul.mubr.f32.gmra.mxu0 %v1762
      %v2578 = vpop.f32.mrf.mxu0
      %v2579 = vadd.f32 %v2424, %v2578
      %v2580 = vpop.f32.mrf.mxu0
      %2581 = vmatprep.mubr.f32.mxu0 %v1788
      %2582 = vmatmul.mubr.f32.gmra.mxu0 %v1787
      %v2583 = vpop.f32.mrf.mxu0
      %v2584 = vadd.f32 %v2429, %v2583
      %v2585 = vpop.f32.mrf.mxu0
      %2586 = vmatprep.mubr.f32.mxu0 %v1813
      %2587 = vmatmul.mubr.f32.gmra.mxu0 %v1812
      %v2588 = vpop.f32.mrf.mxu0
      %v2589 = vadd.f32 %v2434, %v2588
      %v2590 = vpop.f32.mrf.mxu0
      %2591 = vmatprep.mubr.f32.mxu0 %v1838
      %2592 = vmatmul.mubr.f32.gmra.mxu0 %v1837
      %v2593 = vpop.f32.mrf.mxu0
      %v2594 = vadd.f32 %v2439, %v2593
      %v2595 = vpop.f32.mrf.mxu0
      %2596 = vmatprep.mubr.f32.mxu0 %v1863
      %2597 = vmatmul.mubr.f32.gmra.mxu0 %v1862
      %v2598 = vpop.f32.mrf.mxu0
      %v2599 = vadd.f32 %v2444, %v2598
      %v2600 = vpop.f32.mrf.mxu0
      %2601 = vdwg.mxu0
      %2602 = vmatprep.subr.mxu0 0.0
      %2603 = vmatpush1.msra.mxu0 %v1964
      %2604 = vmatprep.subr.mxu0 0.0
      %2605 = vmatpush1.msra.mxu0 %v1963
      %2606 = vmatprep.subr.mxu0 0.0
      %2607 = vmatpush1.msra.mxu0 %v1962
      %2608 = vmatprep.subr.mxu0 0.0
      %2609 = vmatpush1.msra.mxu0 %v1961
      %2610 = vmatprep.subr.mxu0 0.0
      %2611 = vmatpush1.msra.mxu0 %v1960
      %2612 = vmatprep.subr.mxu0 0.0
      %2613 = vmatpush1.msra.mxu0 %v1959
      %2614 = vmatprep.subr.mxu0 0.0
      %2615 = vmatpush1.msra.mxu0 %v1958
      %2616 = vmatprep.subr.mxu0 0.0
      %2617 = vmatpush1.msra.mxu0 %v1957
      %2618 = vmatprep.subr.mxu0 0.0
      %2619 = vmatpush1.msra.mxu0 %v1956
      %2620 = vmatprep.subr.mxu0 0.0
      %2621 = vmatpush1.msra.mxu0 %v1955
      %2622 = vmatprep.subr.mxu0 0.0
      %2623 = vmatpush1.msra.mxu0 %v1954
      %2624 = vmatprep.subr.mxu0 0.0
      %2625 = vmatpush1.msra.mxu0 %v1953
      %2626 = vmatprep.subr.mxu0 0.0
      %2627 = vmatpush1.msra.mxu0 %v1952
      %2628 = vmatprep.subr.mxu0 0.0
      %2629 = vmatpush1.msra.mxu0 %v1951
      %2630 = vmatprep.subr.mxu0 0.0
      %2631 = vmatpush1.msra.mxu0 %v1950
      %2632 = vmatprep.subr.mxu0 0.0
      %2633 = vmatpush1.msra.mxu0 %v1949
      %2634 = vmatprep.subr.mxu0 0.0
      %2635 = vmatpush2.msra.mxu0 %v1980
      %2636 = vmatprep.subr.mxu0 0.0
      %2637 = vmatpush2.msra.mxu0 %v1979
      %2638 = vmatprep.subr.mxu0 0.0
      %2639 = vmatpush2.msra.mxu0 %v1978
      %2640 = vmatprep.subr.mxu0 0.0
      %2641 = vmatpush2.msra.mxu0 %v1977
      %2642 = vmatprep.subr.mxu0 0.0
      %2643 = vmatpush2.msra.mxu0 %v1976
      %2644 = vmatprep.subr.mxu0 0.0
      %2645 = vmatpush2.msra.mxu0 %v1975
      %2646 = vmatprep.subr.mxu0 0.0
      %2647 = vmatpush2.msra.mxu0 %v1974
      %2648 = vmatprep.subr.mxu0 0.0
      %2649 = vmatpush2.msra.mxu0 %v1973
      %2650 = vmatprep.subr.mxu0 0.0
      %2651 = vmatpush2.msra.mxu0 %v1972
      %2652 = vmatprep.subr.mxu0 0.0
      %2653 = vmatpush2.msra.mxu0 %v1971
      %2654 = vmatprep.subr.mxu0 0.0
      %2655 = vmatpush2.msra.mxu0 %v1970
      %2656 = vmatprep.subr.mxu0 0.0
      %2657 = vmatpush2.msra.mxu0 %v1969
      %2658 = vmatprep.subr.mxu0 0.0
      %2659 = vmatpush2.msra.mxu0 %v1968
      %2660 = vmatprep.subr.mxu0 0.0
      %2661 = vmatpush2.msra.mxu0 %v1967
      %2662 = vmatprep.subr.mxu0 0.0
      %2663 = vmatpush2.msra.mxu0 %v1966
      %2664 = vmatprep.subr.mxu0 0.0
      %2665 = vmatpush2.msra.mxu0 %v1965
      %2666 = vmatprep.mubr.f32.mxu0 %v1440
      %2667 = vmatmul.mubr.f32.gmra.mxu0 %v1439
      %v2668 = vpop.f32.mrf.mxu0
      %v2669 = vadd.f32 %v2514, %v2668
      %v2670 = vpop.f32.mrf.mxu0
      %2671 = vmatprep.mubr.f32.mxu0 %v1465
      %2672 = vmatmul.mubr.f32.gmra.mxu0 %v1464
      %v2673 = vpop.f32.mrf.mxu0
      %v2674 = vadd.f32 %v2519, %v2673
      %v2675 = vpop.f32.mrf.mxu0
      %2676 = vmatprep.mubr.f32.mxu0 %v1490
      %2677 = vmatmul.mubr.f32.gmra.mxu0 %v1489
      %v2678 = vpop.f32.mrf.mxu0
      %v2679 = vadd.f32 %v2524, %v2678
      %v2680 = vpop.f32.mrf.mxu0
      %2681 = vmatprep.mubr.f32.mxu0 %v1515
      %2682 = vmatmul.mubr.f32.gmra.mxu0 %v1514
      %v2683 = vpop.f32.mrf.mxu0
      %v2684 = vadd.f32 %v2529, %v2683
      %v2685 = vpop.f32.mrf.mxu0
      %2686 = vmatprep.mubr.f32.mxu0 %v1540
      %2687 = vmatmul.mubr.f32.gmra.mxu0 %v1539
      %v2688 = vpop.f32.mrf.mxu0
      %v2689 = vadd.f32 %v2534, %v2688
      %v2690 = vpop.f32.mrf.mxu0
      %2691 = vmatprep.mubr.f32.mxu0 %v1565
      %2692 = vmatmul.mubr.f32.gmra.mxu0 %v1564
      %v2693 = vpop.f32.mrf.mxu0
      %v2694 = vadd.f32 %v2539, %v2693
      %v2695 = vpop.f32.mrf.mxu0
      %2696 = vmatprep.mubr.f32.mxu0 %v1590
      %2697 = vmatmul.mubr.f32.gmra.mxu0 %v1589
      %v2698 = vpop.f32.mrf.mxu0
      %v2699 = vadd.f32 %v2544, %v2698
      %v2700 = vpop.f32.mrf.mxu0
      %2701 = vmatprep.mubr.f32.mxu0 %v1615
      %2702 = vmatmul.mubr.f32.gmra.mxu0 %v1614
      %v2703 = vpop.f32.mrf.mxu0
      %v2704 = vadd.f32 %v2549, %v2703
      %v2705 = vpop.f32.mrf.mxu0
      %2706 = vmatprep.mubr.f32.mxu0 %v1640
      %2707 = vmatmul.mubr.f32.gmra.mxu0 %v1639
      %v2708 = vpop.f32.mrf.mxu0
      %v2709 = vadd.f32 %v2554, %v2708
      %v2710 = vpop.f32.mrf.mxu0
      %2711 = vmatprep.mubr.f32.mxu0 %v1665
      %2712 = vmatmul.mubr.f32.gmra.mxu0 %v1664
      %v2713 = vpop.f32.mrf.mxu0
      %v2714 = vadd.f32 %v2559, %v2713
      %v2715 = vpop.f32.mrf.mxu0
      %2716 = vmatprep.mubr.f32.mxu0 %v1690
      %2717 = vmatmul.mubr.f32.gmra.mxu0 %v1689
      %v2718 = vpop.f32.mrf.mxu0
      %v2719 = vadd.f32 %v2564, %v2718
      %v2720 = vpop.f32.mrf.mxu0
      %2721 = vmatprep.mubr.f32.mxu0 %v1715
      %2722 = vmatmul.mubr.f32.gmra.mxu0 %v1714
      %v2723 = vpop.f32.mrf.mxu0
      %v2724 = vadd.f32 %v2569, %v2723
      %v2725 = vpop.f32.mrf.mxu0
      %2726 = vmatprep.mubr.f32.mxu0 %v1740
      %2727 = vmatmul.mubr.f32.gmra.mxu0 %v1739
      %v2728 = vpop.f32.mrf.mxu0
      %v2729 = vadd.f32 %v2574, %v2728
      %v2730 = vpop.f32.mrf.mxu0
      %2731 = vmatprep.mubr.f32.mxu0 %v1765
      %2732 = vmatmul.mubr.f32.gmra.mxu0 %v1764
      %v2733 = vpop.f32.mrf.mxu0
      %v2734 = vadd.f32 %v2579, %v2733
      %v2735 = vpop.f32.mrf.mxu0
      %2736 = vmatprep.mubr.f32.mxu0 %v1790
      %2737 = vmatmul.mubr.f32.gmra.mxu0 %v1789
      %v2738 = vpop.f32.mrf.mxu0
      %v2739 = vadd.f32 %v2584, %v2738
      %v2740 = vpop.f32.mrf.mxu0
      %2741 = vmatprep.mubr.f32.mxu0 %v1815
      %2742 = vmatmul.mubr.f32.gmra.mxu0 %v1814
      %v2743 = vpop.f32.mrf.mxu0
      %v2744 = vadd.f32 %v2589, %v2743
      %v2745 = vpop.f32.mrf.mxu0
      %2746 = vmatprep.mubr.f32.mxu0 %v1840
      %2747 = vmatmul.mubr.f32.gmra.mxu0 %v1839
      %v2748 = vpop.f32.mrf.mxu0
      %v2749 = vadd.f32 %v2594, %v2748
      %v2750 = vpop.f32.mrf.mxu0
      %2751 = vmatprep.mubr.f32.mxu0 %v1865
      %2752 = vmatmul.mubr.f32.gmra.mxu0 %v1864
      %v2753 = vpop.f32.mrf.mxu0
      %v2754 = vadd.f32 %v2599, %v2753
      %v2755 = vpop.f32.mrf.mxu0
      %2756 = vdwg.mxu0
      %2757 = vmatprep.subr.mxu0 0.0
      %2758 = vmatpush1.msra.mxu0 %v1996
      %2759 = vmatprep.subr.mxu0 0.0
      %2760 = vmatpush1.msra.mxu0 %v1995
      %2761 = vmatprep.subr.mxu0 0.0
      %2762 = vmatpush1.msra.mxu0 %v1994
      %2763 = vmatprep.subr.mxu0 0.0
      %2764 = vmatpush1.msra.mxu0 %v1993
      %2765 = vmatprep.subr.mxu0 0.0
      %2766 = vmatpush1.msra.mxu0 %v1992
      %2767 = vmatprep.subr.mxu0 0.0
      %2768 = vmatpush1.msra.mxu0 %v1991
      %2769 = vmatprep.subr.mxu0 0.0
      %2770 = vmatpush1.msra.mxu0 %v1990
      %2771 = vmatprep.subr.mxu0 0.0
      %2772 = vmatpush1.msra.mxu0 %v1989
      %2773 = vmatprep.subr.mxu0 0.0
      %2774 = vmatpush1.msra.mxu0 %v1988
      %2775 = vmatprep.subr.mxu0 0.0
      %2776 = vmatpush1.msra.mxu0 %v1987
      %2777 = vmatprep.subr.mxu0 0.0
      %2778 = vmatpush1.msra.mxu0 %v1986
      %2779 = vmatprep.subr.mxu0 0.0
      %2780 = vmatpush1.msra.mxu0 %v1985
      %2781 = vmatprep.subr.mxu0 0.0
      %2782 = vmatpush1.msra.mxu0 %v1984
      %2783 = vmatprep.subr.mxu0 0.0
      %2784 = vmatpush1.msra.mxu0 %v1983
      %2785 = vmatprep.subr.mxu0 0.0
      %2786 = vmatpush1.msra.mxu0 %v1982
      %2787 = vmatprep.subr.mxu0 0.0
      %2788 = vmatpush1.msra.mxu0 %v1981
      %2789 = vmatprep.subr.mxu0 0.0
      %2790 = vmatpush2.msra.mxu0 %v2012
      %2791 = vmatprep.subr.mxu0 0.0
      %2792 = vmatpush2.msra.mxu0 %v2011
      %2793 = vmatprep.subr.mxu0 0.0
      %2794 = vmatpush2.msra.mxu0 %v2010
      %2795 = vmatprep.subr.mxu0 0.0
      %2796 = vmatpush2.msra.mxu0 %v2009
      %2797 = vmatprep.subr.mxu0 0.0
      %2798 = vmatpush2.msra.mxu0 %v2008
      %2799 = vmatprep.subr.mxu0 0.0
      %2800 = vmatpush2.msra.mxu0 %v2007
      %2801 = vmatprep.subr.mxu0 0.0
      %2802 = vmatpush2.msra.mxu0 %v2006
      %2803 = vmatprep.subr.mxu0 0.0
      %2804 = vmatpush2.msra.mxu0 %v2005
      %2805 = vmatprep.subr.mxu0 0.0
      %2806 = vmatpush2.msra.mxu0 %v2004
      %2807 = vmatprep.subr.mxu0 0.0
      %2808 = vmatpush2.msra.mxu0 %v2003
      %2809 = vmatprep.subr.mxu0 0.0
      %2810 = vmatpush2.msra.mxu0 %v2002
      %2811 = vmatprep.subr.mxu0 0.0
      %2812 = vmatpush2.msra.mxu0 %v2001
      %2813 = vmatprep.subr.mxu0 0.0
      %2814 = vmatpush2.msra.mxu0 %v2000
      %2815 = vmatprep.subr.mxu0 0.0
      %2816 = vmatpush2.msra.mxu0 %v1999
      %2817 = vmatprep.subr.mxu0 0.0
      %2818 = vmatpush2.msra.mxu0 %v1998
      %2819 = vmatprep.subr.mxu0 0.0
      %2820 = vmatpush2.msra.mxu0 %v1997
      %2821 = vmatprep.mubr.f32.mxu0 %v1442
      %2822 = vmatmul.mubr.f32.gmra.mxu0 %v1441
      %v2823 = vpop.f32.mrf.mxu0
      %v2824 = vadd.f32 %v2669, %v2823
      %v2825 = vpop.f32.mrf.mxu0
      %2826 = vmatprep.mubr.f32.mxu0 %v1467
      %2827 = vmatmul.mubr.f32.gmra.mxu0 %v1466
      %v2828 = vpop.f32.mrf.mxu0
      %v2829 = vadd.f32 %v2674, %v2828
      %v2830 = vpop.f32.mrf.mxu0
      %2831 = vmatprep.mubr.f32.mxu0 %v1492
      %2832 = vmatmul.mubr.f32.gmra.mxu0 %v1491
      %v2833 = vpop.f32.mrf.mxu0
      %v2834 = vadd.f32 %v2679, %v2833
      %v2835 = vpop.f32.mrf.mxu0
      %2836 = vmatprep.mubr.f32.mxu0 %v1517
      %2837 = vmatmul.mubr.f32.gmra.mxu0 %v1516
      %v2838 = vpop.f32.mrf.mxu0
      %v2839 = vadd.f32 %v2684, %v2838
      %v2840 = vpop.f32.mrf.mxu0
      %2841 = vmatprep.mubr.f32.mxu0 %v1542
      %2842 = vmatmul.mubr.f32.gmra.mxu0 %v1541
      %v2843 = vpop.f32.mrf.mxu0
      %v2844 = vadd.f32 %v2689, %v2843
      %v2845 = vpop.f32.mrf.mxu0
      %2846 = vmatprep.mubr.f32.mxu0 %v1567
      %2847 = vmatmul.mubr.f32.gmra.mxu0 %v1566
      %v2848 = vpop.f32.mrf.mxu0
      %v2849 = vadd.f32 %v2694, %v2848
      %v2850 = vpop.f32.mrf.mxu0
      %2851 = vmatprep.mubr.f32.mxu0 %v1592
      %2852 = vmatmul.mubr.f32.gmra.mxu0 %v1591
      %v2853 = vpop.f32.mrf.mxu0
      %v2854 = vadd.f32 %v2699, %v2853
      %v2855 = vpop.f32.mrf.mxu0
      %2856 = vmatprep.mubr.f32.mxu0 %v1617
      %2857 = vmatmul.mubr.f32.gmra.mxu0 %v1616
      %v2858 = vpop.f32.mrf.mxu0
      %v2859 = vadd.f32 %v2704, %v2858
      %v2860 = vpop.f32.mrf.mxu0
      %2861 = vmatprep.mubr.f32.mxu0 %v1642
      %2862 = vmatmul.mubr.f32.gmra.mxu0 %v1641
      %v2863 = vpop.f32.mrf.mxu0
      %v2864 = vadd.f32 %v2709, %v2863
      %v2865 = vpop.f32.mrf.mxu0
      %2866 = vmatprep.mubr.f32.mxu0 %v1667
      %2867 = vmatmul.mubr.f32.gmra.mxu0 %v1666
      %v2868 = vpop.f32.mrf.mxu0
      %v2869 = vadd.f32 %v2714, %v2868
      %v2870 = vpop.f32.mrf.mxu0
      %2871 = vmatprep.mubr.f32.mxu0 %v1692
      %2872 = vmatmul.mubr.f32.gmra.mxu0 %v1691
      %v2873 = vpop.f32.mrf.mxu0
      %v2874 = vadd.f32 %v2719, %v2873
      %v2875 = vpop.f32.mrf.mxu0
      %2876 = vmatprep.mubr.f32.mxu0 %v1717
      %2877 = vmatmul.mubr.f32.gmra.mxu0 %v1716
      %v2878 = vpop.f32.mrf.mxu0
      %v2879 = vadd.f32 %v2724, %v2878
      %v2880 = vpop.f32.mrf.mxu0
      %2881 = vmatprep.mubr.f32.mxu0 %v1742
      %2882 = vmatmul.mubr.f32.gmra.mxu0 %v1741
      %v2883 = vpop.f32.mrf.mxu0
      %v2884 = vadd.f32 %v2729, %v2883
      %v2885 = vpop.f32.mrf.mxu0
      %2886 = vmatprep.mubr.f32.mxu0 %v1767
      %2887 = vmatmul.mubr.f32.gmra.mxu0 %v1766
      %v2888 = vpop.f32.mrf.mxu0
      %v2889 = vadd.f32 %v2734, %v2888
      %v2890 = vpop.f32.mrf.mxu0
      %2891 = vmatprep.mubr.f32.mxu0 %v1792
      %2892 = vmatmul.mubr.f32.gmra.mxu0 %v1791
      %v2893 = vpop.f32.mrf.mxu0
      %v2894 = vadd.f32 %v2739, %v2893
      %v2895 = vpop.f32.mrf.mxu0
      %2896 = vmatprep.mubr.f32.mxu0 %v1817
      %2897 = vmatmul.mubr.f32.gmra.mxu0 %v1816
      %v2898 = vpop.f32.mrf.mxu0
      %v2899 = vadd.f32 %v2744, %v2898
      %v2900 = vpop.f32.mrf.mxu0
      %2901 = vmatprep.mubr.f32.mxu0 %v1842
      %2902 = vmatmul.mubr.f32.gmra.mxu0 %v1841
      %v2903 = vpop.f32.mrf.mxu0
      %v2904 = vadd.f32 %v2749, %v2903
      %v2905 = vpop.f32.mrf.mxu0
      %2906 = vmatprep.mubr.f32.mxu0 %v1867
      %2907 = vmatmul.mubr.f32.gmra.mxu0 %v1866
      %v2908 = vpop.f32.mrf.mxu0
      %v2909 = vadd.f32 %v2754, %v2908
      %v2910 = vpop.f32.mrf.mxu0
      %2911 = vdwg.mxu0
      %2912 = vmatprep.subr.mxu0 0.0
      %2913 = vmatpush1.msra.mxu0 %v2028
      %2914 = vmatprep.subr.mxu0 0.0
      %2915 = vmatpush1.msra.mxu0 %v2027
      %2916 = vmatprep.subr.mxu0 0.0
      %2917 = vmatpush1.msra.mxu0 %v2026
      %2918 = vmatprep.subr.mxu0 0.0
      %2919 = vmatpush1.msra.mxu0 %v2025
      %2920 = vmatprep.subr.mxu0 0.0
      %2921 = vmatpush1.msra.mxu0 %v2024
      %2922 = vmatprep.subr.mxu0 0.0
      %2923 = vmatpush1.msra.mxu0 %v2023
      %2924 = vmatprep.subr.mxu0 0.0
      %2925 = vmatpush1.msra.mxu0 %v2022
      %2926 = vmatprep.subr.mxu0 0.0
      %2927 = vmatpush1.msra.mxu0 %v2021
      %2928 = vmatprep.subr.mxu0 0.0
      %2929 = vmatpush1.msra.mxu0 %v2020
      %2930 = vmatprep.subr.mxu0 0.0
      %2931 = vmatpush1.msra.mxu0 %v2019
      %2932 = vmatprep.subr.mxu0 0.0
      %2933 = vmatpush1.msra.mxu0 %v2018
      %2934 = vmatprep.subr.mxu0 0.0
      %2935 = vmatpush1.msra.mxu0 %v2017
      %2936 = vmatprep.subr.mxu0 0.0
      %2937 = vmatpush1.msra.mxu0 %v2016
      %2938 = vmatprep.subr.mxu0 0.0
      %2939 = vmatpush1.msra.mxu0 %v2015
      %2940 = vmatprep.subr.mxu0 0.0
      %2941 = vmatpush1.msra.mxu0 %v2014
      %2942 = vmatprep.subr.mxu0 0.0
      %2943 = vmatpush1.msra.mxu0 %v2013
      %2944 = vmatprep.subr.mxu0 0.0
      %2945 = vmatpush2.msra.mxu0 %v2044
      %2946 = vmatprep.subr.mxu0 0.0
      %2947 = vmatpush2.msra.mxu0 %v2043
      %2948 = vmatprep.subr.mxu0 0.0
      %2949 = vmatpush2.msra.mxu0 %v2042
      %2950 = vmatprep.subr.mxu0 0.0
      %2951 = vmatpush2.msra.mxu0 %v2041
      %2952 = vmatprep.subr.mxu0 0.0
      %2953 = vmatpush2.msra.mxu0 %v2040
      %2954 = vmatprep.subr.mxu0 0.0
      %2955 = vmatpush2.msra.mxu0 %v2039
      %2956 = vmatprep.subr.mxu0 0.0
      %2957 = vmatpush2.msra.mxu0 %v2038
      %2958 = vmatprep.subr.mxu0 0.0
      %2959 = vmatpush2.msra.mxu0 %v2037
      %2960 = vmatprep.subr.mxu0 0.0
      %2961 = vmatpush2.msra.mxu0 %v2036
      %2962 = vmatprep.subr.mxu0 0.0
      %2963 = vmatpush2.msra.mxu0 %v2035
      %2964 = vmatprep.subr.mxu0 0.0
      %2965 = vmatpush2.msra.mxu0 %v2034
      %2966 = vmatprep.subr.mxu0 0.0
      %2967 = vmatpush2.msra.mxu0 %v2033
      %2968 = vmatprep.subr.mxu0 0.0
      %2969 = vmatpush2.msra.mxu0 %v2032
      %2970 = vmatprep.subr.mxu0 0.0
      %2971 = vmatpush2.msra.mxu0 %v2031
      %2972 = vmatprep.subr.mxu0 0.0
      %2973 = vmatpush2.msra.mxu0 %v2030
      %2974 = vmatprep.subr.mxu0 0.0
      %2975 = vmatpush2.msra.mxu0 %v2029
      %2976 = vmatprep.mubr.f32.mxu0 %v1444
      %2977 = vmatmul.mubr.f32.gmra.mxu0 %v1443
      %v2978 = vpop.f32.mrf.mxu0
      %v2979 = vadd.f32 %v2824, %v2978
      %v2980 = vpop.f32.mrf.mxu0
      %2981 = vmatprep.mubr.f32.mxu0 %v1469
      %2982 = vmatmul.mubr.f32.gmra.mxu0 %v1468
      %v2983 = vpop.f32.mrf.mxu0
      %v2984 = vadd.f32 %v2829, %v2983
      %v2985 = vpop.f32.mrf.mxu0
      %2986 = vmatprep.mubr.f32.mxu0 %v1494
      %2987 = vmatmul.mubr.f32.gmra.mxu0 %v1493
      %v2988 = vpop.f32.mrf.mxu0
      %v2989 = vadd.f32 %v2834, %v2988
      %v2990 = vpop.f32.mrf.mxu0
      %2991 = vmatprep.mubr.f32.mxu0 %v1519
      %2992 = vmatmul.mubr.f32.gmra.mxu0 %v1518
      %v2993 = vpop.f32.mrf.mxu0
      %v2994 = vadd.f32 %v2839, %v2993
      %v2995 = vpop.f32.mrf.mxu0
      %2996 = vmatprep.mubr.f32.mxu0 %v1544
      %2997 = vmatmul.mubr.f32.gmra.mxu0 %v1543
      %v2998 = vpop.f32.mrf.mxu0
      %v2999 = vadd.f32 %v2844, %v2998
      %v3000 = vpop.f32.mrf.mxu0
      %3001 = vmatprep.mubr.f32.mxu0 %v1569
      %3002 = vmatmul.mubr.f32.gmra.mxu0 %v1568
      %v3003 = vpop.f32.mrf.mxu0
      %v3004 = vadd.f32 %v2849, %v3003
      %v3005 = vpop.f32.mrf.mxu0
      %3006 = vmatprep.mubr.f32.mxu0 %v1594
      %3007 = vmatmul.mubr.f32.gmra.mxu0 %v1593
      %v3008 = vpop.f32.mrf.mxu0
      %v3009 = vadd.f32 %v2854, %v3008
      %v3010 = vpop.f32.mrf.mxu0
      %3011 = vmatprep.mubr.f32.mxu0 %v1619
      %3012 = vmatmul.mubr.f32.gmra.mxu0 %v1618
      %v3013 = vpop.f32.mrf.mxu0
      %v3014 = vadd.f32 %v2859, %v3013
      %v3015 = vpop.f32.mrf.mxu0
      %3016 = vmatprep.mubr.f32.mxu0 %v1644
      %3017 = vmatmul.mubr.f32.gmra.mxu0 %v1643
      %v3018 = vpop.f32.mrf.mxu0
      %v3019 = vadd.f32 %v2864, %v3018
      %v3020 = vpop.f32.mrf.mxu0
      %3021 = vmatprep.mubr.f32.mxu0 %v1669
      %3022 = vmatmul.mubr.f32.gmra.mxu0 %v1668
      %v3023 = vpop.f32.mrf.mxu0
      %v3024 = vadd.f32 %v2869, %v3023
      %v3025 = vpop.f32.mrf.mxu0
      %3026 = vmatprep.mubr.f32.mxu0 %v1694
      %3027 = vmatmul.mubr.f32.gmra.mxu0 %v1693
      %v3028 = vpop.f32.mrf.mxu0
      %v3029 = vadd.f32 %v2874, %v3028
      %v3030 = vpop.f32.mrf.mxu0
      %3031 = vmatprep.mubr.f32.mxu0 %v1719
      %3032 = vmatmul.mubr.f32.gmra.mxu0 %v1718
      %v3033 = vpop.f32.mrf.mxu0
      %v3034 = vadd.f32 %v2879, %v3033
      %v3035 = vpop.f32.mrf.mxu0
      %3036 = vmatprep.mubr.f32.mxu0 %v1744
      %3037 = vmatmul.mubr.f32.gmra.mxu0 %v1743
      %v3038 = vpop.f32.mrf.mxu0
      %v3039 = vadd.f32 %v2884, %v3038
      %v3040 = vpop.f32.mrf.mxu0
      %3041 = vmatprep.mubr.f32.mxu0 %v1769
      %3042 = vmatmul.mubr.f32.gmra.mxu0 %v1768
      %v3043 = vpop.f32.mrf.mxu0
      %v3044 = vadd.f32 %v2889, %v3043
      %v3045 = vpop.f32.mrf.mxu0
      %3046 = vmatprep.mubr.f32.mxu0 %v1794
      %3047 = vmatmul.mubr.f32.gmra.mxu0 %v1793
      %v3048 = vpop.f32.mrf.mxu0
      %v3049 = vadd.f32 %v2894, %v3048
      %v3050 = vpop.f32.mrf.mxu0
      %3051 = vmatprep.mubr.f32.mxu0 %v1819
      %3052 = vmatmul.mubr.f32.gmra.mxu0 %v1818
      %v3053 = vpop.f32.mrf.mxu0
      %v3054 = vadd.f32 %v2899, %v3053
      %v3055 = vpop.f32.mrf.mxu0
      %3056 = vmatprep.mubr.f32.mxu0 %v1844
      %3057 = vmatmul.mubr.f32.gmra.mxu0 %v1843
      %v3058 = vpop.f32.mrf.mxu0
      %v3059 = vadd.f32 %v2904, %v3058
      %v3060 = vpop.f32.mrf.mxu0
      %3061 = vmatprep.mubr.f32.mxu0 %v1869
      %3062 = vmatmul.mubr.f32.gmra.mxu0 %v1868
      %v3063 = vpop.f32.mrf.mxu0
      %v3064 = vadd.f32 %v2909, %v3063
      %v3065 = vpop.f32.mrf.mxu0
      %3066 = vdwg.mxu0
      %3067 = vmatprep.subr.mxu0 0.0
      %3068 = vmatpush1.msra.mxu0 %v2060
      %3069 = vmatprep.subr.mxu0 0.0
      %3070 = vmatpush1.msra.mxu0 %v2059
      %3071 = vmatprep.subr.mxu0 0.0
      %3072 = vmatpush1.msra.mxu0 %v2058
      %3073 = vmatprep.subr.mxu0 0.0
      %3074 = vmatpush1.msra.mxu0 %v2057
      %3075 = vmatprep.subr.mxu0 0.0
      %3076 = vmatpush1.msra.mxu0 %v2056
      %3077 = vmatprep.subr.mxu0 0.0
      %3078 = vmatpush1.msra.mxu0 %v2055
      %3079 = vmatprep.subr.mxu0 0.0
      %3080 = vmatpush1.msra.mxu0 %v2054
      %3081 = vmatprep.subr.mxu0 0.0
      %3082 = vmatpush1.msra.mxu0 %v2053
      %3083 = vmatprep.subr.mxu0 0.0
      %3084 = vmatpush1.msra.mxu0 %v2052
      %3085 = vmatprep.subr.mxu0 0.0
      %3086 = vmatpush1.msra.mxu0 %v2051
      %3087 = vmatprep.subr.mxu0 0.0
      %3088 = vmatpush1.msra.mxu0 %v2050
      %3089 = vmatprep.subr.mxu0 0.0
      %3090 = vmatpush1.msra.mxu0 %v2049
      %3091 = vmatprep.subr.mxu0 0.0
      %3092 = vmatpush1.msra.mxu0 %v2048
      %3093 = vmatprep.subr.mxu0 0.0
      %3094 = vmatpush1.msra.mxu0 %v2047
      %3095 = vmatprep.subr.mxu0 0.0
      %3096 = vmatpush1.msra.mxu0 %v2046
      %3097 = vmatprep.subr.mxu0 0.0
      %3098 = vmatpush1.msra.mxu0 %v2045
      %3099 = vmatprep.subr.mxu0 0.0
      %3100 = vmatpush2.msra.mxu0 %v2076
      %3101 = vmatprep.subr.mxu0 0.0
      %3102 = vmatpush2.msra.mxu0 %v2075
      %3103 = vmatprep.subr.mxu0 0.0
      %3104 = vmatpush2.msra.mxu0 %v2074
      %3105 = vmatprep.subr.mxu0 0.0
      %3106 = vmatpush2.msra.mxu0 %v2073
      %3107 = vmatprep.subr.mxu0 0.0
      %3108 = vmatpush2.msra.mxu0 %v2072
      %3109 = vmatprep.subr.mxu0 0.0
      %3110 = vmatpush2.msra.mxu0 %v2071
      %3111 = vmatprep.subr.mxu0 0.0
      %3112 = vmatpush2.msra.mxu0 %v2070
      %3113 = vmatprep.subr.mxu0 0.0
      %3114 = vmatpush2.msra.mxu0 %v2069
      %3115 = vmatprep.subr.mxu0 0.0
      %3116 = vmatpush2.msra.mxu0 %v2068
      %3117 = vmatprep.subr.mxu0 0.0
      %3118 = vmatpush2.msra.mxu0 %v2067
      %3119 = vmatprep.subr.mxu0 0.0
      %3120 = vmatpush2.msra.mxu0 %v2066
      %3121 = vmatprep.subr.mxu0 0.0
      %3122 = vmatpush2.msra.mxu0 %v2065
      %3123 = vmatprep.subr.mxu0 0.0
      %3124 = vmatpush2.msra.mxu0 %v2064
      %3125 = vmatprep.subr.mxu0 0.0
      %3126 = vmatpush2.msra.mxu0 %v2063
      %3127 = vmatprep.subr.mxu0 0.0
      %3128 = vmatpush2.msra.mxu0 %v2062
      %3129 = vmatprep.subr.mxu0 0.0
      %3130 = vmatpush2.msra.mxu0 %v2061
      %3131 = vmatprep.mubr.f32.mxu0 %v1446
      %3132 = vmatmul.mubr.f32.gmra.mxu0 %v1445
      %v3133 = vpop.f32.mrf.mxu0
      %v3134 = vadd.f32 %v2979, %v3133
      %v3135 = vpop.f32.mrf.mxu0
      %3136 = vmatprep.mubr.f32.mxu0 %v1471
      %3137 = vmatmul.mubr.f32.gmra.mxu0 %v1470
      %v3138 = vpop.f32.mrf.mxu0
      %v3139 = vadd.f32 %v2984, %v3138
      %v3140 = vpop.f32.mrf.mxu0
      %3141 = vmatprep.mubr.f32.mxu0 %v1496
      %3142 = vmatmul.mubr.f32.gmra.mxu0 %v1495
      %v3143 = vpop.f32.mrf.mxu0
      %v3144 = vadd.f32 %v2989, %v3143
      %v3145 = vpop.f32.mrf.mxu0
      %3146 = vmatprep.mubr.f32.mxu0 %v1521
      %3147 = vmatmul.mubr.f32.gmra.mxu0 %v1520
      %v3148 = vpop.f32.mrf.mxu0
      %v3149 = vadd.f32 %v2994, %v3148
      %v3150 = vpop.f32.mrf.mxu0
      %3151 = vmatprep.mubr.f32.mxu0 %v1546
      %3152 = vmatmul.mubr.f32.gmra.mxu0 %v1545
      %v3153 = vpop.f32.mrf.mxu0
      %v3154 = vadd.f32 %v2999, %v3153
      %v3155 = vpop.f32.mrf.mxu0
      %3156 = vmatprep.mubr.f32.mxu0 %v1571
      %3157 = vmatmul.mubr.f32.gmra.mxu0 %v1570
      %v3158 = vpop.f32.mrf.mxu0
      %v3159 = vadd.f32 %v3004, %v3158
      %v3160 = vpop.f32.mrf.mxu0
      %3161 = vmatprep.mubr.f32.mxu0 %v1596
      %3162 = vmatmul.mubr.f32.gmra.mxu0 %v1595
      %v3163 = vpop.f32.mrf.mxu0
      %v3164 = vadd.f32 %v3009, %v3163
      %v3165 = vpop.f32.mrf.mxu0
      %3166 = vmatprep.mubr.f32.mxu0 %v1621
      %3167 = vmatmul.mubr.f32.gmra.mxu0 %v1620
      %v3168 = vpop.f32.mrf.mxu0
      %v3169 = vadd.f32 %v3014, %v3168
      %v3170 = vpop.f32.mrf.mxu0
      %3171 = vmatprep.mubr.f32.mxu0 %v1646
      %3172 = vmatmul.mubr.f32.gmra.mxu0 %v1645
      %v3173 = vpop.f32.mrf.mxu0
      %v3174 = vadd.f32 %v3019, %v3173
      %v3175 = vpop.f32.mrf.mxu0
      %3176 = vmatprep.mubr.f32.mxu0 %v1671
      %3177 = vmatmul.mubr.f32.gmra.mxu0 %v1670
      %v3178 = vpop.f32.mrf.mxu0
      %v3179 = vadd.f32 %v3024, %v3178
      %v3180 = vpop.f32.mrf.mxu0
      %3181 = vmatprep.mubr.f32.mxu0 %v1696
      %3182 = vmatmul.mubr.f32.gmra.mxu0 %v1695
      %v3183 = vpop.f32.mrf.mxu0
      %v3184 = vadd.f32 %v3029, %v3183
      %v3185 = vpop.f32.mrf.mxu0
      %3186 = vmatprep.mubr.f32.mxu0 %v1721
      %3187 = vmatmul.mubr.f32.gmra.mxu0 %v1720
      %v3188 = vpop.f32.mrf.mxu0
      %v3189 = vadd.f32 %v3034, %v3188
      %v3190 = vpop.f32.mrf.mxu0
      %3191 = vmatprep.mubr.f32.mxu0 %v1746
      %3192 = vmatmul.mubr.f32.gmra.mxu0 %v1745
      %v3193 = vpop.f32.mrf.mxu0
      %v3194 = vadd.f32 %v3039, %v3193
      %v3195 = vpop.f32.mrf.mxu0
      %3196 = vmatprep.mubr.f32.mxu0 %v1771
      %3197 = vmatmul.mubr.f32.gmra.mxu0 %v1770
      %v3198 = vpop.f32.mrf.mxu0
      %v3199 = vadd.f32 %v3044, %v3198
      %v3200 = vpop.f32.mrf.mxu0
      %3201 = vmatprep.mubr.f32.mxu0 %v1796
      %3202 = vmatmul.mubr.f32.gmra.mxu0 %v1795
      %v3203 = vpop.f32.mrf.mxu0
      %v3204 = vadd.f32 %v3049, %v3203
      %v3205 = vpop.f32.mrf.mxu0
      %3206 = vmatprep.mubr.f32.mxu0 %v1821
      %3207 = vmatmul.mubr.f32.gmra.mxu0 %v1820
      %v3208 = vpop.f32.mrf.mxu0
      %v3209 = vadd.f32 %v3054, %v3208
      %v3210 = vpop.f32.mrf.mxu0
      %3211 = vmatprep.mubr.f32.mxu0 %v1846
      %3212 = vmatmul.mubr.f32.gmra.mxu0 %v1845
      %v3213 = vpop.f32.mrf.mxu0
      %v3214 = vadd.f32 %v3059, %v3213
      %v3215 = vpop.f32.mrf.mxu0
      %3216 = vmatprep.mubr.f32.mxu0 %v1871
      %3217 = vmatmul.mubr.f32.gmra.mxu0 %v1870
      %v3218 = vpop.f32.mrf.mxu0
      %v3219 = vadd.f32 %v3064, %v3218
      %v3220 = vpop.f32.mrf.mxu0
      %3221 = vdwg.mxu0
      %3222 = vmatprep.subr.mxu0 0.0
      %3223 = vmatpush1.msra.mxu0 %v2092
      %3224 = vmatprep.subr.mxu0 0.0
      %3225 = vmatpush1.msra.mxu0 %v2091
      %3226 = vmatprep.subr.mxu0 0.0
      %3227 = vmatpush1.msra.mxu0 %v2090
      %3228 = vmatprep.subr.mxu0 0.0
      %3229 = vmatpush1.msra.mxu0 %v2089
      %3230 = vmatprep.subr.mxu0 0.0
      %3231 = vmatpush1.msra.mxu0 %v2088
      %3232 = vmatprep.subr.mxu0 0.0
      %3233 = vmatpush1.msra.mxu0 %v2087
      %3234 = vmatprep.subr.mxu0 0.0
      %3235 = vmatpush1.msra.mxu0 %v2086
      %3236 = vmatprep.subr.mxu0 0.0
      %3237 = vmatpush1.msra.mxu0 %v2085
      %3238 = vmatprep.subr.mxu0 0.0
      %3239 = vmatpush1.msra.mxu0 %v2084
      %3240 = vmatprep.subr.mxu0 0.0
      %3241 = vmatpush1.msra.mxu0 %v2083
      %3242 = vmatprep.subr.mxu0 0.0
      %3243 = vmatpush1.msra.mxu0 %v2082
      %3244 = vmatprep.subr.mxu0 0.0
      %3245 = vmatpush1.msra.mxu0 %v2081
      %3246 = vmatprep.subr.mxu0 0.0
      %3247 = vmatpush1.msra.mxu0 %v2080
      %3248 = vmatprep.subr.mxu0 0.0
      %3249 = vmatpush1.msra.mxu0 %v2079
      %3250 = vmatprep.subr.mxu0 0.0
      %3251 = vmatpush1.msra.mxu0 %v2078
      %3252 = vmatprep.subr.mxu0 0.0
      %3253 = vmatpush1.msra.mxu0 %v2077
      %3254 = vmatprep.subr.mxu0 0.0
      %3255 = vmatpush2.msra.mxu0 %v2108
      %3256 = vmatprep.subr.mxu0 0.0
      %3257 = vmatpush2.msra.mxu0 %v2107
      %3258 = vmatprep.subr.mxu0 0.0
      %3259 = vmatpush2.msra.mxu0 %v2106
      %3260 = vmatprep.subr.mxu0 0.0
      %3261 = vmatpush2.msra.mxu0 %v2105
      %3262 = vmatprep.subr.mxu0 0.0
      %3263 = vmatpush2.msra.mxu0 %v2104
      %3264 = vmatprep.subr.mxu0 0.0
      %3265 = vmatpush2.msra.mxu0 %v2103
      %3266 = vmatprep.subr.mxu0 0.0
      %3267 = vmatpush2.msra.mxu0 %v2102
      %3268 = vmatprep.subr.mxu0 0.0
      %3269 = vmatpush2.msra.mxu0 %v2101
      %3270 = vmatprep.subr.mxu0 0.0
      %3271 = vmatpush2.msra.mxu0 %v2100
      %3272 = vmatprep.subr.mxu0 0.0
      %3273 = vmatpush2.msra.mxu0 %v2099
      %3274 = vmatprep.subr.mxu0 0.0
      %3275 = vmatpush2.msra.mxu0 %v2098
      %3276 = vmatprep.subr.mxu0 0.0
      %3277 = vmatpush2.msra.mxu0 %v2097
      %3278 = vmatprep.subr.mxu0 0.0
      %3279 = vmatpush2.msra.mxu0 %v2096
      %3280 = vmatprep.subr.mxu0 0.0
      %3281 = vmatpush2.msra.mxu0 %v2095
      %3282 = vmatprep.subr.mxu0 0.0
      %3283 = vmatpush2.msra.mxu0 %v2094
      %3284 = vmatprep.subr.mxu0 0.0
      %3285 = vmatpush2.msra.mxu0 %v2093
      %3286 = vmatprep.mubr.f32.mxu0 %v1448
      %3287 = vmatmul.mubr.f32.gmra.mxu0 %v1447
      %v3288 = vpop.f32.mrf.mxu0
      %v3289 = vadd.f32 %v3134, %v3288
      %v3290 = vpop.f32.mrf.mxu0
      %3291 = vmatprep.mubr.f32.mxu0 %v1473
      %3292 = vmatmul.mubr.f32.gmra.mxu0 %v1472
      %v3293 = vpop.f32.mrf.mxu0
      %v3294 = vadd.f32 %v3139, %v3293
      %v3295 = vpop.f32.mrf.mxu0
      %3296 = vmatprep.mubr.f32.mxu0 %v1498
      %3297 = vmatmul.mubr.f32.gmra.mxu0 %v1497
      %v3298 = vpop.f32.mrf.mxu0
      %v3299 = vadd.f32 %v3144, %v3298
      %v3300 = vpop.f32.mrf.mxu0
      %3301 = vmatprep.mubr.f32.mxu0 %v1523
      %3302 = vmatmul.mubr.f32.gmra.mxu0 %v1522
      %v3303 = vpop.f32.mrf.mxu0
      %v3304 = vadd.f32 %v3149, %v3303
      %v3305 = vpop.f32.mrf.mxu0
      %3306 = vmatprep.mubr.f32.mxu0 %v1548
      %3307 = vmatmul.mubr.f32.gmra.mxu0 %v1547
      %v3308 = vpop.f32.mrf.mxu0
      %v3309 = vadd.f32 %v3154, %v3308
      %v3310 = vpop.f32.mrf.mxu0
      %3311 = vmatprep.mubr.f32.mxu0 %v1573
      %3312 = vmatmul.mubr.f32.gmra.mxu0 %v1572
      %v3313 = vpop.f32.mrf.mxu0
      %v3314 = vadd.f32 %v3159, %v3313
      %v3315 = vpop.f32.mrf.mxu0
      %3316 = vmatprep.mubr.f32.mxu0 %v1598
      %3317 = vmatmul.mubr.f32.gmra.mxu0 %v1597
      %v3318 = vpop.f32.mrf.mxu0
      %v3319 = vadd.f32 %v3164, %v3318
      %v3320 = vpop.f32.mrf.mxu0
      %3321 = vmatprep.mubr.f32.mxu0 %v1623
      %3322 = vmatmul.mubr.f32.gmra.mxu0 %v1622
      %v3323 = vpop.f32.mrf.mxu0
      %v3324 = vadd.f32 %v3169, %v3323
      %v3325 = vpop.f32.mrf.mxu0
      %3326 = vmatprep.mubr.f32.mxu0 %v1648
      %3327 = vmatmul.mubr.f32.gmra.mxu0 %v1647
      %v3328 = vpop.f32.mrf.mxu0
      %v3329 = vadd.f32 %v3174, %v3328
      %v3330 = vpop.f32.mrf.mxu0
      %3331 = vmatprep.mubr.f32.mxu0 %v1673
      %3332 = vmatmul.mubr.f32.gmra.mxu0 %v1672
      %v3333 = vpop.f32.mrf.mxu0
      %v3334 = vadd.f32 %v3179, %v3333
      %v3335 = vpop.f32.mrf.mxu0
      %3336 = vmatprep.mubr.f32.mxu0 %v1698
      %3337 = vmatmul.mubr.f32.gmra.mxu0 %v1697
      %v3338 = vpop.f32.mrf.mxu0
      %v3339 = vadd.f32 %v3184, %v3338
      %v3340 = vpop.f32.mrf.mxu0
      %3341 = vmatprep.mubr.f32.mxu0 %v1723
      %3342 = vmatmul.mubr.f32.gmra.mxu0 %v1722
      %v3343 = vpop.f32.mrf.mxu0
      %v3344 = vadd.f32 %v3189, %v3343
      %v3345 = vpop.f32.mrf.mxu0
      %3346 = vmatprep.mubr.f32.mxu0 %v1748
      %3347 = vmatmul.mubr.f32.gmra.mxu0 %v1747
      %v3348 = vpop.f32.mrf.mxu0
      %v3349 = vadd.f32 %v3194, %v3348
      %v3350 = vpop.f32.mrf.mxu0
      %3351 = vmatprep.mubr.f32.mxu0 %v1773
      %3352 = vmatmul.mubr.f32.gmra.mxu0 %v1772
      %v3353 = vpop.f32.mrf.mxu0
      %v3354 = vadd.f32 %v3199, %v3353
      %v3355 = vpop.f32.mrf.mxu0
      %3356 = vmatprep.mubr.f32.mxu0 %v1798
      %3357 = vmatmul.mubr.f32.gmra.mxu0 %v1797
      %v3358 = vpop.f32.mrf.mxu0
      %v3359 = vadd.f32 %v3204, %v3358
      %v3360 = vpop.f32.mrf.mxu0
      %3361 = vmatprep.mubr.f32.mxu0 %v1823
      %3362 = vmatmul.mubr.f32.gmra.mxu0 %v1822
      %v3363 = vpop.f32.mrf.mxu0
      %v3364 = vadd.f32 %v3209, %v3363
      %v3365 = vpop.f32.mrf.mxu0
      %3366 = vmatprep.mubr.f32.mxu0 %v1848
      %3367 = vmatmul.mubr.f32.gmra.mxu0 %v1847
      %v3368 = vpop.f32.mrf.mxu0
      %v3369 = vadd.f32 %v3214, %v3368
      %v3370 = vpop.f32.mrf.mxu0
      %3371 = vmatprep.mubr.f32.mxu0 %v1873
      %3372 = vmatmul.mubr.f32.gmra.mxu0 %v1872
      %v3373 = vpop.f32.mrf.mxu0
      %v3374 = vadd.f32 %v3219, %v3373
      %v3375 = vpop.f32.mrf.mxu0
      %3376 = vdwg.mxu0
      %3377 = vmatprep.subr.mxu0 0.0
      %3378 = vmatpush1.msra.mxu0 %v2124
      %3379 = vmatprep.subr.mxu0 0.0
      %3380 = vmatpush1.msra.mxu0 %v2123
      %3381 = vmatprep.subr.mxu0 0.0
      %3382 = vmatpush1.msra.mxu0 %v2122
      %3383 = vmatprep.subr.mxu0 0.0
      %3384 = vmatpush1.msra.mxu0 %v2121
      %3385 = vmatprep.subr.mxu0 0.0
      %3386 = vmatpush1.msra.mxu0 %v2120
      %3387 = vmatprep.subr.mxu0 0.0
      %3388 = vmatpush1.msra.mxu0 %v2119
      %3389 = vmatprep.subr.mxu0 0.0
      %3390 = vmatpush1.msra.mxu0 %v2118
      %3391 = vmatprep.subr.mxu0 0.0
      %3392 = vmatpush1.msra.mxu0 %v2117
      %3393 = vmatprep.subr.mxu0 0.0
      %3394 = vmatpush1.msra.mxu0 %v2116
      %3395 = vmatprep.subr.mxu0 0.0
      %3396 = vmatpush1.msra.mxu0 %v2115
      %3397 = vmatprep.subr.mxu0 0.0
      %3398 = vmatpush1.msra.mxu0 %v2114
      %3399 = vmatprep.subr.mxu0 0.0
      %3400 = vmatpush1.msra.mxu0 %v2113
      %3401 = vmatprep.subr.mxu0 0.0
      %3402 = vmatpush1.msra.mxu0 %v2112
      %3403 = vmatprep.subr.mxu0 0.0
      %3404 = vmatpush1.msra.mxu0 %v2111
      %3405 = vmatprep.subr.mxu0 0.0
      %3406 = vmatpush1.msra.mxu0 %v2110
      %3407 = vmatprep.subr.mxu0 0.0
      %3408 = vmatpush1.msra.mxu0 %v2109
      %3409 = vmatprep.subr.mxu0 0.0
      %3410 = vmatpush2.msra.mxu0 %v2140
      %3411 = vmatprep.subr.mxu0 0.0
      %3412 = vmatpush2.msra.mxu0 %v2139
      %3413 = vmatprep.subr.mxu0 0.0
      %3414 = vmatpush2.msra.mxu0 %v2138
      %3415 = vmatprep.subr.mxu0 0.0
      %3416 = vmatpush2.msra.mxu0 %v2137
      %3417 = vmatprep.subr.mxu0 0.0
      %3418 = vmatpush2.msra.mxu0 %v2136
      %3419 = vmatprep.subr.mxu0 0.0
      %3420 = vmatpush2.msra.mxu0 %v2135
      %3421 = vmatprep.subr.mxu0 0.0
      %3422 = vmatpush2.msra.mxu0 %v2134
      %3423 = vmatprep.subr.mxu0 0.0
      %3424 = vmatpush2.msra.mxu0 %v2133
      %3425 = vmatprep.subr.mxu0 0.0
      %3426 = vmatpush2.msra.mxu0 %v2132
      %3427 = vmatprep.subr.mxu0 0.0
      %3428 = vmatpush2.msra.mxu0 %v2131
      %3429 = vmatprep.subr.mxu0 0.0
      %3430 = vmatpush2.msra.mxu0 %v2130
      %3431 = vmatprep.subr.mxu0 0.0
      %3432 = vmatpush2.msra.mxu0 %v2129
      %3433 = vmatprep.subr.mxu0 0.0
      %3434 = vmatpush2.msra.mxu0 %v2128
      %3435 = vmatprep.subr.mxu0 0.0
      %3436 = vmatpush2.msra.mxu0 %v2127
      %3437 = vmatprep.subr.mxu0 0.0
      %3438 = vmatpush2.msra.mxu0 %v2126
      %3439 = vmatprep.subr.mxu0 0.0
      %3440 = vmatpush2.msra.mxu0 %v2125
      %3441 = vmatprep.mubr.f32.mxu0 %v1450
      %3442 = vmatmul.mubr.f32.gmra.mxu0 %v1449
      %v3443 = vpop.f32.mrf.mxu0
      %v3444 = vadd.f32 %v3289, %v3443
      %v3445 = vpop.f32.mrf.mxu0
      %3446 = vmatprep.mubr.f32.mxu0 %v1475
      %3447 = vmatmul.mubr.f32.gmra.mxu0 %v1474
      %v3448 = vpop.f32.mrf.mxu0
      %v3449 = vadd.f32 %v3294, %v3448
      %v3450 = vpop.f32.mrf.mxu0
      %3451 = vmatprep.mubr.f32.mxu0 %v1500
      %3452 = vmatmul.mubr.f32.gmra.mxu0 %v1499
      %v3453 = vpop.f32.mrf.mxu0
      %v3454 = vadd.f32 %v3299, %v3453
      %v3455 = vpop.f32.mrf.mxu0
      %3456 = vmatprep.mubr.f32.mxu0 %v1525
      %3457 = vmatmul.mubr.f32.gmra.mxu0 %v1524
      %v3458 = vpop.f32.mrf.mxu0
      %v3459 = vadd.f32 %v3304, %v3458
      %v3460 = vpop.f32.mrf.mxu0
      %3461 = vmatprep.mubr.f32.mxu0 %v1550
      %3462 = vmatmul.mubr.f32.gmra.mxu0 %v1549
      %v3463 = vpop.f32.mrf.mxu0
      %v3464 = vadd.f32 %v3309, %v3463
      %v3465 = vpop.f32.mrf.mxu0
      %3466 = vmatprep.mubr.f32.mxu0 %v1575
      %3467 = vmatmul.mubr.f32.gmra.mxu0 %v1574
      %v3468 = vpop.f32.mrf.mxu0
      %v3469 = vadd.f32 %v3314, %v3468
      %v3470 = vpop.f32.mrf.mxu0
      %3471 = vmatprep.mubr.f32.mxu0 %v1600
      %3472 = vmatmul.mubr.f32.gmra.mxu0 %v1599
      %v3473 = vpop.f32.mrf.mxu0
      %v3474 = vadd.f32 %v3319, %v3473
      %v3475 = vpop.f32.mrf.mxu0
      %3476 = vmatprep.mubr.f32.mxu0 %v1625
      %3477 = vmatmul.mubr.f32.gmra.mxu0 %v1624
      %v3478 = vpop.f32.mrf.mxu0
      %v3479 = vadd.f32 %v3324, %v3478
      %v3480 = vpop.f32.mrf.mxu0
      %3481 = vmatprep.mubr.f32.mxu0 %v1650
      %3482 = vmatmul.mubr.f32.gmra.mxu0 %v1649
      %v3483 = vpop.f32.mrf.mxu0
      %v3484 = vadd.f32 %v3329, %v3483
      %v3485 = vpop.f32.mrf.mxu0
      %3486 = vmatprep.mubr.f32.mxu0 %v1675
      %3487 = vmatmul.mubr.f32.gmra.mxu0 %v1674
      %v3488 = vpop.f32.mrf.mxu0
      %v3489 = vadd.f32 %v3334, %v3488
      %v3490 = vpop.f32.mrf.mxu0
      %3491 = vmatprep.mubr.f32.mxu0 %v1700
      %3492 = vmatmul.mubr.f32.gmra.mxu0 %v1699
      %v3493 = vpop.f32.mrf.mxu0
      %v3494 = vadd.f32 %v3339, %v3493
      %v3495 = vpop.f32.mrf.mxu0
      %3496 = vmatprep.mubr.f32.mxu0 %v1725
      %3497 = vmatmul.mubr.f32.gmra.mxu0 %v1724
      %v3498 = vpop.f32.mrf.mxu0
      %v3499 = vadd.f32 %v3344, %v3498
      %v3500 = vpop.f32.mrf.mxu0
      %3501 = vmatprep.mubr.f32.mxu0 %v1750
      %3502 = vmatmul.mubr.f32.gmra.mxu0 %v1749
      %v3503 = vpop.f32.mrf.mxu0
      %v3504 = vadd.f32 %v3349, %v3503
      %v3505 = vpop.f32.mrf.mxu0
      %3506 = vmatprep.mubr.f32.mxu0 %v1775
      %3507 = vmatmul.mubr.f32.gmra.mxu0 %v1774
      %v3508 = vpop.f32.mrf.mxu0
      %v3509 = vadd.f32 %v3354, %v3508
      %v3510 = vpop.f32.mrf.mxu0
      %3511 = vmatprep.mubr.f32.mxu0 %v1800
      %3512 = vmatmul.mubr.f32.gmra.mxu0 %v1799
      %v3513 = vpop.f32.mrf.mxu0
      %v3514 = vadd.f32 %v3359, %v3513
      %v3515 = vpop.f32.mrf.mxu0
      %3516 = vmatprep.mubr.f32.mxu0 %v1825
      %3517 = vmatmul.mubr.f32.gmra.mxu0 %v1824
      %v3518 = vpop.f32.mrf.mxu0
      %v3519 = vadd.f32 %v3364, %v3518
      %v3520 = vpop.f32.mrf.mxu0
      %3521 = vmatprep.mubr.f32.mxu0 %v1850
      %3522 = vmatmul.mubr.f32.gmra.mxu0 %v1849
      %v3523 = vpop.f32.mrf.mxu0
      %v3524 = vadd.f32 %v3369, %v3523
      %v3525 = vpop.f32.mrf.mxu0
      %3526 = vmatprep.mubr.f32.mxu0 %v1875
      %3527 = vmatmul.mubr.f32.gmra.mxu0 %v1874
      %v3528 = vpop.f32.mrf.mxu0
      %v3529 = vadd.f32 %v3374, %v3528
      %v3530 = vpop.f32.mrf.mxu0
      %3531 = vdwg.mxu0
      %3532 = vmatprep.subr.mxu0 0.0
      %3533 = vmatpush1.msra.mxu0 %v2156
      %3534 = vmatprep.subr.mxu0 0.0
      %3535 = vmatpush1.msra.mxu0 %v2155
      %3536 = vmatprep.subr.mxu0 0.0
      %3537 = vmatpush1.msra.mxu0 %v2154
      %3538 = vmatprep.subr.mxu0 0.0
      %3539 = vmatpush1.msra.mxu0 %v2153
      %3540 = vmatprep.subr.mxu0 0.0
      %3541 = vmatpush1.msra.mxu0 %v2152
      %3542 = vmatprep.subr.mxu0 0.0
      %3543 = vmatpush1.msra.mxu0 %v2151
      %3544 = vmatprep.subr.mxu0 0.0
      %3545 = vmatpush1.msra.mxu0 %v2150
      %3546 = vmatprep.subr.mxu0 0.0
      %3547 = vmatpush1.msra.mxu0 %v2149
      %3548 = vmatprep.subr.mxu0 0.0
      %3549 = vmatpush1.msra.mxu0 %v2148
      %3550 = vmatprep.subr.mxu0 0.0
      %3551 = vmatpush1.msra.mxu0 %v2147
      %3552 = vmatprep.subr.mxu0 0.0
      %3553 = vmatpush1.msra.mxu0 %v2146
      %3554 = vmatprep.subr.mxu0 0.0
      %3555 = vmatpush1.msra.mxu0 %v2145
      %3556 = vmatprep.subr.mxu0 0.0
      %3557 = vmatpush1.msra.mxu0 %v2144
      %3558 = vmatprep.subr.mxu0 0.0
      %3559 = vmatpush1.msra.mxu0 %v2143
      %3560 = vmatprep.subr.mxu0 0.0
      %3561 = vmatpush1.msra.mxu0 %v2142
      %3562 = vmatprep.subr.mxu0 0.0
      %3563 = vmatpush1.msra.mxu0 %v2141
      %3564 = vmatprep.subr.mxu0 0.0
      %3565 = vmatpush2.msra.mxu0 %v2172
      %3566 = vmatprep.subr.mxu0 0.0
      %3567 = vmatpush2.msra.mxu0 %v2171
      %3568 = vmatprep.subr.mxu0 0.0
      %3569 = vmatpush2.msra.mxu0 %v2170
      %3570 = vmatprep.subr.mxu0 0.0
      %3571 = vmatpush2.msra.mxu0 %v2169
      %3572 = vmatprep.subr.mxu0 0.0
      %3573 = vmatpush2.msra.mxu0 %v2168
      %3574 = vmatprep.subr.mxu0 0.0
      %3575 = vmatpush2.msra.mxu0 %v2167
      %3576 = vmatprep.subr.mxu0 0.0
      %3577 = vmatpush2.msra.mxu0 %v2166
      %3578 = vmatprep.subr.mxu0 0.0
      %3579 = vmatpush2.msra.mxu0 %v2165
      %3580 = vmatprep.subr.mxu0 0.0
      %3581 = vmatpush2.msra.mxu0 %v2164
      %3582 = vmatprep.subr.mxu0 0.0
      %3583 = vmatpush2.msra.mxu0 %v2163
      %3584 = vmatprep.subr.mxu0 0.0
      %3585 = vmatpush2.msra.mxu0 %v2162
      %3586 = vmatprep.subr.mxu0 0.0
      %3587 = vmatpush2.msra.mxu0 %v2161
      %3588 = vmatprep.subr.mxu0 0.0
      %3589 = vmatpush2.msra.mxu0 %v2160
      %3590 = vmatprep.subr.mxu0 0.0
      %3591 = vmatpush2.msra.mxu0 %v2159
      %3592 = vmatprep.subr.mxu0 0.0
      %3593 = vmatpush2.msra.mxu0 %v2158
      %3594 = vmatprep.subr.mxu0 0.0
      %3595 = vmatpush2.msra.mxu0 %v2157
      %3596 = vmatprep.mubr.f32.mxu0 %v1452
      %3597 = vmatmul.mubr.f32.gmra.mxu0 %v1451
      %v3598 = vpop.f32.mrf.mxu0
      %v3599 = vadd.f32 %v3444, %v3598
      %v3600 = vpop.f32.mrf.mxu0
      %3601 = vmatprep.mubr.f32.mxu0 %v1477
      %3602 = vmatmul.mubr.f32.gmra.mxu0 %v1476
      %v3603 = vpop.f32.mrf.mxu0
      %v3604 = vadd.f32 %v3449, %v3603
      %v3605 = vpop.f32.mrf.mxu0
      %3606 = vmatprep.mubr.f32.mxu0 %v1502
      %3607 = vmatmul.mubr.f32.gmra.mxu0 %v1501
      %v3608 = vpop.f32.mrf.mxu0
      %v3609 = vadd.f32 %v3454, %v3608
      %v3610 = vpop.f32.mrf.mxu0
      %3611 = vmatprep.mubr.f32.mxu0 %v1527
      %3612 = vmatmul.mubr.f32.gmra.mxu0 %v1526
      %v3613 = vpop.f32.mrf.mxu0
      %v3614 = vadd.f32 %v3459, %v3613
      %v3615 = vpop.f32.mrf.mxu0
      %3616 = vmatprep.mubr.f32.mxu0 %v1552
      %3617 = vmatmul.mubr.f32.gmra.mxu0 %v1551
      %v3618 = vpop.f32.mrf.mxu0
      %v3619 = vadd.f32 %v3464, %v3618
      %v3620 = vpop.f32.mrf.mxu0
      %3621 = vmatprep.mubr.f32.mxu0 %v1577
      %3622 = vmatmul.mubr.f32.gmra.mxu0 %v1576
      %v3623 = vpop.f32.mrf.mxu0
      %v3624 = vadd.f32 %v3469, %v3623
      %v3625 = vpop.f32.mrf.mxu0
      %3626 = vmatprep.mubr.f32.mxu0 %v1602
      %3627 = vmatmul.mubr.f32.gmra.mxu0 %v1601
      %v3628 = vpop.f32.mrf.mxu0
      %v3629 = vadd.f32 %v3474, %v3628
      %v3630 = vpop.f32.mrf.mxu0
      %3631 = vmatprep.mubr.f32.mxu0 %v1627
      %3632 = vmatmul.mubr.f32.gmra.mxu0 %v1626
      %v3633 = vpop.f32.mrf.mxu0
      %v3634 = vadd.f32 %v3479, %v3633
      %v3635 = vpop.f32.mrf.mxu0
      %3636 = vmatprep.mubr.f32.mxu0 %v1652
      %3637 = vmatmul.mubr.f32.gmra.mxu0 %v1651
      %v3638 = vpop.f32.mrf.mxu0
      %v3639 = vadd.f32 %v3484, %v3638
      %v3640 = vpop.f32.mrf.mxu0
      %3641 = vmatprep.mubr.f32.mxu0 %v1677
      %3642 = vmatmul.mubr.f32.gmra.mxu0 %v1676
      %v3643 = vpop.f32.mrf.mxu0
      %v3644 = vadd.f32 %v3489, %v3643
      %v3645 = vpop.f32.mrf.mxu0
      %3646 = vmatprep.mubr.f32.mxu0 %v1702
      %3647 = vmatmul.mubr.f32.gmra.mxu0 %v1701
      %v3648 = vpop.f32.mrf.mxu0
      %v3649 = vadd.f32 %v3494, %v3648
      %v3650 = vpop.f32.mrf.mxu0
      %3651 = vmatprep.mubr.f32.mxu0 %v1727
      %3652 = vmatmul.mubr.f32.gmra.mxu0 %v1726
      %v3653 = vpop.f32.mrf.mxu0
      %v3654 = vadd.f32 %v3499, %v3653
      %v3655 = vpop.f32.mrf.mxu0
      %3656 = vmatprep.mubr.f32.mxu0 %v1752
      %3657 = vmatmul.mubr.f32.gmra.mxu0 %v1751
      %v3658 = vpop.f32.mrf.mxu0
      %v3659 = vadd.f32 %v3504, %v3658
      %v3660 = vpop.f32.mrf.mxu0
      %3661 = vmatprep.mubr.f32.mxu0 %v1777
      %3662 = vmatmul.mubr.f32.gmra.mxu0 %v1776
      %v3663 = vpop.f32.mrf.mxu0
      %v3664 = vadd.f32 %v3509, %v3663
      %v3665 = vpop.f32.mrf.mxu0
      %3666 = vmatprep.mubr.f32.mxu0 %v1802
      %3667 = vmatmul.mubr.f32.gmra.mxu0 %v1801
      %v3668 = vpop.f32.mrf.mxu0
      %v3669 = vadd.f32 %v3514, %v3668
      %v3670 = vpop.f32.mrf.mxu0
      %3671 = vmatprep.mubr.f32.mxu0 %v1827
      %3672 = vmatmul.mubr.f32.gmra.mxu0 %v1826
      %v3673 = vpop.f32.mrf.mxu0
      %v3674 = vadd.f32 %v3519, %v3673
      %v3675 = vpop.f32.mrf.mxu0
      %3676 = vmatprep.mubr.f32.mxu0 %v1852
      %3677 = vmatmul.mubr.f32.gmra.mxu0 %v1851
      %v3678 = vpop.f32.mrf.mxu0
      %v3679 = vadd.f32 %v3524, %v3678
      %v3680 = vpop.f32.mrf.mxu0
      %3681 = vmatprep.mubr.f32.mxu0 %v1877
      %3682 = vmatmul.mubr.f32.gmra.mxu0 %v1876
      %v3683 = vpop.f32.mrf.mxu0
      %v3684 = vadd.f32 %v3529, %v3683
      %v3685 = vpop.f32.mrf.mxu0
      %3686 = vdwg.mxu0
      %3687 = vmatprep.subr.mxu0 0.0
      %3688 = vmatpush1.msra.mxu0 %v2188
      %3689 = vmatprep.subr.mxu0 0.0
      %3690 = vmatpush1.msra.mxu0 %v2187
      %3691 = vmatprep.subr.mxu0 0.0
      %3692 = vmatpush1.msra.mxu0 %v2186
      %3693 = vmatprep.subr.mxu0 0.0
      %3694 = vmatpush1.msra.mxu0 %v2185
      %3695 = vmatprep.subr.mxu0 0.0
      %3696 = vmatpush1.msra.mxu0 %v2184
      %3697 = vmatprep.subr.mxu0 0.0
      %3698 = vmatpush1.msra.mxu0 %v2183
      %3699 = vmatprep.subr.mxu0 0.0
      %3700 = vmatpush1.msra.mxu0 %v2182
      %3701 = vmatprep.subr.mxu0 0.0
      %3702 = vmatpush1.msra.mxu0 %v2181
      %3703 = vmatprep.subr.mxu0 0.0
      %3704 = vmatpush1.msra.mxu0 %v2180
      %3705 = vmatprep.subr.mxu0 0.0
      %3706 = vmatpush1.msra.mxu0 %v2179
      %3707 = vmatprep.subr.mxu0 0.0
      %3708 = vmatpush1.msra.mxu0 %v2178
      %3709 = vmatprep.subr.mxu0 0.0
      %3710 = vmatpush1.msra.mxu0 %v2177
      %3711 = vmatprep.subr.mxu0 0.0
      %3712 = vmatpush1.msra.mxu0 %v2176
      %3713 = vmatprep.subr.mxu0 0.0
      %3714 = vmatpush1.msra.mxu0 %v2175
      %3715 = vmatprep.subr.mxu0 0.0
      %3716 = vmatpush1.msra.mxu0 %v2174
      %3717 = vmatprep.subr.mxu0 0.0
      %3718 = vmatpush1.msra.mxu0 %v2173
      %3719 = vmatprep.subr.mxu0 0.0
      %3720 = vmatpush2.msra.mxu0 %v2204
      %3721 = vmatprep.subr.mxu0 0.0
      %3722 = vmatpush2.msra.mxu0 %v2203
      %3723 = vmatprep.subr.mxu0 0.0
      %3724 = vmatpush2.msra.mxu0 %v2202
      %3725 = vmatprep.subr.mxu0 0.0
      %3726 = vmatpush2.msra.mxu0 %v2201
      %3727 = vmatprep.subr.mxu0 0.0
      %3728 = vmatpush2.msra.mxu0 %v2200
      %3729 = vmatprep.subr.mxu0 0.0
      %3730 = vmatpush2.msra.mxu0 %v2199
      %3731 = vmatprep.subr.mxu0 0.0
      %3732 = vmatpush2.msra.mxu0 %v2198
      %3733 = vmatprep.subr.mxu0 0.0
      %3734 = vmatpush2.msra.mxu0 %v2197
      %3735 = vmatprep.subr.mxu0 0.0
      %3736 = vmatpush2.msra.mxu0 %v2196
      %3737 = vmatprep.subr.mxu0 0.0
      %3738 = vmatpush2.msra.mxu0 %v2195
      %3739 = vmatprep.subr.mxu0 0.0
      %3740 = vmatpush2.msra.mxu0 %v2194
      %3741 = vmatprep.subr.mxu0 0.0
      %3742 = vmatpush2.msra.mxu0 %v2193
      %3743 = vmatprep.subr.mxu0 0.0
      %3744 = vmatpush2.msra.mxu0 %v2192
      %3745 = vmatprep.subr.mxu0 0.0
      %3746 = vmatpush2.msra.mxu0 %v2191
      %3747 = vmatprep.subr.mxu0 0.0
      %3748 = vmatpush2.msra.mxu0 %v2190
      %3749 = vmatprep.subr.mxu0 0.0
      %3750 = vmatpush2.msra.mxu0 %v2189
      %3751 = vmatprep.mubr.f32.mxu0 %v1454
      %3752 = vmatmul.mubr.f32.gmra.mxu0 %v1453
      %v3753 = vpop.f32.mrf.mxu0
      %v3754 = vadd.f32 %v3599, %v3753
      %v3755 = vpop.f32.mrf.mxu0
      %3756 = vmatprep.mubr.f32.mxu0 %v1479
      %3757 = vmatmul.mubr.f32.gmra.mxu0 %v1478
      %v3758 = vpop.f32.mrf.mxu0
      %v3759 = vadd.f32 %v3604, %v3758
      %v3760 = vpop.f32.mrf.mxu0
      %3761 = vmatprep.mubr.f32.mxu0 %v1504
      %3762 = vmatmul.mubr.f32.gmra.mxu0 %v1503
      %v3763 = vpop.f32.mrf.mxu0
      %v3764 = vadd.f32 %v3609, %v3763
      %v3765 = vpop.f32.mrf.mxu0
      %3766 = vmatprep.mubr.f32.mxu0 %v1529
      %3767 = vmatmul.mubr.f32.gmra.mxu0 %v1528
      %v3768 = vpop.f32.mrf.mxu0
      %v3769 = vadd.f32 %v3614, %v3768
      %v3770 = vpop.f32.mrf.mxu0
      %3771 = vmatprep.mubr.f32.mxu0 %v1554
      %3772 = vmatmul.mubr.f32.gmra.mxu0 %v1553
      %v3773 = vpop.f32.mrf.mxu0
      %v3774 = vadd.f32 %v3619, %v3773
      %v3775 = vpop.f32.mrf.mxu0
      %3776 = vmatprep.mubr.f32.mxu0 %v1579
      %3777 = vmatmul.mubr.f32.gmra.mxu0 %v1578
      %v3778 = vpop.f32.mrf.mxu0
      %v3779 = vadd.f32 %v3624, %v3778
      %v3780 = vpop.f32.mrf.mxu0
      %3781 = vmatprep.mubr.f32.mxu0 %v1604
      %3782 = vmatmul.mubr.f32.gmra.mxu0 %v1603
      %v3783 = vpop.f32.mrf.mxu0
      %v3784 = vadd.f32 %v3629, %v3783
      %v3785 = vpop.f32.mrf.mxu0
      %3786 = vmatprep.mubr.f32.mxu0 %v1629
      %3787 = vmatmul.mubr.f32.gmra.mxu0 %v1628
      %v3788 = vpop.f32.mrf.mxu0
      %v3789 = vadd.f32 %v3634, %v3788
      %v3790 = vpop.f32.mrf.mxu0
      %3791 = vmatprep.mubr.f32.mxu0 %v1654
      %3792 = vmatmul.mubr.f32.gmra.mxu0 %v1653
      %v3793 = vpop.f32.mrf.mxu0
      %v3794 = vadd.f32 %v3639, %v3793
      %v3795 = vpop.f32.mrf.mxu0
      %3796 = vmatprep.mubr.f32.mxu0 %v1679
      %3797 = vmatmul.mubr.f32.gmra.mxu0 %v1678
      %v3798 = vpop.f32.mrf.mxu0
      %v3799 = vadd.f32 %v3644, %v3798
      %v3800 = vpop.f32.mrf.mxu0
      %3801 = vmatprep.mubr.f32.mxu0 %v1704
      %3802 = vmatmul.mubr.f32.gmra.mxu0 %v1703
      %v3803 = vpop.f32.mrf.mxu0
      %v3804 = vadd.f32 %v3649, %v3803
      %v3805 = vpop.f32.mrf.mxu0
      %3806 = vmatprep.mubr.f32.mxu0 %v1729
      %3807 = vmatmul.mubr.f32.gmra.mxu0 %v1728
      %v3808 = vpop.f32.mrf.mxu0
      %v3809 = vadd.f32 %v3654, %v3808
      %v3810 = vpop.f32.mrf.mxu0
      %3811 = vmatprep.mubr.f32.mxu0 %v1754
      %3812 = vmatmul.mubr.f32.gmra.mxu0 %v1753
      %v3813 = vpop.f32.mrf.mxu0
      %v3814 = vadd.f32 %v3659, %v3813
      %v3815 = vpop.f32.mrf.mxu0
      %3816 = vmatprep.mubr.f32.mxu0 %v1779
      %3817 = vmatmul.mubr.f32.gmra.mxu0 %v1778
      %v3818 = vpop.f32.mrf.mxu0
      %v3819 = vadd.f32 %v3664, %v3818
      %v3820 = vpop.f32.mrf.mxu0
      %3821 = vmatprep.mubr.f32.mxu0 %v1804
      %3822 = vmatmul.mubr.f32.gmra.mxu0 %v1803
      %v3823 = vpop.f32.mrf.mxu0
      %v3824 = vadd.f32 %v3669, %v3823
      %v3825 = vpop.f32.mrf.mxu0
      %3826 = vmatprep.mubr.f32.mxu0 %v1829
      %3827 = vmatmul.mubr.f32.gmra.mxu0 %v1828
      %v3828 = vpop.f32.mrf.mxu0
      %v3829 = vadd.f32 %v3674, %v3828
      %v3830 = vpop.f32.mrf.mxu0
      %3831 = vmatprep.mubr.f32.mxu0 %v1854
      %3832 = vmatmul.mubr.f32.gmra.mxu0 %v1853
      %v3833 = vpop.f32.mrf.mxu0
      %v3834 = vadd.f32 %v3679, %v3833
      %v3835 = vpop.f32.mrf.mxu0
      %3836 = vmatprep.mubr.f32.mxu0 %v1879
      %3837 = vmatmul.mubr.f32.gmra.mxu0 %v1878
      %v3838 = vpop.f32.mrf.mxu0
      %v3839 = vadd.f32 %v3684, %v3838
      %v3840 = vpop.f32.mrf.mxu0
      %3841 = vdwg.mxu0
      %3842 = vmatprep.subr.mxu0 0.0
      %3843 = vmatpush1.msra.mxu0 %v2220
      %3844 = vmatprep.subr.mxu0 0.0
      %3845 = vmatpush1.msra.mxu0 %v2219
      %3846 = vmatprep.subr.mxu0 0.0
      %3847 = vmatpush1.msra.mxu0 %v2218
      %3848 = vmatprep.subr.mxu0 0.0
      %3849 = vmatpush1.msra.mxu0 %v2217
      %3850 = vmatprep.subr.mxu0 0.0
      %3851 = vmatpush1.msra.mxu0 %v2216
      %3852 = vmatprep.subr.mxu0 0.0
      %3853 = vmatpush1.msra.mxu0 %v2215
      %3854 = vmatprep.subr.mxu0 0.0
      %3855 = vmatpush1.msra.mxu0 %v2214
      %3856 = vmatprep.subr.mxu0 0.0
      %3857 = vmatpush1.msra.mxu0 %v2213
      %3858 = vmatprep.subr.mxu0 0.0
      %3859 = vmatpush1.msra.mxu0 %v2212
      %3860 = vmatprep.subr.mxu0 0.0
      %3861 = vmatpush1.msra.mxu0 %v2211
      %3862 = vmatprep.subr.mxu0 0.0
      %3863 = vmatpush1.msra.mxu0 %v2210
      %3864 = vmatprep.subr.mxu0 0.0
      %3865 = vmatpush1.msra.mxu0 %v2209
      %3866 = vmatprep.subr.mxu0 0.0
      %3867 = vmatpush1.msra.mxu0 %v2208
      %3868 = vmatprep.subr.mxu0 0.0
      %3869 = vmatpush1.msra.mxu0 %v2207
      %3870 = vmatprep.subr.mxu0 0.0
      %3871 = vmatpush1.msra.mxu0 %v2206
      %3872 = vmatprep.subr.mxu0 0.0
      %3873 = vmatpush1.msra.mxu0 %v2205
      %3874 = vmatprep.subr.mxu0 0.0
      %3875 = vmatpush2.msra.mxu0 %v2236
      %3876 = vmatprep.subr.mxu0 0.0
      %3877 = vmatpush2.msra.mxu0 %v2235
      %3878 = vmatprep.subr.mxu0 0.0
      %3879 = vmatpush2.msra.mxu0 %v2234
      %3880 = vmatprep.subr.mxu0 0.0
      %3881 = vmatpush2.msra.mxu0 %v2233
      %3882 = vmatprep.subr.mxu0 0.0
      %3883 = vmatpush2.msra.mxu0 %v2232
      %3884 = vmatprep.subr.mxu0 0.0
      %3885 = vmatpush2.msra.mxu0 %v2231
      %3886 = vmatprep.subr.mxu0 0.0
      %3887 = vmatpush2.msra.mxu0 %v2230
      %3888 = vmatprep.subr.mxu0 0.0
      %3889 = vmatpush2.msra.mxu0 %v2229
      %3890 = vmatprep.subr.mxu0 0.0
      %3891 = vmatpush2.msra.mxu0 %v2228
      %3892 = vmatprep.subr.mxu0 0.0
      %3893 = vmatpush2.msra.mxu0 %v2227
      %3894 = vmatprep.subr.mxu0 0.0
      %3895 = vmatpush2.msra.mxu0 %v2226
      %3896 = vmatprep.subr.mxu0 0.0
      %3897 = vmatpush2.msra.mxu0 %v2225
      %3898 = vmatprep.subr.mxu0 0.0
      %3899 = vmatpush2.msra.mxu0 %v2224
      %3900 = vmatprep.subr.mxu0 0.0
      %3901 = vmatpush2.msra.mxu0 %v2223
      %3902 = vmatprep.subr.mxu0 0.0
      %3903 = vmatpush2.msra.mxu0 %v2222
      %3904 = vmatprep.subr.mxu0 0.0
      %3905 = vmatpush2.msra.mxu0 %v2221
      %3906 = vmatprep.mubr.f32.mxu0 %v1456
      %3907 = vmatmul.mubr.f32.gmra.mxu0 %v1455
      %v3908 = vpop.f32.mrf.mxu0
      %v3909 = vadd.f32 %v3754, %v3908
      %v3910 = vpop.f32.mrf.mxu0
      %3911 = vmatprep.mubr.f32.mxu0 %v1481
      %3912 = vmatmul.mubr.f32.gmra.mxu0 %v1480
      %v3913 = vpop.f32.mrf.mxu0
      %v3914 = vadd.f32 %v3759, %v3913
      %v3915 = vpop.f32.mrf.mxu0
      %3916 = vmatprep.mubr.f32.mxu0 %v1506
      %3917 = vmatmul.mubr.f32.gmra.mxu0 %v1505
      %v3918 = vpop.f32.mrf.mxu0
      %v3919 = vadd.f32 %v3764, %v3918
      %v3920 = vpop.f32.mrf.mxu0
      %3921 = vmatprep.mubr.f32.mxu0 %v1531
      %3922 = vmatmul.mubr.f32.gmra.mxu0 %v1530
      %v3923 = vpop.f32.mrf.mxu0
      %v3924 = vadd.f32 %v3769, %v3923
      %v3925 = vpop.f32.mrf.mxu0
      %3926 = vmatprep.mubr.f32.mxu0 %v1556
      %3927 = vmatmul.mubr.f32.gmra.mxu0 %v1555
      %v3928 = vpop.f32.mrf.mxu0
      %v3929 = vadd.f32 %v3774, %v3928
      %v3930 = vpop.f32.mrf.mxu0
      %3931 = vmatprep.mubr.f32.mxu0 %v1581
      %3932 = vmatmul.mubr.f32.gmra.mxu0 %v1580
      %v3933 = vpop.f32.mrf.mxu0
      %v3934 = vadd.f32 %v3779, %v3933
      %v3935 = vpop.f32.mrf.mxu0
      %3936 = vmatprep.mubr.f32.mxu0 %v1606
      %3937 = vmatmul.mubr.f32.gmra.mxu0 %v1605
      %v3938 = vpop.f32.mrf.mxu0
      %v3939 = vadd.f32 %v3784, %v3938
      %v3940 = vpop.f32.mrf.mxu0
      %3941 = vmatprep.mubr.f32.mxu0 %v1631
      %3942 = vmatmul.mubr.f32.gmra.mxu0 %v1630
      %v3943 = vpop.f32.mrf.mxu0
      %v3944 = vadd.f32 %v3789, %v3943
      %v3945 = vpop.f32.mrf.mxu0
      %3946 = vmatprep.mubr.f32.mxu0 %v1656
      %3947 = vmatmul.mubr.f32.gmra.mxu0 %v1655
      %v3948 = vpop.f32.mrf.mxu0
      %v3949 = vadd.f32 %v3794, %v3948
      %v3950 = vpop.f32.mrf.mxu0
      %3951 = vmatprep.mubr.f32.mxu0 %v1681
      %3952 = vmatmul.mubr.f32.gmra.mxu0 %v1680
      %v3953 = vpop.f32.mrf.mxu0
      %v3954 = vadd.f32 %v3799, %v3953
      %v3955 = vpop.f32.mrf.mxu0
      %3956 = vmatprep.mubr.f32.mxu0 %v1706
      %3957 = vmatmul.mubr.f32.gmra.mxu0 %v1705
      %v3958 = vpop.f32.mrf.mxu0
      %v3959 = vadd.f32 %v3804, %v3958
      %v3960 = vpop.f32.mrf.mxu0
      %3961 = vmatprep.mubr.f32.mxu0 %v1731
      %3962 = vmatmul.mubr.f32.gmra.mxu0 %v1730
      %v3963 = vpop.f32.mrf.mxu0
      %v3964 = vadd.f32 %v3809, %v3963
      %v3965 = vpop.f32.mrf.mxu0
      %3966 = vmatprep.mubr.f32.mxu0 %v1756
      %3967 = vmatmul.mubr.f32.gmra.mxu0 %v1755
      %v3968 = vpop.f32.mrf.mxu0
      %v3969 = vadd.f32 %v3814, %v3968
      %v3970 = vpop.f32.mrf.mxu0
      %3971 = vmatprep.mubr.f32.mxu0 %v1781
      %3972 = vmatmul.mubr.f32.gmra.mxu0 %v1780
      %v3973 = vpop.f32.mrf.mxu0
      %v3974 = vadd.f32 %v3819, %v3973
      %v3975 = vpop.f32.mrf.mxu0
      %3976 = vmatprep.mubr.f32.mxu0 %v1806
      %3977 = vmatmul.mubr.f32.gmra.mxu0 %v1805
      %v3978 = vpop.f32.mrf.mxu0
      %v3979 = vadd.f32 %v3824, %v3978
      %v3980 = vpop.f32.mrf.mxu0
      %3981 = vmatprep.mubr.f32.mxu0 %v1831
      %3982 = vmatmul.mubr.f32.gmra.mxu0 %v1830
      %v3983 = vpop.f32.mrf.mxu0
      %v3984 = vadd.f32 %v3829, %v3983
      %v3985 = vpop.f32.mrf.mxu0
      %3986 = vmatprep.mubr.f32.mxu0 %v1856
      %3987 = vmatmul.mubr.f32.gmra.mxu0 %v1855
      %v3988 = vpop.f32.mrf.mxu0
      %v3989 = vadd.f32 %v3834, %v3988
      %v3990 = vpop.f32.mrf.mxu0
      %3991 = vmatprep.mubr.f32.mxu0 %v1881
      %3992 = vmatmul.mubr.f32.gmra.mxu0 %v1880
      %v3993 = vpop.f32.mrf.mxu0
      %v3994 = vadd.f32 %v3839, %v3993
      %v3995 = vpop.f32.mrf.mxu0
      %3996 = vdwg.mxu0
      %3997 = vmatprep.subr.mxu0 0.0
      %3998 = vmatpush1.msra.mxu0 %v2252
      %3999 = vmatprep.subr.mxu0 0.0
      %4000 = vmatpush1.msra.mxu0 %v2251
      %4001 = vmatprep.subr.mxu0 0.0
      %4002 = vmatpush1.msra.mxu0 %v2250
      %4003 = vmatprep.subr.mxu0 0.0
      %4004 = vmatpush1.msra.mxu0 %v2249
      %4005 = vmatprep.subr.mxu0 0.0
      %4006 = vmatpush1.msra.mxu0 %v2248
      %4007 = vmatprep.subr.mxu0 0.0
      %4008 = vmatpush1.msra.mxu0 %v2247
      %4009 = vmatprep.subr.mxu0 0.0
      %4010 = vmatpush1.msra.mxu0 %v2246
      %4011 = vmatprep.subr.mxu0 0.0
      %4012 = vmatpush1.msra.mxu0 %v2245
      %4013 = vmatprep.subr.mxu0 0.0
      %4014 = vmatpush1.msra.mxu0 %v2244
      %4015 = vmatprep.subr.mxu0 0.0
      %4016 = vmatpush1.msra.mxu0 %v2243
      %4017 = vmatprep.subr.mxu0 0.0
      %4018 = vmatpush1.msra.mxu0 %v2242
      %4019 = vmatprep.subr.mxu0 0.0
      %4020 = vmatpush1.msra.mxu0 %v2241
      %4021 = vmatprep.subr.mxu0 0.0
      %4022 = vmatpush1.msra.mxu0 %v2240
      %4023 = vmatprep.subr.mxu0 0.0
      %4024 = vmatpush1.msra.mxu0 %v2239
      %4025 = vmatprep.subr.mxu0 0.0
      %4026 = vmatpush1.msra.mxu0 %v2238
      %4027 = vmatprep.subr.mxu0 0.0
      %4028 = vmatpush1.msra.mxu0 %v2237
      %4029 = vmatprep.subr.mxu0 0.0
      %4030 = vmatpush2.msra.mxu0 %v2268
      %4031 = vmatprep.subr.mxu0 0.0
      %4032 = vmatpush2.msra.mxu0 %v2267
      %4033 = vmatprep.subr.mxu0 0.0
      %4034 = vmatpush2.msra.mxu0 %v2266
      %4035 = vmatprep.subr.mxu0 0.0
      %4036 = vmatpush2.msra.mxu0 %v2265
      %4037 = vmatprep.subr.mxu0 0.0
      %4038 = vmatpush2.msra.mxu0 %v2264
      %4039 = vmatprep.subr.mxu0 0.0
      %4040 = vmatpush2.msra.mxu0 %v2263
      %4041 = vmatprep.subr.mxu0 0.0
      %4042 = vmatpush2.msra.mxu0 %v2262
      %4043 = vmatprep.subr.mxu0 0.0
      %4044 = vmatpush2.msra.mxu0 %v2261
      %4045 = vmatprep.subr.mxu0 0.0
      %4046 = vmatpush2.msra.mxu0 %v2260
      %4047 = vmatprep.subr.mxu0 0.0
      %4048 = vmatpush2.msra.mxu0 %v2259
      %4049 = vmatprep.subr.mxu0 0.0
      %4050 = vmatpush2.msra.mxu0 %v2258
      %4051 = vmatprep.subr.mxu0 0.0
      %4052 = vmatpush2.msra.mxu0 %v2257
      %4053 = vmatprep.subr.mxu0 0.0
      %4054 = vmatpush2.msra.mxu0 %v2256
      %4055 = vmatprep.subr.mxu0 0.0
      %4056 = vmatpush2.msra.mxu0 %v2255
      %4057 = vmatprep.subr.mxu0 0.0
      %4058 = vmatpush2.msra.mxu0 %v2254
      %4059 = vmatprep.subr.mxu0 0.0
      %4060 = vmatpush2.msra.mxu0 %v2253
      %4061 = vmatprep.mubr.f32.mxu0 %v1458
      %4062 = vmatmul.mubr.f32.gmra.mxu0 %v1457
      %v4063 = vpop.f32.mrf.mxu0
      %v4064 = vadd.f32 %v3909, %v4063
      %v4065 = vpop.f32.mrf.mxu0
      %4066 = vmatprep.mubr.f32.mxu0 %v1483
      %4067 = vmatmul.mubr.f32.gmra.mxu0 %v1482
      %v4068 = vpop.f32.mrf.mxu0
      %v4069 = vadd.f32 %v3914, %v4068
      %v4070 = vpop.f32.mrf.mxu0
      %4071 = vmatprep.mubr.f32.mxu0 %v1508
      %4072 = vmatmul.mubr.f32.gmra.mxu0 %v1507
      %v4073 = vpop.f32.mrf.mxu0
      %v4074 = vadd.f32 %v3919, %v4073
      %v4075 = vpop.f32.mrf.mxu0
      %4076 = vmatprep.mubr.f32.mxu0 %v1533
      %4077 = vmatmul.mubr.f32.gmra.mxu0 %v1532
      %v4078 = vpop.f32.mrf.mxu0
      %v4079 = vadd.f32 %v3924, %v4078
      %v4080 = vpop.f32.mrf.mxu0
      %4081 = vmatprep.mubr.f32.mxu0 %v1558
      %4082 = vmatmul.mubr.f32.gmra.mxu0 %v1557
      %v4083 = vpop.f32.mrf.mxu0
      %v4084 = vadd.f32 %v3929, %v4083
      %v4085 = vpop.f32.mrf.mxu0
      %4086 = vmatprep.mubr.f32.mxu0 %v1583
      %4087 = vmatmul.mubr.f32.gmra.mxu0 %v1582
      %v4088 = vpop.f32.mrf.mxu0
      %v4089 = vadd.f32 %v3934, %v4088
      %v4090 = vpop.f32.mrf.mxu0
      %4091 = vmatprep.mubr.f32.mxu0 %v1608
      %4092 = vmatmul.mubr.f32.gmra.mxu0 %v1607
      %v4093 = vpop.f32.mrf.mxu0
      %v4094 = vadd.f32 %v3939, %v4093
      %v4095 = vpop.f32.mrf.mxu0
      %4096 = vmatprep.mubr.f32.mxu0 %v1633
      %4097 = vmatmul.mubr.f32.gmra.mxu0 %v1632
      %v4098 = vpop.f32.mrf.mxu0
      %v4099 = vadd.f32 %v3944, %v4098
      %v4100 = vpop.f32.mrf.mxu0
      %4101 = vmatprep.mubr.f32.mxu0 %v1658
      %4102 = vmatmul.mubr.f32.gmra.mxu0 %v1657
      %v4103 = vpop.f32.mrf.mxu0
      %v4104 = vadd.f32 %v3949, %v4103
      %v4105 = vpop.f32.mrf.mxu0
      %4106 = vmatprep.mubr.f32.mxu0 %v1683
      %4107 = vmatmul.mubr.f32.gmra.mxu0 %v1682
      %v4108 = vpop.f32.mrf.mxu0
      %v4109 = vadd.f32 %v3954, %v4108
      %v4110 = vpop.f32.mrf.mxu0
      %4111 = vmatprep.mubr.f32.mxu0 %v1708
      %4112 = vmatmul.mubr.f32.gmra.mxu0 %v1707
      %v4113 = vpop.f32.mrf.mxu0
      %v4114 = vadd.f32 %v3959, %v4113
      %v4115 = vpop.f32.mrf.mxu0
      %4116 = vmatprep.mubr.f32.mxu0 %v1733
      %4117 = vmatmul.mubr.f32.gmra.mxu0 %v1732
      %v4118 = vpop.f32.mrf.mxu0
      %v4119 = vadd.f32 %v3964, %v4118
      %v4120 = vpop.f32.mrf.mxu0
      %4121 = vmatprep.mubr.f32.mxu0 %v1758
      %4122 = vmatmul.mubr.f32.gmra.mxu0 %v1757
      %v4123 = vpop.f32.mrf.mxu0
      %v4124 = vadd.f32 %v3969, %v4123
      %v4125 = vpop.f32.mrf.mxu0
      %4126 = vmatprep.mubr.f32.mxu0 %v1783
      %4127 = vmatmul.mubr.f32.gmra.mxu0 %v1782
      %v4128 = vpop.f32.mrf.mxu0
      %v4129 = vadd.f32 %v3974, %v4128
      %v4130 = vpop.f32.mrf.mxu0
      %4131 = vmatprep.mubr.f32.mxu0 %v1808
      %4132 = vmatmul.mubr.f32.gmra.mxu0 %v1807
      %v4133 = vpop.f32.mrf.mxu0
      %v4134 = vadd.f32 %v3979, %v4133
      %v4135 = vpop.f32.mrf.mxu0
      %4136 = vmatprep.mubr.f32.mxu0 %v1833
      %4137 = vmatmul.mubr.f32.gmra.mxu0 %v1832
      %v4138 = vpop.f32.mrf.mxu0
      %v4139 = vadd.f32 %v3984, %v4138
      %v4140 = vpop.f32.mrf.mxu0
      %4141 = vmatprep.mubr.f32.mxu0 %v1858
      %4142 = vmatmul.mubr.f32.gmra.mxu0 %v1857
      %v4143 = vpop.f32.mrf.mxu0
      %v4144 = vadd.f32 %v3989, %v4143
      %v4145 = vpop.f32.mrf.mxu0
      %4146 = vmatprep.mubr.f32.mxu0 %v1883
      %4147 = vmatmul.mubr.f32.gmra.mxu0 %v1882
      %v4148 = vpop.f32.mrf.mxu0
      %v4149 = vadd.f32 %v3994, %v4148
      %v4150 = vpop.f32.mrf.mxu0
      %4151 = vdwg.mxu0
      %4152 = vmatprep.subr.mxu0 0.0
      %4153 = vmatpush1.msra.mxu0 %v2284
      %4154 = vmatprep.subr.mxu0 0.0
      %4155 = vmatpush1.msra.mxu0 %v2283
      %4156 = vmatprep.subr.mxu0 0.0
      %4157 = vmatpush1.msra.mxu0 %v2282
      %4158 = vmatprep.subr.mxu0 0.0
      %4159 = vmatpush1.msra.mxu0 %v2281
      %4160 = vmatprep.subr.mxu0 0.0
      %4161 = vmatpush1.msra.mxu0 %v2280
      %4162 = vmatprep.subr.mxu0 0.0
      %4163 = vmatpush1.msra.mxu0 %v2279
      %4164 = vmatprep.subr.mxu0 0.0
      %4165 = vmatpush1.msra.mxu0 %v2278
      %4166 = vmatprep.subr.mxu0 0.0
      %4167 = vmatpush1.msra.mxu0 %v2277
      %4168 = vmatprep.subr.mxu0 0.0
      %4169 = vmatpush1.msra.mxu0 %v2276
      %4170 = vmatprep.subr.mxu0 0.0
      %4171 = vmatpush1.msra.mxu0 %v2275
      %4172 = vmatprep.subr.mxu0 0.0
      %4173 = vmatpush1.msra.mxu0 %v2274
      %4174 = vmatprep.subr.mxu0 0.0
      %4175 = vmatpush1.msra.mxu0 %v2273
      %4176 = vmatprep.subr.mxu0 0.0
      %4177 = vmatpush1.msra.mxu0 %v2272
      %4178 = vmatprep.subr.mxu0 0.0
      %4179 = vmatpush1.msra.mxu0 %v2271
      %4180 = vmatprep.subr.mxu0 0.0
      %4181 = vmatpush1.msra.mxu0 %v2270
      %4182 = vmatprep.subr.mxu0 0.0
      %4183 = vmatpush1.msra.mxu0 %v2269
      %4184 = vmatprep.subr.mxu0 0.0
      %4185 = vmatpush2.msra.mxu0 0.0
      %4186 = vmatprep.subr.mxu0 0.0
      %4187 = vmatpush2.msra.mxu0 0.0
      %4188 = vmatprep.subr.mxu0 0.0
      %4189 = vmatpush2.msra.mxu0 0.0
      %4190 = vmatprep.subr.mxu0 0.0
      %4191 = vmatpush2.msra.mxu0 0.0
      %4192 = vmatprep.subr.mxu0 0.0
      %4193 = vmatpush2.msra.mxu0 0.0
      %4194 = vmatprep.subr.mxu0 0.0
      %4195 = vmatpush2.msra.mxu0 0.0
      %4196 = vmatprep.subr.mxu0 0.0
      %4197 = vmatpush2.msra.mxu0 0.0
      %4198 = vmatprep.subr.mxu0 0.0
      %4199 = vmatpush2.msra.mxu0 0.0
      %4200 = vmatprep.subr.mxu0 0.0
      %4201 = vmatpush2.msra.mxu0 0.0
      %4202 = vmatprep.subr.mxu0 0.0
      %4203 = vmatpush2.msra.mxu0 0.0
      %4204 = vmatprep.subr.mxu0 0.0
      %4205 = vmatpush2.msra.mxu0 0.0
      %4206 = vmatprep.subr.mxu0 0.0
      %4207 = vmatpush2.msra.mxu0 0.0
      %4208 = vmatprep.subr.mxu0 0.0
      %4209 = vmatpush2.msra.mxu0 0.0
      %4210 = vmatprep.subr.mxu0 0.0
      %4211 = vmatpush2.msra.mxu0 0.0
      %4212 = vmatprep.subr.mxu0 0.0
      %4213 = vmatpush2.msra.mxu0 0.0
      %4214 = vmatprep.subr.mxu0 0.0
      %4215 = vmatpush2.msra.mxu0 0.0
      %4216 = vmatprep.mubr.f32.mxu0 0.0
      %4217 = vmatmul.mubr.f32.gmra.mxu0 %v1459
      %v4218 = vpop.f32.mrf.mxu0
      %v4219 = vadd.f32 %v4064, %v4218
      %v4220 = vpop.f32.mrf.mxu0
      %4221 = vmatprep.mubr.f32.mxu0 0.0
      %4222 = vmatmul.mubr.f32.gmra.mxu0 %v1484
      %v4223 = vpop.f32.mrf.mxu0
      %v4224 = vadd.f32 %v4069, %v4223
      %v4225 = vpop.f32.mrf.mxu0
      %4226 = vmatprep.mubr.f32.mxu0 0.0
      %4227 = vmatmul.mubr.f32.gmra.mxu0 %v1509
      %v4228 = vpop.f32.mrf.mxu0
      %v4229 = vadd.f32 %v4074, %v4228
      %v4230 = vpop.f32.mrf.mxu0
      %4231 = vmatprep.mubr.f32.mxu0 0.0
      %4232 = vmatmul.mubr.f32.gmra.mxu0 %v1534
      %v4233 = vpop.f32.mrf.mxu0
      %v4234 = vadd.f32 %v4079, %v4233
      %v4235 = vpop.f32.mrf.mxu0
      %4236 = vmatprep.mubr.f32.mxu0 0.0
      %4237 = vmatmul.mubr.f32.gmra.mxu0 %v1559
      %v4238 = vpop.f32.mrf.mxu0
      %v4239 = vadd.f32 %v4084, %v4238
      %v4240 = vpop.f32.mrf.mxu0
      %4241 = vmatprep.mubr.f32.mxu0 0.0
      %4242 = vmatmul.mubr.f32.gmra.mxu0 %v1584
      %v4243 = vpop.f32.mrf.mxu0
      %v4244 = vadd.f32 %v4089, %v4243
      %v4245 = vpop.f32.mrf.mxu0
      %4246 = vmatprep.mubr.f32.mxu0 0.0
      %4247 = vmatmul.mubr.f32.gmra.mxu0 %v1609
      %v4248 = vpop.f32.mrf.mxu0
      %v4249 = vadd.f32 %v4094, %v4248
      %v4250 = vpop.f32.mrf.mxu0
      %4251 = vmatprep.mubr.f32.mxu0 0.0
      %4252 = vmatmul.mubr.f32.gmra.mxu0 %v1634
      %v4253 = vpop.f32.mrf.mxu0
      %v4254 = vadd.f32 %v4099, %v4253
      %v4255 = vpop.f32.mrf.mxu0
      %4256 = vmatprep.mubr.f32.mxu0 0.0
      %4257 = vmatmul.mubr.f32.gmra.mxu0 %v1659
      %v4258 = vpop.f32.mrf.mxu0
      %v4259 = vadd.f32 %v4104, %v4258
      %v4260 = vpop.f32.mrf.mxu0
      %4261 = vmatprep.mubr.f32.mxu0 0.0
      %4262 = vmatmul.mubr.f32.gmra.mxu0 %v1684
      %v4263 = vpop.f32.mrf.mxu0
      %v4264 = vadd.f32 %v4109, %v4263
      %v4265 = vpop.f32.mrf.mxu0
      %4266 = vmatprep.mubr.f32.mxu0 0.0
      %4267 = vmatmul.mubr.f32.gmra.mxu0 %v1709
      %v4268 = vpop.f32.mrf.mxu0
      %v4269 = vadd.f32 %v4114, %v4268
      %v4270 = vpop.f32.mrf.mxu0
      %4271 = vmatprep.mubr.f32.mxu0 0.0
      %4272 = vmatmul.mubr.f32.gmra.mxu0 %v1734
      %v4273 = vpop.f32.mrf.mxu0
      %v4274 = vadd.f32 %v4119, %v4273
      %v4275 = vpop.f32.mrf.mxu0
      %4276 = vmatprep.mubr.f32.mxu0 0.0
      %4277 = vmatmul.mubr.f32.gmra.mxu0 %v1759
      %v4278 = vpop.f32.mrf.mxu0
      %v4279 = vadd.f32 %v4124, %v4278
      %v4280 = vpop.f32.mrf.mxu0
      %4281 = vmatprep.mubr.f32.mxu0 0.0
      %4282 = vmatmul.mubr.f32.gmra.mxu0 %v1784
      %v4283 = vpop.f32.mrf.mxu0
      %v4284 = vadd.f32 %v4129, %v4283
      %v4285 = vpop.f32.mrf.mxu0
      %4286 = vmatprep.mubr.f32.mxu0 0.0
      %4287 = vmatmul.mubr.f32.gmra.mxu0 %v1809
      %v4288 = vpop.f32.mrf.mxu0
      %v4289 = vadd.f32 %v4134, %v4288
      %v4290 = vpop.f32.mrf.mxu0
      %4291 = vmatprep.mubr.f32.mxu0 0.0
      %4292 = vmatmul.mubr.f32.gmra.mxu0 %v1834
      %v4293 = vpop.f32.mrf.mxu0
      %v4294 = vadd.f32 %v4139, %v4293
      %v4295 = vpop.f32.mrf.mxu0
      %4296 = vmatprep.mubr.f32.mxu0 0.0
      %4297 = vmatmul.mubr.f32.gmra.mxu0 %v1859
      %v4298 = vpop.f32.mrf.mxu0
      %v4299 = vadd.f32 %v4144, %v4298
      %v4300 = vpop.f32.mrf.mxu0
      %4301 = vmatprep.mubr.f32.mxu0 0.0
      %4302 = vmatmul.mubr.f32.gmra.mxu0 %v1884
      %v4303 = vpop.f32.mrf.mxu0
      %v4304 = vadd.f32 %v4149, %v4303
      %v4305 = vpop.f32.mrf.mxu0
      %4306 = vdwg.mxu0
      %vm4307 = vcmp.gt.f32.partialorder %v4219, 0.0
      %vm4308 = vcmp.gt.f32.partialorder %v4224, 0.0
      %vm4309 = vcmp.gt.f32.partialorder %v4229, 0.0
      %vm4310 = vcmp.gt.f32.partialorder %v4234, 0.0
      %vm4311 = vcmp.gt.f32.partialorder %v4239, 0.0
      %vm4312 = vcmp.gt.f32.partialorder %v4244, 0.0
      %vm4313 = vcmp.gt.f32.partialorder %v4249, 0.0
      %vm4314 = vcmp.gt.f32.partialorder %v4254, 0.0
      %vm4315 = vcmp.gt.f32.partialorder %v4259, 0.0
      %vm4316 = vcmp.gt.f32.partialorder %v4264, 0.0
      %vm4317 = vcmp.gt.f32.partialorder %v4269, 0.0
      %vm4318 = vcmp.gt.f32.partialorder %v4274, 0.0
      %vm4319 = vcmp.gt.f32.partialorder %v4279, 0.0
      %vm4320 = vcmp.gt.f32.partialorder %v4284, 0.0
      %vm4321 = vcmp.gt.f32.partialorder %v4289, 0.0
      %vm4322 = vcmp.gt.f32.partialorder %v4294, 0.0
      %vm4323 = vcmp.gt.f32.partialorder %v4299, 0.0
      %vm4324 = vcmp.gt.f32.partialorder %v4304, 0.0
      %v4325 = vmul.f32 %v4219, 0.01
      %v4326 = vmul.f32 %v4224, 0.01
      %v4327 = vmul.f32 %v4229, 0.01
      %v4328 = vmul.f32 %v4234, 0.01
      %v4329 = vmul.f32 %v4239, 0.01
      %v4330 = vmul.f32 %v4244, 0.01
      %v4331 = vmul.f32 %v4249, 0.01
      %v4332 = vmul.f32 %v4254, 0.01
      %v4333 = vmul.f32 %v4259, 0.01
      %v4334 = vmul.f32 %v4264, 0.01
      %v4335 = vmul.f32 %v4269, 0.01
      %v4336 = vmul.f32 %v4274, 0.01
      %v4337 = vmul.f32 %v4279, 0.01
      %v4338 = vmul.f32 %v4284, 0.01
      %v4339 = vmul.f32 %v4289, 0.01
      %v4340 = vmul.f32 %v4294, 0.01
      %v4341 = vmul.f32 %v4299, 0.01
      %v4342 = vmul.f32 %v4304, 0.01
      %v4343 = vsel %vm4307, %v4219, %v4325
      %v4344 = vsel %vm4308, %v4224, %v4326
      %v4345 = vsel %vm4309, %v4229, %v4327
      %v4346 = vsel %vm4310, %v4234, %v4328
      %v4347 = vsel %vm4311, %v4239, %v4329
      %v4348 = vsel %vm4312, %v4244, %v4330
      %v4349 = vsel %vm4313, %v4249, %v4331
      %v4350 = vsel %vm4314, %v4254, %v4332
      %v4351 = vsel %vm4315, %v4259, %v4333
      %v4352 = vsel %vm4316, %v4264, %v4334
      %v4353 = vsel %vm4317, %v4269, %v4335
      %v4354 = vsel %vm4318, %v4274, %v4336
      %v4355 = vsel %vm4319, %v4279, %v4337
      %v4356 = vsel %vm4320, %v4284, %v4338
      %v4357 = vsel %vm4321, %v4289, %v4339
      %v4358 = vsel %vm4322, %v4294, %v4340
      %v4359 = vsel %vm4323, %v4299, %v4341
      %v4360 = vsel %vm4324, %v4304, %v4342
      %4361 = vst [vmem:[%s263] sm:$0xff] %v4343
      %4362 = vst [vmem:[%s263 + $0x8] sm:$0xff] %v4344
      %4363 = vst [vmem:[%s263 + $0x10] sm:$0xff] %v4345
      %4364 = vst [vmem:[%s263 + $0x18] sm:$0xff] %v4346
      %4365 = vst [vmem:[%s263 + $0x20] sm:$0xff] %v4347
      %4366 = vst [vmem:[%s263 + $0x28] sm:$0xff] %v4348
      %4367 = vst [vmem:[%s263 + $0x30] sm:$0xff] %v4349
      %4368 = vst [vmem:[%s263 + $0x38] sm:$0xff] %v4350
      %4369 = vst [vmem:[%s263 + $0x40] sm:$0xff] %v4351
      %4370 = vst [vmem:[%s263 + $0x48] sm:$0xff] %v4352
      %4371 = vst [vmem:[%s263 + $0x50] sm:$0xff] %v4353
      %4372 = vst [vmem:[%s263 + $0x58] sm:$0xff] %v4354
      %4373 = vst [vmem:[%s263 + $0x60] sm:$0xff] %v4355
      %4374 = vst [vmem:[%s263 + $0x68] sm:$0xff] %v4356
      %4375 = vst [vmem:[%s263 + $0x70] sm:$0xff] %v4357
      %4376 = vst [vmem:[%s263 + $0x78] sm:$0xff] %v4358
      %4377 = vst [vmem:[%s263 + $0x80] sm:$0xff] %v4359
      %4378 = vst [vmem:[%s263 + $0x88] sm:$0xff] %v4360
      %v4379 = vadd.f32 %v4343, %v4344
      %v4380 = vadd.f32 %v4379, %v4345
      %v4381 = vadd.f32 %v4380, %v4346
      %v4382 = vadd.f32 %v4381, %v4347
      %v4383 = vadd.f32 %v4382, %v4348
      %v4384 = vadd.f32 %v4383, %v4349
      %v4385 = vadd.f32 %v4384, %v4350
      %v4386 = vadd.f32 %v4385, %v4351
      %v4387 = vadd.f32 %v4386, %v4352
      %v4388 = vadd.f32 %v4387, %v4353
      %v4389 = vadd.f32 %v4388, %v4354
      %v4390 = vadd.f32 %v4389, %v4355
      %v4391 = vadd.f32 %v4390, %v4356
      %v4392 = vadd.f32 %v4391, %v4357
      %v4393 = vadd.f32 %v4392, %v4358
      %v4394 = vadd.f32 %v4393, %v4359
      %v4395 = vadd.f32 %v4394, %v4360
      %v4396 = vrot.slane %v4395, 4
      %v4397 = vadd.f32 %v4395, %v4396
      %v4398 = vrot.slane %v4397, 2
      %v4399 = vadd.f32 %v4397, %v4398
      %v4400 = vrot.slane %v4399, 1
      %v4401 = vadd.f32 %v4399, %v4400
      %v4402 = vmul.f32 %v4343, %v4343
      %v4403 = vmul.f32 %v4344, %v4344
      %v4404 = vmul.f32 %v4345, %v4345
      %v4405 = vmul.f32 %v4346, %v4346
      %v4406 = vmul.f32 %v4347, %v4347
      %v4407 = vmul.f32 %v4348, %v4348
      %v4408 = vmul.f32 %v4349, %v4349
      %v4409 = vmul.f32 %v4350, %v4350
      %v4410 = vmul.f32 %v4351, %v4351
      %v4411 = vmul.f32 %v4352, %v4352
      %v4412 = vmul.f32 %v4353, %v4353
      %v4413 = vmul.f32 %v4354, %v4354
      %v4414 = vmul.f32 %v4355, %v4355
      %v4415 = vmul.f32 %v4356, %v4356
      %v4416 = vmul.f32 %v4357, %v4357
      %v4417 = vmul.f32 %v4358, %v4358
      %v4418 = vmul.f32 %v4359, %v4359
      %v4419 = vmul.f32 %v4360, %v4360
      %v4420 = vadd.f32 %v4402, %v4403
      %v4421 = vadd.f32 %v4420, %v4404
      %v4422 = vadd.f32 %v4421, %v4405
      %v4423 = vadd.f32 %v4422, %v4406
      %v4424 = vadd.f32 %v4423, %v4407
      %v4425 = vadd.f32 %v4424, %v4408
      %v4426 = vadd.f32 %v4425, %v4409
      %v4427 = vadd.f32 %v4426, %v4410
      %v4428 = vadd.f32 %v4427, %v4411
      %v4429 = vadd.f32 %v4428, %v4412
      %v4430 = vadd.f32 %v4429, %v4413
      %v4431 = vadd.f32 %v4430, %v4414
      %v4432 = vadd.f32 %v4431, %v4415
      %v4433 = vadd.f32 %v4432, %v4416
      %v4434 = vadd.f32 %v4433, %v4417
      %v4435 = vadd.f32 %v4434, %v4418
      %v4436 = vadd.f32 %v4435, %v4419
      %v4437 = vrot.slane %v4436, 4
      %v4438 = vadd.f32 %v4436, %v4437
      %v4439 = vrot.slane %v4438, 2
      %v4440 = vadd.f32 %v4438, %v4439
      %v4441 = vrot.slane %v4440, 1
      %v4442 = vadd.f32 %v4440, %v4441
      %vm4443 = vcmask 1040384
      %v4444 = vsel %vm4443, %v4401, %v4442
      %vm4445 = vcmask 1041408
      %v4446 = vsel %vm4445, %v4444, 0.0
      %4447 = vst [vmem:[%s268] sm:$0xff] %v4446
      %s4448 = smul.u32 18, %s18
      %p4449 = scmp.lt.s32.totalorder %s4448, 35
      %s4450 = scalar_select %p4449, %s4448, 35
      %s4451 = smul.addr %s4450, 8
      %s4452 = scalar_lea.vmem %s5, %s4451
      %p4453 = scmp.lt.s32.totalorder %s18, 1
      %s4454 = scalar_select %p4453, %s18, 1
      %s4455 = smul.addr %s4454, 8
      %s4456 = scalar_lea.vmem %s6, %s4455
      // Predicated region
      $region41: #{disc_cero_forward.4} parent=39 // pred_check
        %p4457 = pneg %p146
      $region42: #{disc_cero_forward.4} parent=39 // pred_check_branch
        %4459 = sbr.rel (%p4457) target = $region44
      $region43: #{disc_cero_forward.4} parent=39 // pred_region
        %s4460 = smul.u32 18, %s18
      $region44: #{disc_cero_forward.4} parent=39 // pred_fallthru
        _
      // Predicated region
      $region45: #{disc_cero_forward.4} parent=39 // pred_check
        %p4461 = pneg %p172
      $region46: #{disc_cero_forward.4} parent=39 // pred_check_branch
        %4463 = sbr.rel (%p4461) target = $region48
      $region47: #{disc_cero_forward.4} parent=39 // pred_region
        _
      $region48: #{disc_cero_forward.4} parent=39 // pred_fallthru
        _
    $region40: #{disc_cero_forward.4} parent=5 // pred_fallthru
      _
    %p4464 = scmp.le.s32.totalorder 2, %s13
    // Predicated region
    $region49: #{disc_cero_forward.4} parent=5 // pred_check
      %p4465 = pneg %p4464
    $region50: #{disc_cero_forward.4} parent=5 // pred_check_branch
      %4467 = sbr.rel (%p4465) target = $region52
    $region51: #{disc_cero_forward.4} parent=5 // pred_region
      %s4468 = ssub.s32 %s13, 2
      // Predicated region
      $region53: #{disc_cero_forward.4} parent=51 // pred_check
        %p4469 = pneg %p152
      $region54: #{disc_cero_forward.4} parent=51 // pred_check_branch
        %4471 = sbr.rel (%p4469) target = $region56
      $region55: #{disc_cero_forward.4} parent=51 // pred_region
        %s4472 = smul.u32 18, %s19
        %p4473 = scmp.lt.s32.totalorder %s4472, 35
        %s4474 = scalar_select %p4473, %s4472, 35
        %s4475 = smul.addr %s4474, 8
        %s4476 = scalar_lea.vmem %s5, %s4475
      $region56: #{disc_cero_forward.4} parent=51 // pred_fallthru
        _
      // Predicated region
      $region57: #{disc_cero_forward.4} parent=51 // pred_check
        %p4477 = pneg %p178
      $region58: #{disc_cero_forward.4} parent=51 // pred_check_branch
        %4479 = sbr.rel (%p4477) target = $region60
      $region59: #{disc_cero_forward.4} parent=51 // pred_region
        %p4480 = scmp.lt.s32.totalorder %s19, 1
        %s4481 = scalar_select %p4480, %s19, 1
        %s4482 = smul.addr %s4481, 8
        %s4483 = scalar_lea.vmem %s6, %s4482
      $region60: #{disc_cero_forward.4} parent=51 // pred_fallthru
        _
    $region52: #{disc_cero_forward.4} parent=5 // pred_fallthru
      _
  $region6: #{disc_cero_forward.4} parent=0 // loop_footer
    %s17 = sadd.s32 1, %s13
  $region7: #{disc_cero_forward.4} parent=0 // loop_footer_branch
    %12 = sbr.rel target = $region3
  $region8: #{disc_cero_forward.4} parent=0 // loop_exit
    _

// kernel: tile.33
$region0: #{tile.33}
  #allocation0 [shape = 's32[1]{0}', space=sflag, size = 0x4, scoped, tag = 'scoped memory for tile.33']
  %s0 = inlined_call_operand.vmem [shape: f32[128], index: 0, kind: input, shape index: {}]
  %s1 = inlined_call_operand.vmem [shape: f32[144,128], index: 1, kind: output, shape index: {}]
  // Predicated region
  $region2: #{tile.33} parent=0 // pred_check
    _
  $region3: #{tile.33} parent=0 // pred_check_branch
    %3 = sbr.rel (0) target = $region5
  $region4: #{tile.33} parent=0 // pred_region
    _
  $region5: #{tile.33} parent=0 // pred_fallthru
    _
  %v4 = vld [vmem:[%s0] ss:$0 sm:$0xff]
  %5 = vst [vmem:[%s1] sm:$0xff] %v4
  %s6 = scalar_lea.vmem %s1, 8
  %7 = vst [vmem:[%s6] sm:$0xff] %v4
  %s8 = scalar_lea.vmem %s1, 16
  %9 = vst [vmem:[%s8] sm:$0xff] %v4
  %s10 = scalar_lea.vmem %s1, 24
  %11 = vst [vmem:[%s10] sm:$0xff] %v4
  %s12 = scalar_lea.vmem %s1, 32
  %13 = vst [vmem:[%s12] sm:$0xff] %v4
  %s14 = scalar_lea.vmem %s1, 40
  %15 = vst [vmem:[%s14] sm:$0xff] %v4
  %s16 = scalar_lea.vmem %s1, 48
  %17 = vst [vmem:[%s16] sm:$0xff] %v4
  %s18 = scalar_lea.vmem %s1, 56
  %19 = vst [vmem:[%s18] sm:$0xff] %v4
  %s20 = scalar_lea.vmem %s1, 64
  %21 = vst [vmem:[%s20] sm:$0xff] %v4
  %s22 = scalar_lea.vmem %s1, 72
  %23 = vst [vmem:[%s22] sm:$0xff] %v4
  %s24 = scalar_lea.vmem %s1, 80
  %25 = vst [vmem:[%s24] sm:$0xff] %v4
  %s26 = scalar_lea.vmem %s1, 88
  %27 = vst [vmem:[%s26] sm:$0xff] %v4
  %s28 = scalar_lea.vmem %s1, 96
  %29 = vst [vmem:[%s28] sm:$0xff] %v4
  %s30 = scalar_lea.vmem %s1, 104
  %31 = vst [vmem:[%s30] sm:$0xff] %v4
  %s32 = scalar_lea.vmem %s1, 112
  %33 = vst [vmem:[%s32] sm:$0xff] %v4
  %s34 = scalar_lea.vmem %s1, 120
  %35 = vst [vmem:[%s34] sm:$0xff] %v4
  %s36 = scalar_lea.vmem %s1, 128
  %37 = vst [vmem:[%s36] sm:$0xff] %v4
  %s38 = scalar_lea.vmem %s1, 136
  %39 = vst [vmem:[%s38] sm:$0xff] %v4

// kernel: disc_cero_forward.5
$region0: #{disc_cero_forward.5}
  #allocation0 [shape = 'u32[]', space=smem, size = 0x4, offset = 0x4, fixed_abs, tag = 'smem constant byte address 0x4 - core index']
  #allocation1 [shape = 'u32[144,128]{1,0:T(1,128)}', space=vmem, size = 0x12000, scoped, tag = 'internal scratch']
  #allocation2 [shape = 'f32[1,1]{1,0:T(1,128)S(1)}', space=vmem, size = 0x200, scoped, tag = 'scoped memory for disc_cero_forward.5']
  %s0 = inlined_call_operand.vmem [shape: f32[2,18432], index: 0, kind: input, shape index: {}]
  %s1 = inlined_call_operand.vmem [shape: f32[1,18432], index: 1, kind: input, shape index: {}]
  %s2 = inlined_call_operand.vmem [shape: f32[1,18432], index: 2, kind: input, shape index: {}]
  %s3 = inlined_call_operand.vmem [shape: f32[1,18432], index: 3, kind: input, shape index: {}]
  %s4 = inlined_call_operand.<no memory space> [shape: f32[1,1], index: 4, kind: input, shape index: {}]
  %s5 = inlined_call_operand.vmem [shape: f32[2,1], index: 5, kind: output, shape index: {}]
  %s6 = sld [smem:[#allocation0]]
  $region30: #{disc_cero_forward.5} parent=0
    _
  %s8 = ssub.s32 1, %s6
  %s9 = scalar_select 0, %s8, %s6
  %v10 = vstv %s4
  %11 = vst [vmem:[#allocation2] sm:$0x1] %v10
  // Predicated region
  $region2: #{disc_cero_forward.5} parent=0 // pred_check
    _
  $region3: #{disc_cero_forward.5} parent=0 // pred_check_branch
    %13 = sbr.rel (0) target = $region5
  $region4: #{disc_cero_forward.5} parent=0 // pred_region
    _
  $region5: #{disc_cero_forward.5} parent=0 // pred_fallthru
    _
  // Predicated region
  $region6: #{disc_cero_forward.5} parent=0 // pred_check
    _
  $region7: #{disc_cero_forward.5} parent=0 // pred_check_branch
    %15 = sbr.rel (0) target = $region9
  $region8: #{disc_cero_forward.5} parent=0 // pred_region
    _
  $region9: #{disc_cero_forward.5} parent=0 // pred_fallthru
    _
  // Predicated region
  $region10: #{disc_cero_forward.5} parent=0 // pred_check
    _
  $region11: #{disc_cero_forward.5} parent=0 // pred_check_branch
    %17 = sbr.rel (0) target = $region13
  $region12: #{disc_cero_forward.5} parent=0 // pred_region
    _
  $region13: #{disc_cero_forward.5} parent=0 // pred_fallthru
    _
  // Predicated region
  $region14: #{disc_cero_forward.5} parent=0 // pred_check
    _
  $region15: #{disc_cero_forward.5} parent=0 // pred_check_branch
    %19 = sbr.rel (0) target = $region17
  $region16: #{disc_cero_forward.5} parent=0 // pred_region
    _
  $region17: #{disc_cero_forward.5} parent=0 // pred_fallthru
    _
  // Predicated region
  $region18: #{disc_cero_forward.5} parent=0 // pred_check
    _
  $region19: #{disc_cero_forward.5} parent=0 // pred_check_branch
    %21 = sbr.rel (0) target = $region21
  $region20: #{disc_cero_forward.5} parent=0 // pred_region
    _
  $region21: #{disc_cero_forward.5} parent=0 // pred_fallthru
    _
  %v22 = vld [vmem:[%s0] sm:$0xff]
  %v23 = vld [vmem:[%s0 + $0x8] sm:$0xff]
  %v24 = vld [vmem:[%s0 + $0x10] sm:$0xff]
  %v25 = vld [vmem:[%s0 + $0x18] sm:$0xff]
  %v26 = vld [vmem:[%s0 + $0x20] sm:$0xff]
  %v27 = vld [vmem:[%s0 + $0x28] sm:$0xff]
  %v28 = vld [vmem:[%s0 + $0x30] sm:$0xff]
  %v29 = vld [vmem:[%s0 + $0x38] sm:$0xff]
  %v30 = vld [vmem:[%s0 + $0x40] sm:$0xff]
  %v31 = vld [vmem:[%s0 + $0x48] sm:$0xff]
  %v32 = vld [vmem:[%s0 + $0x50] sm:$0xff]
  %v33 = vld [vmem:[%s0 + $0x58] sm:$0xff]
  %v34 = vld [vmem:[%s0 + $0x60] sm:$0xff]
  %v35 = vld [vmem:[%s0 + $0x68] sm:$0xff]
  %v36 = vld [vmem:[%s0 + $0x70] sm:$0xff]
  %v37 = vld [vmem:[%s0 + $0x78] sm:$0xff]
  %v38 = vld [vmem:[%s0 + $0x80] sm:$0xff]
  %v39 = vld [vmem:[%s0 + $0x88] sm:$0xff]
  %v40 = vld [vmem:[%s0 + $0x90] sm:$0xff]
  %v41 = vld [vmem:[%s0 + $0x98] sm:$0xff]
  %v42 = vld [vmem:[%s0 + $0xa0] sm:$0xff]
  %v43 = vld [vmem:[%s0 + $0xa8] sm:$0xff]
  %v44 = vld [vmem:[%s0 + $0xb0] sm:$0xff]
  %v45 = vld [vmem:[%s0 + $0xb8] sm:$0xff]
  %v46 = vld [vmem:[%s0 + $0xc0] sm:$0xff]
  %v47 = vld [vmem:[%s0 + $0xc8] sm:$0xff]
  %v48 = vld [vmem:[%s0 + $0xd0] sm:$0xff]
  %v49 = vld [vmem:[%s0 + $0xd8] sm:$0xff]
  %v50 = vld [vmem:[%s0 + $0xe0] sm:$0xff]
  %v51 = vld [vmem:[%s0 + $0xe8] sm:$0xff]
  %v52 = vld [vmem:[%s0 + $0xf0] sm:$0xff]
  %v53 = vld [vmem:[%s0 + $0xf8] sm:$0xff]
  %v54 = vld [vmem:[%s0 + $0x100] sm:$0xff]
  %v55 = vld [vmem:[%s0 + $0x108] sm:$0xff]
  %v56 = vld [vmem:[%s0 + $0x110] sm:$0xff]
  %v57 = vld [vmem:[%s0 + $0x118] sm:$0xff]
  %v58 = vld [vmem:[%s1] sm:$0xff]
  %v59 = vld [vmem:[%s1 + $0x8] sm:$0xff]
  %v60 = vld [vmem:[%s1 + $0x10] sm:$0xff]
  %v61 = vld [vmem:[%s1 + $0x18] sm:$0xff]
  %v62 = vld [vmem:[%s1 + $0x20] sm:$0xff]
  %v63 = vld [vmem:[%s1 + $0x28] sm:$0xff]
  %v64 = vld [vmem:[%s1 + $0x30] sm:$0xff]
  %v65 = vld [vmem:[%s1 + $0x38] sm:$0xff]
  %v66 = vld [vmem:[%s1 + $0x40] sm:$0xff]
  %v67 = vld [vmem:[%s1 + $0x48] sm:$0xff]
  %v68 = vld [vmem:[%s1 + $0x50] sm:$0xff]
  %v69 = vld [vmem:[%s1 + $0x58] sm:$0xff]
  %v70 = vld [vmem:[%s1 + $0x60] sm:$0xff]
  %v71 = vld [vmem:[%s1 + $0x68] sm:$0xff]
  %v72 = vld [vmem:[%s1 + $0x70] sm:$0xff]
  %v73 = vld [vmem:[%s1 + $0x78] sm:$0xff]
  %v74 = vld [vmem:[%s1 + $0x80] sm:$0xff]
  %v75 = vld [vmem:[%s1 + $0x88] sm:$0xff]
  %v94 = vlaneseq
  %v95 = vshrl.u32 %v94, 7
  %v96 = vsub.s32 0, %v95
  %v97 = vrot.slane %v58, %v96
  %v98 = vlaneseq
  %v99 = vshrl.u32 %v98, 7
  %v100 = vsub.s32 1, %v99
  %v101 = vrot.slane %v58, %v100
  %v102 = vlaneseq
  %v103 = vshrl.u32 %v102, 7
  %v104 = vsub.s32 2, %v103
  %v105 = vrot.slane %v58, %v104
  %v106 = vlaneseq
  %v107 = vshrl.u32 %v106, 7
  %v108 = vsub.s32 3, %v107
  %v109 = vrot.slane %v58, %v108
  %v110 = vlaneseq
  %v111 = vshrl.u32 %v110, 7
  %v112 = vsub.s32 4, %v111
  %v113 = vrot.slane %v58, %v112
  %v114 = vlaneseq
  %v115 = vshrl.u32 %v114, 7
  %v116 = vsub.s32 5, %v115
  %v117 = vrot.slane %v58, %v116
  %v118 = vlaneseq
  %v119 = vshrl.u32 %v118, 7
  %v120 = vsub.s32 6, %v119
  %v121 = vrot.slane %v58, %v120
  %v122 = vlaneseq
  %v123 = vshrl.u32 %v122, 7
  %v124 = vsub.s32 7, %v123
  %v125 = vrot.slane %v58, %v124
  %v126 = vlaneseq
  %v127 = vshrl.u32 %v126, 7
  %v128 = vsub.s32 0, %v127
  %v129 = vrot.slane %v59, %v128
  %v130 = vlaneseq
  %v131 = vshrl.u32 %v130, 7
  %v132 = vsub.s32 1, %v131
  %v133 = vrot.slane %v59, %v132
  %v134 = vlaneseq
  %v135 = vshrl.u32 %v134, 7
  %v136 = vsub.s32 2, %v135
  %v137 = vrot.slane %v59, %v136
  %v138 = vlaneseq
  %v139 = vshrl.u32 %v138, 7
  %v140 = vsub.s32 3, %v139
  %v141 = vrot.slane %v59, %v140
  %v142 = vlaneseq
  %v143 = vshrl.u32 %v142, 7
  %v144 = vsub.s32 4, %v143
  %v145 = vrot.slane %v59, %v144
  %v146 = vlaneseq
  %v147 = vshrl.u32 %v146, 7
  %v148 = vsub.s32 5, %v147
  %v149 = vrot.slane %v59, %v148
  %v150 = vlaneseq
  %v151 = vshrl.u32 %v150, 7
  %v152 = vsub.s32 6, %v151
  %v153 = vrot.slane %v59, %v152
  %v154 = vlaneseq
  %v155 = vshrl.u32 %v154, 7
  %v156 = vsub.s32 7, %v155
  %v157 = vrot.slane %v59, %v156
  %v158 = vlaneseq
  %v159 = vshrl.u32 %v158, 7
  %v160 = vsub.s32 0, %v159
  %v161 = vrot.slane %v60, %v160
  %v162 = vlaneseq
  %v163 = vshrl.u32 %v162, 7
  %v164 = vsub.s32 1, %v163
  %v165 = vrot.slane %v60, %v164
  %v166 = vlaneseq
  %v167 = vshrl.u32 %v166, 7
  %v168 = vsub.s32 2, %v167
  %v169 = vrot.slane %v60, %v168
  %v170 = vlaneseq
  %v171 = vshrl.u32 %v170, 7
  %v172 = vsub.s32 3, %v171
  %v173 = vrot.slane %v60, %v172
  %v174 = vlaneseq
  %v175 = vshrl.u32 %v174, 7
  %v176 = vsub.s32 4, %v175
  %v177 = vrot.slane %v60, %v176
  %v178 = vlaneseq
  %v179 = vshrl.u32 %v178, 7
  %v180 = vsub.s32 5, %v179
  %v181 = vrot.slane %v60, %v180
  %v182 = vlaneseq
  %v183 = vshrl.u32 %v182, 7
  %v184 = vsub.s32 6, %v183
  %v185 = vrot.slane %v60, %v184
  %v186 = vlaneseq
  %v187 = vshrl.u32 %v186, 7
  %v188 = vsub.s32 7, %v187
  %v189 = vrot.slane %v60, %v188
  %v190 = vlaneseq
  %v191 = vshrl.u32 %v190, 7
  %v192 = vsub.s32 0, %v191
  %v193 = vrot.slane %v61, %v192
  %v194 = vlaneseq
  %v195 = vshrl.u32 %v194, 7
  %v196 = vsub.s32 1, %v195
  %v197 = vrot.slane %v61, %v196
  %v198 = vlaneseq
  %v199 = vshrl.u32 %v198, 7
  %v200 = vsub.s32 2, %v199
  %v201 = vrot.slane %v61, %v200
  %v202 = vlaneseq
  %v203 = vshrl.u32 %v202, 7
  %v204 = vsub.s32 3, %v203
  %v205 = vrot.slane %v61, %v204
  %v206 = vlaneseq
  %v207 = vshrl.u32 %v206, 7
  %v208 = vsub.s32 4, %v207
  %v209 = vrot.slane %v61, %v208
  %v210 = vlaneseq
  %v211 = vshrl.u32 %v210, 7
  %v212 = vsub.s32 5, %v211
  %v213 = vrot.slane %v61, %v212
  %v214 = vlaneseq
  %v215 = vshrl.u32 %v214, 7
  %v216 = vsub.s32 6, %v215
  %v217 = vrot.slane %v61, %v216
  %v218 = vlaneseq
  %v219 = vshrl.u32 %v218, 7
  %v220 = vsub.s32 7, %v219
  %v221 = vrot.slane %v61, %v220
  %v222 = vlaneseq
  %v223 = vshrl.u32 %v222, 7
  %v224 = vsub.s32 0, %v223
  %v225 = vrot.slane %v62, %v224
  %v226 = vlaneseq
  %v227 = vshrl.u32 %v226, 7
  %v228 = vsub.s32 1, %v227
  %v229 = vrot.slane %v62, %v228
  %v230 = vlaneseq
  %v231 = vshrl.u32 %v230, 7
  %v232 = vsub.s32 2, %v231
  %v233 = vrot.slane %v62, %v232
  %v234 = vlaneseq
  %v235 = vshrl.u32 %v234, 7
  %v236 = vsub.s32 3, %v235
  %v237 = vrot.slane %v62, %v236
  %v238 = vlaneseq
  %v239 = vshrl.u32 %v238, 7
  %v240 = vsub.s32 4, %v239
  %v241 = vrot.slane %v62, %v240
  %v242 = vlaneseq
  %v243 = vshrl.u32 %v242, 7
  %v244 = vsub.s32 5, %v243
  %v245 = vrot.slane %v62, %v244
  %v246 = vlaneseq
  %v247 = vshrl.u32 %v246, 7
  %v248 = vsub.s32 6, %v247
  %v249 = vrot.slane %v62, %v248
  %v250 = vlaneseq
  %v251 = vshrl.u32 %v250, 7
  %v252 = vsub.s32 7, %v251
  %v253 = vrot.slane %v62, %v252
  %v254 = vlaneseq
  %v255 = vshrl.u32 %v254, 7
  %v256 = vsub.s32 0, %v255
  %v257 = vrot.slane %v63, %v256
  %v258 = vlaneseq
  %v259 = vshrl.u32 %v258, 7
  %v260 = vsub.s32 1, %v259
  %v261 = vrot.slane %v63, %v260
  %v262 = vlaneseq
  %v263 = vshrl.u32 %v262, 7
  %v264 = vsub.s32 2, %v263
  %v265 = vrot.slane %v63, %v264
  %v266 = vlaneseq
  %v267 = vshrl.u32 %v266, 7
  %v268 = vsub.s32 3, %v267
  %v269 = vrot.slane %v63, %v268
  %v270 = vlaneseq
  %v271 = vshrl.u32 %v270, 7
  %v272 = vsub.s32 4, %v271
  %v273 = vrot.slane %v63, %v272
  %v274 = vlaneseq
  %v275 = vshrl.u32 %v274, 7
  %v276 = vsub.s32 5, %v275
  %v277 = vrot.slane %v63, %v276
  %v278 = vlaneseq
  %v279 = vshrl.u32 %v278, 7
  %v280 = vsub.s32 6, %v279
  %v281 = vrot.slane %v63, %v280
  %v282 = vlaneseq
  %v283 = vshrl.u32 %v282, 7
  %v284 = vsub.s32 7, %v283
  %v285 = vrot.slane %v63, %v284
  %v286 = vlaneseq
  %v287 = vshrl.u32 %v286, 7
  %v288 = vsub.s32 0, %v287
  %v289 = vrot.slane %v64, %v288
  %v290 = vlaneseq
  %v291 = vshrl.u32 %v290, 7
  %v292 = vsub.s32 1, %v291
  %v293 = vrot.slane %v64, %v292
  %v294 = vlaneseq
  %v295 = vshrl.u32 %v294, 7
  %v296 = vsub.s32 2, %v295
  %v297 = vrot.slane %v64, %v296
  %v298 = vlaneseq
  %v299 = vshrl.u32 %v298, 7
  %v300 = vsub.s32 3, %v299
  %v301 = vrot.slane %v64, %v300
  %v302 = vlaneseq
  %v303 = vshrl.u32 %v302, 7
  %v304 = vsub.s32 4, %v303
  %v305 = vrot.slane %v64, %v304
  %v306 = vlaneseq
  %v307 = vshrl.u32 %v306, 7
  %v308 = vsub.s32 5, %v307
  %v309 = vrot.slane %v64, %v308
  %v310 = vlaneseq
  %v311 = vshrl.u32 %v310, 7
  %v312 = vsub.s32 6, %v311
  %v313 = vrot.slane %v64, %v312
  %v314 = vlaneseq
  %v315 = vshrl.u32 %v314, 7
  %v316 = vsub.s32 7, %v315
  %v317 = vrot.slane %v64, %v316
  %v318 = vlaneseq
  %v319 = vshrl.u32 %v318, 7
  %v320 = vsub.s32 0, %v319
  %v321 = vrot.slane %v65, %v320
  %v322 = vlaneseq
  %v323 = vshrl.u32 %v322, 7
  %v324 = vsub.s32 1, %v323
  %v325 = vrot.slane %v65, %v324
  %v326 = vlaneseq
  %v327 = vshrl.u32 %v326, 7
  %v328 = vsub.s32 2, %v327
  %v329 = vrot.slane %v65, %v328
  %v330 = vlaneseq
  %v331 = vshrl.u32 %v330, 7
  %v332 = vsub.s32 3, %v331
  %v333 = vrot.slane %v65, %v332
  %v334 = vlaneseq
  %v335 = vshrl.u32 %v334, 7
  %v336 = vsub.s32 4, %v335
  %v337 = vrot.slane %v65, %v336
  %v338 = vlaneseq
  %v339 = vshrl.u32 %v338, 7
  %v340 = vsub.s32 5, %v339
  %v341 = vrot.slane %v65, %v340
  %v342 = vlaneseq
  %v343 = vshrl.u32 %v342, 7
  %v344 = vsub.s32 6, %v343
  %v345 = vrot.slane %v65, %v344
  %v346 = vlaneseq
  %v347 = vshrl.u32 %v346, 7
  %v348 = vsub.s32 7, %v347
  %v349 = vrot.slane %v65, %v348
  %v350 = vlaneseq
  %v351 = vshrl.u32 %v350, 7
  %v352 = vsub.s32 0, %v351
  %v353 = vrot.slane %v66, %v352
  %v354 = vlaneseq
  %v355 = vshrl.u32 %v354, 7
  %v356 = vsub.s32 1, %v355
  %v357 = vrot.slane %v66, %v356
  %v358 = vlaneseq
  %v359 = vshrl.u32 %v358, 7
  %v360 = vsub.s32 2, %v359
  %v361 = vrot.slane %v66, %v360
  %v362 = vlaneseq
  %v363 = vshrl.u32 %v362, 7
  %v364 = vsub.s32 3, %v363
  %v365 = vrot.slane %v66, %v364
  %v366 = vlaneseq
  %v367 = vshrl.u32 %v366, 7
  %v368 = vsub.s32 4, %v367
  %v369 = vrot.slane %v66, %v368
  %v370 = vlaneseq
  %v371 = vshrl.u32 %v370, 7
  %v372 = vsub.s32 5, %v371
  %v373 = vrot.slane %v66, %v372
  %v374 = vlaneseq
  %v375 = vshrl.u32 %v374, 7
  %v376 = vsub.s32 6, %v375
  %v377 = vrot.slane %v66, %v376
  %v378 = vlaneseq
  %v379 = vshrl.u32 %v378, 7
  %v380 = vsub.s32 7, %v379
  %v381 = vrot.slane %v66, %v380
  %v382 = vlaneseq
  %v383 = vshrl.u32 %v382, 7
  %v384 = vsub.s32 0, %v383
  %v385 = vrot.slane %v67, %v384
  %v386 = vlaneseq
  %v387 = vshrl.u32 %v386, 7
  %v388 = vsub.s32 1, %v387
  %v389 = vrot.slane %v67, %v388
  %v390 = vlaneseq
  %v391 = vshrl.u32 %v390, 7
  %v392 = vsub.s32 2, %v391
  %v393 = vrot.slane %v67, %v392
  %v394 = vlaneseq
  %v395 = vshrl.u32 %v394, 7
  %v396 = vsub.s32 3, %v395
  %v397 = vrot.slane %v67, %v396
  %v398 = vlaneseq
  %v399 = vshrl.u32 %v398, 7
  %v400 = vsub.s32 4, %v399
  %v401 = vrot.slane %v67, %v400
  %v402 = vlaneseq
  %v403 = vshrl.u32 %v402, 7
  %v404 = vsub.s32 5, %v403
  %v405 = vrot.slane %v67, %v404
  %v406 = vlaneseq
  %v407 = vshrl.u32 %v406, 7
  %v408 = vsub.s32 6, %v407
  %v409 = vrot.slane %v67, %v408
  %v410 = vlaneseq
  %v411 = vshrl.u32 %v410, 7
  %v412 = vsub.s32 7, %v411
  %v413 = vrot.slane %v67, %v412
  %v414 = vlaneseq
  %v415 = vshrl.u32 %v414, 7
  %v416 = vsub.s32 0, %v415
  %v417 = vrot.slane %v68, %v416
  %v418 = vlaneseq
  %v419 = vshrl.u32 %v418, 7
  %v420 = vsub.s32 1, %v419
  %v421 = vrot.slane %v68, %v420
  %v422 = vlaneseq
  %v423 = vshrl.u32 %v422, 7
  %v424 = vsub.s32 2, %v423
  %v425 = vrot.slane %v68, %v424
  %v426 = vlaneseq
  %v427 = vshrl.u32 %v426, 7
  %v428 = vsub.s32 3, %v427
  %v429 = vrot.slane %v68, %v428
  %v430 = vlaneseq
  %v431 = vshrl.u32 %v430, 7
  %v432 = vsub.s32 4, %v431
  %v433 = vrot.slane %v68, %v432
  %v434 = vlaneseq
  %v435 = vshrl.u32 %v434, 7
  %v436 = vsub.s32 5, %v435
  %v437 = vrot.slane %v68, %v436
  %v438 = vlaneseq
  %v439 = vshrl.u32 %v438, 7
  %v440 = vsub.s32 6, %v439
  %v441 = vrot.slane %v68, %v440
  %v442 = vlaneseq
  %v443 = vshrl.u32 %v442, 7
  %v444 = vsub.s32 7, %v443
  %v445 = vrot.slane %v68, %v444
  %v446 = vlaneseq
  %v447 = vshrl.u32 %v446, 7
  %v448 = vsub.s32 0, %v447
  %v449 = vrot.slane %v69, %v448
  %v450 = vlaneseq
  %v451 = vshrl.u32 %v450, 7
  %v452 = vsub.s32 1, %v451
  %v453 = vrot.slane %v69, %v452
  %v454 = vlaneseq
  %v455 = vshrl.u32 %v454, 7
  %v456 = vsub.s32 2, %v455
  %v457 = vrot.slane %v69, %v456
  %v458 = vlaneseq
  %v459 = vshrl.u32 %v458, 7
  %v460 = vsub.s32 3, %v459
  %v461 = vrot.slane %v69, %v460
  %v462 = vlaneseq
  %v463 = vshrl.u32 %v462, 7
  %v464 = vsub.s32 4, %v463
  %v465 = vrot.slane %v69, %v464
  %v466 = vlaneseq
  %v467 = vshrl.u32 %v466, 7
  %v468 = vsub.s32 5, %v467
  %v469 = vrot.slane %v69, %v468
  %v470 = vlaneseq
  %v471 = vshrl.u32 %v470, 7
  %v472 = vsub.s32 6, %v471
  %v473 = vrot.slane %v69, %v472
  %v474 = vlaneseq
  %v475 = vshrl.u32 %v474, 7
  %v476 = vsub.s32 7, %v475
  %v477 = vrot.slane %v69, %v476
  %v478 = vlaneseq
  %v479 = vshrl.u32 %v478, 7
  %v480 = vsub.s32 0, %v479
  %v481 = vrot.slane %v70, %v480
  %v482 = vlaneseq
  %v483 = vshrl.u32 %v482, 7
  %v484 = vsub.s32 1, %v483
  %v485 = vrot.slane %v70, %v484
  %v486 = vlaneseq
  %v487 = vshrl.u32 %v486, 7
  %v488 = vsub.s32 2, %v487
  %v489 = vrot.slane %v70, %v488
  %v490 = vlaneseq
  %v491 = vshrl.u32 %v490, 7
  %v492 = vsub.s32 3, %v491
  %v493 = vrot.slane %v70, %v492
  %v494 = vlaneseq
  %v495 = vshrl.u32 %v494, 7
  %v496 = vsub.s32 4, %v495
  %v497 = vrot.slane %v70, %v496
  %v498 = vlaneseq
  %v499 = vshrl.u32 %v498, 7
  %v500 = vsub.s32 5, %v499
  %v501 = vrot.slane %v70, %v500
  %v502 = vlaneseq
  %v503 = vshrl.u32 %v502, 7
  %v504 = vsub.s32 6, %v503
  %v505 = vrot.slane %v70, %v504
  %v506 = vlaneseq
  %v507 = vshrl.u32 %v506, 7
  %v508 = vsub.s32 7, %v507
  %v509 = vrot.slane %v70, %v508
  %v510 = vlaneseq
  %v511 = vshrl.u32 %v510, 7
  %v512 = vsub.s32 0, %v511
  %v513 = vrot.slane %v71, %v512
  %v514 = vlaneseq
  %v515 = vshrl.u32 %v514, 7
  %v516 = vsub.s32 1, %v515
  %v517 = vrot.slane %v71, %v516
  %v518 = vlaneseq
  %v519 = vshrl.u32 %v518, 7
  %v520 = vsub.s32 2, %v519
  %v521 = vrot.slane %v71, %v520
  %v522 = vlaneseq
  %v523 = vshrl.u32 %v522, 7
  %v524 = vsub.s32 3, %v523
  %v525 = vrot.slane %v71, %v524
  %v526 = vlaneseq
  %v527 = vshrl.u32 %v526, 7
  %v528 = vsub.s32 4, %v527
  %v529 = vrot.slane %v71, %v528
  %v530 = vlaneseq
  %v531 = vshrl.u32 %v530, 7
  %v532 = vsub.s32 5, %v531
  %v533 = vrot.slane %v71, %v532
  %v534 = vlaneseq
  %v535 = vshrl.u32 %v534, 7
  %v536 = vsub.s32 6, %v535
  %v537 = vrot.slane %v71, %v536
  %v538 = vlaneseq
  %v539 = vshrl.u32 %v538, 7
  %v540 = vsub.s32 7, %v539
  %v541 = vrot.slane %v71, %v540
  %v542 = vlaneseq
  %v543 = vshrl.u32 %v542, 7
  %v544 = vsub.s32 0, %v543
  %v545 = vrot.slane %v72, %v544
  %v546 = vlaneseq
  %v547 = vshrl.u32 %v546, 7
  %v548 = vsub.s32 1, %v547
  %v549 = vrot.slane %v72, %v548
  %v550 = vlaneseq
  %v551 = vshrl.u32 %v550, 7
  %v552 = vsub.s32 2, %v551
  %v553 = vrot.slane %v72, %v552
  %v554 = vlaneseq
  %v555 = vshrl.u32 %v554, 7
  %v556 = vsub.s32 3, %v555
  %v557 = vrot.slane %v72, %v556
  %v558 = vlaneseq
  %v559 = vshrl.u32 %v558, 7
  %v560 = vsub.s32 4, %v559
  %v561 = vrot.slane %v72, %v560
  %v562 = vlaneseq
  %v563 = vshrl.u32 %v562, 7
  %v564 = vsub.s32 5, %v563
  %v565 = vrot.slane %v72, %v564
  %v566 = vlaneseq
  %v567 = vshrl.u32 %v566, 7
  %v568 = vsub.s32 6, %v567
  %v569 = vrot.slane %v72, %v568
  %v570 = vlaneseq
  %v571 = vshrl.u32 %v570, 7
  %v572 = vsub.s32 7, %v571
  %v573 = vrot.slane %v72, %v572
  %v574 = vlaneseq
  %v575 = vshrl.u32 %v574, 7
  %v576 = vsub.s32 0, %v575
  %v577 = vrot.slane %v73, %v576
  %v578 = vlaneseq
  %v579 = vshrl.u32 %v578, 7
  %v580 = vsub.s32 1, %v579
  %v581 = vrot.slane %v73, %v580
  %v582 = vlaneseq
  %v583 = vshrl.u32 %v582, 7
  %v584 = vsub.s32 2, %v583
  %v585 = vrot.slane %v73, %v584
  %v586 = vlaneseq
  %v587 = vshrl.u32 %v586, 7
  %v588 = vsub.s32 3, %v587
  %v589 = vrot.slane %v73, %v588
  %v590 = vlaneseq
  %v591 = vshrl.u32 %v590, 7
  %v592 = vsub.s32 4, %v591
  %v593 = vrot.slane %v73, %v592
  %v594 = vlaneseq
  %v595 = vshrl.u32 %v594, 7
  %v596 = vsub.s32 5, %v595
  %v597 = vrot.slane %v73, %v596
  %v598 = vlaneseq
  %v599 = vshrl.u32 %v598, 7
  %v600 = vsub.s32 6, %v599
  %v601 = vrot.slane %v73, %v600
  %v602 = vlaneseq
  %v603 = vshrl.u32 %v602, 7
  %v604 = vsub.s32 7, %v603
  %v605 = vrot.slane %v73, %v604
  %v606 = vlaneseq
  %v607 = vshrl.u32 %v606, 7
  %v608 = vsub.s32 0, %v607
  %v609 = vrot.slane %v74, %v608
  %v610 = vlaneseq
  %v611 = vshrl.u32 %v610, 7
  %v612 = vsub.s32 1, %v611
  %v613 = vrot.slane %v74, %v612
  %v614 = vlaneseq
  %v615 = vshrl.u32 %v614, 7
  %v616 = vsub.s32 2, %v615
  %v617 = vrot.slane %v74, %v616
  %v618 = vlaneseq
  %v619 = vshrl.u32 %v618, 7
  %v620 = vsub.s32 3, %v619
  %v621 = vrot.slane %v74, %v620
  %v622 = vlaneseq
  %v623 = vshrl.u32 %v622, 7
  %v624 = vsub.s32 4, %v623
  %v625 = vrot.slane %v74, %v624
  %v626 = vlaneseq
  %v627 = vshrl.u32 %v626, 7
  %v628 = vsub.s32 5, %v627
  %v629 = vrot.slane %v74, %v628
  %v630 = vlaneseq
  %v631 = vshrl.u32 %v630, 7
  %v632 = vsub.s32 6, %v631
  %v633 = vrot.slane %v74, %v632
  %v634 = vlaneseq
  %v635 = vshrl.u32 %v634, 7
  %v636 = vsub.s32 7, %v635
  %v637 = vrot.slane %v74, %v636
  %v638 = vlaneseq
  %v639 = vshrl.u32 %v638, 7
  %v640 = vsub.s32 0, %v639
  %v641 = vrot.slane %v75, %v640
  %v642 = vlaneseq
  %v643 = vshrl.u32 %v642, 7
  %v644 = vsub.s32 1, %v643
  %v645 = vrot.slane %v75, %v644
  %v646 = vlaneseq
  %v647 = vshrl.u32 %v646, 7
  %v648 = vsub.s32 2, %v647
  %v649 = vrot.slane %v75, %v648
  %v650 = vlaneseq
  %v651 = vshrl.u32 %v650, 7
  %v652 = vsub.s32 3, %v651
  %v653 = vrot.slane %v75, %v652
  %v654 = vlaneseq
  %v655 = vshrl.u32 %v654, 7
  %v656 = vsub.s32 4, %v655
  %v657 = vrot.slane %v75, %v656
  %v658 = vlaneseq
  %v659 = vshrl.u32 %v658, 7
  %v660 = vsub.s32 5, %v659
  %v661 = vrot.slane %v75, %v660
  %v662 = vlaneseq
  %v663 = vshrl.u32 %v662, 7
  %v664 = vsub.s32 6, %v663
  %v665 = vrot.slane %v75, %v664
  %v666 = vlaneseq
  %v667 = vshrl.u32 %v666, 7
  %v668 = vsub.s32 7, %v667
  %v669 = vrot.slane %v75, %v668
  %v670 = vcombine.low %v97, %v101
  %v671 = vcombine.low %v105, %v109
  %v673 = vunpack.c.l.s4 1983009808
  %v674 = vunpack.c.0.s8 %v673
  %v675 = vlaneseq
  %v676 = vshrl.u32 %v675, 7
  %v677 = vsub.s32 %v674, %v676
  %v678 = vrot.slane %v670, %v677
  %v680 = vunpack.c.l.s4 1983009808
  %v681 = vunpack.c.0.s8 %v680
  %v682 = vlaneseq
  %v683 = vshrl.u32 %v682, 7
  %v684 = vsub.s32 %v681, %v683
  %v685 = vrot.slane %v671, %v684
  %v686 = vcombine.low %v678, %v685
  %v687 = vcombine.low %v113, %v117
  %v688 = vcombine.low %v121, %v125
  %v690 = vunpack.c.l.s4 1983009808
  %v691 = vunpack.c.0.s8 %v690
  %v692 = vlaneseq
  %v693 = vshrl.u32 %v692, 7
  %v694 = vsub.s32 %v691, %v693
  %v695 = vrot.slane %v687, %v694
  %v697 = vunpack.c.l.s4 1983009808
  %v698 = vunpack.c.0.s8 %v697
  %v699 = vlaneseq
  %v700 = vshrl.u32 %v699, 7
  %v701 = vsub.s32 %v698, %v700
  %v702 = vrot.slane %v688, %v701
  %v703 = vcombine.low %v695, %v702
  %v704 = vcombine.low %v129, %v133
  %v705 = vcombine.low %v137, %v141
  %v707 = vunpack.c.l.s4 1983009808
  %v708 = vunpack.c.0.s8 %v707
  %v709 = vlaneseq
  %v710 = vshrl.u32 %v709, 7
  %v711 = vsub.s32 %v708, %v710
  %v712 = vrot.slane %v704, %v711
  %v714 = vunpack.c.l.s4 1983009808
  %v715 = vunpack.c.0.s8 %v714
  %v716 = vlaneseq
  %v717 = vshrl.u32 %v716, 7
  %v718 = vsub.s32 %v715, %v717
  %v719 = vrot.slane %v705, %v718
  %v720 = vcombine.low %v712, %v719
  %v721 = vcombine.low %v145, %v149
  %v722 = vcombine.low %v153, %v157
  %v724 = vunpack.c.l.s4 1983009808
  %v725 = vunpack.c.0.s8 %v724
  %v726 = vlaneseq
  %v727 = vshrl.u32 %v726, 7
  %v728 = vsub.s32 %v725, %v727
  %v729 = vrot.slane %v721, %v728
  %v731 = vunpack.c.l.s4 1983009808
  %v732 = vunpack.c.0.s8 %v731
  %v733 = vlaneseq
  %v734 = vshrl.u32 %v733, 7
  %v735 = vsub.s32 %v732, %v734
  %v736 = vrot.slane %v722, %v735
  %v737 = vcombine.low %v729, %v736
  %v738 = vcombine.low %v161, %v165
  %v739 = vcombine.low %v169, %v173
  %v741 = vunpack.c.l.s4 1983009808
  %v742 = vunpack.c.0.s8 %v741
  %v743 = vlaneseq
  %v744 = vshrl.u32 %v743, 7
  %v745 = vsub.s32 %v742, %v744
  %v746 = vrot.slane %v738, %v745
  %v748 = vunpack.c.l.s4 1983009808
  %v749 = vunpack.c.0.s8 %v748
  %v750 = vlaneseq
  %v751 = vshrl.u32 %v750, 7
  %v752 = vsub.s32 %v749, %v751
  %v753 = vrot.slane %v739, %v752
  %v754 = vcombine.low %v746, %v753
  %v755 = vcombine.low %v177, %v181
  %v756 = vcombine.low %v185, %v189
  %v758 = vunpack.c.l.s4 1983009808
  %v759 = vunpack.c.0.s8 %v758
  %v760 = vlaneseq
  %v761 = vshrl.u32 %v760, 7
  %v762 = vsub.s32 %v759, %v761
  %v763 = vrot.slane %v755, %v762
  %v765 = vunpack.c.l.s4 1983009808
  %v766 = vunpack.c.0.s8 %v765
  %v767 = vlaneseq
  %v768 = vshrl.u32 %v767, 7
  %v769 = vsub.s32 %v766, %v768
  %v770 = vrot.slane %v756, %v769
  %v771 = vcombine.low %v763, %v770
  %v772 = vcombine.low %v193, %v197
  %v773 = vcombine.low %v201, %v205
  %v775 = vunpack.c.l.s4 1983009808
  %v776 = vunpack.c.0.s8 %v775
  %v777 = vlaneseq
  %v778 = vshrl.u32 %v777, 7
  %v779 = vsub.s32 %v776, %v778
  %v780 = vrot.slane %v772, %v779
  %v782 = vunpack.c.l.s4 1983009808
  %v783 = vunpack.c.0.s8 %v782
  %v784 = vlaneseq
  %v785 = vshrl.u32 %v784, 7
  %v786 = vsub.s32 %v783, %v785
  %v787 = vrot.slane %v773, %v786
  %v788 = vcombine.low %v780, %v787
  %v789 = vcombine.low %v209, %v213
  %v790 = vcombine.low %v217, %v221
  %v792 = vunpack.c.l.s4 1983009808
  %v793 = vunpack.c.0.s8 %v792
  %v794 = vlaneseq
  %v795 = vshrl.u32 %v794, 7
  %v796 = vsub.s32 %v793, %v795
  %v797 = vrot.slane %v789, %v796
  %v799 = vunpack.c.l.s4 1983009808
  %v800 = vunpack.c.0.s8 %v799
  %v801 = vlaneseq
  %v802 = vshrl.u32 %v801, 7
  %v803 = vsub.s32 %v800, %v802
  %v804 = vrot.slane %v790, %v803
  %v805 = vcombine.low %v797, %v804
  %v806 = vcombine.low %v225, %v229
  %v807 = vcombine.low %v233, %v237
  %v809 = vunpack.c.l.s4 1983009808
  %v810 = vunpack.c.0.s8 %v809
  %v811 = vlaneseq
  %v812 = vshrl.u32 %v811, 7
  %v813 = vsub.s32 %v810, %v812
  %v814 = vrot.slane %v806, %v813
  %v816 = vunpack.c.l.s4 1983009808
  %v817 = vunpack.c.0.s8 %v816
  %v818 = vlaneseq
  %v819 = vshrl.u32 %v818, 7
  %v820 = vsub.s32 %v817, %v819
  %v821 = vrot.slane %v807, %v820
  %v822 = vcombine.low %v814, %v821
  %v823 = vcombine.low %v241, %v245
  %v824 = vcombine.low %v249, %v253
  %v826 = vunpack.c.l.s4 1983009808
  %v827 = vunpack.c.0.s8 %v826
  %v828 = vlaneseq
  %v829 = vshrl.u32 %v828, 7
  %v830 = vsub.s32 %v827, %v829
  %v831 = vrot.slane %v823, %v830
  %v833 = vunpack.c.l.s4 1983009808
  %v834 = vunpack.c.0.s8 %v833
  %v835 = vlaneseq
  %v836 = vshrl.u32 %v835, 7
  %v837 = vsub.s32 %v834, %v836
  %v838 = vrot.slane %v824, %v837
  %v839 = vcombine.low %v831, %v838
  %v840 = vcombine.low %v257, %v261
  %v841 = vcombine.low %v265, %v269
  %v843 = vunpack.c.l.s4 1983009808
  %v844 = vunpack.c.0.s8 %v843
  %v845 = vlaneseq
  %v846 = vshrl.u32 %v845, 7
  %v847 = vsub.s32 %v844, %v846
  %v848 = vrot.slane %v840, %v847
  %v850 = vunpack.c.l.s4 1983009808
  %v851 = vunpack.c.0.s8 %v850
  %v852 = vlaneseq
  %v853 = vshrl.u32 %v852, 7
  %v854 = vsub.s32 %v851, %v853
  %v855 = vrot.slane %v841, %v854
  %v856 = vcombine.low %v848, %v855
  %v857 = vcombine.low %v273, %v277
  %v858 = vcombine.low %v281, %v285
  %v860 = vunpack.c.l.s4 1983009808
  %v861 = vunpack.c.0.s8 %v860
  %v862 = vlaneseq
  %v863 = vshrl.u32 %v862, 7
  %v864 = vsub.s32 %v861, %v863
  %v865 = vrot.slane %v857, %v864
  %v867 = vunpack.c.l.s4 1983009808
  %v868 = vunpack.c.0.s8 %v867
  %v869 = vlaneseq
  %v870 = vshrl.u32 %v869, 7
  %v871 = vsub.s32 %v868, %v870
  %v872 = vrot.slane %v858, %v871
  %v873 = vcombine.low %v865, %v872
  %v874 = vcombine.low %v289, %v293
  %v875 = vcombine.low %v297, %v301
  %v877 = vunpack.c.l.s4 1983009808
  %v878 = vunpack.c.0.s8 %v877
  %v879 = vlaneseq
  %v880 = vshrl.u32 %v879, 7
  %v881 = vsub.s32 %v878, %v880
  %v882 = vrot.slane %v874, %v881
  %v884 = vunpack.c.l.s4 1983009808
  %v885 = vunpack.c.0.s8 %v884
  %v886 = vlaneseq
  %v887 = vshrl.u32 %v886, 7
  %v888 = vsub.s32 %v885, %v887
  %v889 = vrot.slane %v875, %v888
  %v890 = vcombine.low %v882, %v889
  %v891 = vcombine.low %v305, %v309
  %v892 = vcombine.low %v313, %v317
  %v894 = vunpack.c.l.s4 1983009808
  %v895 = vunpack.c.0.s8 %v894
  %v896 = vlaneseq
  %v897 = vshrl.u32 %v896, 7
  %v898 = vsub.s32 %v895, %v897
  %v899 = vrot.slane %v891, %v898
  %v901 = vunpack.c.l.s4 1983009808
  %v902 = vunpack.c.0.s8 %v901
  %v903 = vlaneseq
  %v904 = vshrl.u32 %v903, 7
  %v905 = vsub.s32 %v902, %v904
  %v906 = vrot.slane %v892, %v905
  %v907 = vcombine.low %v899, %v906
  %v908 = vcombine.low %v321, %v325
  %v909 = vcombine.low %v329, %v333
  %v911 = vunpack.c.l.s4 1983009808
  %v912 = vunpack.c.0.s8 %v911
  %v913 = vlaneseq
  %v914 = vshrl.u32 %v913, 7
  %v915 = vsub.s32 %v912, %v914
  %v916 = vrot.slane %v908, %v915
  %v918 = vunpack.c.l.s4 1983009808
  %v919 = vunpack.c.0.s8 %v918
  %v920 = vlaneseq
  %v921 = vshrl.u32 %v920, 7
  %v922 = vsub.s32 %v919, %v921
  %v923 = vrot.slane %v909, %v922
  %v924 = vcombine.low %v916, %v923
  %v925 = vcombine.low %v337, %v341
  %v926 = vcombine.low %v345, %v349
  %v928 = vunpack.c.l.s4 1983009808
  %v929 = vunpack.c.0.s8 %v928
  %v930 = vlaneseq
  %v931 = vshrl.u32 %v930, 7
  %v932 = vsub.s32 %v929, %v931
  %v933 = vrot.slane %v925, %v932
  %v935 = vunpack.c.l.s4 1983009808
  %v936 = vunpack.c.0.s8 %v935
  %v937 = vlaneseq
  %v938 = vshrl.u32 %v937, 7
  %v939 = vsub.s32 %v936, %v938
  %v940 = vrot.slane %v926, %v939
  %v941 = vcombine.low %v933, %v940
  %v942 = vcombine.low %v353, %v357
  %v943 = vcombine.low %v361, %v365
  %v945 = vunpack.c.l.s4 1983009808
  %v946 = vunpack.c.0.s8 %v945
  %v947 = vlaneseq
  %v948 = vshrl.u32 %v947, 7
  %v949 = vsub.s32 %v946, %v948
  %v950 = vrot.slane %v942, %v949
  %v952 = vunpack.c.l.s4 1983009808
  %v953 = vunpack.c.0.s8 %v952
  %v954 = vlaneseq
  %v955 = vshrl.u32 %v954, 7
  %v956 = vsub.s32 %v953, %v955
  %v957 = vrot.slane %v943, %v956
  %v958 = vcombine.low %v950, %v957
  %v959 = vcombine.low %v369, %v373
  %v960 = vcombine.low %v377, %v381
  %v962 = vunpack.c.l.s4 1983009808
  %v963 = vunpack.c.0.s8 %v962
  %v964 = vlaneseq
  %v965 = vshrl.u32 %v964, 7
  %v966 = vsub.s32 %v963, %v965
  %v967 = vrot.slane %v959, %v966
  %v969 = vunpack.c.l.s4 1983009808
  %v970 = vunpack.c.0.s8 %v969
  %v971 = vlaneseq
  %v972 = vshrl.u32 %v971, 7
  %v973 = vsub.s32 %v970, %v972
  %v974 = vrot.slane %v960, %v973
  %v975 = vcombine.low %v967, %v974
  %v976 = vcombine.low %v385, %v389
  %v977 = vcombine.low %v393, %v397
  %v979 = vunpack.c.l.s4 1983009808
  %v980 = vunpack.c.0.s8 %v979
  %v981 = vlaneseq
  %v982 = vshrl.u32 %v981, 7
  %v983 = vsub.s32 %v980, %v982
  %v984 = vrot.slane %v976, %v983
  %v986 = vunpack.c.l.s4 1983009808
  %v987 = vunpack.c.0.s8 %v986
  %v988 = vlaneseq
  %v989 = vshrl.u32 %v988, 7
  %v990 = vsub.s32 %v987, %v989
  %v991 = vrot.slane %v977, %v990
  %v992 = vcombine.low %v984, %v991
  %v993 = vcombine.low %v401, %v405
  %v994 = vcombine.low %v409, %v413
  %v996 = vunpack.c.l.s4 1983009808
  %v997 = vunpack.c.0.s8 %v996
  %v998 = vlaneseq
  %v999 = vshrl.u32 %v998, 7
  %v1000 = vsub.s32 %v997, %v999
  %v1001 = vrot.slane %v993, %v1000
  %v1003 = vunpack.c.l.s4 1983009808
  %v1004 = vunpack.c.0.s8 %v1003
  %v1005 = vlaneseq
  %v1006 = vshrl.u32 %v1005, 7
  %v1007 = vsub.s32 %v1004, %v1006
  %v1008 = vrot.slane %v994, %v1007
  %v1009 = vcombine.low %v1001, %v1008
  %v1010 = vcombine.low %v417, %v421
  %v1011 = vcombine.low %v425, %v429
  %v1013 = vunpack.c.l.s4 1983009808
  %v1014 = vunpack.c.0.s8 %v1013
  %v1015 = vlaneseq
  %v1016 = vshrl.u32 %v1015, 7
  %v1017 = vsub.s32 %v1014, %v1016
  %v1018 = vrot.slane %v1010, %v1017
  %v1020 = vunpack.c.l.s4 1983009808
  %v1021 = vunpack.c.0.s8 %v1020
  %v1022 = vlaneseq
  %v1023 = vshrl.u32 %v1022, 7
  %v1024 = vsub.s32 %v1021, %v1023
  %v1025 = vrot.slane %v1011, %v1024
  %v1026 = vcombine.low %v1018, %v1025
  %v1027 = vcombine.low %v433, %v437
  %v1028 = vcombine.low %v441, %v445
  %v1030 = vunpack.c.l.s4 1983009808
  %v1031 = vunpack.c.0.s8 %v1030
  %v1032 = vlaneseq
  %v1033 = vshrl.u32 %v1032, 7
  %v1034 = vsub.s32 %v1031, %v1033
  %v1035 = vrot.slane %v1027, %v1034
  %v1037 = vunpack.c.l.s4 1983009808
  %v1038 = vunpack.c.0.s8 %v1037
  %v1039 = vlaneseq
  %v1040 = vshrl.u32 %v1039, 7
  %v1041 = vsub.s32 %v1038, %v1040
  %v1042 = vrot.slane %v1028, %v1041
  %v1043 = vcombine.low %v1035, %v1042
  %v1044 = vcombine.low %v449, %v453
  %v1045 = vcombine.low %v457, %v461
  %v1047 = vunpack.c.l.s4 1983009808
  %v1048 = vunpack.c.0.s8 %v1047
  %v1049 = vlaneseq
  %v1050 = vshrl.u32 %v1049, 7
  %v1051 = vsub.s32 %v1048, %v1050
  %v1052 = vrot.slane %v1044, %v1051
  %v1054 = vunpack.c.l.s4 1983009808
  %v1055 = vunpack.c.0.s8 %v1054
  %v1056 = vlaneseq
  %v1057 = vshrl.u32 %v1056, 7
  %v1058 = vsub.s32 %v1055, %v1057
  %v1059 = vrot.slane %v1045, %v1058
  %v1060 = vcombine.low %v1052, %v1059
  %v1061 = vcombine.low %v465, %v469
  %v1062 = vcombine.low %v473, %v477
  %v1064 = vunpack.c.l.s4 1983009808
  %v1065 = vunpack.c.0.s8 %v1064
  %v1066 = vlaneseq
  %v1067 = vshrl.u32 %v1066, 7
  %v1068 = vsub.s32 %v1065, %v1067
  %v1069 = vrot.slane %v1061, %v1068
  %v1071 = vunpack.c.l.s4 1983009808
  %v1072 = vunpack.c.0.s8 %v1071
  %v1073 = vlaneseq
  %v1074 = vshrl.u32 %v1073, 7
  %v1075 = vsub.s32 %v1072, %v1074
  %v1076 = vrot.slane %v1062, %v1075
  %v1077 = vcombine.low %v1069, %v1076
  %v1078 = vcombine.low %v481, %v485
  %v1079 = vcombine.low %v489, %v493
  %v1081 = vunpack.c.l.s4 1983009808
  %v1082 = vunpack.c.0.s8 %v1081
  %v1083 = vlaneseq
  %v1084 = vshrl.u32 %v1083, 7
  %v1085 = vsub.s32 %v1082, %v1084
  %v1086 = vrot.slane %v1078, %v1085
  %v1088 = vunpack.c.l.s4 1983009808
  %v1089 = vunpack.c.0.s8 %v1088
  %v1090 = vlaneseq
  %v1091 = vshrl.u32 %v1090, 7
  %v1092 = vsub.s32 %v1089, %v1091
  %v1093 = vrot.slane %v1079, %v1092
  %v1094 = vcombine.low %v1086, %v1093
  %v1095 = vcombine.low %v497, %v501
  %v1096 = vcombine.low %v505, %v509
  %v1098 = vunpack.c.l.s4 1983009808
  %v1099 = vunpack.c.0.s8 %v1098
  %v1100 = vlaneseq
  %v1101 = vshrl.u32 %v1100, 7
  %v1102 = vsub.s32 %v1099, %v1101
  %v1103 = vrot.slane %v1095, %v1102
  %v1105 = vunpack.c.l.s4 1983009808
  %v1106 = vunpack.c.0.s8 %v1105
  %v1107 = vlaneseq
  %v1108 = vshrl.u32 %v1107, 7
  %v1109 = vsub.s32 %v1106, %v1108
  %v1110 = vrot.slane %v1096, %v1109
  %v1111 = vcombine.low %v1103, %v1110
  %v1112 = vcombine.low %v513, %v517
  %v1113 = vcombine.low %v521, %v525
  %v1115 = vunpack.c.l.s4 1983009808
  %v1116 = vunpack.c.0.s8 %v1115
  %v1117 = vlaneseq
  %v1118 = vshrl.u32 %v1117, 7
  %v1119 = vsub.s32 %v1116, %v1118
  %v1120 = vrot.slane %v1112, %v1119
  %v1122 = vunpack.c.l.s4 1983009808
  %v1123 = vunpack.c.0.s8 %v1122
  %v1124 = vlaneseq
  %v1125 = vshrl.u32 %v1124, 7
  %v1126 = vsub.s32 %v1123, %v1125
  %v1127 = vrot.slane %v1113, %v1126
  %v1128 = vcombine.low %v1120, %v1127
  %v1129 = vcombine.low %v529, %v533
  %v1130 = vcombine.low %v537, %v541
  %v1132 = vunpack.c.l.s4 1983009808
  %v1133 = vunpack.c.0.s8 %v1132
  %v1134 = vlaneseq
  %v1135 = vshrl.u32 %v1134, 7
  %v1136 = vsub.s32 %v1133, %v1135
  %v1137 = vrot.slane %v1129, %v1136
  %v1139 = vunpack.c.l.s4 1983009808
  %v1140 = vunpack.c.0.s8 %v1139
  %v1141 = vlaneseq
  %v1142 = vshrl.u32 %v1141, 7
  %v1143 = vsub.s32 %v1140, %v1142
  %v1144 = vrot.slane %v1130, %v1143
  %v1145 = vcombine.low %v1137, %v1144
  %v1146 = vcombine.low %v545, %v549
  %v1147 = vcombine.low %v553, %v557
  %v1149 = vunpack.c.l.s4 1983009808
  %v1150 = vunpack.c.0.s8 %v1149
  %v1151 = vlaneseq
  %v1152 = vshrl.u32 %v1151, 7
  %v1153 = vsub.s32 %v1150, %v1152
  %v1154 = vrot.slane %v1146, %v1153
  %v1156 = vunpack.c.l.s4 1983009808
  %v1157 = vunpack.c.0.s8 %v1156
  %v1158 = vlaneseq
  %v1159 = vshrl.u32 %v1158, 7
  %v1160 = vsub.s32 %v1157, %v1159
  %v1161 = vrot.slane %v1147, %v1160
  %v1162 = vcombine.low %v1154, %v1161
  %v1163 = vcombine.low %v561, %v565
  %v1164 = vcombine.low %v569, %v573
  %v1166 = vunpack.c.l.s4 1983009808
  %v1167 = vunpack.c.0.s8 %v1166
  %v1168 = vlaneseq
  %v1169 = vshrl.u32 %v1168, 7
  %v1170 = vsub.s32 %v1167, %v1169
  %v1171 = vrot.slane %v1163, %v1170
  %v1173 = vunpack.c.l.s4 1983009808
  %v1174 = vunpack.c.0.s8 %v1173
  %v1175 = vlaneseq
  %v1176 = vshrl.u32 %v1175, 7
  %v1177 = vsub.s32 %v1174, %v1176
  %v1178 = vrot.slane %v1164, %v1177
  %v1179 = vcombine.low %v1171, %v1178
  %v1180 = vcombine.low %v577, %v581
  %v1181 = vcombine.low %v585, %v589
  %v1183 = vunpack.c.l.s4 1983009808
  %v1184 = vunpack.c.0.s8 %v1183
  %v1185 = vlaneseq
  %v1186 = vshrl.u32 %v1185, 7
  %v1187 = vsub.s32 %v1184, %v1186
  %v1188 = vrot.slane %v1180, %v1187
  %v1190 = vunpack.c.l.s4 1983009808
  %v1191 = vunpack.c.0.s8 %v1190
  %v1192 = vlaneseq
  %v1193 = vshrl.u32 %v1192, 7
  %v1194 = vsub.s32 %v1191, %v1193
  %v1195 = vrot.slane %v1181, %v1194
  %v1196 = vcombine.low %v1188, %v1195
  %v1197 = vcombine.low %v593, %v597
  %v1198 = vcombine.low %v601, %v605
  %v1200 = vunpack.c.l.s4 1983009808
  %v1201 = vunpack.c.0.s8 %v1200
  %v1202 = vlaneseq
  %v1203 = vshrl.u32 %v1202, 7
  %v1204 = vsub.s32 %v1201, %v1203
  %v1205 = vrot.slane %v1197, %v1204
  %v1207 = vunpack.c.l.s4 1983009808
  %v1208 = vunpack.c.0.s8 %v1207
  %v1209 = vlaneseq
  %v1210 = vshrl.u32 %v1209, 7
  %v1211 = vsub.s32 %v1208, %v1210
  %v1212 = vrot.slane %v1198, %v1211
  %v1213 = vcombine.low %v1205, %v1212
  %v1214 = vcombine.low %v609, %v613
  %v1215 = vcombine.low %v617, %v621
  %v1217 = vunpack.c.l.s4 1983009808
  %v1218 = vunpack.c.0.s8 %v1217
  %v1219 = vlaneseq
  %v1220 = vshrl.u32 %v1219, 7
  %v1221 = vsub.s32 %v1218, %v1220
  %v1222 = vrot.slane %v1214, %v1221
  %v1224 = vunpack.c.l.s4 1983009808
  %v1225 = vunpack.c.0.s8 %v1224
  %v1226 = vlaneseq
  %v1227 = vshrl.u32 %v1226, 7
  %v1228 = vsub.s32 %v1225, %v1227
  %v1229 = vrot.slane %v1215, %v1228
  %v1230 = vcombine.low %v1222, %v1229
  %v1231 = vcombine.low %v625, %v629
  %v1232 = vcombine.low %v633, %v637
  %v1234 = vunpack.c.l.s4 1983009808
  %v1235 = vunpack.c.0.s8 %v1234
  %v1236 = vlaneseq
  %v1237 = vshrl.u32 %v1236, 7
  %v1238 = vsub.s32 %v1235, %v1237
  %v1239 = vrot.slane %v1231, %v1238
  %v1241 = vunpack.c.l.s4 1983009808
  %v1242 = vunpack.c.0.s8 %v1241
  %v1243 = vlaneseq
  %v1244 = vshrl.u32 %v1243, 7
  %v1245 = vsub.s32 %v1242, %v1244
  %v1246 = vrot.slane %v1232, %v1245
  %v1247 = vcombine.low %v1239, %v1246
  %v1248 = vcombine.low %v641, %v645
  %v1249 = vcombine.low %v649, %v653
  %v1251 = vunpack.c.l.s4 1983009808
  %v1252 = vunpack.c.0.s8 %v1251
  %v1253 = vlaneseq
  %v1254 = vshrl.u32 %v1253, 7
  %v1255 = vsub.s32 %v1252, %v1254
  %v1256 = vrot.slane %v1248, %v1255
  %v1258 = vunpack.c.l.s4 1983009808
  %v1259 = vunpack.c.0.s8 %v1258
  %v1260 = vlaneseq
  %v1261 = vshrl.u32 %v1260, 7
  %v1262 = vsub.s32 %v1259, %v1261
  %v1263 = vrot.slane %v1249, %v1262
  %v1264 = vcombine.low %v1256, %v1263
  %v1265 = vcombine.low %v657, %v661
  %v1266 = vcombine.low %v665, %v669
  %v1268 = vunpack.c.l.s4 1983009808
  %v1269 = vunpack.c.0.s8 %v1268
  %v1270 = vlaneseq
  %v1271 = vshrl.u32 %v1270, 7
  %v1272 = vsub.s32 %v1269, %v1271
  %v1273 = vrot.slane %v1265, %v1272
  %v1275 = vunpack.c.l.s4 1983009808
  %v1276 = vunpack.c.0.s8 %v1275
  %v1277 = vlaneseq
  %v1278 = vshrl.u32 %v1277, 7
  %v1279 = vsub.s32 %v1276, %v1278
  %v1280 = vrot.slane %v1266, %v1279
  %v1281 = vcombine.low %v1273, %v1280
  %v1318 = vmul.f32 %v22, %v686
  %v1319 = vmul.f32 %v23, %v703
  %v1320 = vmul.f32 %v24, %v720
  %v1321 = vmul.f32 %v25, %v737
  %v1322 = vmul.f32 %v26, %v754
  %v1323 = vmul.f32 %v27, %v771
  %v1324 = vmul.f32 %v28, %v788
  %v1325 = vmul.f32 %v29, %v805
  %v1326 = vmul.f32 %v30, %v822
  %v1327 = vmul.f32 %v31, %v839
  %v1328 = vmul.f32 %v32, %v856
  %v1329 = vmul.f32 %v33, %v873
  %v1330 = vmul.f32 %v34, %v890
  %v1331 = vmul.f32 %v35, %v907
  %v1332 = vmul.f32 %v36, %v924
  %v1333 = vmul.f32 %v37, %v941
  %v1334 = vmul.f32 %v38, %v958
  %v1335 = vmul.f32 %v39, %v975
  %v1336 = vmul.f32 %v40, %v992
  %v1337 = vmul.f32 %v41, %v1009
  %v1338 = vmul.f32 %v42, %v1026
  %v1339 = vmul.f32 %v43, %v1043
  %v1340 = vmul.f32 %v44, %v1060
  %v1341 = vmul.f32 %v45, %v1077
  %v1342 = vmul.f32 %v46, %v1094
  %v1343 = vmul.f32 %v47, %v1111
  %v1344 = vmul.f32 %v48, %v1128
  %v1345 = vmul.f32 %v49, %v1145
  %v1346 = vmul.f32 %v50, %v1162
  %v1347 = vmul.f32 %v51, %v1179
  %v1348 = vmul.f32 %v52, %v1196
  %v1349 = vmul.f32 %v53, %v1213
  %v1350 = vmul.f32 %v54, %v1230
  %v1351 = vmul.f32 %v55, %v1247
  %v1352 = vmul.f32 %v56, %v1264
  %v1353 = vmul.f32 %v57, %v1281
  %v1354 = vld [vmem:[%s2] sm:$0xff]
  %v1355 = vld [vmem:[%s2 + $0x8] sm:$0xff]
  %v1356 = vld [vmem:[%s2 + $0x10] sm:$0xff]
  %v1357 = vld [vmem:[%s2 + $0x18] sm:$0xff]
  %v1358 = vld [vmem:[%s2 + $0x20] sm:$0xff]
  %v1359 = vld [vmem:[%s2 + $0x28] sm:$0xff]
  %v1360 = vld [vmem:[%s2 + $0x30] sm:$0xff]
  %v1361 = vld [vmem:[%s2 + $0x38] sm:$0xff]
  %v1362 = vld [vmem:[%s2 + $0x40] sm:$0xff]
  %v1363 = vld [vmem:[%s2 + $0x48] sm:$0xff]
  %v1364 = vld [vmem:[%s2 + $0x50] sm:$0xff]
  %v1365 = vld [vmem:[%s2 + $0x58] sm:$0xff]
  %v1366 = vld [vmem:[%s2 + $0x60] sm:$0xff]
  %v1367 = vld [vmem:[%s2 + $0x68] sm:$0xff]
  %v1368 = vld [vmem:[%s2 + $0x70] sm:$0xff]
  %v1369 = vld [vmem:[%s2 + $0x78] sm:$0xff]
  %v1370 = vld [vmem:[%s2 + $0x80] sm:$0xff]
  %v1371 = vld [vmem:[%s2 + $0x88] sm:$0xff]
  %v1390 = vlaneseq
  %v1391 = vshrl.u32 %v1390, 7
  %v1392 = vsub.s32 0, %v1391
  %v1393 = vrot.slane %v1354, %v1392
  %v1394 = vlaneseq
  %v1395 = vshrl.u32 %v1394, 7
  %v1396 = vsub.s32 1, %v1395
  %v1397 = vrot.slane %v1354, %v1396
  %v1398 = vlaneseq
  %v1399 = vshrl.u32 %v1398, 7
  %v1400 = vsub.s32 2, %v1399
  %v1401 = vrot.slane %v1354, %v1400
  %v1402 = vlaneseq
  %v1403 = vshrl.u32 %v1402, 7
  %v1404 = vsub.s32 3, %v1403
  %v1405 = vrot.slane %v1354, %v1404
  %v1406 = vlaneseq
  %v1407 = vshrl.u32 %v1406, 7
  %v1408 = vsub.s32 4, %v1407
  %v1409 = vrot.slane %v1354, %v1408
  %v1410 = vlaneseq
  %v1411 = vshrl.u32 %v1410, 7
  %v1412 = vsub.s32 5, %v1411
  %v1413 = vrot.slane %v1354, %v1412
  %v1414 = vlaneseq
  %v1415 = vshrl.u32 %v1414, 7
  %v1416 = vsub.s32 6, %v1415
  %v1417 = vrot.slane %v1354, %v1416
  %v1418 = vlaneseq
  %v1419 = vshrl.u32 %v1418, 7
  %v1420 = vsub.s32 7, %v1419
  %v1421 = vrot.slane %v1354, %v1420
  %v1422 = vlaneseq
  %v1423 = vshrl.u32 %v1422, 7
  %v1424 = vsub.s32 0, %v1423
  %v1425 = vrot.slane %v1355, %v1424
  %v1426 = vlaneseq
  %v1427 = vshrl.u32 %v1426, 7
  %v1428 = vsub.s32 1, %v1427
  %v1429 = vrot.slane %v1355, %v1428
  %v1430 = vlaneseq
  %v1431 = vshrl.u32 %v1430, 7
  %v1432 = vsub.s32 2, %v1431
  %v1433 = vrot.slane %v1355, %v1432
  %v1434 = vlaneseq
  %v1435 = vshrl.u32 %v1434, 7
  %v1436 = vsub.s32 3, %v1435
  %v1437 = vrot.slane %v1355, %v1436
  %v1438 = vlaneseq
  %v1439 = vshrl.u32 %v1438, 7
  %v1440 = vsub.s32 4, %v1439
  %v1441 = vrot.slane %v1355, %v1440
  %v1442 = vlaneseq
  %v1443 = vshrl.u32 %v1442, 7
  %v1444 = vsub.s32 5, %v1443
  %v1445 = vrot.slane %v1355, %v1444
  %v1446 = vlaneseq
  %v1447 = vshrl.u32 %v1446, 7
  %v1448 = vsub.s32 6, %v1447
  %v1449 = vrot.slane %v1355, %v1448
  %v1450 = vlaneseq
  %v1451 = vshrl.u32 %v1450, 7
  %v1452 = vsub.s32 7, %v1451
  %v1453 = vrot.slane %v1355, %v1452
  %v1454 = vlaneseq
  %v1455 = vshrl.u32 %v1454, 7
  %v1456 = vsub.s32 0, %v1455
  %v1457 = vrot.slane %v1356, %v1456
  %v1458 = vlaneseq
  %v1459 = vshrl.u32 %v1458, 7
  %v1460 = vsub.s32 1, %v1459
  %v1461 = vrot.slane %v1356, %v1460
  %v1462 = vlaneseq
  %v1463 = vshrl.u32 %v1462, 7
  %v1464 = vsub.s32 2, %v1463
  %v1465 = vrot.slane %v1356, %v1464
  %v1466 = vlaneseq
  %v1467 = vshrl.u32 %v1466, 7
  %v1468 = vsub.s32 3, %v1467
  %v1469 = vrot.slane %v1356, %v1468
  %v1470 = vlaneseq
  %v1471 = vshrl.u32 %v1470, 7
  %v1472 = vsub.s32 4, %v1471
  %v1473 = vrot.slane %v1356, %v1472
  %v1474 = vlaneseq
  %v1475 = vshrl.u32 %v1474, 7
  %v1476 = vsub.s32 5, %v1475
  %v1477 = vrot.slane %v1356, %v1476
  %v1478 = vlaneseq
  %v1479 = vshrl.u32 %v1478, 7
  %v1480 = vsub.s32 6, %v1479
  %v1481 = vrot.slane %v1356, %v1480
  %v1482 = vlaneseq
  %v1483 = vshrl.u32 %v1482, 7
  %v1484 = vsub.s32 7, %v1483
  %v1485 = vrot.slane %v1356, %v1484
  %v1486 = vlaneseq
  %v1487 = vshrl.u32 %v1486, 7
  %v1488 = vsub.s32 0, %v1487
  %v1489 = vrot.slane %v1357, %v1488
  %v1490 = vlaneseq
  %v1491 = vshrl.u32 %v1490, 7
  %v1492 = vsub.s32 1, %v1491
  %v1493 = vrot.slane %v1357, %v1492
  %v1494 = vlaneseq
  %v1495 = vshrl.u32 %v1494, 7
  %v1496 = vsub.s32 2, %v1495
  %v1497 = vrot.slane %v1357, %v1496
  %v1498 = vlaneseq
  %v1499 = vshrl.u32 %v1498, 7
  %v1500 = vsub.s32 3, %v1499
  %v1501 = vrot.slane %v1357, %v1500
  %v1502 = vlaneseq
  %v1503 = vshrl.u32 %v1502, 7
  %v1504 = vsub.s32 4, %v1503
  %v1505 = vrot.slane %v1357, %v1504
  %v1506 = vlaneseq
  %v1507 = vshrl.u32 %v1506, 7
  %v1508 = vsub.s32 5, %v1507
  %v1509 = vrot.slane %v1357, %v1508
  %v1510 = vlaneseq
  %v1511 = vshrl.u32 %v1510, 7
  %v1512 = vsub.s32 6, %v1511
  %v1513 = vrot.slane %v1357, %v1512
  %v1514 = vlaneseq
  %v1515 = vshrl.u32 %v1514, 7
  %v1516 = vsub.s32 7, %v1515
  %v1517 = vrot.slane %v1357, %v1516
  %v1518 = vlaneseq
  %v1519 = vshrl.u32 %v1518, 7
  %v1520 = vsub.s32 0, %v1519
  %v1521 = vrot.slane %v1358, %v1520
  %v1522 = vlaneseq
  %v1523 = vshrl.u32 %v1522, 7
  %v1524 = vsub.s32 1, %v1523
  %v1525 = vrot.slane %v1358, %v1524
  %v1526 = vlaneseq
  %v1527 = vshrl.u32 %v1526, 7
  %v1528 = vsub.s32 2, %v1527
  %v1529 = vrot.slane %v1358, %v1528
  %v1530 = vlaneseq
  %v1531 = vshrl.u32 %v1530, 7
  %v1532 = vsub.s32 3, %v1531
  %v1533 = vrot.slane %v1358, %v1532
  %v1534 = vlaneseq
  %v1535 = vshrl.u32 %v1534, 7
  %v1536 = vsub.s32 4, %v1535
  %v1537 = vrot.slane %v1358, %v1536
  %v1538 = vlaneseq
  %v1539 = vshrl.u32 %v1538, 7
  %v1540 = vsub.s32 5, %v1539
  %v1541 = vrot.slane %v1358, %v1540
  %v1542 = vlaneseq
  %v1543 = vshrl.u32 %v1542, 7
  %v1544 = vsub.s32 6, %v1543
  %v1545 = vrot.slane %v1358, %v1544
  %v1546 = vlaneseq
  %v1547 = vshrl.u32 %v1546, 7
  %v1548 = vsub.s32 7, %v1547
  %v1549 = vrot.slane %v1358, %v1548
  %v1550 = vlaneseq
  %v1551 = vshrl.u32 %v1550, 7
  %v1552 = vsub.s32 0, %v1551
  %v1553 = vrot.slane %v1359, %v1552
  %v1554 = vlaneseq
  %v1555 = vshrl.u32 %v1554, 7
  %v1556 = vsub.s32 1, %v1555
  %v1557 = vrot.slane %v1359, %v1556
  %v1558 = vlaneseq
  %v1559 = vshrl.u32 %v1558, 7
  %v1560 = vsub.s32 2, %v1559
  %v1561 = vrot.slane %v1359, %v1560
  %v1562 = vlaneseq
  %v1563 = vshrl.u32 %v1562, 7
  %v1564 = vsub.s32 3, %v1563
  %v1565 = vrot.slane %v1359, %v1564
  %v1566 = vlaneseq
  %v1567 = vshrl.u32 %v1566, 7
  %v1568 = vsub.s32 4, %v1567
  %v1569 = vrot.slane %v1359, %v1568
  %v1570 = vlaneseq
  %v1571 = vshrl.u32 %v1570, 7
  %v1572 = vsub.s32 5, %v1571
  %v1573 = vrot.slane %v1359, %v1572
  %v1574 = vlaneseq
  %v1575 = vshrl.u32 %v1574, 7
  %v1576 = vsub.s32 6, %v1575
  %v1577 = vrot.slane %v1359, %v1576
  %v1578 = vlaneseq
  %v1579 = vshrl.u32 %v1578, 7
  %v1580 = vsub.s32 7, %v1579
  %v1581 = vrot.slane %v1359, %v1580
  %v1582 = vlaneseq
  %v1583 = vshrl.u32 %v1582, 7
  %v1584 = vsub.s32 0, %v1583
  %v1585 = vrot.slane %v1360, %v1584
  %v1586 = vlaneseq
  %v1587 = vshrl.u32 %v1586, 7
  %v1588 = vsub.s32 1, %v1587
  %v1589 = vrot.slane %v1360, %v1588
  %v1590 = vlaneseq
  %v1591 = vshrl.u32 %v1590, 7
  %v1592 = vsub.s32 2, %v1591
  %v1593 = vrot.slane %v1360, %v1592
  %v1594 = vlaneseq
  %v1595 = vshrl.u32 %v1594, 7
  %v1596 = vsub.s32 3, %v1595
  %v1597 = vrot.slane %v1360, %v1596
  %v1598 = vlaneseq
  %v1599 = vshrl.u32 %v1598, 7
  %v1600 = vsub.s32 4, %v1599
  %v1601 = vrot.slane %v1360, %v1600
  %v1602 = vlaneseq
  %v1603 = vshrl.u32 %v1602, 7
  %v1604 = vsub.s32 5, %v1603
  %v1605 = vrot.slane %v1360, %v1604
  %v1606 = vlaneseq
  %v1607 = vshrl.u32 %v1606, 7
  %v1608 = vsub.s32 6, %v1607
  %v1609 = vrot.slane %v1360, %v1608
  %v1610 = vlaneseq
  %v1611 = vshrl.u32 %v1610, 7
  %v1612 = vsub.s32 7, %v1611
  %v1613 = vrot.slane %v1360, %v1612
  %v1614 = vlaneseq
  %v1615 = vshrl.u32 %v1614, 7
  %v1616 = vsub.s32 0, %v1615
  %v1617 = vrot.slane %v1361, %v1616
  %v1618 = vlaneseq
  %v1619 = vshrl.u32 %v1618, 7
  %v1620 = vsub.s32 1, %v1619
  %v1621 = vrot.slane %v1361, %v1620
  %v1622 = vlaneseq
  %v1623 = vshrl.u32 %v1622, 7
  %v1624 = vsub.s32 2, %v1623
  %v1625 = vrot.slane %v1361, %v1624
  %v1626 = vlaneseq
  %v1627 = vshrl.u32 %v1626, 7
  %v1628 = vsub.s32 3, %v1627
  %v1629 = vrot.slane %v1361, %v1628
  %v1630 = vlaneseq
  %v1631 = vshrl.u32 %v1630, 7
  %v1632 = vsub.s32 4, %v1631
  %v1633 = vrot.slane %v1361, %v1632
  %v1634 = vlaneseq
  %v1635 = vshrl.u32 %v1634, 7
  %v1636 = vsub.s32 5, %v1635
  %v1637 = vrot.slane %v1361, %v1636
  %v1638 = vlaneseq
  %v1639 = vshrl.u32 %v1638, 7
  %v1640 = vsub.s32 6, %v1639
  %v1641 = vrot.slane %v1361, %v1640
  %v1642 = vlaneseq
  %v1643 = vshrl.u32 %v1642, 7
  %v1644 = vsub.s32 7, %v1643
  %v1645 = vrot.slane %v1361, %v1644
  %v1646 = vlaneseq
  %v1647 = vshrl.u32 %v1646, 7
  %v1648 = vsub.s32 0, %v1647
  %v1649 = vrot.slane %v1362, %v1648
  %v1650 = vlaneseq
  %v1651 = vshrl.u32 %v1650, 7
  %v1652 = vsub.s32 1, %v1651
  %v1653 = vrot.slane %v1362, %v1652
  %v1654 = vlaneseq
  %v1655 = vshrl.u32 %v1654, 7
  %v1656 = vsub.s32 2, %v1655
  %v1657 = vrot.slane %v1362, %v1656
  %v1658 = vlaneseq
  %v1659 = vshrl.u32 %v1658, 7
  %v1660 = vsub.s32 3, %v1659
  %v1661 = vrot.slane %v1362, %v1660
  %v1662 = vlaneseq
  %v1663 = vshrl.u32 %v1662, 7
  %v1664 = vsub.s32 4, %v1663
  %v1665 = vrot.slane %v1362, %v1664
  %v1666 = vlaneseq
  %v1667 = vshrl.u32 %v1666, 7
  %v1668 = vsub.s32 5, %v1667
  %v1669 = vrot.slane %v1362, %v1668
  %v1670 = vlaneseq
  %v1671 = vshrl.u32 %v1670, 7
  %v1672 = vsub.s32 6, %v1671
  %v1673 = vrot.slane %v1362, %v1672
  %v1674 = vlaneseq
  %v1675 = vshrl.u32 %v1674, 7
  %v1676 = vsub.s32 7, %v1675
  %v1677 = vrot.slane %v1362, %v1676
  %v1678 = vlaneseq
  %v1679 = vshrl.u32 %v1678, 7
  %v1680 = vsub.s32 0, %v1679
  %v1681 = vrot.slane %v1363, %v1680
  %v1682 = vlaneseq
  %v1683 = vshrl.u32 %v1682, 7
  %v1684 = vsub.s32 1, %v1683
  %v1685 = vrot.slane %v1363, %v1684
  %v1686 = vlaneseq
  %v1687 = vshrl.u32 %v1686, 7
  %v1688 = vsub.s32 2, %v1687
  %v1689 = vrot.slane %v1363, %v1688
  %v1690 = vlaneseq
  %v1691 = vshrl.u32 %v1690, 7
  %v1692 = vsub.s32 3, %v1691
  %v1693 = vrot.slane %v1363, %v1692
  %v1694 = vlaneseq
  %v1695 = vshrl.u32 %v1694, 7
  %v1696 = vsub.s32 4, %v1695
  %v1697 = vrot.slane %v1363, %v1696
  %v1698 = vlaneseq
  %v1699 = vshrl.u32 %v1698, 7
  %v1700 = vsub.s32 5, %v1699
  %v1701 = vrot.slane %v1363, %v1700
  %v1702 = vlaneseq
  %v1703 = vshrl.u32 %v1702, 7
  %v1704 = vsub.s32 6, %v1703
  %v1705 = vrot.slane %v1363, %v1704
  %v1706 = vlaneseq
  %v1707 = vshrl.u32 %v1706, 7
  %v1708 = vsub.s32 7, %v1707
  %v1709 = vrot.slane %v1363, %v1708
  %v1710 = vlaneseq
  %v1711 = vshrl.u32 %v1710, 7
  %v1712 = vsub.s32 0, %v1711
  %v1713 = vrot.slane %v1364, %v1712
  %v1714 = vlaneseq
  %v1715 = vshrl.u32 %v1714, 7
  %v1716 = vsub.s32 1, %v1715
  %v1717 = vrot.slane %v1364, %v1716
  %v1718 = vlaneseq
  %v1719 = vshrl.u32 %v1718, 7
  %v1720 = vsub.s32 2, %v1719
  %v1721 = vrot.slane %v1364, %v1720
  %v1722 = vlaneseq
  %v1723 = vshrl.u32 %v1722, 7
  %v1724 = vsub.s32 3, %v1723
  %v1725 = vrot.slane %v1364, %v1724
  %v1726 = vlaneseq
  %v1727 = vshrl.u32 %v1726, 7
  %v1728 = vsub.s32 4, %v1727
  %v1729 = vrot.slane %v1364, %v1728
  %v1730 = vlaneseq
  %v1731 = vshrl.u32 %v1730, 7
  %v1732 = vsub.s32 5, %v1731
  %v1733 = vrot.slane %v1364, %v1732
  %v1734 = vlaneseq
  %v1735 = vshrl.u32 %v1734, 7
  %v1736 = vsub.s32 6, %v1735
  %v1737 = vrot.slane %v1364, %v1736
  %v1738 = vlaneseq
  %v1739 = vshrl.u32 %v1738, 7
  %v1740 = vsub.s32 7, %v1739
  %v1741 = vrot.slane %v1364, %v1740
  %v1742 = vlaneseq
  %v1743 = vshrl.u32 %v1742, 7
  %v1744 = vsub.s32 0, %v1743
  %v1745 = vrot.slane %v1365, %v1744
  %v1746 = vlaneseq
  %v1747 = vshrl.u32 %v1746, 7
  %v1748 = vsub.s32 1, %v1747
  %v1749 = vrot.slane %v1365, %v1748
  %v1750 = vlaneseq
  %v1751 = vshrl.u32 %v1750, 7
  %v1752 = vsub.s32 2, %v1751
  %v1753 = vrot.slane %v1365, %v1752
  %v1754 = vlaneseq
  %v1755 = vshrl.u32 %v1754, 7
  %v1756 = vsub.s32 3, %v1755
  %v1757 = vrot.slane %v1365, %v1756
  %v1758 = vlaneseq
  %v1759 = vshrl.u32 %v1758, 7
  %v1760 = vsub.s32 4, %v1759
  %v1761 = vrot.slane %v1365, %v1760
  %v1762 = vlaneseq
  %v1763 = vshrl.u32 %v1762, 7
  %v1764 = vsub.s32 5, %v1763
  %v1765 = vrot.slane %v1365, %v1764
  %v1766 = vlaneseq
  %v1767 = vshrl.u32 %v1766, 7
  %v1768 = vsub.s32 6, %v1767
  %v1769 = vrot.slane %v1365, %v1768
  %v1770 = vlaneseq
  %v1771 = vshrl.u32 %v1770, 7
  %v1772 = vsub.s32 7, %v1771
  %v1773 = vrot.slane %v1365, %v1772
  %v1774 = vlaneseq
  %v1775 = vshrl.u32 %v1774, 7
  %v1776 = vsub.s32 0, %v1775
  %v1777 = vrot.slane %v1366, %v1776
  %v1778 = vlaneseq
  %v1779 = vshrl.u32 %v1778, 7
  %v1780 = vsub.s32 1, %v1779
  %v1781 = vrot.slane %v1366, %v1780
  %v1782 = vlaneseq
  %v1783 = vshrl.u32 %v1782, 7
  %v1784 = vsub.s32 2, %v1783
  %v1785 = vrot.slane %v1366, %v1784
  %v1786 = vlaneseq
  %v1787 = vshrl.u32 %v1786, 7
  %v1788 = vsub.s32 3, %v1787
  %v1789 = vrot.slane %v1366, %v1788
  %v1790 = vlaneseq
  %v1791 = vshrl.u32 %v1790, 7
  %v1792 = vsub.s32 4, %v1791
  %v1793 = vrot.slane %v1366, %v1792
  %v1794 = vlaneseq
  %v1795 = vshrl.u32 %v1794, 7
  %v1796 = vsub.s32 5, %v1795
  %v1797 = vrot.slane %v1366, %v1796
  %v1798 = vlaneseq
  %v1799 = vshrl.u32 %v1798, 7
  %v1800 = vsub.s32 6, %v1799
  %v1801 = vrot.slane %v1366, %v1800
  %v1802 = vlaneseq
  %v1803 = vshrl.u32 %v1802, 7
  %v1804 = vsub.s32 7, %v1803
  %v1805 = vrot.slane %v1366, %v1804
  %v1806 = vlaneseq
  %v1807 = vshrl.u32 %v1806, 7
  %v1808 = vsub.s32 0, %v1807
  %v1809 = vrot.slane %v1367, %v1808
  %v1810 = vlaneseq
  %v1811 = vshrl.u32 %v1810, 7
  %v1812 = vsub.s32 1, %v1811
  %v1813 = vrot.slane %v1367, %v1812
  %v1814 = vlaneseq
  %v1815 = vshrl.u32 %v1814, 7
  %v1816 = vsub.s32 2, %v1815
  %v1817 = vrot.slane %v1367, %v1816
  %v1818 = vlaneseq
  %v1819 = vshrl.u32 %v1818, 7
  %v1820 = vsub.s32 3, %v1819
  %v1821 = vrot.slane %v1367, %v1820
  %v1822 = vlaneseq
  %v1823 = vshrl.u32 %v1822, 7
  %v1824 = vsub.s32 4, %v1823
  %v1825 = vrot.slane %v1367, %v1824
  %v1826 = vlaneseq
  %v1827 = vshrl.u32 %v1826, 7
  %v1828 = vsub.s32 5, %v1827
  %v1829 = vrot.slane %v1367, %v1828
  %v1830 = vlaneseq
  %v1831 = vshrl.u32 %v1830, 7
  %v1832 = vsub.s32 6, %v1831
  %v1833 = vrot.slane %v1367, %v1832
  %v1834 = vlaneseq
  %v1835 = vshrl.u32 %v1834, 7
  %v1836 = vsub.s32 7, %v1835
  %v1837 = vrot.slane %v1367, %v1836
  %v1838 = vlaneseq
  %v1839 = vshrl.u32 %v1838, 7
  %v1840 = vsub.s32 0, %v1839
  %v1841 = vrot.slane %v1368, %v1840
  %v1842 = vlaneseq
  %v1843 = vshrl.u32 %v1842, 7
  %v1844 = vsub.s32 1, %v1843
  %v1845 = vrot.slane %v1368, %v1844
  %v1846 = vlaneseq
  %v1847 = vshrl.u32 %v1846, 7
  %v1848 = vsub.s32 2, %v1847
  %v1849 = vrot.slane %v1368, %v1848
  %v1850 = vlaneseq
  %v1851 = vshrl.u32 %v1850, 7
  %v1852 = vsub.s32 3, %v1851
  %v1853 = vrot.slane %v1368, %v1852
  %v1854 = vlaneseq
  %v1855 = vshrl.u32 %v1854, 7
  %v1856 = vsub.s32 4, %v1855
  %v1857 = vrot.slane %v1368, %v1856
  %v1858 = vlaneseq
  %v1859 = vshrl.u32 %v1858, 7
  %v1860 = vsub.s32 5, %v1859
  %v1861 = vrot.slane %v1368, %v1860
  %v1862 = vlaneseq
  %v1863 = vshrl.u32 %v1862, 7
  %v1864 = vsub.s32 6, %v1863
  %v1865 = vrot.slane %v1368, %v1864
  %v1866 = vlaneseq
  %v1867 = vshrl.u32 %v1866, 7
  %v1868 = vsub.s32 7, %v1867
  %v1869 = vrot.slane %v1368, %v1868
  %v1870 = vlaneseq
  %v1871 = vshrl.u32 %v1870, 7
  %v1872 = vsub.s32 0, %v1871
  %v1873 = vrot.slane %v1369, %v1872
  %v1874 = vlaneseq
  %v1875 = vshrl.u32 %v1874, 7
  %v1876 = vsub.s32 1, %v1875
  %v1877 = vrot.slane %v1369, %v1876
  %v1878 = vlaneseq
  %v1879 = vshrl.u32 %v1878, 7
  %v1880 = vsub.s32 2, %v1879
  %v1881 = vrot.slane %v1369, %v1880
  %v1882 = vlaneseq
  %v1883 = vshrl.u32 %v1882, 7
  %v1884 = vsub.s32 3, %v1883
  %v1885 = vrot.slane %v1369, %v1884
  %v1886 = vlaneseq
  %v1887 = vshrl.u32 %v1886, 7
  %v1888 = vsub.s32 4, %v1887
  %v1889 = vrot.slane %v1369, %v1888
  %v1890 = vlaneseq
  %v1891 = vshrl.u32 %v1890, 7
  %v1892 = vsub.s32 5, %v1891
  %v1893 = vrot.slane %v1369, %v1892
  %v1894 = vlaneseq
  %v1895 = vshrl.u32 %v1894, 7
  %v1896 = vsub.s32 6, %v1895
  %v1897 = vrot.slane %v1369, %v1896
  %v1898 = vlaneseq
  %v1899 = vshrl.u32 %v1898, 7
  %v1900 = vsub.s32 7, %v1899
  %v1901 = vrot.slane %v1369, %v1900
  %v1902 = vlaneseq
  %v1903 = vshrl.u32 %v1902, 7
  %v1904 = vsub.s32 0, %v1903
  %v1905 = vrot.slane %v1370, %v1904
  %v1906 = vlaneseq
  %v1907 = vshrl.u32 %v1906, 7
  %v1908 = vsub.s32 1, %v1907
  %v1909 = vrot.slane %v1370, %v1908
  %v1910 = vlaneseq
  %v1911 = vshrl.u32 %v1910, 7
  %v1912 = vsub.s32 2, %v1911
  %v1913 = vrot.slane %v1370, %v1912
  %v1914 = vlaneseq
  %v1915 = vshrl.u32 %v1914, 7
  %v1916 = vsub.s32 3, %v1915
  %v1917 = vrot.slane %v1370, %v1916
  %v1918 = vlaneseq
  %v1919 = vshrl.u32 %v1918, 7
  %v1920 = vsub.s32 4, %v1919
  %v1921 = vrot.slane %v1370, %v1920
  %v1922 = vlaneseq
  %v1923 = vshrl.u32 %v1922, 7
  %v1924 = vsub.s32 5, %v1923
  %v1925 = vrot.slane %v1370, %v1924
  %v1926 = vlaneseq
  %v1927 = vshrl.u32 %v1926, 7
  %v1928 = vsub.s32 6, %v1927
  %v1929 = vrot.slane %v1370, %v1928
  %v1930 = vlaneseq
  %v1931 = vshrl.u32 %v1930, 7
  %v1932 = vsub.s32 7, %v1931
  %v1933 = vrot.slane %v1370, %v1932
  %v1934 = vlaneseq
  %v1935 = vshrl.u32 %v1934, 7
  %v1936 = vsub.s32 0, %v1935
  %v1937 = vrot.slane %v1371, %v1936
  %v1938 = vlaneseq
  %v1939 = vshrl.u32 %v1938, 7
  %v1940 = vsub.s32 1, %v1939
  %v1941 = vrot.slane %v1371, %v1940
  %v1942 = vlaneseq
  %v1943 = vshrl.u32 %v1942, 7
  %v1944 = vsub.s32 2, %v1943
  %v1945 = vrot.slane %v1371, %v1944
  %v1946 = vlaneseq
  %v1947 = vshrl.u32 %v1946, 7
  %v1948 = vsub.s32 3, %v1947
  %v1949 = vrot.slane %v1371, %v1948
  %v1950 = vlaneseq
  %v1951 = vshrl.u32 %v1950, 7
  %v1952 = vsub.s32 4, %v1951
  %v1953 = vrot.slane %v1371, %v1952
  %v1954 = vlaneseq
  %v1955 = vshrl.u32 %v1954, 7
  %v1956 = vsub.s32 5, %v1955
  %v1957 = vrot.slane %v1371, %v1956
  %v1958 = vlaneseq
  %v1959 = vshrl.u32 %v1958, 7
  %v1960 = vsub.s32 6, %v1959
  %v1961 = vrot.slane %v1371, %v1960
  %v1962 = vlaneseq
  %v1963 = vshrl.u32 %v1962, 7
  %v1964 = vsub.s32 7, %v1963
  %v1965 = vrot.slane %v1371, %v1964
  %v1966 = vcombine.low %v1393, %v1397
  %v1967 = vcombine.low %v1401, %v1405
  %v1969 = vunpack.c.l.s4 1983009808
  %v1970 = vunpack.c.0.s8 %v1969
  %v1971 = vlaneseq
  %v1972 = vshrl.u32 %v1971, 7
  %v1973 = vsub.s32 %v1970, %v1972
  %v1974 = vrot.slane %v1966, %v1973
  %v1976 = vunpack.c.l.s4 1983009808
  %v1977 = vunpack.c.0.s8 %v1976
  %v1978 = vlaneseq
  %v1979 = vshrl.u32 %v1978, 7
  %v1980 = vsub.s32 %v1977, %v1979
  %v1981 = vrot.slane %v1967, %v1980
  %v1982 = vcombine.low %v1974, %v1981
  %v1983 = vcombine.low %v1409, %v1413
  %v1984 = vcombine.low %v1417, %v1421
  %v1986 = vunpack.c.l.s4 1983009808
  %v1987 = vunpack.c.0.s8 %v1986
  %v1988 = vlaneseq
  %v1989 = vshrl.u32 %v1988, 7
  %v1990 = vsub.s32 %v1987, %v1989
  %v1991 = vrot.slane %v1983, %v1990
  %v1993 = vunpack.c.l.s4 1983009808
  %v1994 = vunpack.c.0.s8 %v1993
  %v1995 = vlaneseq
  %v1996 = vshrl.u32 %v1995, 7
  %v1997 = vsub.s32 %v1994, %v1996
  %v1998 = vrot.slane %v1984, %v1997
  %v1999 = vcombine.low %v1991, %v1998
  %v2000 = vcombine.low %v1425, %v1429
  %v2001 = vcombine.low %v1433, %v1437
  %v2003 = vunpack.c.l.s4 1983009808
  %v2004 = vunpack.c.0.s8 %v2003
  %v2005 = vlaneseq
  %v2006 = vshrl.u32 %v2005, 7
  %v2007 = vsub.s32 %v2004, %v2006
  %v2008 = vrot.slane %v2000, %v2007
  %v2010 = vunpack.c.l.s4 1983009808
  %v2011 = vunpack.c.0.s8 %v2010
  %v2012 = vlaneseq
  %v2013 = vshrl.u32 %v2012, 7
  %v2014 = vsub.s32 %v2011, %v2013
  %v2015 = vrot.slane %v2001, %v2014
  %v2016 = vcombine.low %v2008, %v2015
  %v2017 = vcombine.low %v1441, %v1445
  %v2018 = vcombine.low %v1449, %v1453
  %v2020 = vunpack.c.l.s4 1983009808
  %v2021 = vunpack.c.0.s8 %v2020
  %v2022 = vlaneseq
  %v2023 = vshrl.u32 %v2022, 7
  %v2024 = vsub.s32 %v2021, %v2023
  %v2025 = vrot.slane %v2017, %v2024
  %v2027 = vunpack.c.l.s4 1983009808
  %v2028 = vunpack.c.0.s8 %v2027
  %v2029 = vlaneseq
  %v2030 = vshrl.u32 %v2029, 7
  %v2031 = vsub.s32 %v2028, %v2030
  %v2032 = vrot.slane %v2018, %v2031
  %v2033 = vcombine.low %v2025, %v2032
  %v2034 = vcombine.low %v1457, %v1461
  %v2035 = vcombine.low %v1465, %v1469
  %v2037 = vunpack.c.l.s4 1983009808
  %v2038 = vunpack.c.0.s8 %v2037
  %v2039 = vlaneseq
  %v2040 = vshrl.u32 %v2039, 7
  %v2041 = vsub.s32 %v2038, %v2040
  %v2042 = vrot.slane %v2034, %v2041
  %v2044 = vunpack.c.l.s4 1983009808
  %v2045 = vunpack.c.0.s8 %v2044
  %v2046 = vlaneseq
  %v2047 = vshrl.u32 %v2046, 7
  %v2048 = vsub.s32 %v2045, %v2047
  %v2049 = vrot.slane %v2035, %v2048
  %v2050 = vcombine.low %v2042, %v2049
  %v2051 = vcombine.low %v1473, %v1477
  %v2052 = vcombine.low %v1481, %v1485
  %v2054 = vunpack.c.l.s4 1983009808
  %v2055 = vunpack.c.0.s8 %v2054
  %v2056 = vlaneseq
  %v2057 = vshrl.u32 %v2056, 7
  %v2058 = vsub.s32 %v2055, %v2057
  %v2059 = vrot.slane %v2051, %v2058
  %v2061 = vunpack.c.l.s4 1983009808
  %v2062 = vunpack.c.0.s8 %v2061
  %v2063 = vlaneseq
  %v2064 = vshrl.u32 %v2063, 7
  %v2065 = vsub.s32 %v2062, %v2064
  %v2066 = vrot.slane %v2052, %v2065
  %v2067 = vcombine.low %v2059, %v2066
  %v2068 = vcombine.low %v1489, %v1493
  %v2069 = vcombine.low %v1497, %v1501
  %v2071 = vunpack.c.l.s4 1983009808
  %v2072 = vunpack.c.0.s8 %v2071
  %v2073 = vlaneseq
  %v2074 = vshrl.u32 %v2073, 7
  %v2075 = vsub.s32 %v2072, %v2074
  %v2076 = vrot.slane %v2068, %v2075
  %v2078 = vunpack.c.l.s4 1983009808
  %v2079 = vunpack.c.0.s8 %v2078
  %v2080 = vlaneseq
  %v2081 = vshrl.u32 %v2080, 7
  %v2082 = vsub.s32 %v2079, %v2081
  %v2083 = vrot.slane %v2069, %v2082
  %v2084 = vcombine.low %v2076, %v2083
  %v2085 = vcombine.low %v1505, %v1509
  %v2086 = vcombine.low %v1513, %v1517
  %v2088 = vunpack.c.l.s4 1983009808
  %v2089 = vunpack.c.0.s8 %v2088
  %v2090 = vlaneseq
  %v2091 = vshrl.u32 %v2090, 7
  %v2092 = vsub.s32 %v2089, %v2091
  %v2093 = vrot.slane %v2085, %v2092
  %v2095 = vunpack.c.l.s4 1983009808
  %v2096 = vunpack.c.0.s8 %v2095
  %v2097 = vlaneseq
  %v2098 = vshrl.u32 %v2097, 7
  %v2099 = vsub.s32 %v2096, %v2098
  %v2100 = vrot.slane %v2086, %v2099
  %v2101 = vcombine.low %v2093, %v2100
  %v2102 = vcombine.low %v1521, %v1525
  %v2103 = vcombine.low %v1529, %v1533
  %v2105 = vunpack.c.l.s4 1983009808
  %v2106 = vunpack.c.0.s8 %v2105
  %v2107 = vlaneseq
  %v2108 = vshrl.u32 %v2107, 7
  %v2109 = vsub.s32 %v2106, %v2108
  %v2110 = vrot.slane %v2102, %v2109
  %v2112 = vunpack.c.l.s4 1983009808
  %v2113 = vunpack.c.0.s8 %v2112
  %v2114 = vlaneseq
  %v2115 = vshrl.u32 %v2114, 7
  %v2116 = vsub.s32 %v2113, %v2115
  %v2117 = vrot.slane %v2103, %v2116
  %v2118 = vcombine.low %v2110, %v2117
  %v2119 = vcombine.low %v1537, %v1541
  %v2120 = vcombine.low %v1545, %v1549
  %v2122 = vunpack.c.l.s4 1983009808
  %v2123 = vunpack.c.0.s8 %v2122
  %v2124 = vlaneseq
  %v2125 = vshrl.u32 %v2124, 7
  %v2126 = vsub.s32 %v2123, %v2125
  %v2127 = vrot.slane %v2119, %v2126
  %v2129 = vunpack.c.l.s4 1983009808
  %v2130 = vunpack.c.0.s8 %v2129
  %v2131 = vlaneseq
  %v2132 = vshrl.u32 %v2131, 7
  %v2133 = vsub.s32 %v2130, %v2132
  %v2134 = vrot.slane %v2120, %v2133
  %v2135 = vcombine.low %v2127, %v2134
  %v2136 = vcombine.low %v1553, %v1557
  %v2137 = vcombine.low %v1561, %v1565
  %v2139 = vunpack.c.l.s4 1983009808
  %v2140 = vunpack.c.0.s8 %v2139
  %v2141 = vlaneseq
  %v2142 = vshrl.u32 %v2141, 7
  %v2143 = vsub.s32 %v2140, %v2142
  %v2144 = vrot.slane %v2136, %v2143
  %v2146 = vunpack.c.l.s4 1983009808
  %v2147 = vunpack.c.0.s8 %v2146
  %v2148 = vlaneseq
  %v2149 = vshrl.u32 %v2148, 7
  %v2150 = vsub.s32 %v2147, %v2149
  %v2151 = vrot.slane %v2137, %v2150
  %v2152 = vcombine.low %v2144, %v2151
  %v2153 = vcombine.low %v1569, %v1573
  %v2154 = vcombine.low %v1577, %v1581
  %v2156 = vunpack.c.l.s4 1983009808
  %v2157 = vunpack.c.0.s8 %v2156
  %v2158 = vlaneseq
  %v2159 = vshrl.u32 %v2158, 7
  %v2160 = vsub.s32 %v2157, %v2159
  %v2161 = vrot.slane %v2153, %v2160
  %v2163 = vunpack.c.l.s4 1983009808
  %v2164 = vunpack.c.0.s8 %v2163
  %v2165 = vlaneseq
  %v2166 = vshrl.u32 %v2165, 7
  %v2167 = vsub.s32 %v2164, %v2166
  %v2168 = vrot.slane %v2154, %v2167
  %v2169 = vcombine.low %v2161, %v2168
  %v2170 = vcombine.low %v1585, %v1589
  %v2171 = vcombine.low %v1593, %v1597
  %v2173 = vunpack.c.l.s4 1983009808
  %v2174 = vunpack.c.0.s8 %v2173
  %v2175 = vlaneseq
  %v2176 = vshrl.u32 %v2175, 7
  %v2177 = vsub.s32 %v2174, %v2176
  %v2178 = vrot.slane %v2170, %v2177
  %v2180 = vunpack.c.l.s4 1983009808
  %v2181 = vunpack.c.0.s8 %v2180
  %v2182 = vlaneseq
  %v2183 = vshrl.u32 %v2182, 7
  %v2184 = vsub.s32 %v2181, %v2183
  %v2185 = vrot.slane %v2171, %v2184
  %v2186 = vcombine.low %v2178, %v2185
  %v2187 = vcombine.low %v1601, %v1605
  %v2188 = vcombine.low %v1609, %v1613
  %v2190 = vunpack.c.l.s4 1983009808
  %v2191 = vunpack.c.0.s8 %v2190
  %v2192 = vlaneseq
  %v2193 = vshrl.u32 %v2192, 7
  %v2194 = vsub.s32 %v2191, %v2193
  %v2195 = vrot.slane %v2187, %v2194
  %v2197 = vunpack.c.l.s4 1983009808
  %v2198 = vunpack.c.0.s8 %v2197
  %v2199 = vlaneseq
  %v2200 = vshrl.u32 %v2199, 7
  %v2201 = vsub.s32 %v2198, %v2200
  %v2202 = vrot.slane %v2188, %v2201
  %v2203 = vcombine.low %v2195, %v2202
  %v2204 = vcombine.low %v1617, %v1621
  %v2205 = vcombine.low %v1625, %v1629
  %v2207 = vunpack.c.l.s4 1983009808
  %v2208 = vunpack.c.0.s8 %v2207
  %v2209 = vlaneseq
  %v2210 = vshrl.u32 %v2209, 7
  %v2211 = vsub.s32 %v2208, %v2210
  %v2212 = vrot.slane %v2204, %v2211
  %v2214 = vunpack.c.l.s4 1983009808
  %v2215 = vunpack.c.0.s8 %v2214
  %v2216 = vlaneseq
  %v2217 = vshrl.u32 %v2216, 7
  %v2218 = vsub.s32 %v2215, %v2217
  %v2219 = vrot.slane %v2205, %v2218
  %v2220 = vcombine.low %v2212, %v2219
  %v2221 = vcombine.low %v1633, %v1637
  %v2222 = vcombine.low %v1641, %v1645
  %v2224 = vunpack.c.l.s4 1983009808
  %v2225 = vunpack.c.0.s8 %v2224
  %v2226 = vlaneseq
  %v2227 = vshrl.u32 %v2226, 7
  %v2228 = vsub.s32 %v2225, %v2227
  %v2229 = vrot.slane %v2221, %v2228
  %v2231 = vunpack.c.l.s4 1983009808
  %v2232 = vunpack.c.0.s8 %v2231
  %v2233 = vlaneseq
  %v2234 = vshrl.u32 %v2233, 7
  %v2235 = vsub.s32 %v2232, %v2234
  %v2236 = vrot.slane %v2222, %v2235
  %v2237 = vcombine.low %v2229, %v2236
  %v2238 = vcombine.low %v1649, %v1653
  %v2239 = vcombine.low %v1657, %v1661
  %v2241 = vunpack.c.l.s4 1983009808
  %v2242 = vunpack.c.0.s8 %v2241
  %v2243 = vlaneseq
  %v2244 = vshrl.u32 %v2243, 7
  %v2245 = vsub.s32 %v2242, %v2244
  %v2246 = vrot.slane %v2238, %v2245
  %v2248 = vunpack.c.l.s4 1983009808
  %v2249 = vunpack.c.0.s8 %v2248
  %v2250 = vlaneseq
  %v2251 = vshrl.u32 %v2250, 7
  %v2252 = vsub.s32 %v2249, %v2251
  %v2253 = vrot.slane %v2239, %v2252
  %v2254 = vcombine.low %v2246, %v2253
  %v2255 = vcombine.low %v1665, %v1669
  %v2256 = vcombine.low %v1673, %v1677
  %v2258 = vunpack.c.l.s4 1983009808
  %v2259 = vunpack.c.0.s8 %v2258
  %v2260 = vlaneseq
  %v2261 = vshrl.u32 %v2260, 7
  %v2262 = vsub.s32 %v2259, %v2261
  %v2263 = vrot.slane %v2255, %v2262
  %v2265 = vunpack.c.l.s4 1983009808
  %v2266 = vunpack.c.0.s8 %v2265
  %v2267 = vlaneseq
  %v2268 = vshrl.u32 %v2267, 7
  %v2269 = vsub.s32 %v2266, %v2268
  %v2270 = vrot.slane %v2256, %v2269
  %v2271 = vcombine.low %v2263, %v2270
  %v2272 = vcombine.low %v1681, %v1685
  %v2273 = vcombine.low %v1689, %v1693
  %v2275 = vunpack.c.l.s4 1983009808
  %v2276 = vunpack.c.0.s8 %v2275
  %v2277 = vlaneseq
  %v2278 = vshrl.u32 %v2277, 7
  %v2279 = vsub.s32 %v2276, %v2278
  %v2280 = vrot.slane %v2272, %v2279
  %v2282 = vunpack.c.l.s4 1983009808
  %v2283 = vunpack.c.0.s8 %v2282
  %v2284 = vlaneseq
  %v2285 = vshrl.u32 %v2284, 7
  %v2286 = vsub.s32 %v2283, %v2285
  %v2287 = vrot.slane %v2273, %v2286
  %v2288 = vcombine.low %v2280, %v2287
  %v2289 = vcombine.low %v1697, %v1701
  %v2290 = vcombine.low %v1705, %v1709
  %v2292 = vunpack.c.l.s4 1983009808
  %v2293 = vunpack.c.0.s8 %v2292
  %v2294 = vlaneseq
  %v2295 = vshrl.u32 %v2294, 7
  %v2296 = vsub.s32 %v2293, %v2295
  %v2297 = vrot.slane %v2289, %v2296
  %v2299 = vunpack.c.l.s4 1983009808
  %v2300 = vunpack.c.0.s8 %v2299
  %v2301 = vlaneseq
  %v2302 = vshrl.u32 %v2301, 7
  %v2303 = vsub.s32 %v2300, %v2302
  %v2304 = vrot.slane %v2290, %v2303
  %v2305 = vcombine.low %v2297, %v2304
  %v2306 = vcombine.low %v1713, %v1717
  %v2307 = vcombine.low %v1721, %v1725
  %v2309 = vunpack.c.l.s4 1983009808
  %v2310 = vunpack.c.0.s8 %v2309
  %v2311 = vlaneseq
  %v2312 = vshrl.u32 %v2311, 7
  %v2313 = vsub.s32 %v2310, %v2312
  %v2314 = vrot.slane %v2306, %v2313
  %v2316 = vunpack.c.l.s4 1983009808
  %v2317 = vunpack.c.0.s8 %v2316
  %v2318 = vlaneseq
  %v2319 = vshrl.u32 %v2318, 7
  %v2320 = vsub.s32 %v2317, %v2319
  %v2321 = vrot.slane %v2307, %v2320
  %v2322 = vcombine.low %v2314, %v2321
  %v2323 = vcombine.low %v1729, %v1733
  %v2324 = vcombine.low %v1737, %v1741
  %v2326 = vunpack.c.l.s4 1983009808
  %v2327 = vunpack.c.0.s8 %v2326
  %v2328 = vlaneseq
  %v2329 = vshrl.u32 %v2328, 7
  %v2330 = vsub.s32 %v2327, %v2329
  %v2331 = vrot.slane %v2323, %v2330
  %v2333 = vunpack.c.l.s4 1983009808
  %v2334 = vunpack.c.0.s8 %v2333
  %v2335 = vlaneseq
  %v2336 = vshrl.u32 %v2335, 7
  %v2337 = vsub.s32 %v2334, %v2336
  %v2338 = vrot.slane %v2324, %v2337
  %v2339 = vcombine.low %v2331, %v2338
  %v2340 = vcombine.low %v1745, %v1749
  %v2341 = vcombine.low %v1753, %v1757
  %v2343 = vunpack.c.l.s4 1983009808
  %v2344 = vunpack.c.0.s8 %v2343
  %v2345 = vlaneseq
  %v2346 = vshrl.u32 %v2345, 7
  %v2347 = vsub.s32 %v2344, %v2346
  %v2348 = vrot.slane %v2340, %v2347
  %v2350 = vunpack.c.l.s4 1983009808
  %v2351 = vunpack.c.0.s8 %v2350
  %v2352 = vlaneseq
  %v2353 = vshrl.u32 %v2352, 7
  %v2354 = vsub.s32 %v2351, %v2353
  %v2355 = vrot.slane %v2341, %v2354
  %v2356 = vcombine.low %v2348, %v2355
  %v2357 = vcombine.low %v1761, %v1765
  %v2358 = vcombine.low %v1769, %v1773
  %v2360 = vunpack.c.l.s4 1983009808
  %v2361 = vunpack.c.0.s8 %v2360
  %v2362 = vlaneseq
  %v2363 = vshrl.u32 %v2362, 7
  %v2364 = vsub.s32 %v2361, %v2363
  %v2365 = vrot.slane %v2357, %v2364
  %v2367 = vunpack.c.l.s4 1983009808
  %v2368 = vunpack.c.0.s8 %v2367
  %v2369 = vlaneseq
  %v2370 = vshrl.u32 %v2369, 7
  %v2371 = vsub.s32 %v2368, %v2370
  %v2372 = vrot.slane %v2358, %v2371
  %v2373 = vcombine.low %v2365, %v2372
  %v2374 = vcombine.low %v1777, %v1781
  %v2375 = vcombine.low %v1785, %v1789
  %v2377 = vunpack.c.l.s4 1983009808
  %v2378 = vunpack.c.0.s8 %v2377
  %v2379 = vlaneseq
  %v2380 = vshrl.u32 %v2379, 7
  %v2381 = vsub.s32 %v2378, %v2380
  %v2382 = vrot.slane %v2374, %v2381
  %v2384 = vunpack.c.l.s4 1983009808
  %v2385 = vunpack.c.0.s8 %v2384
  %v2386 = vlaneseq
  %v2387 = vshrl.u32 %v2386, 7
  %v2388 = vsub.s32 %v2385, %v2387
  %v2389 = vrot.slane %v2375, %v2388
  %v2390 = vcombine.low %v2382, %v2389
  %v2391 = vcombine.low %v1793, %v1797
  %v2392 = vcombine.low %v1801, %v1805
  %v2394 = vunpack.c.l.s4 1983009808
  %v2395 = vunpack.c.0.s8 %v2394
  %v2396 = vlaneseq
  %v2397 = vshrl.u32 %v2396, 7
  %v2398 = vsub.s32 %v2395, %v2397
  %v2399 = vrot.slane %v2391, %v2398
  %v2401 = vunpack.c.l.s4 1983009808
  %v2402 = vunpack.c.0.s8 %v2401
  %v2403 = vlaneseq
  %v2404 = vshrl.u32 %v2403, 7
  %v2405 = vsub.s32 %v2402, %v2404
  %v2406 = vrot.slane %v2392, %v2405
  %v2407 = vcombine.low %v2399, %v2406
  %v2408 = vcombine.low %v1809, %v1813
  %v2409 = vcombine.low %v1817, %v1821
  %v2411 = vunpack.c.l.s4 1983009808
  %v2412 = vunpack.c.0.s8 %v2411
  %v2413 = vlaneseq
  %v2414 = vshrl.u32 %v2413, 7
  %v2415 = vsub.s32 %v2412, %v2414
  %v2416 = vrot.slane %v2408, %v2415
  %v2418 = vunpack.c.l.s4 1983009808
  %v2419 = vunpack.c.0.s8 %v2418
  %v2420 = vlaneseq
  %v2421 = vshrl.u32 %v2420, 7
  %v2422 = vsub.s32 %v2419, %v2421
  %v2423 = vrot.slane %v2409, %v2422
  %v2424 = vcombine.low %v2416, %v2423
  %v2425 = vcombine.low %v1825, %v1829
  %v2426 = vcombine.low %v1833, %v1837
  %v2428 = vunpack.c.l.s4 1983009808
  %v2429 = vunpack.c.0.s8 %v2428
  %v2430 = vlaneseq
  %v2431 = vshrl.u32 %v2430, 7
  %v2432 = vsub.s32 %v2429, %v2431
  %v2433 = vrot.slane %v2425, %v2432
  %v2435 = vunpack.c.l.s4 1983009808
  %v2436 = vunpack.c.0.s8 %v2435
  %v2437 = vlaneseq
  %v2438 = vshrl.u32 %v2437, 7
  %v2439 = vsub.s32 %v2436, %v2438
  %v2440 = vrot.slane %v2426, %v2439
  %v2441 = vcombine.low %v2433, %v2440
  %v2442 = vcombine.low %v1841, %v1845
  %v2443 = vcombine.low %v1849, %v1853
  %v2445 = vunpack.c.l.s4 1983009808
  %v2446 = vunpack.c.0.s8 %v2445
  %v2447 = vlaneseq
  %v2448 = vshrl.u32 %v2447, 7
  %v2449 = vsub.s32 %v2446, %v2448
  %v2450 = vrot.slane %v2442, %v2449
  %v2452 = vunpack.c.l.s4 1983009808
  %v2453 = vunpack.c.0.s8 %v2452
  %v2454 = vlaneseq
  %v2455 = vshrl.u32 %v2454, 7
  %v2456 = vsub.s32 %v2453, %v2455
  %v2457 = vrot.slane %v2443, %v2456
  %v2458 = vcombine.low %v2450, %v2457
  %v2459 = vcombine.low %v1857, %v1861
  %v2460 = vcombine.low %v1865, %v1869
  %v2462 = vunpack.c.l.s4 1983009808
  %v2463 = vunpack.c.0.s8 %v2462
  %v2464 = vlaneseq
  %v2465 = vshrl.u32 %v2464, 7
  %v2466 = vsub.s32 %v2463, %v2465
  %v2467 = vrot.slane %v2459, %v2466
  %v2469 = vunpack.c.l.s4 1983009808
  %v2470 = vunpack.c.0.s8 %v2469
  %v2471 = vlaneseq
  %v2472 = vshrl.u32 %v2471, 7
  %v2473 = vsub.s32 %v2470, %v2472
  %v2474 = vrot.slane %v2460, %v2473
  %v2475 = vcombine.low %v2467, %v2474
  %v2476 = vcombine.low %v1873, %v1877
  %v2477 = vcombine.low %v1881, %v1885
  %v2479 = vunpack.c.l.s4 1983009808
  %v2480 = vunpack.c.0.s8 %v2479
  %v2481 = vlaneseq
  %v2482 = vshrl.u32 %v2481, 7
  %v2483 = vsub.s32 %v2480, %v2482
  %v2484 = vrot.slane %v2476, %v2483
  %v2486 = vunpack.c.l.s4 1983009808
  %v2487 = vunpack.c.0.s8 %v2486
  %v2488 = vlaneseq
  %v2489 = vshrl.u32 %v2488, 7
  %v2490 = vsub.s32 %v2487, %v2489
  %v2491 = vrot.slane %v2477, %v2490
  %v2492 = vcombine.low %v2484, %v2491
  %v2493 = vcombine.low %v1889, %v1893
  %v2494 = vcombine.low %v1897, %v1901
  %v2496 = vunpack.c.l.s4 1983009808
  %v2497 = vunpack.c.0.s8 %v2496
  %v2498 = vlaneseq
  %v2499 = vshrl.u32 %v2498, 7
  %v2500 = vsub.s32 %v2497, %v2499
  %v2501 = vrot.slane %v2493, %v2500
  %v2503 = vunpack.c.l.s4 1983009808
  %v2504 = vunpack.c.0.s8 %v2503
  %v2505 = vlaneseq
  %v2506 = vshrl.u32 %v2505, 7
  %v2507 = vsub.s32 %v2504, %v2506
  %v2508 = vrot.slane %v2494, %v2507
  %v2509 = vcombine.low %v2501, %v2508
  %v2510 = vcombine.low %v1905, %v1909
  %v2511 = vcombine.low %v1913, %v1917
  %v2513 = vunpack.c.l.s4 1983009808
  %v2514 = vunpack.c.0.s8 %v2513
  %v2515 = vlaneseq
  %v2516 = vshrl.u32 %v2515, 7
  %v2517 = vsub.s32 %v2514, %v2516
  %v2518 = vrot.slane %v2510, %v2517
  %v2520 = vunpack.c.l.s4 1983009808
  %v2521 = vunpack.c.0.s8 %v2520
  %v2522 = vlaneseq
  %v2523 = vshrl.u32 %v2522, 7
  %v2524 = vsub.s32 %v2521, %v2523
  %v2525 = vrot.slane %v2511, %v2524
  %v2526 = vcombine.low %v2518, %v2525
  %v2527 = vcombine.low %v1921, %v1925
  %v2528 = vcombine.low %v1929, %v1933
  %v2530 = vunpack.c.l.s4 1983009808
  %v2531 = vunpack.c.0.s8 %v2530
  %v2532 = vlaneseq
  %v2533 = vshrl.u32 %v2532, 7
  %v2534 = vsub.s32 %v2531, %v2533
  %v2535 = vrot.slane %v2527, %v2534
  %v2537 = vunpack.c.l.s4 1983009808
  %v2538 = vunpack.c.0.s8 %v2537
  %v2539 = vlaneseq
  %v2540 = vshrl.u32 %v2539, 7
  %v2541 = vsub.s32 %v2538, %v2540
  %v2542 = vrot.slane %v2528, %v2541
  %v2543 = vcombine.low %v2535, %v2542
  %v2544 = vcombine.low %v1937, %v1941
  %v2545 = vcombine.low %v1945, %v1949
  %v2547 = vunpack.c.l.s4 1983009808
  %v2548 = vunpack.c.0.s8 %v2547
  %v2549 = vlaneseq
  %v2550 = vshrl.u32 %v2549, 7
  %v2551 = vsub.s32 %v2548, %v2550
  %v2552 = vrot.slane %v2544, %v2551
  %v2554 = vunpack.c.l.s4 1983009808
  %v2555 = vunpack.c.0.s8 %v2554
  %v2556 = vlaneseq
  %v2557 = vshrl.u32 %v2556, 7
  %v2558 = vsub.s32 %v2555, %v2557
  %v2559 = vrot.slane %v2545, %v2558
  %v2560 = vcombine.low %v2552, %v2559
  %v2561 = vcombine.low %v1953, %v1957
  %v2562 = vcombine.low %v1961, %v1965
  %v2564 = vunpack.c.l.s4 1983009808
  %v2565 = vunpack.c.0.s8 %v2564
  %v2566 = vlaneseq
  %v2567 = vshrl.u32 %v2566, 7
  %v2568 = vsub.s32 %v2565, %v2567
  %v2569 = vrot.slane %v2561, %v2568
  %v2571 = vunpack.c.l.s4 1983009808
  %v2572 = vunpack.c.0.s8 %v2571
  %v2573 = vlaneseq
  %v2574 = vshrl.u32 %v2573, 7
  %v2575 = vsub.s32 %v2572, %v2574
  %v2576 = vrot.slane %v2562, %v2575
  %v2577 = vcombine.low %v2569, %v2576
  %v2614 = vadd.f32 %v1318, %v1982
  %v2615 = vadd.f32 %v1319, %v1999
  %v2616 = vadd.f32 %v1320, %v2016
  %v2617 = vadd.f32 %v1321, %v2033
  %v2618 = vadd.f32 %v1322, %v2050
  %v2619 = vadd.f32 %v1323, %v2067
  %v2620 = vadd.f32 %v1324, %v2084
  %v2621 = vadd.f32 %v1325, %v2101
  %v2622 = vadd.f32 %v1326, %v2118
  %v2623 = vadd.f32 %v1327, %v2135
  %v2624 = vadd.f32 %v1328, %v2152
  %v2625 = vadd.f32 %v1329, %v2169
  %v2626 = vadd.f32 %v1330, %v2186
  %v2627 = vadd.f32 %v1331, %v2203
  %v2628 = vadd.f32 %v1332, %v2220
  %v2629 = vadd.f32 %v1333, %v2237
  %v2630 = vadd.f32 %v1334, %v2254
  %v2631 = vadd.f32 %v1335, %v2271
  %v2632 = vadd.f32 %v1336, %v2288
  %v2633 = vadd.f32 %v1337, %v2305
  %v2634 = vadd.f32 %v1338, %v2322
  %v2635 = vadd.f32 %v1339, %v2339
  %v2636 = vadd.f32 %v1340, %v2356
  %v2637 = vadd.f32 %v1341, %v2373
  %v2638 = vadd.f32 %v1342, %v2390
  %v2639 = vadd.f32 %v1343, %v2407
  %v2640 = vadd.f32 %v1344, %v2424
  %v2641 = vadd.f32 %v1345, %v2441
  %v2642 = vadd.f32 %v1346, %v2458
  %v2643 = vadd.f32 %v1347, %v2475
  %v2644 = vadd.f32 %v1348, %v2492
  %v2645 = vadd.f32 %v1349, %v2509
  %v2646 = vadd.f32 %v1350, %v2526
  %v2647 = vadd.f32 %v1351, %v2543
  %v2648 = vadd.f32 %v1352, %v2560
  %v2649 = vadd.f32 %v1353, %v2577
  %v2650 = vld [vmem:[%s3] sm:$0xff]
  %v2651 = vld [vmem:[%s3 + $0x8] sm:$0xff]
  %v2652 = vld [vmem:[%s3 + $0x10] sm:$0xff]
  %v2653 = vld [vmem:[%s3 + $0x18] sm:$0xff]
  %v2654 = vld [vmem:[%s3 + $0x20] sm:$0xff]
  %v2655 = vld [vmem:[%s3 + $0x28] sm:$0xff]
  %v2656 = vld [vmem:[%s3 + $0x30] sm:$0xff]
  %v2657 = vld [vmem:[%s3 + $0x38] sm:$0xff]
  %v2658 = vld [vmem:[%s3 + $0x40] sm:$0xff]
  %v2659 = vld [vmem:[%s3 + $0x48] sm:$0xff]
  %v2660 = vld [vmem:[%s3 + $0x50] sm:$0xff]
  %v2661 = vld [vmem:[%s3 + $0x58] sm:$0xff]
  %v2662 = vld [vmem:[%s3 + $0x60] sm:$0xff]
  %v2663 = vld [vmem:[%s3 + $0x68] sm:$0xff]
  %v2664 = vld [vmem:[%s3 + $0x70] sm:$0xff]
  %v2665 = vld [vmem:[%s3 + $0x78] sm:$0xff]
  %v2666 = vld [vmem:[%s3 + $0x80] sm:$0xff]
  %v2667 = vld [vmem:[%s3 + $0x88] sm:$0xff]
  %v2686 = vlaneseq
  %v2687 = vshrl.u32 %v2686, 7
  %v2688 = vsub.s32 0, %v2687
  %v2689 = vrot.slane %v2650, %v2688
  %v2690 = vlaneseq
  %v2691 = vshrl.u32 %v2690, 7
  %v2692 = vsub.s32 1, %v2691
  %v2693 = vrot.slane %v2650, %v2692
  %v2694 = vlaneseq
  %v2695 = vshrl.u32 %v2694, 7
  %v2696 = vsub.s32 2, %v2695
  %v2697 = vrot.slane %v2650, %v2696
  %v2698 = vlaneseq
  %v2699 = vshrl.u32 %v2698, 7
  %v2700 = vsub.s32 3, %v2699
  %v2701 = vrot.slane %v2650, %v2700
  %v2702 = vlaneseq
  %v2703 = vshrl.u32 %v2702, 7
  %v2704 = vsub.s32 4, %v2703
  %v2705 = vrot.slane %v2650, %v2704
  %v2706 = vlaneseq
  %v2707 = vshrl.u32 %v2706, 7
  %v2708 = vsub.s32 5, %v2707
  %v2709 = vrot.slane %v2650, %v2708
  %v2710 = vlaneseq
  %v2711 = vshrl.u32 %v2710, 7
  %v2712 = vsub.s32 6, %v2711
  %v2713 = vrot.slane %v2650, %v2712
  %v2714 = vlaneseq
  %v2715 = vshrl.u32 %v2714, 7
  %v2716 = vsub.s32 7, %v2715
  %v2717 = vrot.slane %v2650, %v2716
  %v2718 = vlaneseq
  %v2719 = vshrl.u32 %v2718, 7
  %v2720 = vsub.s32 0, %v2719
  %v2721 = vrot.slane %v2651, %v2720
  %v2722 = vlaneseq
  %v2723 = vshrl.u32 %v2722, 7
  %v2724 = vsub.s32 1, %v2723
  %v2725 = vrot.slane %v2651, %v2724
  %v2726 = vlaneseq
  %v2727 = vshrl.u32 %v2726, 7
  %v2728 = vsub.s32 2, %v2727
  %v2729 = vrot.slane %v2651, %v2728
  %v2730 = vlaneseq
  %v2731 = vshrl.u32 %v2730, 7
  %v2732 = vsub.s32 3, %v2731
  %v2733 = vrot.slane %v2651, %v2732
  %v2734 = vlaneseq
  %v2735 = vshrl.u32 %v2734, 7
  %v2736 = vsub.s32 4, %v2735
  %v2737 = vrot.slane %v2651, %v2736
  %v2738 = vlaneseq
  %v2739 = vshrl.u32 %v2738, 7
  %v2740 = vsub.s32 5, %v2739
  %v2741 = vrot.slane %v2651, %v2740
  %v2742 = vlaneseq
  %v2743 = vshrl.u32 %v2742, 7
  %v2744 = vsub.s32 6, %v2743
  %v2745 = vrot.slane %v2651, %v2744
  %v2746 = vlaneseq
  %v2747 = vshrl.u32 %v2746, 7
  %v2748 = vsub.s32 7, %v2747
  %v2749 = vrot.slane %v2651, %v2748
  %v2750 = vlaneseq
  %v2751 = vshrl.u32 %v2750, 7
  %v2752 = vsub.s32 0, %v2751
  %v2753 = vrot.slane %v2652, %v2752
  %v2754 = vlaneseq
  %v2755 = vshrl.u32 %v2754, 7
  %v2756 = vsub.s32 1, %v2755
  %v2757 = vrot.slane %v2652, %v2756
  %v2758 = vlaneseq
  %v2759 = vshrl.u32 %v2758, 7
  %v2760 = vsub.s32 2, %v2759
  %v2761 = vrot.slane %v2652, %v2760
  %v2762 = vlaneseq
  %v2763 = vshrl.u32 %v2762, 7
  %v2764 = vsub.s32 3, %v2763
  %v2765 = vrot.slane %v2652, %v2764
  %v2766 = vlaneseq
  %v2767 = vshrl.u32 %v2766, 7
  %v2768 = vsub.s32 4, %v2767
  %v2769 = vrot.slane %v2652, %v2768
  %v2770 = vlaneseq
  %v2771 = vshrl.u32 %v2770, 7
  %v2772 = vsub.s32 5, %v2771
  %v2773 = vrot.slane %v2652, %v2772
  %v2774 = vlaneseq
  %v2775 = vshrl.u32 %v2774, 7
  %v2776 = vsub.s32 6, %v2775
  %v2777 = vrot.slane %v2652, %v2776
  %v2778 = vlaneseq
  %v2779 = vshrl.u32 %v2778, 7
  %v2780 = vsub.s32 7, %v2779
  %v2781 = vrot.slane %v2652, %v2780
  %v2782 = vlaneseq
  %v2783 = vshrl.u32 %v2782, 7
  %v2784 = vsub.s32 0, %v2783
  %v2785 = vrot.slane %v2653, %v2784
  %v2786 = vlaneseq
  %v2787 = vshrl.u32 %v2786, 7
  %v2788 = vsub.s32 1, %v2787
  %v2789 = vrot.slane %v2653, %v2788
  %v2790 = vlaneseq
  %v2791 = vshrl.u32 %v2790, 7
  %v2792 = vsub.s32 2, %v2791
  %v2793 = vrot.slane %v2653, %v2792
  %v2794 = vlaneseq
  %v2795 = vshrl.u32 %v2794, 7
  %v2796 = vsub.s32 3, %v2795
  %v2797 = vrot.slane %v2653, %v2796
  %v2798 = vlaneseq
  %v2799 = vshrl.u32 %v2798, 7
  %v2800 = vsub.s32 4, %v2799
  %v2801 = vrot.slane %v2653, %v2800
  %v2802 = vlaneseq
  %v2803 = vshrl.u32 %v2802, 7
  %v2804 = vsub.s32 5, %v2803
  %v2805 = vrot.slane %v2653, %v2804
  %v2806 = vlaneseq
  %v2807 = vshrl.u32 %v2806, 7
  %v2808 = vsub.s32 6, %v2807
  %v2809 = vrot.slane %v2653, %v2808
  %v2810 = vlaneseq
  %v2811 = vshrl.u32 %v2810, 7
  %v2812 = vsub.s32 7, %v2811
  %v2813 = vrot.slane %v2653, %v2812
  %v2814 = vlaneseq
  %v2815 = vshrl.u32 %v2814, 7
  %v2816 = vsub.s32 0, %v2815
  %v2817 = vrot.slane %v2654, %v2816
  %v2818 = vlaneseq
  %v2819 = vshrl.u32 %v2818, 7
  %v2820 = vsub.s32 1, %v2819
  %v2821 = vrot.slane %v2654, %v2820
  %v2822 = vlaneseq
  %v2823 = vshrl.u32 %v2822, 7
  %v2824 = vsub.s32 2, %v2823
  %v2825 = vrot.slane %v2654, %v2824
  %v2826 = vlaneseq
  %v2827 = vshrl.u32 %v2826, 7
  %v2828 = vsub.s32 3, %v2827
  %v2829 = vrot.slane %v2654, %v2828
  %v2830 = vlaneseq
  %v2831 = vshrl.u32 %v2830, 7
  %v2832 = vsub.s32 4, %v2831
  %v2833 = vrot.slane %v2654, %v2832
  %v2834 = vlaneseq
  %v2835 = vshrl.u32 %v2834, 7
  %v2836 = vsub.s32 5, %v2835
  %v2837 = vrot.slane %v2654, %v2836
  %v2838 = vlaneseq
  %v2839 = vshrl.u32 %v2838, 7
  %v2840 = vsub.s32 6, %v2839
  %v2841 = vrot.slane %v2654, %v2840
  %v2842 = vlaneseq
  %v2843 = vshrl.u32 %v2842, 7
  %v2844 = vsub.s32 7, %v2843
  %v2845 = vrot.slane %v2654, %v2844
  %v2846 = vlaneseq
  %v2847 = vshrl.u32 %v2846, 7
  %v2848 = vsub.s32 0, %v2847
  %v2849 = vrot.slane %v2655, %v2848
  %v2850 = vlaneseq
  %v2851 = vshrl.u32 %v2850, 7
  %v2852 = vsub.s32 1, %v2851
  %v2853 = vrot.slane %v2655, %v2852
  %v2854 = vlaneseq
  %v2855 = vshrl.u32 %v2854, 7
  %v2856 = vsub.s32 2, %v2855
  %v2857 = vrot.slane %v2655, %v2856
  %v2858 = vlaneseq
  %v2859 = vshrl.u32 %v2858, 7
  %v2860 = vsub.s32 3, %v2859
  %v2861 = vrot.slane %v2655, %v2860
  %v2862 = vlaneseq
  %v2863 = vshrl.u32 %v2862, 7
  %v2864 = vsub.s32 4, %v2863
  %v2865 = vrot.slane %v2655, %v2864
  %v2866 = vlaneseq
  %v2867 = vshrl.u32 %v2866, 7
  %v2868 = vsub.s32 5, %v2867
  %v2869 = vrot.slane %v2655, %v2868
  %v2870 = vlaneseq
  %v2871 = vshrl.u32 %v2870, 7
  %v2872 = vsub.s32 6, %v2871
  %v2873 = vrot.slane %v2655, %v2872
  %v2874 = vlaneseq
  %v2875 = vshrl.u32 %v2874, 7
  %v2876 = vsub.s32 7, %v2875
  %v2877 = vrot.slane %v2655, %v2876
  %v2878 = vlaneseq
  %v2879 = vshrl.u32 %v2878, 7
  %v2880 = vsub.s32 0, %v2879
  %v2881 = vrot.slane %v2656, %v2880
  %v2882 = vlaneseq
  %v2883 = vshrl.u32 %v2882, 7
  %v2884 = vsub.s32 1, %v2883
  %v2885 = vrot.slane %v2656, %v2884
  %v2886 = vlaneseq
  %v2887 = vshrl.u32 %v2886, 7
  %v2888 = vsub.s32 2, %v2887
  %v2889 = vrot.slane %v2656, %v2888
  %v2890 = vlaneseq
  %v2891 = vshrl.u32 %v2890, 7
  %v2892 = vsub.s32 3, %v2891
  %v2893 = vrot.slane %v2656, %v2892
  %v2894 = vlaneseq
  %v2895 = vshrl.u32 %v2894, 7
  %v2896 = vsub.s32 4, %v2895
  %v2897 = vrot.slane %v2656, %v2896
  %v2898 = vlaneseq
  %v2899 = vshrl.u32 %v2898, 7
  %v2900 = vsub.s32 5, %v2899
  %v2901 = vrot.slane %v2656, %v2900
  %v2902 = vlaneseq
  %v2903 = vshrl.u32 %v2902, 7
  %v2904 = vsub.s32 6, %v2903
  %v2905 = vrot.slane %v2656, %v2904
  %v2906 = vlaneseq
  %v2907 = vshrl.u32 %v2906, 7
  %v2908 = vsub.s32 7, %v2907
  %v2909 = vrot.slane %v2656, %v2908
  %v2910 = vlaneseq
  %v2911 = vshrl.u32 %v2910, 7
  %v2912 = vsub.s32 0, %v2911
  %v2913 = vrot.slane %v2657, %v2912
  %v2914 = vlaneseq
  %v2915 = vshrl.u32 %v2914, 7
  %v2916 = vsub.s32 1, %v2915
  %v2917 = vrot.slane %v2657, %v2916
  %v2918 = vlaneseq
  %v2919 = vshrl.u32 %v2918, 7
  %v2920 = vsub.s32 2, %v2919
  %v2921 = vrot.slane %v2657, %v2920
  %v2922 = vlaneseq
  %v2923 = vshrl.u32 %v2922, 7
  %v2924 = vsub.s32 3, %v2923
  %v2925 = vrot.slane %v2657, %v2924
  %v2926 = vlaneseq
  %v2927 = vshrl.u32 %v2926, 7
  %v2928 = vsub.s32 4, %v2927
  %v2929 = vrot.slane %v2657, %v2928
  %v2930 = vlaneseq
  %v2931 = vshrl.u32 %v2930, 7
  %v2932 = vsub.s32 5, %v2931
  %v2933 = vrot.slane %v2657, %v2932
  %v2934 = vlaneseq
  %v2935 = vshrl.u32 %v2934, 7
  %v2936 = vsub.s32 6, %v2935
  %v2937 = vrot.slane %v2657, %v2936
  %v2938 = vlaneseq
  %v2939 = vshrl.u32 %v2938, 7
  %v2940 = vsub.s32 7, %v2939
  %v2941 = vrot.slane %v2657, %v2940
  %v2942 = vlaneseq
  %v2943 = vshrl.u32 %v2942, 7
  %v2944 = vsub.s32 0, %v2943
  %v2945 = vrot.slane %v2658, %v2944
  %v2946 = vlaneseq
  %v2947 = vshrl.u32 %v2946, 7
  %v2948 = vsub.s32 1, %v2947
  %v2949 = vrot.slane %v2658, %v2948
  %v2950 = vlaneseq
  %v2951 = vshrl.u32 %v2950, 7
  %v2952 = vsub.s32 2, %v2951
  %v2953 = vrot.slane %v2658, %v2952
  %v2954 = vlaneseq
  %v2955 = vshrl.u32 %v2954, 7
  %v2956 = vsub.s32 3, %v2955
  %v2957 = vrot.slane %v2658, %v2956
  %v2958 = vlaneseq
  %v2959 = vshrl.u32 %v2958, 7
  %v2960 = vsub.s32 4, %v2959
  %v2961 = vrot.slane %v2658, %v2960
  %v2962 = vlaneseq
  %v2963 = vshrl.u32 %v2962, 7
  %v2964 = vsub.s32 5, %v2963
  %v2965 = vrot.slane %v2658, %v2964
  %v2966 = vlaneseq
  %v2967 = vshrl.u32 %v2966, 7
  %v2968 = vsub.s32 6, %v2967
  %v2969 = vrot.slane %v2658, %v2968
  %v2970 = vlaneseq
  %v2971 = vshrl.u32 %v2970, 7
  %v2972 = vsub.s32 7, %v2971
  %v2973 = vrot.slane %v2658, %v2972
  %v2974 = vlaneseq
  %v2975 = vshrl.u32 %v2974, 7
  %v2976 = vsub.s32 0, %v2975
  %v2977 = vrot.slane %v2659, %v2976
  %v2978 = vlaneseq
  %v2979 = vshrl.u32 %v2978, 7
  %v2980 = vsub.s32 1, %v2979
  %v2981 = vrot.slane %v2659, %v2980
  %v2982 = vlaneseq
  %v2983 = vshrl.u32 %v2982, 7
  %v2984 = vsub.s32 2, %v2983
  %v2985 = vrot.slane %v2659, %v2984
  %v2986 = vlaneseq
  %v2987 = vshrl.u32 %v2986, 7
  %v2988 = vsub.s32 3, %v2987
  %v2989 = vrot.slane %v2659, %v2988
  %v2990 = vlaneseq
  %v2991 = vshrl.u32 %v2990, 7
  %v2992 = vsub.s32 4, %v2991
  %v2993 = vrot.slane %v2659, %v2992
  %v2994 = vlaneseq
  %v2995 = vshrl.u32 %v2994, 7
  %v2996 = vsub.s32 5, %v2995
  %v2997 = vrot.slane %v2659, %v2996
  %v2998 = vlaneseq
  %v2999 = vshrl.u32 %v2998, 7
  %v3000 = vsub.s32 6, %v2999
  %v3001 = vrot.slane %v2659, %v3000
  %v3002 = vlaneseq
  %v3003 = vshrl.u32 %v3002, 7
  %v3004 = vsub.s32 7, %v3003
  %v3005 = vrot.slane %v2659, %v3004
  %v3006 = vlaneseq
  %v3007 = vshrl.u32 %v3006, 7
  %v3008 = vsub.s32 0, %v3007
  %v3009 = vrot.slane %v2660, %v3008
  %v3010 = vlaneseq
  %v3011 = vshrl.u32 %v3010, 7
  %v3012 = vsub.s32 1, %v3011
  %v3013 = vrot.slane %v2660, %v3012
  %v3014 = vlaneseq
  %v3015 = vshrl.u32 %v3014, 7
  %v3016 = vsub.s32 2, %v3015
  %v3017 = vrot.slane %v2660, %v3016
  %v3018 = vlaneseq
  %v3019 = vshrl.u32 %v3018, 7
  %v3020 = vsub.s32 3, %v3019
  %v3021 = vrot.slane %v2660, %v3020
  %v3022 = vlaneseq
  %v3023 = vshrl.u32 %v3022, 7
  %v3024 = vsub.s32 4, %v3023
  %v3025 = vrot.slane %v2660, %v3024
  %v3026 = vlaneseq
  %v3027 = vshrl.u32 %v3026, 7
  %v3028 = vsub.s32 5, %v3027
  %v3029 = vrot.slane %v2660, %v3028
  %v3030 = vlaneseq
  %v3031 = vshrl.u32 %v3030, 7
  %v3032 = vsub.s32 6, %v3031
  %v3033 = vrot.slane %v2660, %v3032
  %v3034 = vlaneseq
  %v3035 = vshrl.u32 %v3034, 7
  %v3036 = vsub.s32 7, %v3035
  %v3037 = vrot.slane %v2660, %v3036
  %v3038 = vlaneseq
  %v3039 = vshrl.u32 %v3038, 7
  %v3040 = vsub.s32 0, %v3039
  %v3041 = vrot.slane %v2661, %v3040
  %v3042 = vlaneseq
  %v3043 = vshrl.u32 %v3042, 7
  %v3044 = vsub.s32 1, %v3043
  %v3045 = vrot.slane %v2661, %v3044
  %v3046 = vlaneseq
  %v3047 = vshrl.u32 %v3046, 7
  %v3048 = vsub.s32 2, %v3047
  %v3049 = vrot.slane %v2661, %v3048
  %v3050 = vlaneseq
  %v3051 = vshrl.u32 %v3050, 7
  %v3052 = vsub.s32 3, %v3051
  %v3053 = vrot.slane %v2661, %v3052
  %v3054 = vlaneseq
  %v3055 = vshrl.u32 %v3054, 7
  %v3056 = vsub.s32 4, %v3055
  %v3057 = vrot.slane %v2661, %v3056
  %v3058 = vlaneseq
  %v3059 = vshrl.u32 %v3058, 7
  %v3060 = vsub.s32 5, %v3059
  %v3061 = vrot.slane %v2661, %v3060
  %v3062 = vlaneseq
  %v3063 = vshrl.u32 %v3062, 7
  %v3064 = vsub.s32 6, %v3063
  %v3065 = vrot.slane %v2661, %v3064
  %v3066 = vlaneseq
  %v3067 = vshrl.u32 %v3066, 7
  %v3068 = vsub.s32 7, %v3067
  %v3069 = vrot.slane %v2661, %v3068
  %v3070 = vlaneseq
  %v3071 = vshrl.u32 %v3070, 7
  %v3072 = vsub.s32 0, %v3071
  %v3073 = vrot.slane %v2662, %v3072
  %v3074 = vlaneseq
  %v3075 = vshrl.u32 %v3074, 7
  %v3076 = vsub.s32 1, %v3075
  %v3077 = vrot.slane %v2662, %v3076
  %v3078 = vlaneseq
  %v3079 = vshrl.u32 %v3078, 7
  %v3080 = vsub.s32 2, %v3079
  %v3081 = vrot.slane %v2662, %v3080
  %v3082 = vlaneseq
  %v3083 = vshrl.u32 %v3082, 7
  %v3084 = vsub.s32 3, %v3083
  %v3085 = vrot.slane %v2662, %v3084
  %v3086 = vlaneseq
  %v3087 = vshrl.u32 %v3086, 7
  %v3088 = vsub.s32 4, %v3087
  %v3089 = vrot.slane %v2662, %v3088
  %v3090 = vlaneseq
  %v3091 = vshrl.u32 %v3090, 7
  %v3092 = vsub.s32 5, %v3091
  %v3093 = vrot.slane %v2662, %v3092
  %v3094 = vlaneseq
  %v3095 = vshrl.u32 %v3094, 7
  %v3096 = vsub.s32 6, %v3095
  %v3097 = vrot.slane %v2662, %v3096
  %v3098 = vlaneseq
  %v3099 = vshrl.u32 %v3098, 7
  %v3100 = vsub.s32 7, %v3099
  %v3101 = vrot.slane %v2662, %v3100
  %v3102 = vlaneseq
  %v3103 = vshrl.u32 %v3102, 7
  %v3104 = vsub.s32 0, %v3103
  %v3105 = vrot.slane %v2663, %v3104
  %v3106 = vlaneseq
  %v3107 = vshrl.u32 %v3106, 7
  %v3108 = vsub.s32 1, %v3107
  %v3109 = vrot.slane %v2663, %v3108
  %v3110 = vlaneseq
  %v3111 = vshrl.u32 %v3110, 7
  %v3112 = vsub.s32 2, %v3111
  %v3113 = vrot.slane %v2663, %v3112
  %v3114 = vlaneseq
  %v3115 = vshrl.u32 %v3114, 7
  %v3116 = vsub.s32 3, %v3115
  %v3117 = vrot.slane %v2663, %v3116
  %v3118 = vlaneseq
  %v3119 = vshrl.u32 %v3118, 7
  %v3120 = vsub.s32 4, %v3119
  %v3121 = vrot.slane %v2663, %v3120
  %v3122 = vlaneseq
  %v3123 = vshrl.u32 %v3122, 7
  %v3124 = vsub.s32 5, %v3123
  %v3125 = vrot.slane %v2663, %v3124
  %v3126 = vlaneseq
  %v3127 = vshrl.u32 %v3126, 7
  %v3128 = vsub.s32 6, %v3127
  %v3129 = vrot.slane %v2663, %v3128
  %v3130 = vlaneseq
  %v3131 = vshrl.u32 %v3130, 7
  %v3132 = vsub.s32 7, %v3131
  %v3133 = vrot.slane %v2663, %v3132
  %v3134 = vlaneseq
  %v3135 = vshrl.u32 %v3134, 7
  %v3136 = vsub.s32 0, %v3135
  %v3137 = vrot.slane %v2664, %v3136
  %v3138 = vlaneseq
  %v3139 = vshrl.u32 %v3138, 7
  %v3140 = vsub.s32 1, %v3139
  %v3141 = vrot.slane %v2664, %v3140
  %v3142 = vlaneseq
  %v3143 = vshrl.u32 %v3142, 7
  %v3144 = vsub.s32 2, %v3143
  %v3145 = vrot.slane %v2664, %v3144
  %v3146 = vlaneseq
  %v3147 = vshrl.u32 %v3146, 7
  %v3148 = vsub.s32 3, %v3147
  %v3149 = vrot.slane %v2664, %v3148
  %v3150 = vlaneseq
  %v3151 = vshrl.u32 %v3150, 7
  %v3152 = vsub.s32 4, %v3151
  %v3153 = vrot.slane %v2664, %v3152
  %v3154 = vlaneseq
  %v3155 = vshrl.u32 %v3154, 7
  %v3156 = vsub.s32 5, %v3155
  %v3157 = vrot.slane %v2664, %v3156
  %v3158 = vlaneseq
  %v3159 = vshrl.u32 %v3158, 7
  %v3160 = vsub.s32 6, %v3159
  %v3161 = vrot.slane %v2664, %v3160
  %v3162 = vlaneseq
  %v3163 = vshrl.u32 %v3162, 7
  %v3164 = vsub.s32 7, %v3163
  %v3165 = vrot.slane %v2664, %v3164
  %v3166 = vlaneseq
  %v3167 = vshrl.u32 %v3166, 7
  %v3168 = vsub.s32 0, %v3167
  %v3169 = vrot.slane %v2665, %v3168
  %v3170 = vlaneseq
  %v3171 = vshrl.u32 %v3170, 7
  %v3172 = vsub.s32 1, %v3171
  %v3173 = vrot.slane %v2665, %v3172
  %v3174 = vlaneseq
  %v3175 = vshrl.u32 %v3174, 7
  %v3176 = vsub.s32 2, %v3175
  %v3177 = vrot.slane %v2665, %v3176
  %v3178 = vlaneseq
  %v3179 = vshrl.u32 %v3178, 7
  %v3180 = vsub.s32 3, %v3179
  %v3181 = vrot.slane %v2665, %v3180
  %v3182 = vlaneseq
  %v3183 = vshrl.u32 %v3182, 7
  %v3184 = vsub.s32 4, %v3183
  %v3185 = vrot.slane %v2665, %v3184
  %v3186 = vlaneseq
  %v3187 = vshrl.u32 %v3186, 7
  %v3188 = vsub.s32 5, %v3187
  %v3189 = vrot.slane %v2665, %v3188
  %v3190 = vlaneseq
  %v3191 = vshrl.u32 %v3190, 7
  %v3192 = vsub.s32 6, %v3191
  %v3193 = vrot.slane %v2665, %v3192
  %v3194 = vlaneseq
  %v3195 = vshrl.u32 %v3194, 7
  %v3196 = vsub.s32 7, %v3195
  %v3197 = vrot.slane %v2665, %v3196
  %v3198 = vlaneseq
  %v3199 = vshrl.u32 %v3198, 7
  %v3200 = vsub.s32 0, %v3199
  %v3201 = vrot.slane %v2666, %v3200
  %v3202 = vlaneseq
  %v3203 = vshrl.u32 %v3202, 7
  %v3204 = vsub.s32 1, %v3203
  %v3205 = vrot.slane %v2666, %v3204
  %v3206 = vlaneseq
  %v3207 = vshrl.u32 %v3206, 7
  %v3208 = vsub.s32 2, %v3207
  %v3209 = vrot.slane %v2666, %v3208
  %v3210 = vlaneseq
  %v3211 = vshrl.u32 %v3210, 7
  %v3212 = vsub.s32 3, %v3211
  %v3213 = vrot.slane %v2666, %v3212
  %v3214 = vlaneseq
  %v3215 = vshrl.u32 %v3214, 7
  %v3216 = vsub.s32 4, %v3215
  %v3217 = vrot.slane %v2666, %v3216
  %v3218 = vlaneseq
  %v3219 = vshrl.u32 %v3218, 7
  %v3220 = vsub.s32 5, %v3219
  %v3221 = vrot.slane %v2666, %v3220
  %v3222 = vlaneseq
  %v3223 = vshrl.u32 %v3222, 7
  %v3224 = vsub.s32 6, %v3223
  %v3225 = vrot.slane %v2666, %v3224
  %v3226 = vlaneseq
  %v3227 = vshrl.u32 %v3226, 7
  %v3228 = vsub.s32 7, %v3227
  %v3229 = vrot.slane %v2666, %v3228
  %v3230 = vlaneseq
  %v3231 = vshrl.u32 %v3230, 7
  %v3232 = vsub.s32 0, %v3231
  %v3233 = vrot.slane %v2667, %v3232
  %v3234 = vlaneseq
  %v3235 = vshrl.u32 %v3234, 7
  %v3236 = vsub.s32 1, %v3235
  %v3237 = vrot.slane %v2667, %v3236
  %v3238 = vlaneseq
  %v3239 = vshrl.u32 %v3238, 7
  %v3240 = vsub.s32 2, %v3239
  %v3241 = vrot.slane %v2667, %v3240
  %v3242 = vlaneseq
  %v3243 = vshrl.u32 %v3242, 7
  %v3244 = vsub.s32 3, %v3243
  %v3245 = vrot.slane %v2667, %v3244
  %v3246 = vlaneseq
  %v3247 = vshrl.u32 %v3246, 7
  %v3248 = vsub.s32 4, %v3247
  %v3249 = vrot.slane %v2667, %v3248
  %v3250 = vlaneseq
  %v3251 = vshrl.u32 %v3250, 7
  %v3252 = vsub.s32 5, %v3251
  %v3253 = vrot.slane %v2667, %v3252
  %v3254 = vlaneseq
  %v3255 = vshrl.u32 %v3254, 7
  %v3256 = vsub.s32 6, %v3255
  %v3257 = vrot.slane %v2667, %v3256
  %v3258 = vlaneseq
  %v3259 = vshrl.u32 %v3258, 7
  %v3260 = vsub.s32 7, %v3259
  %v3261 = vrot.slane %v2667, %v3260
  %v3262 = vcombine.low %v2689, %v2693
  %v3263 = vcombine.low %v2697, %v2701
  %v3265 = vunpack.c.l.s4 1983009808
  %v3266 = vunpack.c.0.s8 %v3265
  %v3267 = vlaneseq
  %v3268 = vshrl.u32 %v3267, 7
  %v3269 = vsub.s32 %v3266, %v3268
  %v3270 = vrot.slane %v3262, %v3269
  %v3272 = vunpack.c.l.s4 1983009808
  %v3273 = vunpack.c.0.s8 %v3272
  %v3274 = vlaneseq
  %v3275 = vshrl.u32 %v3274, 7
  %v3276 = vsub.s32 %v3273, %v3275
  %v3277 = vrot.slane %v3263, %v3276
  %v3278 = vcombine.low %v3270, %v3277
  %v3279 = vcombine.low %v2705, %v2709
  %v3280 = vcombine.low %v2713, %v2717
  %v3282 = vunpack.c.l.s4 1983009808
  %v3283 = vunpack.c.0.s8 %v3282
  %v3284 = vlaneseq
  %v3285 = vshrl.u32 %v3284, 7
  %v3286 = vsub.s32 %v3283, %v3285
  %v3287 = vrot.slane %v3279, %v3286
  %v3289 = vunpack.c.l.s4 1983009808
  %v3290 = vunpack.c.0.s8 %v3289
  %v3291 = vlaneseq
  %v3292 = vshrl.u32 %v3291, 7
  %v3293 = vsub.s32 %v3290, %v3292
  %v3294 = vrot.slane %v3280, %v3293
  %v3295 = vcombine.low %v3287, %v3294
  %v3296 = vcombine.low %v2721, %v2725
  %v3297 = vcombine.low %v2729, %v2733
  %v3299 = vunpack.c.l.s4 1983009808
  %v3300 = vunpack.c.0.s8 %v3299
  %v3301 = vlaneseq
  %v3302 = vshrl.u32 %v3301, 7
  %v3303 = vsub.s32 %v3300, %v3302
  %v3304 = vrot.slane %v3296, %v3303
  %v3306 = vunpack.c.l.s4 1983009808
  %v3307 = vunpack.c.0.s8 %v3306
  %v3308 = vlaneseq
  %v3309 = vshrl.u32 %v3308, 7
  %v3310 = vsub.s32 %v3307, %v3309
  %v3311 = vrot.slane %v3297, %v3310
  %v3312 = vcombine.low %v3304, %v3311
  %v3313 = vcombine.low %v2737, %v2741
  %v3314 = vcombine.low %v2745, %v2749
  %v3316 = vunpack.c.l.s4 1983009808
  %v3317 = vunpack.c.0.s8 %v3316
  %v3318 = vlaneseq
  %v3319 = vshrl.u32 %v3318, 7
  %v3320 = vsub.s32 %v3317, %v3319
  %v3321 = vrot.slane %v3313, %v3320
  %v3323 = vunpack.c.l.s4 1983009808
  %v3324 = vunpack.c.0.s8 %v3323
  %v3325 = vlaneseq
  %v3326 = vshrl.u32 %v3325, 7
  %v3327 = vsub.s32 %v3324, %v3326
  %v3328 = vrot.slane %v3314, %v3327
  %v3329 = vcombine.low %v3321, %v3328
  %v3330 = vcombine.low %v2753, %v2757
  %v3331 = vcombine.low %v2761, %v2765
  %v3333 = vunpack.c.l.s4 1983009808
  %v3334 = vunpack.c.0.s8 %v3333
  %v3335 = vlaneseq
  %v3336 = vshrl.u32 %v3335, 7
  %v3337 = vsub.s32 %v3334, %v3336
  %v3338 = vrot.slane %v3330, %v3337
  %v3340 = vunpack.c.l.s4 1983009808
  %v3341 = vunpack.c.0.s8 %v3340
  %v3342 = vlaneseq
  %v3343 = vshrl.u32 %v3342, 7
  %v3344 = vsub.s32 %v3341, %v3343
  %v3345 = vrot.slane %v3331, %v3344
  %v3346 = vcombine.low %v3338, %v3345
  %v3347 = vcombine.low %v2769, %v2773
  %v3348 = vcombine.low %v2777, %v2781
  %v3350 = vunpack.c.l.s4 1983009808
  %v3351 = vunpack.c.0.s8 %v3350
  %v3352 = vlaneseq
  %v3353 = vshrl.u32 %v3352, 7
  %v3354 = vsub.s32 %v3351, %v3353
  %v3355 = vrot.slane %v3347, %v3354
  %v3357 = vunpack.c.l.s4 1983009808
  %v3358 = vunpack.c.0.s8 %v3357
  %v3359 = vlaneseq
  %v3360 = vshrl.u32 %v3359, 7
  %v3361 = vsub.s32 %v3358, %v3360
  %v3362 = vrot.slane %v3348, %v3361
  %v3363 = vcombine.low %v3355, %v3362
  %v3364 = vcombine.low %v2785, %v2789
  %v3365 = vcombine.low %v2793, %v2797
  %v3367 = vunpack.c.l.s4 1983009808
  %v3368 = vunpack.c.0.s8 %v3367
  %v3369 = vlaneseq
  %v3370 = vshrl.u32 %v3369, 7
  %v3371 = vsub.s32 %v3368, %v3370
  %v3372 = vrot.slane %v3364, %v3371
  %v3374 = vunpack.c.l.s4 1983009808
  %v3375 = vunpack.c.0.s8 %v3374
  %v3376 = vlaneseq
  %v3377 = vshrl.u32 %v3376, 7
  %v3378 = vsub.s32 %v3375, %v3377
  %v3379 = vrot.slane %v3365, %v3378
  %v3380 = vcombine.low %v3372, %v3379
  %v3381 = vcombine.low %v2801, %v2805
  %v3382 = vcombine.low %v2809, %v2813
  %v3384 = vunpack.c.l.s4 1983009808
  %v3385 = vunpack.c.0.s8 %v3384
  %v3386 = vlaneseq
  %v3387 = vshrl.u32 %v3386, 7
  %v3388 = vsub.s32 %v3385, %v3387
  %v3389 = vrot.slane %v3381, %v3388
  %v3391 = vunpack.c.l.s4 1983009808
  %v3392 = vunpack.c.0.s8 %v3391
  %v3393 = vlaneseq
  %v3394 = vshrl.u32 %v3393, 7
  %v3395 = vsub.s32 %v3392, %v3394
  %v3396 = vrot.slane %v3382, %v3395
  %v3397 = vcombine.low %v3389, %v3396
  %v3398 = vcombine.low %v2817, %v2821
  %v3399 = vcombine.low %v2825, %v2829
  %v3401 = vunpack.c.l.s4 1983009808
  %v3402 = vunpack.c.0.s8 %v3401
  %v3403 = vlaneseq
  %v3404 = vshrl.u32 %v3403, 7
  %v3405 = vsub.s32 %v3402, %v3404
  %v3406 = vrot.slane %v3398, %v3405
  %v3408 = vunpack.c.l.s4 1983009808
  %v3409 = vunpack.c.0.s8 %v3408
  %v3410 = vlaneseq
  %v3411 = vshrl.u32 %v3410, 7
  %v3412 = vsub.s32 %v3409, %v3411
  %v3413 = vrot.slane %v3399, %v3412
  %v3414 = vcombine.low %v3406, %v3413
  %v3415 = vcombine.low %v2833, %v2837
  %v3416 = vcombine.low %v2841, %v2845
  %v3418 = vunpack.c.l.s4 1983009808
  %v3419 = vunpack.c.0.s8 %v3418
  %v3420 = vlaneseq
  %v3421 = vshrl.u32 %v3420, 7
  %v3422 = vsub.s32 %v3419, %v3421
  %v3423 = vrot.slane %v3415, %v3422
  %v3425 = vunpack.c.l.s4 1983009808
  %v3426 = vunpack.c.0.s8 %v3425
  %v3427 = vlaneseq
  %v3428 = vshrl.u32 %v3427, 7
  %v3429 = vsub.s32 %v3426, %v3428
  %v3430 = vrot.slane %v3416, %v3429
  %v3431 = vcombine.low %v3423, %v3430
  %v3432 = vcombine.low %v2849, %v2853
  %v3433 = vcombine.low %v2857, %v2861
  %v3435 = vunpack.c.l.s4 1983009808
  %v3436 = vunpack.c.0.s8 %v3435
  %v3437 = vlaneseq
  %v3438 = vshrl.u32 %v3437, 7
  %v3439 = vsub.s32 %v3436, %v3438
  %v3440 = vrot.slane %v3432, %v3439
  %v3442 = vunpack.c.l.s4 1983009808
  %v3443 = vunpack.c.0.s8 %v3442
  %v3444 = vlaneseq
  %v3445 = vshrl.u32 %v3444, 7
  %v3446 = vsub.s32 %v3443, %v3445
  %v3447 = vrot.slane %v3433, %v3446
  %v3448 = vcombine.low %v3440, %v3447
  %v3449 = vcombine.low %v2865, %v2869
  %v3450 = vcombine.low %v2873, %v2877
  %v3452 = vunpack.c.l.s4 1983009808
  %v3453 = vunpack.c.0.s8 %v3452
  %v3454 = vlaneseq
  %v3455 = vshrl.u32 %v3454, 7
  %v3456 = vsub.s32 %v3453, %v3455
  %v3457 = vrot.slane %v3449, %v3456
  %v3459 = vunpack.c.l.s4 1983009808
  %v3460 = vunpack.c.0.s8 %v3459
  %v3461 = vlaneseq
  %v3462 = vshrl.u32 %v3461, 7
  %v3463 = vsub.s32 %v3460, %v3462
  %v3464 = vrot.slane %v3450, %v3463
  %v3465 = vcombine.low %v3457, %v3464
  %v3466 = vcombine.low %v2881, %v2885
  %v3467 = vcombine.low %v2889, %v2893
  %v3469 = vunpack.c.l.s4 1983009808
  %v3470 = vunpack.c.0.s8 %v3469
  %v3471 = vlaneseq
  %v3472 = vshrl.u32 %v3471, 7
  %v3473 = vsub.s32 %v3470, %v3472
  %v3474 = vrot.slane %v3466, %v3473
  %v3476 = vunpack.c.l.s4 1983009808
  %v3477 = vunpack.c.0.s8 %v3476
  %v3478 = vlaneseq
  %v3479 = vshrl.u32 %v3478, 7
  %v3480 = vsub.s32 %v3477, %v3479
  %v3481 = vrot.slane %v3467, %v3480
  %v3482 = vcombine.low %v3474, %v3481
  %v3483 = vcombine.low %v2897, %v2901
  %v3484 = vcombine.low %v2905, %v2909
  %v3486 = vunpack.c.l.s4 1983009808
  %v3487 = vunpack.c.0.s8 %v3486
  %v3488 = vlaneseq
  %v3489 = vshrl.u32 %v3488, 7
  %v3490 = vsub.s32 %v3487, %v3489
  %v3491 = vrot.slane %v3483, %v3490
  %v3493 = vunpack.c.l.s4 1983009808
  %v3494 = vunpack.c.0.s8 %v3493
  %v3495 = vlaneseq
  %v3496 = vshrl.u32 %v3495, 7
  %v3497 = vsub.s32 %v3494, %v3496
  %v3498 = vrot.slane %v3484, %v3497
  %v3499 = vcombine.low %v3491, %v3498
  %v3500 = vcombine.low %v2913, %v2917
  %v3501 = vcombine.low %v2921, %v2925
  %v3503 = vunpack.c.l.s4 1983009808
  %v3504 = vunpack.c.0.s8 %v3503
  %v3505 = vlaneseq
  %v3506 = vshrl.u32 %v3505, 7
  %v3507 = vsub.s32 %v3504, %v3506
  %v3508 = vrot.slane %v3500, %v3507
  %v3510 = vunpack.c.l.s4 1983009808
  %v3511 = vunpack.c.0.s8 %v3510
  %v3512 = vlaneseq
  %v3513 = vshrl.u32 %v3512, 7
  %v3514 = vsub.s32 %v3511, %v3513
  %v3515 = vrot.slane %v3501, %v3514
  %v3516 = vcombine.low %v3508, %v3515
  %v3517 = vcombine.low %v2929, %v2933
  %v3518 = vcombine.low %v2937, %v2941
  %v3520 = vunpack.c.l.s4 1983009808
  %v3521 = vunpack.c.0.s8 %v3520
  %v3522 = vlaneseq
  %v3523 = vshrl.u32 %v3522, 7
  %v3524 = vsub.s32 %v3521, %v3523
  %v3525 = vrot.slane %v3517, %v3524
  %v3527 = vunpack.c.l.s4 1983009808
  %v3528 = vunpack.c.0.s8 %v3527
  %v3529 = vlaneseq
  %v3530 = vshrl.u32 %v3529, 7
  %v3531 = vsub.s32 %v3528, %v3530
  %v3532 = vrot.slane %v3518, %v3531
  %v3533 = vcombine.low %v3525, %v3532
  %v3534 = vcombine.low %v2945, %v2949
  %v3535 = vcombine.low %v2953, %v2957
  %v3537 = vunpack.c.l.s4 1983009808
  %v3538 = vunpack.c.0.s8 %v3537
  %v3539 = vlaneseq
  %v3540 = vshrl.u32 %v3539, 7
  %v3541 = vsub.s32 %v3538, %v3540
  %v3542 = vrot.slane %v3534, %v3541
  %v3544 = vunpack.c.l.s4 1983009808
  %v3545 = vunpack.c.0.s8 %v3544
  %v3546 = vlaneseq
  %v3547 = vshrl.u32 %v3546, 7
  %v3548 = vsub.s32 %v3545, %v3547
  %v3549 = vrot.slane %v3535, %v3548
  %v3550 = vcombine.low %v3542, %v3549
  %v3551 = vcombine.low %v2961, %v2965
  %v3552 = vcombine.low %v2969, %v2973
  %v3554 = vunpack.c.l.s4 1983009808
  %v3555 = vunpack.c.0.s8 %v3554
  %v3556 = vlaneseq
  %v3557 = vshrl.u32 %v3556, 7
  %v3558 = vsub.s32 %v3555, %v3557
  %v3559 = vrot.slane %v3551, %v3558
  %v3561 = vunpack.c.l.s4 1983009808
  %v3562 = vunpack.c.0.s8 %v3561
  %v3563 = vlaneseq
  %v3564 = vshrl.u32 %v3563, 7
  %v3565 = vsub.s32 %v3562, %v3564
  %v3566 = vrot.slane %v3552, %v3565
  %v3567 = vcombine.low %v3559, %v3566
  %v3568 = vcombine.low %v2977, %v2981
  %v3569 = vcombine.low %v2985, %v2989
  %v3571 = vunpack.c.l.s4 1983009808
  %v3572 = vunpack.c.0.s8 %v3571
  %v3573 = vlaneseq
  %v3574 = vshrl.u32 %v3573, 7
  %v3575 = vsub.s32 %v3572, %v3574
  %v3576 = vrot.slane %v3568, %v3575
  %v3578 = vunpack.c.l.s4 1983009808
  %v3579 = vunpack.c.0.s8 %v3578
  %v3580 = vlaneseq
  %v3581 = vshrl.u32 %v3580, 7
  %v3582 = vsub.s32 %v3579, %v3581
  %v3583 = vrot.slane %v3569, %v3582
  %v3584 = vcombine.low %v3576, %v3583
  %v3585 = vcombine.low %v2993, %v2997
  %v3586 = vcombine.low %v3001, %v3005
  %v3588 = vunpack.c.l.s4 1983009808
  %v3589 = vunpack.c.0.s8 %v3588
  %v3590 = vlaneseq
  %v3591 = vshrl.u32 %v3590, 7
  %v3592 = vsub.s32 %v3589, %v3591
  %v3593 = vrot.slane %v3585, %v3592
  %v3595 = vunpack.c.l.s4 1983009808
  %v3596 = vunpack.c.0.s8 %v3595
  %v3597 = vlaneseq
  %v3598 = vshrl.u32 %v3597, 7
  %v3599 = vsub.s32 %v3596, %v3598
  %v3600 = vrot.slane %v3586, %v3599
  %v3601 = vcombine.low %v3593, %v3600
  %v3602 = vcombine.low %v3009, %v3013
  %v3603 = vcombine.low %v3017, %v3021
  %v3605 = vunpack.c.l.s4 1983009808
  %v3606 = vunpack.c.0.s8 %v3605
  %v3607 = vlaneseq
  %v3608 = vshrl.u32 %v3607, 7
  %v3609 = vsub.s32 %v3606, %v3608
  %v3610 = vrot.slane %v3602, %v3609
  %v3612 = vunpack.c.l.s4 1983009808
  %v3613 = vunpack.c.0.s8 %v3612
  %v3614 = vlaneseq
  %v3615 = vshrl.u32 %v3614, 7
  %v3616 = vsub.s32 %v3613, %v3615
  %v3617 = vrot.slane %v3603, %v3616
  %v3618 = vcombine.low %v3610, %v3617
  %v3619 = vcombine.low %v3025, %v3029
  %v3620 = vcombine.low %v3033, %v3037
  %v3622 = vunpack.c.l.s4 1983009808
  %v3623 = vunpack.c.0.s8 %v3622
  %v3624 = vlaneseq
  %v3625 = vshrl.u32 %v3624, 7
  %v3626 = vsub.s32 %v3623, %v3625
  %v3627 = vrot.slane %v3619, %v3626
  %v3629 = vunpack.c.l.s4 1983009808
  %v3630 = vunpack.c.0.s8 %v3629
  %v3631 = vlaneseq
  %v3632 = vshrl.u32 %v3631, 7
  %v3633 = vsub.s32 %v3630, %v3632
  %v3634 = vrot.slane %v3620, %v3633
  %v3635 = vcombine.low %v3627, %v3634
  %v3636 = vcombine.low %v3041, %v3045
  %v3637 = vcombine.low %v3049, %v3053
  %v3639 = vunpack.c.l.s4 1983009808
  %v3640 = vunpack.c.0.s8 %v3639
  %v3641 = vlaneseq
  %v3642 = vshrl.u32 %v3641, 7
  %v3643 = vsub.s32 %v3640, %v3642
  %v3644 = vrot.slane %v3636, %v3643
  %v3646 = vunpack.c.l.s4 1983009808
  %v3647 = vunpack.c.0.s8 %v3646
  %v3648 = vlaneseq
  %v3649 = vshrl.u32 %v3648, 7
  %v3650 = vsub.s32 %v3647, %v3649
  %v3651 = vrot.slane %v3637, %v3650
  %v3652 = vcombine.low %v3644, %v3651
  %v3653 = vcombine.low %v3057, %v3061
  %v3654 = vcombine.low %v3065, %v3069
  %v3656 = vunpack.c.l.s4 1983009808
  %v3657 = vunpack.c.0.s8 %v3656
  %v3658 = vlaneseq
  %v3659 = vshrl.u32 %v3658, 7
  %v3660 = vsub.s32 %v3657, %v3659
  %v3661 = vrot.slane %v3653, %v3660
  %v3663 = vunpack.c.l.s4 1983009808
  %v3664 = vunpack.c.0.s8 %v3663
  %v3665 = vlaneseq
  %v3666 = vshrl.u32 %v3665, 7
  %v3667 = vsub.s32 %v3664, %v3666
  %v3668 = vrot.slane %v3654, %v3667
  %v3669 = vcombine.low %v3661, %v3668
  %v3670 = vcombine.low %v3073, %v3077
  %v3671 = vcombine.low %v3081, %v3085
  %v3673 = vunpack.c.l.s4 1983009808
  %v3674 = vunpack.c.0.s8 %v3673
  %v3675 = vlaneseq
  %v3676 = vshrl.u32 %v3675, 7
  %v3677 = vsub.s32 %v3674, %v3676
  %v3678 = vrot.slane %v3670, %v3677
  %v3680 = vunpack.c.l.s4 1983009808
  %v3681 = vunpack.c.0.s8 %v3680
  %v3682 = vlaneseq
  %v3683 = vshrl.u32 %v3682, 7
  %v3684 = vsub.s32 %v3681, %v3683
  %v3685 = vrot.slane %v3671, %v3684
  %v3686 = vcombine.low %v3678, %v3685
  %v3687 = vcombine.low %v3089, %v3093
  %v3688 = vcombine.low %v3097, %v3101
  %v3690 = vunpack.c.l.s4 1983009808
  %v3691 = vunpack.c.0.s8 %v3690
  %v3692 = vlaneseq
  %v3693 = vshrl.u32 %v3692, 7
  %v3694 = vsub.s32 %v3691, %v3693
  %v3695 = vrot.slane %v3687, %v3694
  %v3697 = vunpack.c.l.s4 1983009808
  %v3698 = vunpack.c.0.s8 %v3697
  %v3699 = vlaneseq
  %v3700 = vshrl.u32 %v3699, 7
  %v3701 = vsub.s32 %v3698, %v3700
  %v3702 = vrot.slane %v3688, %v3701
  %v3703 = vcombine.low %v3695, %v3702
  %v3704 = vcombine.low %v3105, %v3109
  %v3705 = vcombine.low %v3113, %v3117
  %v3707 = vunpack.c.l.s4 1983009808
  %v3708 = vunpack.c.0.s8 %v3707
  %v3709 = vlaneseq
  %v3710 = vshrl.u32 %v3709, 7
  %v3711 = vsub.s32 %v3708, %v3710
  %v3712 = vrot.slane %v3704, %v3711
  %v3714 = vunpack.c.l.s4 1983009808
  %v3715 = vunpack.c.0.s8 %v3714
  %v3716 = vlaneseq
  %v3717 = vshrl.u32 %v3716, 7
  %v3718 = vsub.s32 %v3715, %v3717
  %v3719 = vrot.slane %v3705, %v3718
  %v3720 = vcombine.low %v3712, %v3719
  %v3721 = vcombine.low %v3121, %v3125
  %v3722 = vcombine.low %v3129, %v3133
  %v3724 = vunpack.c.l.s4 1983009808
  %v3725 = vunpack.c.0.s8 %v3724
  %v3726 = vlaneseq
  %v3727 = vshrl.u32 %v3726, 7
  %v3728 = vsub.s32 %v3725, %v3727
  %v3729 = vrot.slane %v3721, %v3728
  %v3731 = vunpack.c.l.s4 1983009808
  %v3732 = vunpack.c.0.s8 %v3731
  %v3733 = vlaneseq
  %v3734 = vshrl.u32 %v3733, 7
  %v3735 = vsub.s32 %v3732, %v3734
  %v3736 = vrot.slane %v3722, %v3735
  %v3737 = vcombine.low %v3729, %v3736
  %v3738 = vcombine.low %v3137, %v3141
  %v3739 = vcombine.low %v3145, %v3149
  %v3741 = vunpack.c.l.s4 1983009808
  %v3742 = vunpack.c.0.s8 %v3741
  %v3743 = vlaneseq
  %v3744 = vshrl.u32 %v3743, 7
  %v3745 = vsub.s32 %v3742, %v3744
  %v3746 = vrot.slane %v3738, %v3745
  %v3748 = vunpack.c.l.s4 1983009808
  %v3749 = vunpack.c.0.s8 %v3748
  %v3750 = vlaneseq
  %v3751 = vshrl.u32 %v3750, 7
  %v3752 = vsub.s32 %v3749, %v3751
  %v3753 = vrot.slane %v3739, %v3752
  %v3754 = vcombine.low %v3746, %v3753
  %v3755 = vcombine.low %v3153, %v3157
  %v3756 = vcombine.low %v3161, %v3165
  %v3758 = vunpack.c.l.s4 1983009808
  %v3759 = vunpack.c.0.s8 %v3758
  %v3760 = vlaneseq
  %v3761 = vshrl.u32 %v3760, 7
  %v3762 = vsub.s32 %v3759, %v3761
  %v3763 = vrot.slane %v3755, %v3762
  %v3765 = vunpack.c.l.s4 1983009808
  %v3766 = vunpack.c.0.s8 %v3765
  %v3767 = vlaneseq
  %v3768 = vshrl.u32 %v3767, 7
  %v3769 = vsub.s32 %v3766, %v3768
  %v3770 = vrot.slane %v3756, %v3769
  %v3771 = vcombine.low %v3763, %v3770
  %v3772 = vcombine.low %v3169, %v3173
  %v3773 = vcombine.low %v3177, %v3181
  %v3775 = vunpack.c.l.s4 1983009808
  %v3776 = vunpack.c.0.s8 %v3775
  %v3777 = vlaneseq
  %v3778 = vshrl.u32 %v3777, 7
  %v3779 = vsub.s32 %v3776, %v3778
  %v3780 = vrot.slane %v3772, %v3779
  %v3782 = vunpack.c.l.s4 1983009808
  %v3783 = vunpack.c.0.s8 %v3782
  %v3784 = vlaneseq
  %v3785 = vshrl.u32 %v3784, 7
  %v3786 = vsub.s32 %v3783, %v3785
  %v3787 = vrot.slane %v3773, %v3786
  %v3788 = vcombine.low %v3780, %v3787
  %v3789 = vcombine.low %v3185, %v3189
  %v3790 = vcombine.low %v3193, %v3197
  %v3792 = vunpack.c.l.s4 1983009808
  %v3793 = vunpack.c.0.s8 %v3792
  %v3794 = vlaneseq
  %v3795 = vshrl.u32 %v3794, 7
  %v3796 = vsub.s32 %v3793, %v3795
  %v3797 = vrot.slane %v3789, %v3796
  %v3799 = vunpack.c.l.s4 1983009808
  %v3800 = vunpack.c.0.s8 %v3799
  %v3801 = vlaneseq
  %v3802 = vshrl.u32 %v3801, 7
  %v3803 = vsub.s32 %v3800, %v3802
  %v3804 = vrot.slane %v3790, %v3803
  %v3805 = vcombine.low %v3797, %v3804
  %v3806 = vcombine.low %v3201, %v3205
  %v3807 = vcombine.low %v3209, %v3213
  %v3809 = vunpack.c.l.s4 1983009808
  %v3810 = vunpack.c.0.s8 %v3809
  %v3811 = vlaneseq
  %v3812 = vshrl.u32 %v3811, 7
  %v3813 = vsub.s32 %v3810, %v3812
  %v3814 = vrot.slane %v3806, %v3813
  %v3816 = vunpack.c.l.s4 1983009808
  %v3817 = vunpack.c.0.s8 %v3816
  %v3818 = vlaneseq
  %v3819 = vshrl.u32 %v3818, 7
  %v3820 = vsub.s32 %v3817, %v3819
  %v3821 = vrot.slane %v3807, %v3820
  %v3822 = vcombine.low %v3814, %v3821
  %v3823 = vcombine.low %v3217, %v3221
  %v3824 = vcombine.low %v3225, %v3229
  %v3826 = vunpack.c.l.s4 1983009808
  %v3827 = vunpack.c.0.s8 %v3826
  %v3828 = vlaneseq
  %v3829 = vshrl.u32 %v3828, 7
  %v3830 = vsub.s32 %v3827, %v3829
  %v3831 = vrot.slane %v3823, %v3830
  %v3833 = vunpack.c.l.s4 1983009808
  %v3834 = vunpack.c.0.s8 %v3833
  %v3835 = vlaneseq
  %v3836 = vshrl.u32 %v3835, 7
  %v3837 = vsub.s32 %v3834, %v3836
  %v3838 = vrot.slane %v3824, %v3837
  %v3839 = vcombine.low %v3831, %v3838
  %v3840 = vcombine.low %v3233, %v3237
  %v3841 = vcombine.low %v3241, %v3245
  %v3843 = vunpack.c.l.s4 1983009808
  %v3844 = vunpack.c.0.s8 %v3843
  %v3845 = vlaneseq
  %v3846 = vshrl.u32 %v3845, 7
  %v3847 = vsub.s32 %v3844, %v3846
  %v3848 = vrot.slane %v3840, %v3847
  %v3850 = vunpack.c.l.s4 1983009808
  %v3851 = vunpack.c.0.s8 %v3850
  %v3852 = vlaneseq
  %v3853 = vshrl.u32 %v3852, 7
  %v3854 = vsub.s32 %v3851, %v3853
  %v3855 = vrot.slane %v3841, %v3854
  %v3856 = vcombine.low %v3848, %v3855
  %v3857 = vcombine.low %v3249, %v3253
  %v3858 = vcombine.low %v3257, %v3261
  %v3860 = vunpack.c.l.s4 1983009808
  %v3861 = vunpack.c.0.s8 %v3860
  %v3862 = vlaneseq
  %v3863 = vshrl.u32 %v3862, 7
  %v3864 = vsub.s32 %v3861, %v3863
  %v3865 = vrot.slane %v3857, %v3864
  %v3867 = vunpack.c.l.s4 1983009808
  %v3868 = vunpack.c.0.s8 %v3867
  %v3869 = vlaneseq
  %v3870 = vshrl.u32 %v3869, 7
  %v3871 = vsub.s32 %v3868, %v3870
  %v3872 = vrot.slane %v3858, %v3871
  %v3873 = vcombine.low %v3865, %v3872
  %v3910 = vmul.f32 %v2614, %v3278
  %v3911 = vmul.f32 %v2615, %v3295
  %v3912 = vmul.f32 %v2616, %v3312
  %v3913 = vmul.f32 %v2617, %v3329
  %v3914 = vmul.f32 %v2618, %v3346
  %v3915 = vmul.f32 %v2619, %v3363
  %v3916 = vmul.f32 %v2620, %v3380
  %v3917 = vmul.f32 %v2621, %v3397
  %v3918 = vmul.f32 %v2622, %v3414
  %v3919 = vmul.f32 %v2623, %v3431
  %v3920 = vmul.f32 %v2624, %v3448
  %v3921 = vmul.f32 %v2625, %v3465
  %v3922 = vmul.f32 %v2626, %v3482
  %v3923 = vmul.f32 %v2627, %v3499
  %v3924 = vmul.f32 %v2628, %v3516
  %v3925 = vmul.f32 %v2629, %v3533
  %v3926 = vmul.f32 %v2630, %v3550
  %v3927 = vmul.f32 %v2631, %v3567
  %v3928 = vmul.f32 %v2632, %v3584
  %v3929 = vmul.f32 %v2633, %v3601
  %v3930 = vmul.f32 %v2634, %v3618
  %v3931 = vmul.f32 %v2635, %v3635
  %v3932 = vmul.f32 %v2636, %v3652
  %v3933 = vmul.f32 %v2637, %v3669
  %v3934 = vmul.f32 %v2638, %v3686
  %v3935 = vmul.f32 %v2639, %v3703
  %v3936 = vmul.f32 %v2640, %v3720
  %v3937 = vmul.f32 %v2641, %v3737
  %v3938 = vmul.f32 %v2642, %v3754
  %v3939 = vmul.f32 %v2643, %v3771
  %v3940 = vmul.f32 %v2644, %v3788
  %v3941 = vmul.f32 %v2645, %v3805
  %v3942 = vmul.f32 %v2646, %v3822
  %v3943 = vmul.f32 %v2647, %v3839
  %v3944 = vmul.f32 %v2648, %v3856
  %v3945 = vmul.f32 %v2649, %v3873
  %v3982 = vcombine.high %v3910, %v3910
  %v3984 = vunpack.c.l.s4 1983009808
  %v3985 = vunpack.c.0.s8 %v3984
  %v3986 = vlaneseq
  %v3987 = vshrl.u32 %v3986, 7
  %v3988 = vsub.s32 %v3985, %v3987
  %v3989 = vrot.slane %v3910, %v3988
  %v3991 = vunpack.c.l.s4 1983009808
  %v3992 = vunpack.c.0.s8 %v3991
  %v3993 = vlaneseq
  %v3994 = vshrl.u32 %v3993, 7
  %v3995 = vsub.s32 %v3992, %v3994
  %v3996 = vrot.slane %v3982, %v3995
  %v3997 = vcombine.high %v3989, %v3989
  %v3998 = vcombine.high %v3996, %v3996
  %v3999 = vcombine.high %v3911, %v3911
  %v4001 = vunpack.c.l.s4 1983009808
  %v4002 = vunpack.c.0.s8 %v4001
  %v4003 = vlaneseq
  %v4004 = vshrl.u32 %v4003, 7
  %v4005 = vsub.s32 %v4002, %v4004
  %v4006 = vrot.slane %v3911, %v4005
  %v4008 = vunpack.c.l.s4 1983009808
  %v4009 = vunpack.c.0.s8 %v4008
  %v4010 = vlaneseq
  %v4011 = vshrl.u32 %v4010, 7
  %v4012 = vsub.s32 %v4009, %v4011
  %v4013 = vrot.slane %v3999, %v4012
  %v4014 = vcombine.high %v4006, %v4006
  %v4015 = vcombine.high %v4013, %v4013
  %v4016 = vcombine.high %v3912, %v3912
  %v4018 = vunpack.c.l.s4 1983009808
  %v4019 = vunpack.c.0.s8 %v4018
  %v4020 = vlaneseq
  %v4021 = vshrl.u32 %v4020, 7
  %v4022 = vsub.s32 %v4019, %v4021
  %v4023 = vrot.slane %v3912, %v4022
  %v4025 = vunpack.c.l.s4 1983009808
  %v4026 = vunpack.c.0.s8 %v4025
  %v4027 = vlaneseq
  %v4028 = vshrl.u32 %v4027, 7
  %v4029 = vsub.s32 %v4026, %v4028
  %v4030 = vrot.slane %v4016, %v4029
  %v4031 = vcombine.high %v4023, %v4023
  %v4032 = vcombine.high %v4030, %v4030
  %v4033 = vcombine.high %v3913, %v3913
  %v4035 = vunpack.c.l.s4 1983009808
  %v4036 = vunpack.c.0.s8 %v4035
  %v4037 = vlaneseq
  %v4038 = vshrl.u32 %v4037, 7
  %v4039 = vsub.s32 %v4036, %v4038
  %v4040 = vrot.slane %v3913, %v4039
  %v4042 = vunpack.c.l.s4 1983009808
  %v4043 = vunpack.c.0.s8 %v4042
  %v4044 = vlaneseq
  %v4045 = vshrl.u32 %v4044, 7
  %v4046 = vsub.s32 %v4043, %v4045
  %v4047 = vrot.slane %v4033, %v4046
  %v4048 = vcombine.high %v4040, %v4040
  %v4049 = vcombine.high %v4047, %v4047
  %v4050 = vcombine.high %v3914, %v3914
  %v4052 = vunpack.c.l.s4 1983009808
  %v4053 = vunpack.c.0.s8 %v4052
  %v4054 = vlaneseq
  %v4055 = vshrl.u32 %v4054, 7
  %v4056 = vsub.s32 %v4053, %v4055
  %v4057 = vrot.slane %v3914, %v4056
  %v4059 = vunpack.c.l.s4 1983009808
  %v4060 = vunpack.c.0.s8 %v4059
  %v4061 = vlaneseq
  %v4062 = vshrl.u32 %v4061, 7
  %v4063 = vsub.s32 %v4060, %v4062
  %v4064 = vrot.slane %v4050, %v4063
  %v4065 = vcombine.high %v4057, %v4057
  %v4066 = vcombine.high %v4064, %v4064
  %v4067 = vcombine.high %v3915, %v3915
  %v4069 = vunpack.c.l.s4 1983009808
  %v4070 = vunpack.c.0.s8 %v4069
  %v4071 = vlaneseq
  %v4072 = vshrl.u32 %v4071, 7
  %v4073 = vsub.s32 %v4070, %v4072
  %v4074 = vrot.slane %v3915, %v4073
  %v4076 = vunpack.c.l.s4 1983009808
  %v4077 = vunpack.c.0.s8 %v4076
  %v4078 = vlaneseq
  %v4079 = vshrl.u32 %v4078, 7
  %v4080 = vsub.s32 %v4077, %v4079
  %v4081 = vrot.slane %v4067, %v4080
  %v4082 = vcombine.high %v4074, %v4074
  %v4083 = vcombine.high %v4081, %v4081
  %v4084 = vcombine.high %v3916, %v3916
  %v4086 = vunpack.c.l.s4 1983009808
  %v4087 = vunpack.c.0.s8 %v4086
  %v4088 = vlaneseq
  %v4089 = vshrl.u32 %v4088, 7
  %v4090 = vsub.s32 %v4087, %v4089
  %v4091 = vrot.slane %v3916, %v4090
  %v4093 = vunpack.c.l.s4 1983009808
  %v4094 = vunpack.c.0.s8 %v4093
  %v4095 = vlaneseq
  %v4096 = vshrl.u32 %v4095, 7
  %v4097 = vsub.s32 %v4094, %v4096
  %v4098 = vrot.slane %v4084, %v4097
  %v4099 = vcombine.high %v4091, %v4091
  %v4100 = vcombine.high %v4098, %v4098
  %v4101 = vcombine.high %v3917, %v3917
  %v4103 = vunpack.c.l.s4 1983009808
  %v4104 = vunpack.c.0.s8 %v4103
  %v4105 = vlaneseq
  %v4106 = vshrl.u32 %v4105, 7
  %v4107 = vsub.s32 %v4104, %v4106
  %v4108 = vrot.slane %v3917, %v4107
  %v4110 = vunpack.c.l.s4 1983009808
  %v4111 = vunpack.c.0.s8 %v4110
  %v4112 = vlaneseq
  %v4113 = vshrl.u32 %v4112, 7
  %v4114 = vsub.s32 %v4111, %v4113
  %v4115 = vrot.slane %v4101, %v4114
  %v4116 = vcombine.high %v4108, %v4108
  %v4117 = vcombine.high %v4115, %v4115
  %v4118 = vcombine.high %v3918, %v3918
  %v4120 = vunpack.c.l.s4 1983009808
  %v4121 = vunpack.c.0.s8 %v4120
  %v4122 = vlaneseq
  %v4123 = vshrl.u32 %v4122, 7
  %v4124 = vsub.s32 %v4121, %v4123
  %v4125 = vrot.slane %v3918, %v4124
  %v4127 = vunpack.c.l.s4 1983009808
  %v4128 = vunpack.c.0.s8 %v4127
  %v4129 = vlaneseq
  %v4130 = vshrl.u32 %v4129, 7
  %v4131 = vsub.s32 %v4128, %v4130
  %v4132 = vrot.slane %v4118, %v4131
  %v4133 = vcombine.high %v4125, %v4125
  %v4134 = vcombine.high %v4132, %v4132
  %v4135 = vcombine.high %v3919, %v3919
  %v4137 = vunpack.c.l.s4 1983009808
  %v4138 = vunpack.c.0.s8 %v4137
  %v4139 = vlaneseq
  %v4140 = vshrl.u32 %v4139, 7
  %v4141 = vsub.s32 %v4138, %v4140
  %v4142 = vrot.slane %v3919, %v4141
  %v4144 = vunpack.c.l.s4 1983009808
  %v4145 = vunpack.c.0.s8 %v4144
  %v4146 = vlaneseq
  %v4147 = vshrl.u32 %v4146, 7
  %v4148 = vsub.s32 %v4145, %v4147
  %v4149 = vrot.slane %v4135, %v4148
  %v4150 = vcombine.high %v4142, %v4142
  %v4151 = vcombine.high %v4149, %v4149
  %v4152 = vcombine.high %v3920, %v3920
  %v4154 = vunpack.c.l.s4 1983009808
  %v4155 = vunpack.c.0.s8 %v4154
  %v4156 = vlaneseq
  %v4157 = vshrl.u32 %v4156, 7
  %v4158 = vsub.s32 %v4155, %v4157
  %v4159 = vrot.slane %v3920, %v4158
  %v4161 = vunpack.c.l.s4 1983009808
  %v4162 = vunpack.c.0.s8 %v4161
  %v4163 = vlaneseq
  %v4164 = vshrl.u32 %v4163, 7
  %v4165 = vsub.s32 %v4162, %v4164
  %v4166 = vrot.slane %v4152, %v4165
  %v4167 = vcombine.high %v4159, %v4159
  %v4168 = vcombine.high %v4166, %v4166
  %v4169 = vcombine.high %v3921, %v3921
  %v4171 = vunpack.c.l.s4 1983009808
  %v4172 = vunpack.c.0.s8 %v4171
  %v4173 = vlaneseq
  %v4174 = vshrl.u32 %v4173, 7
  %v4175 = vsub.s32 %v4172, %v4174
  %v4176 = vrot.slane %v3921, %v4175
  %v4178 = vunpack.c.l.s4 1983009808
  %v4179 = vunpack.c.0.s8 %v4178
  %v4180 = vlaneseq
  %v4181 = vshrl.u32 %v4180, 7
  %v4182 = vsub.s32 %v4179, %v4181
  %v4183 = vrot.slane %v4169, %v4182
  %v4184 = vcombine.high %v4176, %v4176
  %v4185 = vcombine.high %v4183, %v4183
  %v4186 = vcombine.high %v3922, %v3922
  %v4188 = vunpack.c.l.s4 1983009808
  %v4189 = vunpack.c.0.s8 %v4188
  %v4190 = vlaneseq
  %v4191 = vshrl.u32 %v4190, 7
  %v4192 = vsub.s32 %v4189, %v4191
  %v4193 = vrot.slane %v3922, %v4192
  %v4195 = vunpack.c.l.s4 1983009808
  %v4196 = vunpack.c.0.s8 %v4195
  %v4197 = vlaneseq
  %v4198 = vshrl.u32 %v4197, 7
  %v4199 = vsub.s32 %v4196, %v4198
  %v4200 = vrot.slane %v4186, %v4199
  %v4201 = vcombine.high %v4193, %v4193
  %v4202 = vcombine.high %v4200, %v4200
  %v4203 = vcombine.high %v3923, %v3923
  %v4205 = vunpack.c.l.s4 1983009808
  %v4206 = vunpack.c.0.s8 %v4205
  %v4207 = vlaneseq
  %v4208 = vshrl.u32 %v4207, 7
  %v4209 = vsub.s32 %v4206, %v4208
  %v4210 = vrot.slane %v3923, %v4209
  %v4212 = vunpack.c.l.s4 1983009808
  %v4213 = vunpack.c.0.s8 %v4212
  %v4214 = vlaneseq
  %v4215 = vshrl.u32 %v4214, 7
  %v4216 = vsub.s32 %v4213, %v4215
  %v4217 = vrot.slane %v4203, %v4216
  %v4218 = vcombine.high %v4210, %v4210
  %v4219 = vcombine.high %v4217, %v4217
  %v4220 = vcombine.high %v3924, %v3924
  %v4222 = vunpack.c.l.s4 1983009808
  %v4223 = vunpack.c.0.s8 %v4222
  %v4224 = vlaneseq
  %v4225 = vshrl.u32 %v4224, 7
  %v4226 = vsub.s32 %v4223, %v4225
  %v4227 = vrot.slane %v3924, %v4226
  %v4229 = vunpack.c.l.s4 1983009808
  %v4230 = vunpack.c.0.s8 %v4229
  %v4231 = vlaneseq
  %v4232 = vshrl.u32 %v4231, 7
  %v4233 = vsub.s32 %v4230, %v4232
  %v4234 = vrot.slane %v4220, %v4233
  %v4235 = vcombine.high %v4227, %v4227
  %v4236 = vcombine.high %v4234, %v4234
  %v4237 = vcombine.high %v3925, %v3925
  %v4239 = vunpack.c.l.s4 1983009808
  %v4240 = vunpack.c.0.s8 %v4239
  %v4241 = vlaneseq
  %v4242 = vshrl.u32 %v4241, 7
  %v4243 = vsub.s32 %v4240, %v4242
  %v4244 = vrot.slane %v3925, %v4243
  %v4246 = vunpack.c.l.s4 1983009808
  %v4247 = vunpack.c.0.s8 %v4246
  %v4248 = vlaneseq
  %v4249 = vshrl.u32 %v4248, 7
  %v4250 = vsub.s32 %v4247, %v4249
  %v4251 = vrot.slane %v4237, %v4250
  %v4252 = vcombine.high %v4244, %v4244
  %v4253 = vcombine.high %v4251, %v4251
  %v4254 = vcombine.high %v3926, %v3926
  %v4256 = vunpack.c.l.s4 1983009808
  %v4257 = vunpack.c.0.s8 %v4256
  %v4258 = vlaneseq
  %v4259 = vshrl.u32 %v4258, 7
  %v4260 = vsub.s32 %v4257, %v4259
  %v4261 = vrot.slane %v3926, %v4260
  %v4263 = vunpack.c.l.s4 1983009808
  %v4264 = vunpack.c.0.s8 %v4263
  %v4265 = vlaneseq
  %v4266 = vshrl.u32 %v4265, 7
  %v4267 = vsub.s32 %v4264, %v4266
  %v4268 = vrot.slane %v4254, %v4267
  %v4269 = vcombine.high %v4261, %v4261
  %v4270 = vcombine.high %v4268, %v4268
  %v4271 = vcombine.high %v3927, %v3927
  %v4273 = vunpack.c.l.s4 1983009808
  %v4274 = vunpack.c.0.s8 %v4273
  %v4275 = vlaneseq
  %v4276 = vshrl.u32 %v4275, 7
  %v4277 = vsub.s32 %v4274, %v4276
  %v4278 = vrot.slane %v3927, %v4277
  %v4280 = vunpack.c.l.s4 1983009808
  %v4281 = vunpack.c.0.s8 %v4280
  %v4282 = vlaneseq
  %v4283 = vshrl.u32 %v4282, 7
  %v4284 = vsub.s32 %v4281, %v4283
  %v4285 = vrot.slane %v4271, %v4284
  %v4286 = vcombine.high %v4278, %v4278
  %v4287 = vcombine.high %v4285, %v4285
  %v4288 = vcombine.high %v3928, %v3928
  %v4290 = vunpack.c.l.s4 1983009808
  %v4291 = vunpack.c.0.s8 %v4290
  %v4292 = vlaneseq
  %v4293 = vshrl.u32 %v4292, 7
  %v4294 = vsub.s32 %v4291, %v4293
  %v4295 = vrot.slane %v3928, %v4294
  %v4297 = vunpack.c.l.s4 1983009808
  %v4298 = vunpack.c.0.s8 %v4297
  %v4299 = vlaneseq
  %v4300 = vshrl.u32 %v4299, 7
  %v4301 = vsub.s32 %v4298, %v4300
  %v4302 = vrot.slane %v4288, %v4301
  %v4303 = vcombine.high %v4295, %v4295
  %v4304 = vcombine.high %v4302, %v4302
  %v4305 = vcombine.high %v3929, %v3929
  %v4307 = vunpack.c.l.s4 1983009808
  %v4308 = vunpack.c.0.s8 %v4307
  %v4309 = vlaneseq
  %v4310 = vshrl.u32 %v4309, 7
  %v4311 = vsub.s32 %v4308, %v4310
  %v4312 = vrot.slane %v3929, %v4311
  %v4314 = vunpack.c.l.s4 1983009808
  %v4315 = vunpack.c.0.s8 %v4314
  %v4316 = vlaneseq
  %v4317 = vshrl.u32 %v4316, 7
  %v4318 = vsub.s32 %v4315, %v4317
  %v4319 = vrot.slane %v4305, %v4318
  %v4320 = vcombine.high %v4312, %v4312
  %v4321 = vcombine.high %v4319, %v4319
  %v4322 = vcombine.high %v3930, %v3930
  %v4324 = vunpack.c.l.s4 1983009808
  %v4325 = vunpack.c.0.s8 %v4324
  %v4326 = vlaneseq
  %v4327 = vshrl.u32 %v4326, 7
  %v4328 = vsub.s32 %v4325, %v4327
  %v4329 = vrot.slane %v3930, %v4328
  %v4331 = vunpack.c.l.s4 1983009808
  %v4332 = vunpack.c.0.s8 %v4331
  %v4333 = vlaneseq
  %v4334 = vshrl.u32 %v4333, 7
  %v4335 = vsub.s32 %v4332, %v4334
  %v4336 = vrot.slane %v4322, %v4335
  %v4337 = vcombine.high %v4329, %v4329
  %v4338 = vcombine.high %v4336, %v4336
  %v4339 = vcombine.high %v3931, %v3931
  %v4341 = vunpack.c.l.s4 1983009808
  %v4342 = vunpack.c.0.s8 %v4341
  %v4343 = vlaneseq
  %v4344 = vshrl.u32 %v4343, 7
  %v4345 = vsub.s32 %v4342, %v4344
  %v4346 = vrot.slane %v3931, %v4345
  %v4348 = vunpack.c.l.s4 1983009808
  %v4349 = vunpack.c.0.s8 %v4348
  %v4350 = vlaneseq
  %v4351 = vshrl.u32 %v4350, 7
  %v4352 = vsub.s32 %v4349, %v4351
  %v4353 = vrot.slane %v4339, %v4352
  %v4354 = vcombine.high %v4346, %v4346
  %v4355 = vcombine.high %v4353, %v4353
  %v4356 = vcombine.high %v3932, %v3932
  %v4358 = vunpack.c.l.s4 1983009808
  %v4359 = vunpack.c.0.s8 %v4358
  %v4360 = vlaneseq
  %v4361 = vshrl.u32 %v4360, 7
  %v4362 = vsub.s32 %v4359, %v4361
  %v4363 = vrot.slane %v3932, %v4362
  %v4365 = vunpack.c.l.s4 1983009808
  %v4366 = vunpack.c.0.s8 %v4365
  %v4367 = vlaneseq
  %v4368 = vshrl.u32 %v4367, 7
  %v4369 = vsub.s32 %v4366, %v4368
  %v4370 = vrot.slane %v4356, %v4369
  %v4371 = vcombine.high %v4363, %v4363
  %v4372 = vcombine.high %v4370, %v4370
  %v4373 = vcombine.high %v3933, %v3933
  %v4375 = vunpack.c.l.s4 1983009808
  %v4376 = vunpack.c.0.s8 %v4375
  %v4377 = vlaneseq
  %v4378 = vshrl.u32 %v4377, 7
  %v4379 = vsub.s32 %v4376, %v4378
  %v4380 = vrot.slane %v3933, %v4379
  %v4382 = vunpack.c.l.s4 1983009808
  %v4383 = vunpack.c.0.s8 %v4382
  %v4384 = vlaneseq
  %v4385 = vshrl.u32 %v4384, 7
  %v4386 = vsub.s32 %v4383, %v4385
  %v4387 = vrot.slane %v4373, %v4386
  %v4388 = vcombine.high %v4380, %v4380
  %v4389 = vcombine.high %v4387, %v4387
  %v4390 = vcombine.high %v3934, %v3934
  %v4392 = vunpack.c.l.s4 1983009808
  %v4393 = vunpack.c.0.s8 %v4392
  %v4394 = vlaneseq
  %v4395 = vshrl.u32 %v4394, 7
  %v4396 = vsub.s32 %v4393, %v4395
  %v4397 = vrot.slane %v3934, %v4396
  %v4399 = vunpack.c.l.s4 1983009808
  %v4400 = vunpack.c.0.s8 %v4399
  %v4401 = vlaneseq
  %v4402 = vshrl.u32 %v4401, 7
  %v4403 = vsub.s32 %v4400, %v4402
  %v4404 = vrot.slane %v4390, %v4403
  %v4405 = vcombine.high %v4397, %v4397
  %v4406 = vcombine.high %v4404, %v4404
  %v4407 = vcombine.high %v3935, %v3935
  %v4409 = vunpack.c.l.s4 1983009808
  %v4410 = vunpack.c.0.s8 %v4409
  %v4411 = vlaneseq
  %v4412 = vshrl.u32 %v4411, 7
  %v4413 = vsub.s32 %v4410, %v4412
  %v4414 = vrot.slane %v3935, %v4413
  %v4416 = vunpack.c.l.s4 1983009808
  %v4417 = vunpack.c.0.s8 %v4416
  %v4418 = vlaneseq
  %v4419 = vshrl.u32 %v4418, 7
  %v4420 = vsub.s32 %v4417, %v4419
  %v4421 = vrot.slane %v4407, %v4420
  %v4422 = vcombine.high %v4414, %v4414
  %v4423 = vcombine.high %v4421, %v4421
  %v4424 = vcombine.high %v3936, %v3936
  %v4426 = vunpack.c.l.s4 1983009808
  %v4427 = vunpack.c.0.s8 %v4426
  %v4428 = vlaneseq
  %v4429 = vshrl.u32 %v4428, 7
  %v4430 = vsub.s32 %v4427, %v4429
  %v4431 = vrot.slane %v3936, %v4430
  %v4433 = vunpack.c.l.s4 1983009808
  %v4434 = vunpack.c.0.s8 %v4433
  %v4435 = vlaneseq
  %v4436 = vshrl.u32 %v4435, 7
  %v4437 = vsub.s32 %v4434, %v4436
  %v4438 = vrot.slane %v4424, %v4437
  %v4439 = vcombine.high %v4431, %v4431
  %v4440 = vcombine.high %v4438, %v4438
  %v4441 = vcombine.high %v3937, %v3937
  %v4443 = vunpack.c.l.s4 1983009808
  %v4444 = vunpack.c.0.s8 %v4443
  %v4445 = vlaneseq
  %v4446 = vshrl.u32 %v4445, 7
  %v4447 = vsub.s32 %v4444, %v4446
  %v4448 = vrot.slane %v3937, %v4447
  %v4450 = vunpack.c.l.s4 1983009808
  %v4451 = vunpack.c.0.s8 %v4450
  %v4452 = vlaneseq
  %v4453 = vshrl.u32 %v4452, 7
  %v4454 = vsub.s32 %v4451, %v4453
  %v4455 = vrot.slane %v4441, %v4454
  %v4456 = vcombine.high %v4448, %v4448
  %v4457 = vcombine.high %v4455, %v4455
  %v4458 = vcombine.high %v3938, %v3938
  %v4460 = vunpack.c.l.s4 1983009808
  %v4461 = vunpack.c.0.s8 %v4460
  %v4462 = vlaneseq
  %v4463 = vshrl.u32 %v4462, 7
  %v4464 = vsub.s32 %v4461, %v4463
  %v4465 = vrot.slane %v3938, %v4464
  %v4467 = vunpack.c.l.s4 1983009808
  %v4468 = vunpack.c.0.s8 %v4467
  %v4469 = vlaneseq
  %v4470 = vshrl.u32 %v4469, 7
  %v4471 = vsub.s32 %v4468, %v4470
  %v4472 = vrot.slane %v4458, %v4471
  %v4473 = vcombine.high %v4465, %v4465
  %v4474 = vcombine.high %v4472, %v4472
  %v4475 = vcombine.high %v3939, %v3939
  %v4477 = vunpack.c.l.s4 1983009808
  %v4478 = vunpack.c.0.s8 %v4477
  %v4479 = vlaneseq
  %v4480 = vshrl.u32 %v4479, 7
  %v4481 = vsub.s32 %v4478, %v4480
  %v4482 = vrot.slane %v3939, %v4481
  %v4484 = vunpack.c.l.s4 1983009808
  %v4485 = vunpack.c.0.s8 %v4484
  %v4486 = vlaneseq
  %v4487 = vshrl.u32 %v4486, 7
  %v4488 = vsub.s32 %v4485, %v4487
  %v4489 = vrot.slane %v4475, %v4488
  %v4490 = vcombine.high %v4482, %v4482
  %v4491 = vcombine.high %v4489, %v4489
  %v4492 = vcombine.high %v3940, %v3940
  %v4494 = vunpack.c.l.s4 1983009808
  %v4495 = vunpack.c.0.s8 %v4494
  %v4496 = vlaneseq
  %v4497 = vshrl.u32 %v4496, 7
  %v4498 = vsub.s32 %v4495, %v4497
  %v4499 = vrot.slane %v3940, %v4498
  %v4501 = vunpack.c.l.s4 1983009808
  %v4502 = vunpack.c.0.s8 %v4501
  %v4503 = vlaneseq
  %v4504 = vshrl.u32 %v4503, 7
  %v4505 = vsub.s32 %v4502, %v4504
  %v4506 = vrot.slane %v4492, %v4505
  %v4507 = vcombine.high %v4499, %v4499
  %v4508 = vcombine.high %v4506, %v4506
  %v4509 = vcombine.high %v3941, %v3941
  %v4511 = vunpack.c.l.s4 1983009808
  %v4512 = vunpack.c.0.s8 %v4511
  %v4513 = vlaneseq
  %v4514 = vshrl.u32 %v4513, 7
  %v4515 = vsub.s32 %v4512, %v4514
  %v4516 = vrot.slane %v3941, %v4515
  %v4518 = vunpack.c.l.s4 1983009808
  %v4519 = vunpack.c.0.s8 %v4518
  %v4520 = vlaneseq
  %v4521 = vshrl.u32 %v4520, 7
  %v4522 = vsub.s32 %v4519, %v4521
  %v4523 = vrot.slane %v4509, %v4522
  %v4524 = vcombine.high %v4516, %v4516
  %v4525 = vcombine.high %v4523, %v4523
  %v4526 = vcombine.high %v3942, %v3942
  %v4528 = vunpack.c.l.s4 1983009808
  %v4529 = vunpack.c.0.s8 %v4528
  %v4530 = vlaneseq
  %v4531 = vshrl.u32 %v4530, 7
  %v4532 = vsub.s32 %v4529, %v4531
  %v4533 = vrot.slane %v3942, %v4532
  %v4535 = vunpack.c.l.s4 1983009808
  %v4536 = vunpack.c.0.s8 %v4535
  %v4537 = vlaneseq
  %v4538 = vshrl.u32 %v4537, 7
  %v4539 = vsub.s32 %v4536, %v4538
  %v4540 = vrot.slane %v4526, %v4539
  %v4541 = vcombine.high %v4533, %v4533
  %v4542 = vcombine.high %v4540, %v4540
  %v4543 = vcombine.high %v3943, %v3943
  %v4545 = vunpack.c.l.s4 1983009808
  %v4546 = vunpack.c.0.s8 %v4545
  %v4547 = vlaneseq
  %v4548 = vshrl.u32 %v4547, 7
  %v4549 = vsub.s32 %v4546, %v4548
  %v4550 = vrot.slane %v3943, %v4549
  %v4552 = vunpack.c.l.s4 1983009808
  %v4553 = vunpack.c.0.s8 %v4552
  %v4554 = vlaneseq
  %v4555 = vshrl.u32 %v4554, 7
  %v4556 = vsub.s32 %v4553, %v4555
  %v4557 = vrot.slane %v4543, %v4556
  %v4558 = vcombine.high %v4550, %v4550
  %v4559 = vcombine.high %v4557, %v4557
  %v4560 = vcombine.high %v3944, %v3944
  %v4562 = vunpack.c.l.s4 1983009808
  %v4563 = vunpack.c.0.s8 %v4562
  %v4564 = vlaneseq
  %v4565 = vshrl.u32 %v4564, 7
  %v4566 = vsub.s32 %v4563, %v4565
  %v4567 = vrot.slane %v3944, %v4566
  %v4569 = vunpack.c.l.s4 1983009808
  %v4570 = vunpack.c.0.s8 %v4569
  %v4571 = vlaneseq
  %v4572 = vshrl.u32 %v4571, 7
  %v4573 = vsub.s32 %v4570, %v4572
  %v4574 = vrot.slane %v4560, %v4573
  %v4575 = vcombine.high %v4567, %v4567
  %v4576 = vcombine.high %v4574, %v4574
  %v4577 = vcombine.high %v3945, %v3945
  %v4579 = vunpack.c.l.s4 1983009808
  %v4580 = vunpack.c.0.s8 %v4579
  %v4581 = vlaneseq
  %v4582 = vshrl.u32 %v4581, 7
  %v4583 = vsub.s32 %v4580, %v4582
  %v4584 = vrot.slane %v3945, %v4583
  %v4586 = vunpack.c.l.s4 1983009808
  %v4587 = vunpack.c.0.s8 %v4586
  %v4588 = vlaneseq
  %v4589 = vshrl.u32 %v4588, 7
  %v4590 = vsub.s32 %v4587, %v4589
  %v4591 = vrot.slane %v4577, %v4590
  %v4592 = vcombine.high %v4584, %v4584
  %v4593 = vcombine.high %v4591, %v4591
  %vm4738 = vcmask 1041408
  %v4739 = vsel %vm4738, %v3989, 0.0
  %v4740 = vsel %vm4738, %v3997, 0.0
  %v4741 = vadd.f32 %v4739, %v4740
  %v4742 = vsel %vm4738, %v3996, 0.0
  %v4743 = vadd.f32 %v4741, %v4742
  %v4744 = vsel %vm4738, %v3998, 0.0
  %v4745 = vadd.f32 %v4743, %v4744
  %v4746 = vsel %vm4738, %v4006, 0.0
  %v4747 = vadd.f32 %v4745, %v4746
  %v4748 = vsel %vm4738, %v4014, 0.0
  %v4749 = vadd.f32 %v4747, %v4748
  %v4750 = vsel %vm4738, %v4013, 0.0
  %v4751 = vadd.f32 %v4749, %v4750
  %v4752 = vsel %vm4738, %v4015, 0.0
  %v4753 = vadd.f32 %v4751, %v4752
  %v4754 = vsel %vm4738, %v4023, 0.0
  %v4755 = vadd.f32 %v4753, %v4754
  %v4756 = vsel %vm4738, %v4031, 0.0
  %v4757 = vadd.f32 %v4755, %v4756
  %v4758 = vsel %vm4738, %v4030, 0.0
  %v4759 = vadd.f32 %v4757, %v4758
  %v4760 = vsel %vm4738, %v4032, 0.0
  %v4761 = vadd.f32 %v4759, %v4760
  %v4762 = vsel %vm4738, %v4040, 0.0
  %v4763 = vadd.f32 %v4761, %v4762
  %v4764 = vsel %vm4738, %v4048, 0.0
  %v4765 = vadd.f32 %v4763, %v4764
  %v4766 = vsel %vm4738, %v4047, 0.0
  %v4767 = vadd.f32 %v4765, %v4766
  %v4768 = vsel %vm4738, %v4049, 0.0
  %v4769 = vadd.f32 %v4767, %v4768
  %v4770 = vsel %vm4738, %v4057, 0.0
  %v4771 = vadd.f32 %v4769, %v4770
  %v4772 = vsel %vm4738, %v4065, 0.0
  %v4773 = vadd.f32 %v4771, %v4772
  %v4774 = vsel %vm4738, %v4064, 0.0
  %v4775 = vadd.f32 %v4773, %v4774
  %v4776 = vsel %vm4738, %v4066, 0.0
  %v4777 = vadd.f32 %v4775, %v4776
  %v4778 = vsel %vm4738, %v4074, 0.0
  %v4779 = vadd.f32 %v4777, %v4778
  %v4780 = vsel %vm4738, %v4082, 0.0
  %v4781 = vadd.f32 %v4779, %v4780
  %v4782 = vsel %vm4738, %v4081, 0.0
  %v4783 = vadd.f32 %v4781, %v4782
  %v4784 = vsel %vm4738, %v4083, 0.0
  %v4785 = vadd.f32 %v4783, %v4784
  %v4786 = vsel %vm4738, %v4091, 0.0
  %v4787 = vadd.f32 %v4785, %v4786
  %v4788 = vsel %vm4738, %v4099, 0.0
  %v4789 = vadd.f32 %v4787, %v4788
  %v4790 = vsel %vm4738, %v4098, 0.0
  %v4791 = vadd.f32 %v4789, %v4790
  %v4792 = vsel %vm4738, %v4100, 0.0
  %v4793 = vadd.f32 %v4791, %v4792
  %v4794 = vsel %vm4738, %v4108, 0.0
  %v4795 = vadd.f32 %v4793, %v4794
  %v4796 = vsel %vm4738, %v4116, 0.0
  %v4797 = vadd.f32 %v4795, %v4796
  %v4798 = vsel %vm4738, %v4115, 0.0
  %v4799 = vadd.f32 %v4797, %v4798
  %v4800 = vsel %vm4738, %v4117, 0.0
  %v4801 = vadd.f32 %v4799, %v4800
  %v4802 = vsel %vm4738, %v4125, 0.0
  %v4803 = vadd.f32 %v4801, %v4802
  %v4804 = vsel %vm4738, %v4133, 0.0
  %v4805 = vadd.f32 %v4803, %v4804
  %v4806 = vsel %vm4738, %v4132, 0.0
  %v4807 = vadd.f32 %v4805, %v4806
  %v4808 = vsel %vm4738, %v4134, 0.0
  %v4809 = vadd.f32 %v4807, %v4808
  %v4810 = vsel %vm4738, %v4142, 0.0
  %v4811 = vadd.f32 %v4809, %v4810
  %v4812 = vsel %vm4738, %v4150, 0.0
  %v4813 = vadd.f32 %v4811, %v4812
  %v4814 = vsel %vm4738, %v4149, 0.0
  %v4815 = vadd.f32 %v4813, %v4814
  %v4816 = vsel %vm4738, %v4151, 0.0
  %v4817 = vadd.f32 %v4815, %v4816
  %v4818 = vsel %vm4738, %v4159, 0.0
  %v4819 = vadd.f32 %v4817, %v4818
  %v4820 = vsel %vm4738, %v4167, 0.0
  %v4821 = vadd.f32 %v4819, %v4820
  %v4822 = vsel %vm4738, %v4166, 0.0
  %v4823 = vadd.f32 %v4821, %v4822
  %v4824 = vsel %vm4738, %v4168, 0.0
  %v4825 = vadd.f32 %v4823, %v4824
  %v4826 = vsel %vm4738, %v4176, 0.0
  %v4827 = vadd.f32 %v4825, %v4826
  %v4828 = vsel %vm4738, %v4184, 0.0
  %v4829 = vadd.f32 %v4827, %v4828
  %v4830 = vsel %vm4738, %v4183, 0.0
  %v4831 = vadd.f32 %v4829, %v4830
  %v4832 = vsel %vm4738, %v4185, 0.0
  %v4833 = vadd.f32 %v4831, %v4832
  %v4834 = vsel %vm4738, %v4193, 0.0
  %v4835 = vadd.f32 %v4833, %v4834
  %v4836 = vsel %vm4738, %v4201, 0.0
  %v4837 = vadd.f32 %v4835, %v4836
  %v4838 = vsel %vm4738, %v4200, 0.0
  %v4839 = vadd.f32 %v4837, %v4838
  %v4840 = vsel %vm4738, %v4202, 0.0
  %v4841 = vadd.f32 %v4839, %v4840
  %v4842 = vsel %vm4738, %v4210, 0.0
  %v4843 = vadd.f32 %v4841, %v4842
  %v4844 = vsel %vm4738, %v4218, 0.0
  %v4845 = vadd.f32 %v4843, %v4844
  %v4846 = vsel %vm4738, %v4217, 0.0
  %v4847 = vadd.f32 %v4845, %v4846
  %v4848 = vsel %vm4738, %v4219, 0.0
  %v4849 = vadd.f32 %v4847, %v4848
  %v4850 = vsel %vm4738, %v4227, 0.0
  %v4851 = vadd.f32 %v4849, %v4850
  %v4852 = vsel %vm4738, %v4235, 0.0
  %v4853 = vadd.f32 %v4851, %v4852
  %v4854 = vsel %vm4738, %v4234, 0.0
  %v4855 = vadd.f32 %v4853, %v4854
  %v4856 = vsel %vm4738, %v4236, 0.0
  %v4857 = vadd.f32 %v4855, %v4856
  %v4858 = vsel %vm4738, %v4244, 0.0
  %v4859 = vadd.f32 %v4857, %v4858
  %v4860 = vsel %vm4738, %v4252, 0.0
  %v4861 = vadd.f32 %v4859, %v4860
  %v4862 = vsel %vm4738, %v4251, 0.0
  %v4863 = vadd.f32 %v4861, %v4862
  %v4864 = vsel %vm4738, %v4253, 0.0
  %v4865 = vadd.f32 %v4863, %v4864
  %v4866 = vsel %vm4738, %v4261, 0.0
  %v4867 = vadd.f32 %v4865, %v4866
  %v4868 = vsel %vm4738, %v4269, 0.0
  %v4869 = vadd.f32 %v4867, %v4868
  %v4870 = vsel %vm4738, %v4268, 0.0
  %v4871 = vadd.f32 %v4869, %v4870
  %v4872 = vsel %vm4738, %v4270, 0.0
  %v4873 = vadd.f32 %v4871, %v4872
  %v4874 = vsel %vm4738, %v4278, 0.0
  %v4875 = vadd.f32 %v4873, %v4874
  %v4876 = vsel %vm4738, %v4286, 0.0
  %v4877 = vadd.f32 %v4875, %v4876
  %v4878 = vsel %vm4738, %v4285, 0.0
  %v4879 = vadd.f32 %v4877, %v4878
  %v4880 = vsel %vm4738, %v4287, 0.0
  %v4881 = vadd.f32 %v4879, %v4880
  %v4882 = vsel %vm4738, %v4295, 0.0
  %v4883 = vadd.f32 %v4881, %v4882
  %v4884 = vsel %vm4738, %v4303, 0.0
  %v4885 = vadd.f32 %v4883, %v4884
  %v4886 = vsel %vm4738, %v4302, 0.0
  %v4887 = vadd.f32 %v4885, %v4886
  %v4888 = vsel %vm4738, %v4304, 0.0
  %v4889 = vadd.f32 %v4887, %v4888
  %v4890 = vsel %vm4738, %v4312, 0.0
  %v4891 = vadd.f32 %v4889, %v4890
  %v4892 = vsel %vm4738, %v4320, 0.0
  %v4893 = vadd.f32 %v4891, %v4892
  %v4894 = vsel %vm4738, %v4319, 0.0
  %v4895 = vadd.f32 %v4893, %v4894
  %v4896 = vsel %vm4738, %v4321, 0.0
  %v4897 = vadd.f32 %v4895, %v4896
  %v4898 = vsel %vm4738, %v4329, 0.0
  %v4899 = vadd.f32 %v4897, %v4898
  %v4900 = vsel %vm4738, %v4337, 0.0
  %v4901 = vadd.f32 %v4899, %v4900
  %v4902 = vsel %vm4738, %v4336, 0.0
  %v4903 = vadd.f32 %v4901, %v4902
  %v4904 = vsel %vm4738, %v4338, 0.0
  %v4905 = vadd.f32 %v4903, %v4904
  %v4906 = vsel %vm4738, %v4346, 0.0
  %v4907 = vadd.f32 %v4905, %v4906
  %v4908 = vsel %vm4738, %v4354, 0.0
  %v4909 = vadd.f32 %v4907, %v4908
  %v4910 = vsel %vm4738, %v4353, 0.0
  %v4911 = vadd.f32 %v4909, %v4910
  %v4912 = vsel %vm4738, %v4355, 0.0
  %v4913 = vadd.f32 %v4911, %v4912
  %v4914 = vsel %vm4738, %v4363, 0.0
  %v4915 = vadd.f32 %v4913, %v4914
  %v4916 = vsel %vm4738, %v4371, 0.0
  %v4917 = vadd.f32 %v4915, %v4916
  %v4918 = vsel %vm4738, %v4370, 0.0
  %v4919 = vadd.f32 %v4917, %v4918
  %v4920 = vsel %vm4738, %v4372, 0.0
  %v4921 = vadd.f32 %v4919, %v4920
  %v4922 = vsel %vm4738, %v4380, 0.0
  %v4923 = vadd.f32 %v4921, %v4922
  %v4924 = vsel %vm4738, %v4388, 0.0
  %v4925 = vadd.f32 %v4923, %v4924
  %v4926 = vsel %vm4738, %v4387, 0.0
  %v4927 = vadd.f32 %v4925, %v4926
  %v4928 = vsel %vm4738, %v4389, 0.0
  %v4929 = vadd.f32 %v4927, %v4928
  %v4930 = vsel %vm4738, %v4397, 0.0
  %v4931 = vadd.f32 %v4929, %v4930
  %v4932 = vsel %vm4738, %v4405, 0.0
  %v4933 = vadd.f32 %v4931, %v4932
  %v4934 = vsel %vm4738, %v4404, 0.0
  %v4935 = vadd.f32 %v4933, %v4934
  %v4936 = vsel %vm4738, %v4406, 0.0
  %v4937 = vadd.f32 %v4935, %v4936
  %v4938 = vsel %vm4738, %v4414, 0.0
  %v4939 = vadd.f32 %v4937, %v4938
  %v4940 = vsel %vm4738, %v4422, 0.0
  %v4941 = vadd.f32 %v4939, %v4940
  %v4942 = vsel %vm4738, %v4421, 0.0
  %v4943 = vadd.f32 %v4941, %v4942
  %v4944 = vsel %vm4738, %v4423, 0.0
  %v4945 = vadd.f32 %v4943, %v4944
  %v4946 = vsel %vm4738, %v4431, 0.0
  %v4947 = vadd.f32 %v4945, %v4946
  %v4948 = vsel %vm4738, %v4439, 0.0
  %v4949 = vadd.f32 %v4947, %v4948
  %v4950 = vsel %vm4738, %v4438, 0.0
  %v4951 = vadd.f32 %v4949, %v4950
  %v4952 = vsel %vm4738, %v4440, 0.0
  %v4953 = vadd.f32 %v4951, %v4952
  %v4954 = vsel %vm4738, %v4448, 0.0
  %v4955 = vadd.f32 %v4953, %v4954
  %v4956 = vsel %vm4738, %v4456, 0.0
  %v4957 = vadd.f32 %v4955, %v4956
  %v4958 = vsel %vm4738, %v4455, 0.0
  %v4959 = vadd.f32 %v4957, %v4958
  %v4960 = vsel %vm4738, %v4457, 0.0
  %v4961 = vadd.f32 %v4959, %v4960
  %v4962 = vsel %vm4738, %v4465, 0.0
  %v4963 = vadd.f32 %v4961, %v4962
  %v4964 = vsel %vm4738, %v4473, 0.0
  %v4965 = vadd.f32 %v4963, %v4964
  %v4966 = vsel %vm4738, %v4472, 0.0
  %v4967 = vadd.f32 %v4965, %v4966
  %v4968 = vsel %vm4738, %v4474, 0.0
  %v4969 = vadd.f32 %v4967, %v4968
  %v4970 = vsel %vm4738, %v4482, 0.0
  %v4971 = vadd.f32 %v4969, %v4970
  %v4972 = vsel %vm4738, %v4490, 0.0
  %v4973 = vadd.f32 %v4971, %v4972
  %v4974 = vsel %vm4738, %v4489, 0.0
  %v4975 = vadd.f32 %v4973, %v4974
  %v4976 = vsel %vm4738, %v4491, 0.0
  %v4977 = vadd.f32 %v4975, %v4976
  %v4978 = vsel %vm4738, %v4499, 0.0
  %v4979 = vadd.f32 %v4977, %v4978
  %v4980 = vsel %vm4738, %v4507, 0.0
  %v4981 = vadd.f32 %v4979, %v4980
  %v4982 = vsel %vm4738, %v4506, 0.0
  %v4983 = vadd.f32 %v4981, %v4982
  %v4984 = vsel %vm4738, %v4508, 0.0
  %v4985 = vadd.f32 %v4983, %v4984
  %v4986 = vsel %vm4738, %v4516, 0.0
  %v4987 = vadd.f32 %v4985, %v4986
  %v4988 = vsel %vm4738, %v4524, 0.0
  %v4989 = vadd.f32 %v4987, %v4988
  %v4990 = vsel %vm4738, %v4523, 0.0
  %v4991 = vadd.f32 %v4989, %v4990
  %v4992 = vsel %vm4738, %v4525, 0.0
  %v4993 = vadd.f32 %v4991, %v4992
  %v4994 = vsel %vm4738, %v4533, 0.0
  %v4995 = vadd.f32 %v4993, %v4994
  %v4996 = vsel %vm4738, %v4541, 0.0
  %v4997 = vadd.f32 %v4995, %v4996
  %v4998 = vsel %vm4738, %v4540, 0.0
  %v4999 = vadd.f32 %v4997, %v4998
  %v5000 = vsel %vm4738, %v4542, 0.0
  %v5001 = vadd.f32 %v4999, %v5000
  %v5002 = vsel %vm4738, %v4550, 0.0
  %v5003 = vadd.f32 %v5001, %v5002
  %v5004 = vsel %vm4738, %v4558, 0.0
  %v5005 = vadd.f32 %v5003, %v5004
  %v5006 = vsel %vm4738, %v4557, 0.0
  %v5007 = vadd.f32 %v5005, %v5006
  %v5008 = vsel %vm4738, %v4559, 0.0
  %v5009 = vadd.f32 %v5007, %v5008
  %v5010 = vsel %vm4738, %v4567, 0.0
  %v5011 = vadd.f32 %v5009, %v5010
  %v5012 = vsel %vm4738, %v4575, 0.0
  %v5013 = vadd.f32 %v5011, %v5012
  %v5014 = vsel %vm4738, %v4574, 0.0
  %v5015 = vadd.f32 %v5013, %v5014
  %v5016 = vsel %vm4738, %v4576, 0.0
  %v5017 = vadd.f32 %v5015, %v5016
  %v5018 = vsel %vm4738, %v4584, 0.0
  %v5019 = vadd.f32 %v5017, %v5018
  %v5020 = vsel %vm4738, %v4592, 0.0
  %v5021 = vadd.f32 %v5019, %v5020
  %v5022 = vsel %vm4738, %v4591, 0.0
  %v5023 = vadd.f32 %v5021, %v5022
  %v5024 = vsel %vm4738, %v4593, 0.0
  %v5025 = vadd.f32 %v5023, %v5024
  %5026 = vadd.xlane.f32.xlu0 %v5025
  %v5027 = vpop.xlane.xlu0 %5026
  %v5028 = vld [vmem:[#allocation2] sm:$0x1]
  %v5030 = vlaneseq
  %v5031 = vshrl.u32 %v5030, 7
  %v5032 = vsub.s32 0, %v5031
  %v5033 = vrot.slane %v5028, %v5032
  %v5035 = vadd.f32 %v5027, %v5033
  %v5036 = vsub.f32 0.0, %v5035
  %v5037 = vmul.f32 %v5036, 1.442695
  %v5038 = vpow.pop %v5037
  %v5039 = vadd.f32 %v5038, 1.0
  %v5040 = vrcp.pop %v5039
  %v5041 = vmul.f32 1.0, %v5040
  %vm5042 = vcmask 1024
  %5043 = vst.msk [vmem:[%s5] sm:$0x3] %vm5042, %v5041
  // Predicated region
  $region22: #{disc_cero_forward.5} parent=0 // pred_check
    _
  $region23: #{disc_cero_forward.5} parent=0 // pred_check_branch
    %5045 = sbr.rel (0) target = $region25
  $region24: #{disc_cero_forward.5} parent=0 // pred_region
    _
  $region25: #{disc_cero_forward.5} parent=0 // pred_fallthru
    _
  // Predicated region
  $region26: #{disc_cero_forward.5} parent=0 // pred_check
    _
  $region27: #{disc_cero_forward.5} parent=0 // pred_check_branch
    %5047 = sbr.rel (0) target = $region29
  $region28: #{disc_cero_forward.5} parent=0 // pred_region
    _
  $region29: #{disc_cero_forward.5} parent=0 // pred_fallthru
    _

</llo_original>
